<compile_context>
chip_gen: v7x
topology: tpu7x:2x2x1
jax: 0.10.0
libtpu: 0.0.40
codegen_flags: <defaults>
</compile_context>

<pallas_src>
import functools

import jax
import jax.numpy as jnp
from jax.experimental import pallas as pl
from jax.experimental.pallas import tpu as pltpu

EPS = 1e-5        # CLIP LayerNorm eps
NEG_INF = -1e9    # finite mask value


def _layernorm(x, g, b):
    """LayerNorm with f32 statistics regardless of input dtype."""
    x = x.astype(jnp.float32)
    mu = jnp.mean(x, axis=-1, keepdims=True)
    var = jnp.mean((x - mu) ** 2, axis=-1, keepdims=True)
    return (x - mu) * jax.lax.rsqrt(var + EPS) * g + b


# --------------------------------------------------------------------------
# Fused encoder-stack kernel: grid = (num_layers, batch).
# Weights are indexed by the layer axis only (prefetched / double buffered);
# the residual stream is resident in an f32 VMEM scratch indexed by batch.
# --------------------------------------------------------------------------
def clip_stack_kernel(x_ref,
                      ln1_g_ref, ln1_b_ref, wqkv_ref, bqkv_ref,
                      wo_ref, bo_ref, ln2_g_ref, ln2_b_ref,
                      w1_ref, b1_ref, w2_ref, b2_ref,
                      lnf_g_ref, lnf_b_ref,
                      o_ref, resid_ref, *, num_heads):
    l = pl.program_id(0)
    b = pl.program_id(1)
    n_layers = pl.num_programs(0)

    # Layer 0: pull this batch row's (bf16) embedding block into the resident
    # f32 residual stream.
    @pl.when(l == 0)
    def _():
        resid_ref[b] = x_ref[0].astype(jnp.float32)

    x = resid_ref[b]                                   # (S, D) f32 residual
    S, D = x.shape
    H = num_heads
    hd = D // H

    # ---- causal multi-head self-attention (pre-LN) ----
    h = _layernorm(x, ln1_g_ref[0], ln1_b_ref[0]).astype(jnp.bfloat16)
    # attention scale (hd**-0.5) is pre-folded into the q third of wqkv/bqkv.
    qkv = (jnp.dot(h, wqkv_ref[0], preferred_element_type=jnp.float32)
           + bqkv_ref[0]).astype(jnp.bfloat16)         # (S, 3D) bf16
    # cast happened BEFORE the head split so the relayouts below are bf16.
    q = qkv[:, :D].reshape(S, H, hd).swapaxes(0, 1)            # (H, S, hd)
    k = qkv[:, D:2 * D].reshape(S, H, hd).swapaxes(0, 1)
    v = qkv[:, 2 * D:].reshape(S, H, hd).swapaxes(0, 1)

    scores = jax.lax.dot_general(                      # (H, S, S), f32 acc
        q, k, (((2,), (2,)), ((0,), (0,))),
        preferred_element_type=jnp.float32)

    row = jax.lax.broadcasted_iota(jnp.int32, (S, S), 0)
    col = jax.lax.broadcasted_iota(jnp.int32, (S, S), 1)
    scores = jnp.where((row >= col)[None, :, :], scores, NEG_INF)

    m = jnp.max(scores, axis=-1, keepdims=True)
    p = jnp.exp(scores - m)                            # f32 softmax
    p = p * pl.reciprocal(jnp.sum(p, axis=-1, keepdims=True), approx=True)

    ctx = jax.lax.dot_general(                         # (H, S, hd), f32 acc
        p.astype(jnp.bfloat16), v, (((2,), (1,)), ((0,), (0,))),
        preferred_element_type=jnp.float32)
    attn = ctx.astype(jnp.bfloat16).swapaxes(0, 1).reshape(S, D)   # bf16 merge
    attn = jnp.dot(attn, wo_ref[0], preferred_element_type=jnp.float32) + bo_ref[0]
    x = x + attn                                       # residual add in f32

    # ---- quickGELU MLP (pre-LN) ----
    h2 = _layernorm(x, ln2_g_ref[0], ln2_b_ref[0]).astype(jnp.bfloat16)
    a = jnp.dot(h2, w1_ref[0], preferred_element_type=jnp.float32) + b1_ref[0]
    a = a * jax.nn.sigmoid(1.702 * a)                  # quick_gelu (sigmoid on EUP)
    # TODO(synk): on v5e, chunk the FF dimension here (fori_loop over column
    # tiles of w1/w2) to avoid the full (S, FF) f32 intermediate; kept
    # un-chunked for portability.
    mlp = jnp.dot(a.astype(jnp.bfloat16), w2_ref[0],
                  preferred_element_type=jnp.float32) + b2_ref[0]
    y = x + mlp                                        # residual add in f32

    resid_ref[b] = y                                   # stays f32 in VMEM

    # Last layer: fused final LayerNorm -> output.  Earlier layers write the
    # current residual (those HBM slots are overwritten at the last layer;
    # writing keeps the auto-writeback contents deterministic).
    @pl.when(l == n_layers - 1)
    def _():
        o_ref[0] = _layernorm(y, lnf_g_ref[...], lnf_b_ref[...]).astype(o_ref.dtype)

    @pl.when(l != n_layers - 1)
    def _():
        o_ref[0] = y.astype(o_ref.dtype)


# --------------------------------------------------------------------------
# pallas_call wrapper
# --------------------------------------------------------------------------
_STACKED_ORDER = ('ln1_g', 'ln1_b', 'w_qkv', 'b_qkv', 'wo', 'bo',
                  'ln2_g', 'ln2_b', 'w1', 'b1', 'w2', 'b2')


def _stacked_spec(arr):
    """One-layer block of a layer-stacked (L, ...) parameter, indexed by the
    layer grid axis; default double-buffering prefetches layer l+1 behind
    layer l's compute."""
    zeros = (0,) * (arr.ndim - 1)
    return pl.BlockSpec((1,) + arr.shape[1:], lambda l, b: (l,) + zeros)


def _vmem_cap_bytes():
    """~85% of physical VMEM (leaves Mosaic internal-scratch headroom)."""
    try:
        cap = getattr(pltpu.get_tpu_info(), "vmem_capacity_bytes", None)
        if cap:
            return int(cap * 0.85)
    except Exception:
        pass
    return 54 << 20   # conservative fallback (~85% of v7x's 64 MiB)


def clip_encoder_stack(x, params, *, num_heads):
    B, S, D = x.shape
    stacked = [params[name] for name in _STACKED_ORDER]
    L = stacked[0].shape[0]
    FF = params['w1'].shape[-1]
    H = num_heads
    assert D % H == 0

    # VMEM budget: double-buffered per-layer weight blocks + pipelined
    # activation/output blocks + resident f32 residual + matmul intermediates.
    layer_block_bytes = sum(int(p.size // L) * p.dtype.itemsize for p in stacked)
    act_bytes = (2 * S * D * 2            # x blocks (bf16, double buffered)
                 + 2 * S * D * 4          # out blocks (f32, double buffered)
                 + B * S * D * 4)         # resident residual scratch
    inter_bytes = (S * 3 * D * 4 + 2 * H * S * S * 4
                   + 2 * S * FF * 4 + 4 * S * D * 4)
    needed = 2 * layer_block_bytes + act_bytes + inter_bytes + (8 << 20)
    vmem_limit = int(min(max(needed, 32 << 20), _vmem_cap_bytes()))

    in_specs = [pl.BlockSpec((1, S, D), lambda l, b: (b, 0, 0))]
    in_specs += [_stacked_spec(p) for p in stacked]
    in_specs += [pl.BlockSpec(params['lnf_g'].shape, lambda l, b: (0, 0)),
                 pl.BlockSpec(params['lnf_b'].shape, lambda l, b: (0, 0))]

    # The layer axis is the OUTER, sequential axis so each layer's weights are
    # DMA'd exactly once and prefetched behind the previous step's compute.
    # TODO(synk): on v7x (2 TensorCores) split the batch / query rows across
    # cores (core-parallel axis) so both cores get work at B=1; measured impact
    # of plain "parallel" vs "arbitrary" on single-TC chips is near zero.
    # TODO(synk): fp8 (v7x) / int8 (v5e/v6e) weights with per-channel scales
    # would halve the dominant HBM weight traffic; kept bf16 for portability.
    return pl.pallas_call(
        functools.partial(clip_stack_kernel, num_heads=num_heads),
        out_shape=jax.ShapeDtypeStruct((B, S, D), jnp.float32),
        grid=(L, B),
        in_specs=in_specs,
        out_specs=pl.BlockSpec((1, S, D), lambda l, b: (b, 0, 0)),
        scratch_shapes=[pltpu.VMEM((B, S, D), jnp.float32)],
        compiler_params=pltpu.CompilerParams(
            dimension_semantics=("arbitrary", "arbitrary"),
            vmem_limit_bytes=vmem_limit),
    )(x, *stacked, params['lnf_g'], params['lnf_b'])


# --------------------------------------------------------------------------
# Parameters (synthetic, deterministic) and full forward
# --------------------------------------------------------------------------
def init_params(key, vocab, max_pos, d_model, d_ff, num_layers):
    """Raw f32 parameters, PyTorch layout (Linear weights pre-transposed to
    (in_features, out_features) so y = x @ W + b)."""
    def nrm(k, shape):
        return (0.02 * jax.random.normal(k, shape)).astype(jnp.float32)

    keys = jax.random.split(key, 2 + num_layers * 6)
    params = {
        'tok_emb': nrm(keys[0], (vocab, d_model)),
        'pos_emb': nrm(keys[1], (max_pos, d_model)),
        'lnf_g': jnp.ones((1, d_model), jnp.float32),
        'lnf_b': jnp.zeros((1, d_model), jnp.float32),
        'layers': [],
    }
    for l in range(num_layers):
        kq, kk, kv, ko, k1, k2 = keys[2 + 6 * l: 2 + 6 * (l + 1)]
        params['layers'].append({
            'ln1_g': jnp.ones((1, d_model), jnp.float32),
            'ln1_b': jnp.zeros((1, d_model), jnp.float32),
            'wq': nrm(kq, (d_model, d_model)), 'bq': jnp.zeros((1, d_model), jnp.float32),
            'wk': nrm(kk, (d_model, d_model)), 'bk': jnp.zeros((1, d_model), jnp.float32),
            'wv': nrm(kv, (d_model, d_model)), 'bv': jnp.zeros((1, d_model), jnp.float32),
            'wo': nrm(ko, (d_model, d_model)), 'bo': jnp.zeros((1, d_model), jnp.float32),
            'ln2_g': jnp.ones((1, d_model), jnp.float32),
            'ln2_b': jnp.zeros((1, d_model), jnp.float32),
            'w1': nrm(k1, (d_model, d_ff)), 'b1': jnp.zeros((1, d_ff), jnp.float32),
            'w2': nrm(k2, (d_ff, d_model)), 'b2': jnp.zeros((1, d_model), jnp.float32),
        })
    return params


def prepare_params(raw, num_heads):
    """One-time prep: fold the attention scale (head_dim**-0.5) into wq/bq,
    fuse wq|wk|wv -> (D, 3D), cast matmul weights to bf16 (LN params and biases
    stay f32), and stack every per-layer tensor along a leading layer axis."""
    d_model = raw['tok_emb'].shape[1]
    scale = (d_model // num_heads) ** -0.5
    out = {k: raw[k] for k in ('tok_emb', 'pos_emb', 'lnf_g', 'lnf_b')}
    per_layer = {name: [] for name in _STACKED_ORDER}
    for lp in raw['layers']:
        w_qkv = jnp.concatenate([lp['wq'] * scale, lp['wk'], lp['wv']], axis=1)
        b_qkv = jnp.concatenate([lp['bq'] * scale, lp['bk'], lp['bv']], axis=1)
        per_layer['ln1_g'].append(lp['ln1_g'])
        per_layer['ln1_b'].append(lp['ln1_b'])
        per_layer['w_qkv'].append(w_qkv.astype(jnp.bfloat16))
        per_layer['b_qkv'].append(b_qkv)
        per_layer['wo'].append(lp['wo'].astype(jnp.bfloat16))
        per_layer['bo'].append(lp['bo'])
        per_layer['ln2_g'].append(lp['ln2_g'])
        per_layer['ln2_b'].append(lp['ln2_b'])
        per_layer['w1'].append(lp['w1'].astype(jnp.bfloat16))
        per_layer['b1'].append(lp['b1'])
        per_layer['w2'].append(lp['w2'].astype(jnp.bfloat16))
        per_layer['b2'].append(lp['b2'])
    for name, lst in per_layer.items():
        out[name] = jnp.stack(lst, axis=0)   # (L, ...) layer-stacked
    return out


def frozen_clip_embedder(tokens, params, num_heads):
    """layer='last': last_hidden_state of the CLIP text transformer.

    Matches the Stable-Diffusion FrozenCLIPEmbedder usage: pad-to-max_length
    tokens, causal mask only (no padding attention_mask).
    """
    # TODO(synk): the HuggingFace CLIPTokenizer (string -> ids) is host-side
    # string processing with no Pallas equivalent; `tokens` are pre-tokenized,
    # padded/truncated ids of shape (B, max_length).
    B, S = tokens.shape
    x = jnp.take(params['tok_emb'], tokens, axis=0)     # (B, S, D) gather glue
    x = x + params['pos_emb'][None, :S, :]

    # Pad seq to a multiple of 128 (real CLIP: 77 -> 128) so the (S, S) score /
    # softmax tiles and head slices are lane-dense.  Padded key columns are
    # excluded by the causal mask; padded rows are sliced off at the end.
    S_pad = -(-S // 128) * 128
    if S_pad != S:
        x = jnp.pad(x, ((0, 0), (0, S_pad - S), (0, 0)))

    x = x.astype(jnp.bfloat16)                           # stream embeddings in bf16
    z = clip_encoder_stack(x, params, num_heads=num_heads)
    return z[:, :S, :]                                   # f32 (final LN fused in-kernel)


if __name__ == "__main__":
    # Small shapes consistent with the module (max_length -> seq, hidden -> D).
    B, S = 2, 8              # batch, max_length (small)
    D, FF = 32, 128          # hidden size, MLP size (4*D, as in CLIP)
    HEADS = 4
    LAYERS = 2
    VOCAB = 1000
    MAX_POS = 16

    key = jax.random.PRNGKey(0)
    kp, kt = jax.random.split(key)
    raw_params = init_params(kp, VOCAB, MAX_POS, D, FF, LAYERS)
    params = prepare_params(raw_params, HEADS)
    tokens = jax.random.randint(kt, (B, S), 0, VOCAB, dtype=jnp.int32)

    z = frozen_clip_embedder(tokens, params, HEADS)
    z = jax.block_until_ready(z)
    assert z.shape == (B, S, D) and z.dtype == jnp.float32
    assert bool(jnp.all(jnp.isfinite(z)))
    print("KERNEL_OK")
</pallas_src>

<mosaic_0001>
module attributes {stable_mosaic.version = 11 : i64} {
  func.func @clip_stack_kernel(%arg0: i32, %arg1: i32, %arg2: memref<1x128x32xbf16, #tpu.memory_space<vmem>>, %arg3: memref<1x1x32xf32, #tpu.memory_space<vmem>>, %arg4: memref<1x1x32xf32, #tpu.memory_space<vmem>>, %arg5: memref<1x32x96xbf16, #tpu.memory_space<vmem>>, %arg6: memref<1x1x96xf32, #tpu.memory_space<vmem>>, %arg7: memref<1x32x32xbf16, #tpu.memory_space<vmem>>, %arg8: memref<1x1x32xf32, #tpu.memory_space<vmem>>, %arg9: memref<1x1x32xf32, #tpu.memory_space<vmem>>, %arg10: memref<1x1x32xf32, #tpu.memory_space<vmem>>, %arg11: memref<1x32x128xbf16, #tpu.memory_space<vmem>>, %arg12: memref<1x1x128xf32, #tpu.memory_space<vmem>>, %arg13: memref<1x128x32xbf16, #tpu.memory_space<vmem>>, %arg14: memref<1x1x32xf32, #tpu.memory_space<vmem>>, %arg15: memref<1x32xf32, #tpu.memory_space<vmem>>, %arg16: memref<1x32xf32, #tpu.memory_space<vmem>>, %arg17: memref<1x128x32xf32, #tpu.memory_space<vmem>>, %arg18: memref<2x128x32xf32, #tpu.memory_space<vmem>>) attributes {dimension_semantics = [#tpu.dimension_semantics<arbitrary>, #tpu.dimension_semantics<arbitrary>], iteration_bounds = array<i64: 2, 2>, scalar_prefetch = 0 : i64, scratch_operands = 1 : i64, tpu.core_type = #tpu.core_type<tc>, window_params = [{transform_indices = @transform_0, window_bounds = array<i64: 1, 128, 32>}, {transform_indices = @transform_1, window_bounds = array<i64: 1, 1, 32>}, {transform_indices = @transform_2, window_bounds = array<i64: 1, 1, 32>}, {transform_indices = @transform_3, window_bounds = array<i64: 1, 32, 96>}, {transform_indices = @transform_4, window_bounds = array<i64: 1, 1, 96>}, {transform_indices = @transform_5, window_bounds = array<i64: 1, 32, 32>}, {transform_indices = @transform_6, window_bounds = array<i64: 1, 1, 32>}, {transform_indices = @transform_7, window_bounds = array<i64: 1, 1, 32>}, {transform_indices = @transform_8, window_bounds = array<i64: 1, 1, 32>}, {transform_indices = @transform_9, window_bounds = array<i64: 1, 32, 128>}, {transform_indices = @transform_10, window_bounds = array<i64: 1, 1, 128>}, {transform_indices = @transform_11, window_bounds = array<i64: 1, 128, 32>}, {transform_indices = @transform_12, window_bounds = array<i64: 1, 1, 32>}, {pipeline_mode = #tpu.pipeline_mode<synchronous>, transform_indices = @transform_13, window_bounds = array<i64: 1, 32>}, {pipeline_mode = #tpu.pipeline_mode<synchronous>, transform_indices = @transform_14, window_bounds = array<i64: 1, 32>}, {transform_indices = @transform_15, window_bounds = array<i64: 1, 128, 32>}]} {
    %c0_i32 = arith.constant 0 : i32
    %0 = arith.cmpi eq, %arg0, %c0_i32 : i32
    %1 = arith.extui %0 : i1 to i32
    %c0_i32_0 = arith.constant 0 : i32
    %2 = arith.cmpi ne, %1, %c0_i32_0 : i32
    scf.if %2 {
      %c0_63 = arith.constant 0 : index
      %c0_64 = arith.constant 0 : index
      %c0_65 = arith.constant 0 : index
      %143 = vector.load %arg2[%c0_63, %c0_64, %c0_65] : memref<1x128x32xbf16, #tpu.memory_space<vmem>>, vector<1x128x32xbf16>
      %144 = vector.shape_cast %143 : vector<1x128x32xbf16> to vector<128x32xbf16>
      %145 = arith.extf %144 : vector<128x32xbf16> to vector<128x32xf32>
      %146 = arith.index_cast %arg1 : i32 to index
      %c0_66 = arith.constant 0 : index
      %c0_67 = arith.constant 0 : index
      %147 = vector.load %arg18[%146, %c0_66, %c0_67] : memref<2x128x32xf32, #tpu.memory_space<vmem>>, vector<1x128x32xf32>
      %148 = vector.shape_cast %147 : vector<1x128x32xf32> to vector<128x32xf32>
      %149 = vector.shape_cast %145 : vector<128x32xf32> to vector<1x128x32xf32>
      tpu.vector_store %arg18[%146, %c0_66, %c0_67], %149 {strides = array<i32>} : memref<2x128x32xf32, #tpu.memory_space<vmem>>, vector<1x128x32xf32>,
    } else {
    }
    %3 = arith.index_cast %arg1 : i32 to index
    %c0 = arith.constant 0 : index
    %c0_1 = arith.constant 0 : index
    %4 = vector.load %arg18[%3, %c0, %c0_1] : memref<2x128x32xf32, #tpu.memory_space<vmem>>, vector<1x128x32xf32>
    %5 = vector.shape_cast %4 : vector<1x128x32xf32> to vector<128x32xf32>
    %c0_2 = arith.constant 0 : index
    %c0_3 = arith.constant 0 : index
    %c0_4 = arith.constant 0 : index
    %6 = vector.load %arg3[%c0_2, %c0_3, %c0_4] : memref<1x1x32xf32, #tpu.memory_space<vmem>>, vector<1x1x32xf32>
    %7 = vector.shape_cast %6 : vector<1x1x32xf32> to vector<1x32xf32>
    %c0_5 = arith.constant 0 : index
    %c0_6 = arith.constant 0 : index
    %c0_7 = arith.constant 0 : index
    %8 = vector.load %arg4[%c0_5, %c0_6, %c0_7] : memref<1x1x32xf32, #tpu.memory_space<vmem>>, vector<1x1x32xf32>
    %9 = vector.shape_cast %8 : vector<1x1x32xf32> to vector<1x32xf32>
    %cst = arith.constant dense<0.000000e+00> : vector<128xf32>
    %10 = vector.multi_reduction <add>, %5, %cst [1] : vector<128x32xf32> to vector<128xf32>
    %11 = vector.shape_cast %10 : vector<128xf32> to vector<128x1xf32>
    %cst_8 = arith.constant 3.200000e+01 : f32
    %12 = vector.broadcast %cst_8 : f32 to vector<128x1xf32>
    %13 = arith.divf %11, %12 : vector<128x1xf32>
    %14 = vector.broadcast %13 : vector<128x1xf32> to vector<128x32xf32>
    %15 = arith.subf %5, %14 : vector<128x32xf32>
    %16 = arith.mulf %15, %15 : vector<128x32xf32>
    %cst_9 = arith.constant dense<0.000000e+00> : vector<128xf32>
    %17 = vector.multi_reduction <add>, %16, %cst_9 [1] : vector<128x32xf32> to vector<128xf32>
    %18 = vector.shape_cast %17 : vector<128xf32> to vector<128x1xf32>
    %cst_10 = arith.constant 3.200000e+01 : f32
    %19 = vector.broadcast %cst_10 : f32 to vector<128x1xf32>
    %20 = arith.divf %18, %19 : vector<128x1xf32>
    %21 = vector.broadcast %13 : vector<128x1xf32> to vector<128x32xf32>
    %22 = arith.subf %5, %21 : vector<128x32xf32>
    %cst_11 = arith.constant 9.99999974E-6 : f32
    %23 = vector.broadcast %cst_11 : f32 to vector<128x1xf32>
    %24 = arith.addf %20, %23 : vector<128x1xf32>
    %25 = math.rsqrt %24 : vector<128x1xf32>
    %26 = vector.broadcast %25 : vector<128x1xf32> to vector<128x32xf32>
    %27 = arith.mulf %22, %26 : vector<128x32xf32>
    %28 = vector.broadcast %7 : vector<1x32xf32> to vector<128x32xf32>
    %29 = arith.mulf %27, %28 : vector<128x32xf32>
    %30 = vector.broadcast %9 : vector<1x32xf32> to vector<128x32xf32>
    %31 = arith.addf %29, %30 : vector<128x32xf32>
    %32 = arith.truncf %31 : vector<128x32xf32> to vector<128x32xbf16>
    %c0_12 = arith.constant 0 : index
    %c0_13 = arith.constant 0 : index
    %c0_14 = arith.constant 0 : index
    %33 = vector.load %arg5[%c0_12, %c0_13, %c0_14] : memref<1x32x96xbf16, #tpu.memory_space<vmem>>, vector<1x32x96xbf16>
    %34 = vector.shape_cast %33 : vector<1x32x96xbf16> to vector<32x96xbf16>
    %cst_15 = arith.constant dense<0.000000e+00> : vector<128x96xf32>
    %35 = tpu.matmul %32, %34, %cst_15 {dimension_numbers = #tpu.dot_dimension_numbers<[1], [0], [0], [1], [0, 0, 1, 1], [], []>} : vector<128x32xbf16>, vector<32x96xbf16>, vector<128x96xf32> -> vector<128x96xf32>
    %c0_16 = arith.constant 0 : index
    %c0_17 = arith.constant 0 : index
    %c0_18 = arith.constant 0 : index
    %36 = vector.load %arg6[%c0_16, %c0_17, %c0_18] : memref<1x1x96xf32, #tpu.memory_space<vmem>>, vector<1x1x96xf32>
    %37 = vector.shape_cast %36 : vector<1x1x96xf32> to vector<1x96xf32>
    %38 = vector.broadcast %37 : vector<1x96xf32> to vector<128x96xf32>
    %39 = arith.addf %35, %38 : vector<128x96xf32>
    %40 = arith.truncf %39 : vector<128x96xf32> to vector<128x96xbf16>
    %41 = vector.extract_strided_slice %40 {offsets = [0, 0], sizes = [128, 32], strides = [1, 1]} : vector<128x96xbf16> to vector<128x32xbf16>
    %42 = vector.shape_cast %41 : vector<128x32xbf16> to vector<128x4x8xbf16>
    %43 = tpu.transpose %42, [1, 0, 2] : vector<128x4x8xbf16> -> vector<4x128x8xbf16>
    %44 = vector.extract_strided_slice %40 {offsets = [0, 32], sizes = [128, 32], strides = [1, 1]} : vector<128x96xbf16> to vector<128x32xbf16>
    %45 = vector.shape_cast %44 : vector<128x32xbf16> to vector<128x4x8xbf16>
    %46 = tpu.transpose %45, [1, 0, 2] : vector<128x4x8xbf16> -> vector<4x128x8xbf16>
    %47 = vector.extract_strided_slice %40 {offsets = [0, 64], sizes = [128, 32], strides = [1, 1]} : vector<128x96xbf16> to vector<128x32xbf16>
    %48 = vector.shape_cast %47 : vector<128x32xbf16> to vector<128x4x8xbf16>
    %49 = tpu.transpose %48, [1, 0, 2] : vector<128x4x8xbf16> -> vector<4x128x8xbf16>
    %cst_19 = arith.constant dense<0.000000e+00> : vector<4x128x128xf32>
    %50 = tpu.matmul %43, %46, %cst_19 {dimension_numbers = #tpu.dot_dimension_numbers<[2], [2], [1], [1], [0, 0, 0, 1, 1, 1], [0], [0]>} : vector<4x128x8xbf16>, vector<4x128x8xbf16>, vector<4x128x128xf32> -> vector<4x128x128xf32>
    %51 = tpu.iota {dimensions = array<i32: 0>} : vector<128x128xi32>
    %52 = tpu.iota {dimensions = array<i32: 1>} : vector<128x128xi32>
    %53 = arith.cmpi sge, %51, %52 : vector<128x128xi32>
    %54 = vector.shape_cast %53 : vector<128x128xi1> to vector<1x128x128xi1>
    %cst_20 = arith.constant -1.000000e+09 : f32
    %55 = vector.shape_cast %54 : vector<1x128x128xi1> to vector<1x128x128xi1>
    %56 = vector.broadcast %55 : vector<1x128x128xi1> to vector<4x128x128xi1>
    %57 = vector.broadcast %cst_20 : f32 to vector<4x128x128xf32>
    %58 = arith.select %56, %50, %57 : vector<4x128x128xi1>, vector<4x128x128xf32>
    %cst_21 = arith.constant dense<0xFF800000> : vector<4x128xf32>
    %59 = vector.multi_reduction <maximumf>, %58, %cst_21 [2] : vector<4x128x128xf32> to vector<4x128xf32>
    %60 = vector.shape_cast %59 : vector<4x128xf32> to vector<4x128x1xf32>
    %61 = vector.broadcast %60 : vector<4x128x1xf32> to vector<4x128x128xf32>
    %62 = arith.subf %58, %61 : vector<4x128x128xf32>
    %63 = math.exp %62 : vector<4x128x128xf32>
    %cst_22 = arith.constant dense<0.000000e+00> : vector<4x128xf32>
    %64 = vector.multi_reduction <add>, %63, %cst_22 [2] : vector<4x128x128xf32> to vector<4x128xf32>
    %65 = vector.shape_cast %64 : vector<4x128xf32> to vector<4x128x1xf32>
    %66 = tpu.reciprocal %65 {approx = true} : vector<4x128x1xf32> -> vector<4x128x1xf32>
    %67 = vector.broadcast %66 : vector<4x128x1xf32> to vector<4x128x128xf32>
    %68 = arith.mulf %63, %67 : vector<4x128x128xf32>
    %69 = arith.truncf %68 : vector<4x128x128xf32> to vector<4x128x128xbf16>
    %cst_23 = arith.constant dense<0.000000e+00> : vector<4x128x8xf32>
    %70 = tpu.matmul %69, %49, %cst_23 {dimension_numbers = #tpu.dot_dimension_numbers<[2], [1], [1], [2], [0, 0, 0, 1, 1, 2], [0], [0]>} : vector<4x128x128xbf16>, vector<4x128x8xbf16>, vector<4x128x8xf32> -> vector<4x128x8xf32>
    %71 = arith.truncf %70 : vector<4x128x8xf32> to vector<4x128x8xbf16>
    %72 = tpu.transpose %71, [1, 0, 2] : vector<4x128x8xbf16> -> vector<128x4x8xbf16>
    %73 = vector.shape_cast %72 : vector<128x4x8xbf16> to vector<128x32xbf16>
    %c0_24 = arith.constant 0 : index
    %c0_25 = arith.constant 0 : index
    %c0_26 = arith.constant 0 : index
    %74 = vector.load %arg7[%c0_24, %c0_25, %c0_26] : memref<1x32x32xbf16, #tpu.memory_space<vmem>>, vector<1x32x32xbf16>
    %75 = vector.shape_cast %74 : vector<1x32x32xbf16> to vector<32x32xbf16>
    %cst_27 = arith.constant dense<0.000000e+00> : vector<128x32xf32>
    %76 = tpu.matmul %73, %75, %cst_27 {dimension_numbers = #tpu.dot_dimension_numbers<[1], [0], [0], [1], [0, 0, 1, 1], [], []>} : vector<128x32xbf16>, vector<32x32xbf16>, vector<128x32xf32> -> vector<128x32xf32>
    %c0_28 = arith.constant 0 : index
    %c0_29 = arith.constant 0 : index
    %c0_30 = arith.constant 0 : index
    %77 = vector.load %arg8[%c0_28, %c0_29, %c0_30] : memref<1x1x32xf32, #tpu.memory_space<vmem>>, vector<1x1x32xf32>
    %78 = vector.shape_cast %77 : vector<1x1x32xf32> to vector<1x32xf32>
    %79 = vector.broadcast %78 : vector<1x32xf32> to vector<128x32xf32>
    %80 = arith.addf %76, %79 : vector<128x32xf32>
    %81 = arith.addf %5, %80 : vector<128x32xf32>
    %c0_31 = arith.constant 0 : index
    %c0_32 = arith.constant 0 : index
    %c0_33 = arith.constant 0 : index
    %82 = vector.load %arg9[%c0_31, %c0_32, %c0_33] : memref<1x1x32xf32, #tpu.memory_space<vmem>>, vector<1x1x32xf32>
    %83 = vector.shape_cast %82 : vector<1x1x32xf32> to vector<1x32xf32>
    %c0_34 = arith.constant 0 : index
    %c0_35 = arith.constant 0 : index
    %c0_36 = arith.constant 0 : index
    %84 = vector.load %arg10[%c0_34, %c0_35, %c0_36] : memref<1x1x32xf32, #tpu.memory_space<vmem>>, vector<1x1x32xf32>
    %85 = vector.shape_cast %84 : vector<1x1x32xf32> to vector<1x32xf32>
    %cst_37 = arith.constant dense<0.000000e+00> : vector<128xf32>
    %86 = vector.multi_reduction <add>, %81, %cst_37 [1] : vector<128x32xf32> to vector<128xf32>
    %87 = vector.shape_cast %86 : vector<128xf32> to vector<128x1xf32>
    %cst_38 = arith.constant 3.200000e+01 : f32
    %88 = vector.broadcast %cst_38 : f32 to vector<128x1xf32>
    %89 = arith.divf %87, %88 : vector<128x1xf32>
    %90 = vector.broadcast %89 : vector<128x1xf32> to vector<128x32xf32>
    %91 = arith.subf %81, %90 : vector<128x32xf32>
    %92 = arith.mulf %91, %91 : vector<128x32xf32>
    %cst_39 = arith.constant dense<0.000000e+00> : vector<128xf32>
    %93 = vector.multi_reduction <add>, %92, %cst_39 [1] : vector<128x32xf32> to vector<128xf32>
    %94 = vector.shape_cast %93 : vector<128xf32> to vector<128x1xf32>
    %cst_40 = arith.constant 3.200000e+01 : f32
    %95 = vector.broadcast %cst_40 : f32 to vector<128x1xf32>
    %96 = arith.divf %94, %95 : vector<128x1xf32>
    %97 = vector.broadcast %89 : vector<128x1xf32> to vector<128x32xf32>
    %98 = arith.subf %81, %97 : vector<128x32xf32>
    %cst_41 = arith.constant 9.99999974E-6 : f32
    %99 = vector.broadcast %cst_41 : f32 to vector<128x1xf32>
    %100 = arith.addf %96, %99 : vector<128x1xf32>
    %101 = math.rsqrt %100 : vector<128x1xf32>
    %102 = vector.broadcast %101 : vector<128x1xf32> to vector<128x32xf32>
    %103 = arith.mulf %98, %102 : vector<128x32xf32>
    %104 = vector.broadcast %83 : vector<1x32xf32> to vector<128x32xf32>
    %105 = arith.mulf %103, %104 : vector<128x32xf32>
    %106 = vector.broadcast %85 : vector<1x32xf32> to vector<128x32xf32>
    %107 = arith.addf %105, %106 : vector<128x32xf32>
    %108 = arith.truncf %107 : vector<128x32xf32> to vector<128x32xbf16>
    %c0_42 = arith.constant 0 : index
    %c0_43 = arith.constant 0 : index
    %c0_44 = arith.constant 0 : index
    %109 = vector.load %arg11[%c0_42, %c0_43, %c0_44] : memref<1x32x128xbf16, #tpu.memory_space<vmem>>, vector<1x32x128xbf16>
    %110 = vector.shape_cast %109 : vector<1x32x128xbf16> to vector<32x128xbf16>
    %cst_45 = arith.constant dense<0.000000e+00> : vector<128x128xf32>
    %111 = tpu.matmul %108, %110, %cst_45 {dimension_numbers = #tpu.dot_dimension_numbers<[1], [0], [0], [1], [0, 0, 1, 1], [], []>} : vector<128x32xbf16>, vector<32x128xbf16>, vector<128x128xf32> -> vector<128x128xf32>
    %c0_46 = arith.constant 0 : index
    %c0_47 = arith.constant 0 : index
    %c0_48 = arith.constant 0 : index
    %112 = vector.load %arg12[%c0_46, %c0_47, %c0_48] : memref<1x1x128xf32, #tpu.memory_space<vmem>>, vector<1x1x128xf32>
    %113 = vector.shape_cast %112 : vector<1x1x128xf32> to vector<1x128xf32>
    %114 = vector.broadcast %113 : vector<1x128xf32> to vector<128x128xf32>
    %115 = arith.addf %111, %114 : vector<128x128xf32>
    %cst_49 = arith.constant 1.702000e+00 : f32
    %116 = vector.broadcast %cst_49 : f32 to vector<128x128xf32>
    %117 = arith.mulf %116, %115 : vector<128x128xf32>
    %118 = arith.negf %117 : vector<128x128xf32>
    %119 = math.exp %118 : vector<128x128xf32>
    %cst_50 = arith.constant 1.000000e+00 : f32
    %120 = vector.broadcast %cst_50 : f32 to vector<128x128xf32>
    %121 = arith.addf %120, %119 : vector<128x128xf32>
    %122 = arith.divf %120, %121 : vector<128x128xf32>
    %123 = arith.mulf %115, %122 : vector<128x128xf32>
    %124 = arith.truncf %123 : vector<128x128xf32> to vector<128x128xbf16>
    %c0_51 = arith.constant 0 : index
    %c0_52 = arith.constant 0 : index
    %c0_53 = arith.constant 0 : index
    %125 = vector.load %arg13[%c0_51, %c0_52, %c0_53] : memref<1x128x32xbf16, #tpu.memory_space<vmem>>, vector<1x128x32xbf16>
    %126 = vector.shape_cast %125 : vector<1x128x32xbf16> to vector<128x32xbf16>
    %cst_54 = arith.constant dense<0.000000e+00> : vector<128x32xf32>
    %127 = tpu.matmul %124, %126, %cst_54 {dimension_numbers = #tpu.dot_dimension_numbers<[1], [0], [0], [1], [0, 0, 1, 1], [], []>} : vector<128x128xbf16>, vector<128x32xbf16>, vector<128x32xf32> -> vector<128x32xf32>
    %c0_55 = arith.constant 0 : index
    %c0_56 = arith.constant 0 : index
    %c0_57 = arith.constant 0 : index
    %128 = vector.load %arg14[%c0_55, %c0_56, %c0_57] : memref<1x1x32xf32, #tpu.memory_space<vmem>>, vector<1x1x32xf32>
    %129 = vector.shape_cast %128 : vector<1x1x32xf32> to vector<1x32xf32>
    %130 = vector.broadcast %129 : vector<1x32xf32> to vector<128x32xf32>
    %131 = arith.addf %127, %130 : vector<128x32xf32>
    %132 = arith.addf %81, %131 : vector<128x32xf32>
    %133 = arith.index_cast %arg1 : i32 to index
    %c0_58 = arith.constant 0 : index
    %c0_59 = arith.constant 0 : index
    %134 = vector.load %arg18[%133, %c0_58, %c0_59] : memref<2x128x32xf32, #tpu.memory_space<vmem>>, vector<1x128x32xf32>
    %135 = vector.shape_cast %134 : vector<1x128x32xf32> to vector<128x32xf32>
    %136 = vector.shape_cast %132 : vector<128x32xf32> to vector<1x128x32xf32>
    tpu.vector_store %arg18[%133, %c0_58, %c0_59], %136 {strides = array<i32>} : memref<2x128x32xf32, #tpu.memory_space<vmem>>, vector<1x128x32xf32>,
    %c1_i32 = arith.constant 1 : i32
    %137 = arith.cmpi eq, %arg0, %c1_i32 : i32
    %138 = arith.extui %137 : i1 to i32
    %c0_i32_60 = arith.constant 0 : i32
    %139 = arith.cmpi ne, %138, %c0_i32_60 : i32
    scf.if %139 {
      %c0_63 = arith.constant 0 : index
      %c0_64 = arith.constant 0 : index
      %143 = vector.load %arg15[%c0_63, %c0_64] : memref<1x32xf32, #tpu.memory_space<vmem>>, vector<1x32xf32>
      %c0_65 = arith.constant 0 : index
      %c0_66 = arith.constant 0 : index
      %144 = vector.load %arg16[%c0_65, %c0_66] : memref<1x32xf32, #tpu.memory_space<vmem>>, vector<1x32xf32>
      %cst_67 = arith.constant dense<0.000000e+00> : vector<128xf32>
      %145 = vector.multi_reduction <add>, %132, %cst_67 [1] : vector<128x32xf32> to vector<128xf32>
      %146 = vector.shape_cast %145 : vector<128xf32> to vector<128x1xf32>
      %cst_68 = arith.constant 3.200000e+01 : f32
      %147 = vector.broadcast %cst_68 : f32 to vector<128x1xf32>
      %148 = arith.divf %146, %147 : vector<128x1xf32>
      %149 = vector.broadcast %148 : vector<128x1xf32> to vector<128x32xf32>
      %150 = arith.subf %132, %149 : vector<128x32xf32>
      %151 = arith.mulf %150, %150 : vector<128x32xf32>
      %cst_69 = arith.constant dense<0.000000e+00> : vector<128xf32>
      %152 = vector.multi_reduction <add>, %151, %cst_69 [1] : vector<128x32xf32> to vector<128xf32>
      %153 = vector.shape_cast %152 : vector<128xf32> to vector<128x1xf32>
      %cst_70 = arith.constant 3.200000e+01 : f32
      %154 = vector.broadcast %cst_70 : f32 to vector<128x1xf32>
      %155 = arith.divf %153, %154 : vector<128x1xf32>
      %156 = vector.broadcast %148 : vector<128x1xf32> to vector<128x32xf32>
      %157 = arith.subf %132, %156 : vector<128x32xf32>
      %cst_71 = arith.constant 9.99999974E-6 : f32
      %158 = vector.broadcast %cst_71 : f32 to vector<128x1xf32>
      %159 = arith.addf %155, %158 : vector<128x1xf32>
      %160 = math.rsqrt %159 : vector<128x1xf32>
      %161 = vector.broadcast %160 : vector<128x1xf32> to vector<128x32xf32>
      %162 = arith.mulf %157, %161 : vector<128x32xf32>
      %163 = vector.broadcast %143 : vector<1x32xf32> to vector<128x32xf32>
      %164 = arith.mulf %162, %163 : vector<128x32xf32>
      %165 = vector.broadcast %144 : vector<1x32xf32> to vector<128x32xf32>
      %166 = arith.addf %164, %165 : vector<128x32xf32>
      %c0_72 = arith.constant 0 : index
      %c0_73 = arith.constant 0 : index
      %c0_74 = arith.constant 0 : index
      %167 = vector.load %arg17[%c0_72, %c0_73, %c0_74] : memref<1x128x32xf32, #tpu.memory_space<vmem>>, vector<1x128x32xf32>
      %168 = vector.shape_cast %167 : vector<1x128x32xf32> to vector<128x32xf32>
      %169 = vector.shape_cast %166 : vector<128x32xf32> to vector<1x128x32xf32>
      tpu.vector_store %arg17[%c0_72, %c0_73, %c0_74], %169 {strides = array<i32>} : memref<1x128x32xf32, #tpu.memory_space<vmem>>, vector<1x128x32xf32>,
    } else {
    }
    %c1_i32_61 = arith.constant 1 : i32
    %140 = arith.cmpi ne, %arg0, %c1_i32_61 : i32
    %141 = arith.extui %140 : i1 to i32
    %c0_i32_62 = arith.constant 0 : i32
    %142 = arith.cmpi ne, %141, %c0_i32_62 : i32
    scf.if %142 {
      %c0_63 = arith.constant 0 : index
      %c0_64 = arith.constant 0 : index
      %c0_65 = arith.constant 0 : index
      %143 = vector.load %arg17[%c0_63, %c0_64, %c0_65] : memref<1x128x32xf32, #tpu.memory_space<vmem>>, vector<1x128x32xf32>
      %144 = vector.shape_cast %143 : vector<1x128x32xf32> to vector<128x32xf32>
      %145 = vector.shape_cast %132 : vector<128x32xf32> to vector<1x128x32xf32>
      tpu.vector_store %arg17[%c0_63, %c0_64, %c0_65], %145 {strides = array<i32>} : memref<1x128x32xf32, #tpu.memory_space<vmem>>, vector<1x128x32xf32>,
    } else {
    }
    return
  }
  func.func @transform_0(%arg0: i32, %arg1: i32) -> (i32, i32, i32) {
    %c0_i32 = arith.constant 0 : i32
    %c0_i32_0 = arith.constant 0 : i32
    %c0_i32_1 = arith.constant 0 : i32
    return %arg1, %c0_i32, %c0_i32_0 : i32, i32, i32
  }
  func.func @transform_1(%arg0: i32, %arg1: i32) -> (i32, i32, i32) {
    %c0_i32 = arith.constant 0 : i32
    %c0_i32_0 = arith.constant 0 : i32
    %c0_i32_1 = arith.constant 0 : i32
    return %arg0, %c0_i32, %c0_i32_0 : i32, i32, i32
  }
  func.func @transform_2(%arg0: i32, %arg1: i32) -> (i32, i32, i32) {
    %c0_i32 = arith.constant 0 : i32
    %c0_i32_0 = arith.constant 0 : i32
    %c0_i32_1 = arith.constant 0 : i32
    return %arg0, %c0_i32, %c0_i32_0 : i32, i32, i32
  }
  func.func @transform_3(%arg0: i32, %arg1: i32) -> (i32, i32, i32) {
    %c0_i32 = arith.constant 0 : i32
    %c0_i32_0 = arith.constant 0 : i32
    %c0_i32_1 = arith.constant 0 : i32
    return %arg0, %c0_i32, %c0_i32_0 : i32, i32, i32
  }
  func.func @transform_4(%arg0: i32, %arg1: i32) -> (i32, i32, i32) {
    %c0_i32 = arith.constant 0 : i32
    %c0_i32_0 = arith.constant 0 : i32
    %c0_i32_1 = arith.constant 0 : i32
    return %arg0, %c0_i32, %c0_i32_0 : i32, i32, i32
  }
  func.func @transform_5(%arg0: i32, %arg1: i32) -> (i32, i32, i32) {
    %c0_i32 = arith.constant 0 : i32
    %c0_i32_0 = arith.constant 0 : i32
    %c0_i32_1 = arith.constant 0 : i32
    return %arg0, %c0_i32, %c0_i32_0 : i32, i32, i32
  }
  func.func @transform_6(%arg0: i32, %arg1: i32) -> (i32, i32, i32) {
    %c0_i32 = arith.constant 0 : i32
    %c0_i32_0 = arith.constant 0 : i32
    %c0_i32_1 = arith.constant 0 : i32
    return %arg0, %c0_i32, %c0_i32_0 : i32, i32, i32
  }
  func.func @transform_7(%arg0: i32, %arg1: i32) -> (i32, i32, i32) {
    %c0_i32 = arith.constant 0 : i32
    %c0_i32_0 = arith.constant 0 : i32
    %c0_i32_1 = arith.constant 0 : i32
    return %arg0, %c0_i32, %c0_i32_0 : i32, i32, i32
  }
  func.func @transform_8(%arg0: i32, %arg1: i32) -> (i32, i32, i32) {
    %c0_i32 = arith.constant 0 : i32
    %c0_i32_0 = arith.constant 0 : i32
    %c0_i32_1 = arith.constant 0 : i32
    return %arg0, %c0_i32, %c0_i32_0 : i32, i32, i32
  }
  func.func @transform_9(%arg0: i32, %arg1: i32) -> (i32, i32, i32) {
    %c0_i32 = arith.constant 0 : i32
    %c0_i32_0 = arith.constant 0 : i32
    %c0_i32_1 = arith.constant 0 : i32
    return %arg0, %c0_i32, %c0_i32_0 : i32, i32, i32
  }
  func.func @transform_10(%arg0: i32, %arg1: i32) -> (i32, i32, i32) {
    %c0_i32 = arith.constant 0 : i32
    %c0_i32_0 = arith.constant 0 : i32
    %c0_i32_1 = arith.constant 0 : i32
    return %arg0, %c0_i32, %c0_i32_0 : i32, i32, i32
  }
  func.func @transform_11(%arg0: i32, %arg1: i32) -> (i32, i32, i32) {
    %c0_i32 = arith.constant 0 : i32
    %c0_i32_0 = arith.constant 0 : i32
    %c0_i32_1 = arith.constant 0 : i32
    return %arg0, %c0_i32, %c0_i32_0 : i32, i32, i32
  }
  func.func @transform_12(%arg0: i32, %arg1: i32) -> (i32, i32, i32) {
    %c0_i32 = arith.constant 0 : i32
    %c0_i32_0 = arith.constant 0 : i32
    %c0_i32_1 = arith.constant 0 : i32
    return %arg0, %c0_i32, %c0_i32_0 : i32, i32, i32
  }
  func.func @transform_13(%arg0: i32, %arg1: i32) -> (i32, i32) {
    %c0_i32 = arith.constant 0 : i32
    %c0_i32_0 = arith.constant 0 : i32
    %c0_i32_1 = arith.constant 0 : i32
    return %c0_i32, %c0_i32_0 : i32, i32
  }
  func.func @transform_14(%arg0: i32, %arg1: i32) -> (i32, i32) {
    %c0_i32 = arith.constant 0 : i32
    %c0_i32_0 = arith.constant 0 : i32
    %c0_i32_1 = arith.constant 0 : i32
    return %c0_i32, %c0_i32_0 : i32, i32
  }
  func.func @transform_15(%arg0: i32, %arg1: i32) -> (i32, i32, i32) {
    %c0_i32 = arith.constant 0 : i32
    %c0_i32_0 = arith.constant 0 : i32
    %c0_i32_1 = arith.constant 0 : i32
    return %arg1, %c0_i32, %c0_i32_0 : i32, i32, i32
  }
}

</mosaic_0001>

<llo_original>
// kernel: tpu_custom_call.1
$region0: #{tpu_custom_call.1}
  #allocation0 [shape = 'u32[]', space=smem, size = 0x4, offset = 0x4, fixed_abs, tag = 'smem constant byte address 0x4 - core index']
  #allocation1 [shape = 'u32[144,128]{1,0:T(1,128)}', space=vmem, size = 0x12000, scoped, tag = 'internal scratch']
  #allocation2 [shape = 'f32[2,128,32]{2,1,0:T(8,128)}', space=vmem, size = 0x20000, scoped, tag = 'scratch operand']
  %s0 = inlined_call_operand.vmem [shape: bf16[2,128,32], index: 0, kind: input, shape index: {}]
  %s1 = inlined_call_operand.vmem [shape: f32[2,1,32], index: 1, kind: input, shape index: {}]
  %s2 = inlined_call_operand.vmem [shape: f32[2,1,32], index: 2, kind: input, shape index: {}]
  %s3 = inlined_call_operand.vmem [shape: bf16[2,32,96], index: 3, kind: input, shape index: {}]
  %s4 = inlined_call_operand.vmem [shape: f32[2,1,96], index: 4, kind: input, shape index: {}]
  %s5 = inlined_call_operand.vmem [shape: bf16[2,32,32], index: 5, kind: input, shape index: {}]
  %s6 = inlined_call_operand.vmem [shape: f32[2,1,32], index: 6, kind: input, shape index: {}]
  %s7 = inlined_call_operand.vmem [shape: f32[2,1,32], index: 7, kind: input, shape index: {}]
  %s8 = inlined_call_operand.vmem [shape: f32[2,1,32], index: 8, kind: input, shape index: {}]
  %s9 = inlined_call_operand.vmem [shape: bf16[2,32,128], index: 9, kind: input, shape index: {}]
  %s10 = inlined_call_operand.vmem [shape: f32[2,1,128], index: 10, kind: input, shape index: {}]
  %s11 = inlined_call_operand.vmem [shape: bf16[2,128,32], index: 11, kind: input, shape index: {}]
  %s12 = inlined_call_operand.vmem [shape: f32[2,1,32], index: 12, kind: input, shape index: {}]
  %s13 = inlined_call_operand.vmem [shape: f32[1,32], index: 13, kind: input, shape index: {}]
  %s14 = inlined_call_operand.vmem [shape: f32[1,32], index: 14, kind: input, shape index: {}]
  %s15 = inlined_call_operand.vmem [shape: f32[2,128,32], index: 15, kind: output, shape index: {}]
  %s16 = sld [smem:[#allocation0]]
  $region105: #{tpu_custom_call.1} parent=0
    _
  %s18 = ssub.s32 1, %s16
  %s19 = scalar_select 0, %s18, %s16
  loop: start=0, step=1, limit=6
  $region2: #{tpu_custom_call.1} parent=0 // loop_pre_header
    _
  $region3: #{tpu_custom_call.1} parent=0 // loop_header
    %s21 = sphi 0, %s25
    %p22 = scmp.ge.s32.totalorder %s21, 6
    %s28 = sphi 0, %s40
    %s29 = sphi 0, %s36
    %s30 = sphi 0, %s28
    %s31 = sphi 0, %s29
    %s32 = sphi 0, %s30
    %s33 = sphi 0, %s31
    %s43 = sphi 0, %s45
    %s46 = sphi 0, %s43
    %s47 = sphi 0, %s46
    %s63 = sphi 0, %s47
    %s69 = sphi 0, %s71
    %s72 = sphi 0, %s69
    %s73 = sphi 0, %s72
    %s89 = sphi 0, %s73
    %s95 = sphi 0, %s97
    %s98 = sphi 0, %s95
    %s99 = sphi 0, %s98
    %s115 = sphi 0, %s99
    %s121 = sphi 0, %s123
    %s124 = sphi 0, %s121
    %s125 = sphi 0, %s124
    %s141 = sphi 0, %s125
    %s147 = sphi 0, %s149
    %s150 = sphi 0, %s147
    %s151 = sphi 0, %s150
    %s167 = sphi 0, %s151
    %s173 = sphi 0, %s175
    %s176 = sphi 0, %s173
    %s177 = sphi 0, %s176
    %s193 = sphi 0, %s177
    %s199 = sphi 0, %s201
    %s202 = sphi 0, %s199
    %s203 = sphi 0, %s202
    %s219 = sphi 0, %s203
    %s225 = sphi 0, %s227
    %s228 = sphi 0, %s225
    %s229 = sphi 0, %s228
    %s245 = sphi 0, %s229
    %s251 = sphi 0, %s253
    %s254 = sphi 0, %s251
    %s255 = sphi 0, %s254
    %s271 = sphi 0, %s255
    %s277 = sphi 0, %s279
    %s280 = sphi 0, %s277
    %s281 = sphi 0, %s280
    %s297 = sphi 0, %s281
    %s303 = sphi 0, %s305
    %s306 = sphi 0, %s303
    %s307 = sphi 0, %s306
    %s323 = sphi 0, %s307
    %s329 = sphi 0, %s331
    %s332 = sphi 0, %s329
    %s333 = sphi 0, %s332
    %s349 = sphi 0, %s333
    %s355 = sphi 0, %s357
    %s358 = sphi 0, %s355
    %s359 = sphi 0, %s358
    %s375 = sphi 0, %s359
    %s379 = sphi 0, %s379
    %s381 = sphi 0, %s379
    %s382 = sphi 0, %s381
    %s396 = sphi 0, %s382
    %s400 = sphi 0, %s400
    %s402 = sphi 0, %s400
    %s403 = sphi 0, %s402
    %s417 = sphi 0, %s403
    %s423 = sphi 0, %s425
    %s426 = sphi 0, %s423
    %s427 = sphi 0, %s426
    %s443 = sphi 0, %s427
  $region4: #{tpu_custom_call.1} parent=0 // loop_header_branch
    %24 = sbr.rel (%p22) target = $region8
  $region5: #{tpu_custom_call.1} parent=0 // loop_body
    %s26 = ssub.s32 %s21, 1
    %s27 = ssub.s32 %s21, 2
    %s34 = sadd.s32 1, %s29
    %p35 = scmp.ge.s32.totalorder %s34, 2
    %s36 = scalar_select %p35, 0, %s34
    %s37 = sadd.s32 1, %s28
    %s38 = scalar_select %p35, %s37, %s28
    %p39 = scmp.ge.s32.totalorder %s38, 2
    %s40 = scalar_select %p39, 0, %s38
    %s41 = ssub.s32 %s29, %s36
    %p42 = scmp.eq.s32.totalorder %s41, 0
    %s44 = sadd.s32 %s43, 1
    %s45 = scalar_select %p42, %s43, %s44
    %p48 = pneg %p42
    %p49 = scmp.eq.s32.totalorder %s21, 3
    %p50 = por %p48, %p49
    %p51 = scmp.ne.s32.totalorder %s43, %s46
    %p52 = scmp.eq.s32.totalorder %s21, 0
    %p53 = por %p51, %p52
    %p54 = scmp.ne.s32.totalorder %s43, %s46
    %p55 = scmp.eq.s32.totalorder %s26, 3
    %p56 = por %p54, %p55
    %p57 = scmp.ne.s32.totalorder %s46, %s47
    %p58 = scmp.eq.s32.totalorder %s26, 0
    %p59 = por %p57, %p58
    %p60 = scmp.ne.s32.totalorder %s46, %s47
    %p61 = scmp.eq.s32.totalorder %s27, 3
    %p62 = por %p60, %p61
    %p64 = scmp.ne.s32.totalorder %s47, %s63
    %p65 = scmp.eq.s32.totalorder %s27, 0
    %p66 = por %p64, %p65
    %s67 = ssub.s32 %s28, %s40
    %p68 = scmp.eq.s32.totalorder %s67, 0
    %s70 = sadd.s32 %s69, 1
    %s71 = scalar_select %p68, %s69, %s70
    %p74 = pneg %p68
    %p75 = scmp.eq.s32.totalorder %s21, 3
    %p76 = por %p74, %p75
    %p77 = scmp.ne.s32.totalorder %s69, %s72
    %p78 = scmp.eq.s32.totalorder %s21, 0
    %p79 = por %p77, %p78
    %p80 = scmp.ne.s32.totalorder %s69, %s72
    %p81 = scmp.eq.s32.totalorder %s26, 3
    %p82 = por %p80, %p81
    %p83 = scmp.ne.s32.totalorder %s72, %s73
    %p84 = scmp.eq.s32.totalorder %s26, 0
    %p85 = por %p83, %p84
    %p86 = scmp.ne.s32.totalorder %s72, %s73
    %p87 = scmp.eq.s32.totalorder %s27, 3
    %p88 = por %p86, %p87
    %p90 = scmp.ne.s32.totalorder %s73, %s89
    %p91 = scmp.eq.s32.totalorder %s27, 0
    %p92 = por %p90, %p91
    %s93 = ssub.s32 %s28, %s40
    %p94 = scmp.eq.s32.totalorder %s93, 0
    %s96 = sadd.s32 %s95, 1
    %s97 = scalar_select %p94, %s95, %s96
    %p100 = pneg %p94
    %p101 = scmp.eq.s32.totalorder %s21, 3
    %p102 = por %p100, %p101
    %p103 = scmp.ne.s32.totalorder %s95, %s98
    %p104 = scmp.eq.s32.totalorder %s21, 0
    %p105 = por %p103, %p104
    %p106 = scmp.ne.s32.totalorder %s95, %s98
    %p107 = scmp.eq.s32.totalorder %s26, 3
    %p108 = por %p106, %p107
    %p109 = scmp.ne.s32.totalorder %s98, %s99
    %p110 = scmp.eq.s32.totalorder %s26, 0
    %p111 = por %p109, %p110
    %p112 = scmp.ne.s32.totalorder %s98, %s99
    %p113 = scmp.eq.s32.totalorder %s27, 3
    %p114 = por %p112, %p113
    %p116 = scmp.ne.s32.totalorder %s99, %s115
    %p117 = scmp.eq.s32.totalorder %s27, 0
    %p118 = por %p116, %p117
    %s119 = ssub.s32 %s28, %s40
    %p120 = scmp.eq.s32.totalorder %s119, 0
    %s122 = sadd.s32 %s121, 1
    %s123 = scalar_select %p120, %s121, %s122
    %p126 = pneg %p120
    %p127 = scmp.eq.s32.totalorder %s21, 3
    %p128 = por %p126, %p127
    %p129 = scmp.ne.s32.totalorder %s121, %s124
    %p130 = scmp.eq.s32.totalorder %s21, 0
    %p131 = por %p129, %p130
    %p132 = scmp.ne.s32.totalorder %s121, %s124
    %p133 = scmp.eq.s32.totalorder %s26, 3
    %p134 = por %p132, %p133
    %p135 = scmp.ne.s32.totalorder %s124, %s125
    %p136 = scmp.eq.s32.totalorder %s26, 0
    %p137 = por %p135, %p136
    %p138 = scmp.ne.s32.totalorder %s124, %s125
    %p139 = scmp.eq.s32.totalorder %s27, 3
    %p140 = por %p138, %p139
    %p142 = scmp.ne.s32.totalorder %s125, %s141
    %p143 = scmp.eq.s32.totalorder %s27, 0
    %p144 = por %p142, %p143
    %s145 = ssub.s32 %s28, %s40
    %p146 = scmp.eq.s32.totalorder %s145, 0
    %s148 = sadd.s32 %s147, 1
    %s149 = scalar_select %p146, %s147, %s148
    %p152 = pneg %p146
    %p153 = scmp.eq.s32.totalorder %s21, 3
    %p154 = por %p152, %p153
    %p155 = scmp.ne.s32.totalorder %s147, %s150
    %p156 = scmp.eq.s32.totalorder %s21, 0
    %p157 = por %p155, %p156
    %p158 = scmp.ne.s32.totalorder %s147, %s150
    %p159 = scmp.eq.s32.totalorder %s26, 3
    %p160 = por %p158, %p159
    %p161 = scmp.ne.s32.totalorder %s150, %s151
    %p162 = scmp.eq.s32.totalorder %s26, 0
    %p163 = por %p161, %p162
    %p164 = scmp.ne.s32.totalorder %s150, %s151
    %p165 = scmp.eq.s32.totalorder %s27, 3
    %p166 = por %p164, %p165
    %p168 = scmp.ne.s32.totalorder %s151, %s167
    %p169 = scmp.eq.s32.totalorder %s27, 0
    %p170 = por %p168, %p169
    %s171 = ssub.s32 %s28, %s40
    %p172 = scmp.eq.s32.totalorder %s171, 0
    %s174 = sadd.s32 %s173, 1
    %s175 = scalar_select %p172, %s173, %s174
    %p178 = pneg %p172
    %p179 = scmp.eq.s32.totalorder %s21, 3
    %p180 = por %p178, %p179
    %p181 = scmp.ne.s32.totalorder %s173, %s176
    %p182 = scmp.eq.s32.totalorder %s21, 0
    %p183 = por %p181, %p182
    %p184 = scmp.ne.s32.totalorder %s173, %s176
    %p185 = scmp.eq.s32.totalorder %s26, 3
    %p186 = por %p184, %p185
    %p187 = scmp.ne.s32.totalorder %s176, %s177
    %p188 = scmp.eq.s32.totalorder %s26, 0
    %p189 = por %p187, %p188
    %p190 = scmp.ne.s32.totalorder %s176, %s177
    %p191 = scmp.eq.s32.totalorder %s27, 3
    %p192 = por %p190, %p191
    %p194 = scmp.ne.s32.totalorder %s177, %s193
    %p195 = scmp.eq.s32.totalorder %s27, 0
    %p196 = por %p194, %p195
    %s197 = ssub.s32 %s28, %s40
    %p198 = scmp.eq.s32.totalorder %s197, 0
    %s200 = sadd.s32 %s199, 1
    %s201 = scalar_select %p198, %s199, %s200
    %p204 = pneg %p198
    %p205 = scmp.eq.s32.totalorder %s21, 3
    %p206 = por %p204, %p205
    %p207 = scmp.ne.s32.totalorder %s199, %s202
    %p208 = scmp.eq.s32.totalorder %s21, 0
    %p209 = por %p207, %p208
    %p210 = scmp.ne.s32.totalorder %s199, %s202
    %p211 = scmp.eq.s32.totalorder %s26, 3
    %p212 = por %p210, %p211
    %p213 = scmp.ne.s32.totalorder %s202, %s203
    %p214 = scmp.eq.s32.totalorder %s26, 0
    %p215 = por %p213, %p214
    %p216 = scmp.ne.s32.totalorder %s202, %s203
    %p217 = scmp.eq.s32.totalorder %s27, 3
    %p218 = por %p216, %p217
    %p220 = scmp.ne.s32.totalorder %s203, %s219
    %p221 = scmp.eq.s32.totalorder %s27, 0
    %p222 = por %p220, %p221
    %s223 = ssub.s32 %s28, %s40
    %p224 = scmp.eq.s32.totalorder %s223, 0
    %s226 = sadd.s32 %s225, 1
    %s227 = scalar_select %p224, %s225, %s226
    %p230 = pneg %p224
    %p231 = scmp.eq.s32.totalorder %s21, 3
    %p232 = por %p230, %p231
    %p233 = scmp.ne.s32.totalorder %s225, %s228
    %p234 = scmp.eq.s32.totalorder %s21, 0
    %p235 = por %p233, %p234
    %p236 = scmp.ne.s32.totalorder %s225, %s228
    %p237 = scmp.eq.s32.totalorder %s26, 3
    %p238 = por %p236, %p237
    %p239 = scmp.ne.s32.totalorder %s228, %s229
    %p240 = scmp.eq.s32.totalorder %s26, 0
    %p241 = por %p239, %p240
    %p242 = scmp.ne.s32.totalorder %s228, %s229
    %p243 = scmp.eq.s32.totalorder %s27, 3
    %p244 = por %p242, %p243
    %p246 = scmp.ne.s32.totalorder %s229, %s245
    %p247 = scmp.eq.s32.totalorder %s27, 0
    %p248 = por %p246, %p247
    %s249 = ssub.s32 %s28, %s40
    %p250 = scmp.eq.s32.totalorder %s249, 0
    %s252 = sadd.s32 %s251, 1
    %s253 = scalar_select %p250, %s251, %s252
    %p256 = pneg %p250
    %p257 = scmp.eq.s32.totalorder %s21, 3
    %p258 = por %p256, %p257
    %p259 = scmp.ne.s32.totalorder %s251, %s254
    %p260 = scmp.eq.s32.totalorder %s21, 0
    %p261 = por %p259, %p260
    %p262 = scmp.ne.s32.totalorder %s251, %s254
    %p263 = scmp.eq.s32.totalorder %s26, 3
    %p264 = por %p262, %p263
    %p265 = scmp.ne.s32.totalorder %s254, %s255
    %p266 = scmp.eq.s32.totalorder %s26, 0
    %p267 = por %p265, %p266
    %p268 = scmp.ne.s32.totalorder %s254, %s255
    %p269 = scmp.eq.s32.totalorder %s27, 3
    %p270 = por %p268, %p269
    %p272 = scmp.ne.s32.totalorder %s255, %s271
    %p273 = scmp.eq.s32.totalorder %s27, 0
    %p274 = por %p272, %p273
    %s275 = ssub.s32 %s28, %s40
    %p276 = scmp.eq.s32.totalorder %s275, 0
    %s278 = sadd.s32 %s277, 1
    %s279 = scalar_select %p276, %s277, %s278
    %p282 = pneg %p276
    %p283 = scmp.eq.s32.totalorder %s21, 3
    %p284 = por %p282, %p283
    %p285 = scmp.ne.s32.totalorder %s277, %s280
    %p286 = scmp.eq.s32.totalorder %s21, 0
    %p287 = por %p285, %p286
    %p288 = scmp.ne.s32.totalorder %s277, %s280
    %p289 = scmp.eq.s32.totalorder %s26, 3
    %p290 = por %p288, %p289
    %p291 = scmp.ne.s32.totalorder %s280, %s281
    %p292 = scmp.eq.s32.totalorder %s26, 0
    %p293 = por %p291, %p292
    %p294 = scmp.ne.s32.totalorder %s280, %s281
    %p295 = scmp.eq.s32.totalorder %s27, 3
    %p296 = por %p294, %p295
    %p298 = scmp.ne.s32.totalorder %s281, %s297
    %p299 = scmp.eq.s32.totalorder %s27, 0
    %p300 = por %p298, %p299
    %s301 = ssub.s32 %s28, %s40
    %p302 = scmp.eq.s32.totalorder %s301, 0
    %s304 = sadd.s32 %s303, 1
    %s305 = scalar_select %p302, %s303, %s304
    %p308 = pneg %p302
    %p309 = scmp.eq.s32.totalorder %s21, 3
    %p310 = por %p308, %p309
    %p311 = scmp.ne.s32.totalorder %s303, %s306
    %p312 = scmp.eq.s32.totalorder %s21, 0
    %p313 = por %p311, %p312
    %p314 = scmp.ne.s32.totalorder %s303, %s306
    %p315 = scmp.eq.s32.totalorder %s26, 3
    %p316 = por %p314, %p315
    %p317 = scmp.ne.s32.totalorder %s306, %s307
    %p318 = scmp.eq.s32.totalorder %s26, 0
    %p319 = por %p317, %p318
    %p320 = scmp.ne.s32.totalorder %s306, %s307
    %p321 = scmp.eq.s32.totalorder %s27, 3
    %p322 = por %p320, %p321
    %p324 = scmp.ne.s32.totalorder %s307, %s323
    %p325 = scmp.eq.s32.totalorder %s27, 0
    %p326 = por %p324, %p325
    %s327 = ssub.s32 %s28, %s40
    %p328 = scmp.eq.s32.totalorder %s327, 0
    %s330 = sadd.s32 %s329, 1
    %s331 = scalar_select %p328, %s329, %s330
    %p334 = pneg %p328
    %p335 = scmp.eq.s32.totalorder %s21, 3
    %p336 = por %p334, %p335
    %p337 = scmp.ne.s32.totalorder %s329, %s332
    %p338 = scmp.eq.s32.totalorder %s21, 0
    %p339 = por %p337, %p338
    %p340 = scmp.ne.s32.totalorder %s329, %s332
    %p341 = scmp.eq.s32.totalorder %s26, 3
    %p342 = por %p340, %p341
    %p343 = scmp.ne.s32.totalorder %s332, %s333
    %p344 = scmp.eq.s32.totalorder %s26, 0
    %p345 = por %p343, %p344
    %p346 = scmp.ne.s32.totalorder %s332, %s333
    %p347 = scmp.eq.s32.totalorder %s27, 3
    %p348 = por %p346, %p347
    %p350 = scmp.ne.s32.totalorder %s333, %s349
    %p351 = scmp.eq.s32.totalorder %s27, 0
    %p352 = por %p350, %p351
    %s353 = ssub.s32 %s28, %s40
    %p354 = scmp.eq.s32.totalorder %s353, 0
    %s356 = sadd.s32 %s355, 1
    %s357 = scalar_select %p354, %s355, %s356
    %p360 = pneg %p354
    %p361 = scmp.eq.s32.totalorder %s21, 3
    %p362 = por %p360, %p361
    %p363 = scmp.ne.s32.totalorder %s355, %s358
    %p364 = scmp.eq.s32.totalorder %s21, 0
    %p365 = por %p363, %p364
    %p366 = scmp.ne.s32.totalorder %s355, %s358
    %p367 = scmp.eq.s32.totalorder %s26, 3
    %p368 = por %p366, %p367
    %p369 = scmp.ne.s32.totalorder %s358, %s359
    %p370 = scmp.eq.s32.totalorder %s26, 0
    %p371 = por %p369, %p370
    %p372 = scmp.ne.s32.totalorder %s358, %s359
    %p373 = scmp.eq.s32.totalorder %s27, 3
    %p374 = por %p372, %p373
    %p376 = scmp.ne.s32.totalorder %s359, %s375
    %p377 = scmp.eq.s32.totalorder %s27, 0
    %p378 = por %p376, %p377
    %s380 = sadd.s32 %s379, 1
    %p383 = scmp.eq.s32.totalorder %s21, 3
    %p384 = scmp.ne.s32.totalorder %s379, %s381
    %p385 = scmp.eq.s32.totalorder %s21, 0
    %p386 = por %p384, %p385
    %p387 = scmp.ne.s32.totalorder %s379, %s381
    %p388 = scmp.eq.s32.totalorder %s26, 3
    %p389 = por %p387, %p388
    %p390 = scmp.ne.s32.totalorder %s381, %s382
    %p391 = scmp.eq.s32.totalorder %s26, 0
    %p392 = por %p390, %p391
    %p393 = scmp.ne.s32.totalorder %s381, %s382
    %p394 = scmp.eq.s32.totalorder %s27, 3
    %p395 = por %p393, %p394
    %p397 = scmp.ne.s32.totalorder %s382, %s396
    %p398 = scmp.eq.s32.totalorder %s27, 0
    %p399 = por %p397, %p398
    %s401 = sadd.s32 %s400, 1
    %p404 = scmp.eq.s32.totalorder %s21, 3
    %p405 = scmp.ne.s32.totalorder %s400, %s402
    %p406 = scmp.eq.s32.totalorder %s21, 0
    %p407 = por %p405, %p406
    %p408 = scmp.ne.s32.totalorder %s400, %s402
    %p409 = scmp.eq.s32.totalorder %s26, 3
    %p410 = por %p408, %p409
    %p411 = scmp.ne.s32.totalorder %s402, %s403
    %p412 = scmp.eq.s32.totalorder %s26, 0
    %p413 = por %p411, %p412
    %p414 = scmp.ne.s32.totalorder %s402, %s403
    %p415 = scmp.eq.s32.totalorder %s27, 3
    %p416 = por %p414, %p415
    %p418 = scmp.ne.s32.totalorder %s403, %s417
    %p419 = scmp.eq.s32.totalorder %s27, 0
    %p420 = por %p418, %p419
    %s421 = ssub.s32 %s29, %s36
    %p422 = scmp.eq.s32.totalorder %s421, 0
    %s424 = sadd.s32 %s423, 1
    %s425 = scalar_select %p422, %s423, %s424
    %p428 = pneg %p422
    %p429 = scmp.eq.s32.totalorder %s21, 3
    %p430 = por %p428, %p429
    %p431 = scmp.ne.s32.totalorder %s423, %s426
    %p432 = scmp.eq.s32.totalorder %s21, 0
    %p433 = por %p431, %p432
    %p434 = scmp.ne.s32.totalorder %s423, %s426
    %p435 = scmp.eq.s32.totalorder %s26, 3
    %p436 = por %p434, %p435
    %p437 = scmp.ne.s32.totalorder %s426, %s427
    %p438 = scmp.eq.s32.totalorder %s26, 0
    %p439 = por %p437, %p438
    %p440 = scmp.ne.s32.totalorder %s426, %s427
    %p441 = scmp.eq.s32.totalorder %s27, 3
    %p442 = por %p440, %p441
    %p444 = scmp.ne.s32.totalorder %s427, %s443
    %p445 = scmp.eq.s32.totalorder %s27, 0
    %p446 = por %p444, %p445
    %p447 = scmp.le.s32.totalorder 1, %s21
    %p448 = scmp.lt.s32.totalorder %s21, 5
    %p449 = pnand %p447, %p448
    %p450 = pneg %p449
    // Predicated region
    $region9: #{tpu_custom_call.1} parent=5 // pred_check
      _
    $region10: #{tpu_custom_call.1} parent=5 // pred_check_branch
      %452 = sbr.rel (%p449) target = $region12
    $region11: #{tpu_custom_call.1} parent=5 // pred_region
      %s453 = ssub.s32 %s21, 1
      // Predicated region
      $region13: #{tpu_custom_call.1} parent=11 // pred_check
        %p454 = pneg %p392
      $region14: #{tpu_custom_call.1} parent=11 // pred_check_branch
        %456 = sbr.rel (%p454) target = $region16
      $region15: #{tpu_custom_call.1} parent=11 // pred_region
        _
      $region16: #{tpu_custom_call.1} parent=11 // pred_fallthru
        _
      // Predicated region
      $region17: #{tpu_custom_call.1} parent=11 // pred_check
        %p457 = pneg %p413
      $region18: #{tpu_custom_call.1} parent=11 // pred_check_branch
        %459 = sbr.rel (%p457) target = $region20
      $region19: #{tpu_custom_call.1} parent=11 // pred_region
        _
      $region20: #{tpu_custom_call.1} parent=11 // pred_fallthru
        _
    $region12: #{tpu_custom_call.1} parent=5 // pred_fallthru
      _
    %p460 = scmp.lt.s32.totalorder %s21, 4
    // Predicated region
    $region21: #{tpu_custom_call.1} parent=5 // pred_check
      %p461 = pneg %p460
    $region22: #{tpu_custom_call.1} parent=5 // pred_check_branch
      %463 = sbr.rel (%p461) target = $region24
    $region23: #{tpu_custom_call.1} parent=5 // pred_region
      // Predicated region
      $region25: #{tpu_custom_call.1} parent=23 // pred_check
        %p464 = pneg %p53
      $region26: #{tpu_custom_call.1} parent=23 // pred_check_branch
        %466 = sbr.rel (%p464) target = $region28
      $region27: #{tpu_custom_call.1} parent=23 // pred_region
        %p467 = scmp.lt.s32.totalorder %s29, 1
        %s468 = scalar_select %p467, %s29, 1
        %s469 = smul.addr %s468, 16
        %s470 = smul.addr %s469, 4
        %s471 = scalar_lea.vmem %s0, %s470
      $region28: #{tpu_custom_call.1} parent=23 // pred_fallthru
        _
      // Predicated region
      $region29: #{tpu_custom_call.1} parent=23 // pred_check
        %p472 = pneg %p79
      $region30: #{tpu_custom_call.1} parent=23 // pred_check_branch
        %474 = sbr.rel (%p472) target = $region32
      $region31: #{tpu_custom_call.1} parent=23 // pred_region
        %p475 = scmp.lt.s32.totalorder %s28, 1
        %s476 = scalar_select %p475, %s28, 1
        %s477 = scalar_lea.vmem %s1, %s476
      $region32: #{tpu_custom_call.1} parent=23 // pred_fallthru
        _
      // Predicated region
      $region33: #{tpu_custom_call.1} parent=23 // pred_check
        %p478 = pneg %p105
      $region34: #{tpu_custom_call.1} parent=23 // pred_check_branch
        %480 = sbr.rel (%p478) target = $region36
      $region35: #{tpu_custom_call.1} parent=23 // pred_region
        %p481 = scmp.lt.s32.totalorder %s28, 1
        %s482 = scalar_select %p481, %s28, 1
        %s483 = scalar_lea.vmem %s2, %s482
      $region36: #{tpu_custom_call.1} parent=23 // pred_fallthru
        _
      // Predicated region
      $region37: #{tpu_custom_call.1} parent=23 // pred_check
        %p484 = pneg %p131
      $region38: #{tpu_custom_call.1} parent=23 // pred_check_branch
        %486 = sbr.rel (%p484) target = $region40
      $region39: #{tpu_custom_call.1} parent=23 // pred_region
        %p487 = scmp.lt.s32.totalorder %s28, 1
        %s488 = scalar_select %p487, %s28, 1
        %s489 = smul.addr %s488, 4
        %s490 = smul.addr %s489, 4
        %s491 = scalar_lea.vmem %s3, %s490
      $region40: #{tpu_custom_call.1} parent=23 // pred_fallthru
        _
      // Predicated region
      $region41: #{tpu_custom_call.1} parent=23 // pred_check
        %p492 = pneg %p157
      $region42: #{tpu_custom_call.1} parent=23 // pred_check_branch
        %494 = sbr.rel (%p492) target = $region44
      $region43: #{tpu_custom_call.1} parent=23 // pred_region
        %p495 = scmp.lt.s32.totalorder %s28, 1
        %s496 = scalar_select %p495, %s28, 1
        %s497 = scalar_lea.vmem %s4, %s496
      $region44: #{tpu_custom_call.1} parent=23 // pred_fallthru
        _
      // Predicated region
      $region45: #{tpu_custom_call.1} parent=23 // pred_check
        %p498 = pneg %p183
      $region46: #{tpu_custom_call.1} parent=23 // pred_check_branch
        %500 = sbr.rel (%p498) target = $region48
      $region47: #{tpu_custom_call.1} parent=23 // pred_region
        %p501 = scmp.lt.s32.totalorder %s28, 1
        %s502 = scalar_select %p501, %s28, 1
        %s503 = smul.addr %s502, 4
        %s504 = smul.addr %s503, 4
        %s505 = scalar_lea.vmem %s5, %s504
      $region48: #{tpu_custom_call.1} parent=23 // pred_fallthru
        _
      // Predicated region
      $region49: #{tpu_custom_call.1} parent=23 // pred_check
        %p506 = pneg %p209
      $region50: #{tpu_custom_call.1} parent=23 // pred_check_branch
        %508 = sbr.rel (%p506) target = $region52
      $region51: #{tpu_custom_call.1} parent=23 // pred_region
        %p509 = scmp.lt.s32.totalorder %s28, 1
        %s510 = scalar_select %p509, %s28, 1
        %s511 = scalar_lea.vmem %s6, %s510
      $region52: #{tpu_custom_call.1} parent=23 // pred_fallthru
        _
      // Predicated region
      $region53: #{tpu_custom_call.1} parent=23 // pred_check
        %p512 = pneg %p235
      $region54: #{tpu_custom_call.1} parent=23 // pred_check_branch
        %514 = sbr.rel (%p512) target = $region56
      $region55: #{tpu_custom_call.1} parent=23 // pred_region
        %p515 = scmp.lt.s32.totalorder %s28, 1
        %s516 = scalar_select %p515, %s28, 1
        %s517 = scalar_lea.vmem %s7, %s516
      $region56: #{tpu_custom_call.1} parent=23 // pred_fallthru
        _
      // Predicated region
      $region57: #{tpu_custom_call.1} parent=23 // pred_check
        %p518 = pneg %p261
      $region58: #{tpu_custom_call.1} parent=23 // pred_check_branch
        %520 = sbr.rel (%p518) target = $region60
      $region59: #{tpu_custom_call.1} parent=23 // pred_region
        %p521 = scmp.lt.s32.totalorder %s28, 1
        %s522 = scalar_select %p521, %s28, 1
        %s523 = scalar_lea.vmem %s8, %s522
      $region60: #{tpu_custom_call.1} parent=23 // pred_fallthru
        _
      // Predicated region
      $region61: #{tpu_custom_call.1} parent=23 // pred_check
        %p524 = pneg %p287
      $region62: #{tpu_custom_call.1} parent=23 // pred_check_branch
        %526 = sbr.rel (%p524) target = $region64
      $region63: #{tpu_custom_call.1} parent=23 // pred_region
        %p527 = scmp.lt.s32.totalorder %s28, 1
        %s528 = scalar_select %p527, %s28, 1
        %s529 = smul.addr %s528, 4
        %s530 = smul.addr %s529, 4
        %s531 = scalar_lea.vmem %s9, %s530
      $region64: #{tpu_custom_call.1} parent=23 // pred_fallthru
        _
      // Predicated region
      $region65: #{tpu_custom_call.1} parent=23 // pred_check
        %p532 = pneg %p313
      $region66: #{tpu_custom_call.1} parent=23 // pred_check_branch
        %534 = sbr.rel (%p532) target = $region68
      $region67: #{tpu_custom_call.1} parent=23 // pred_region
        %p535 = scmp.lt.s32.totalorder %s28, 1
        %s536 = scalar_select %p535, %s28, 1
        %s537 = scalar_lea.vmem %s10, %s536
      $region68: #{tpu_custom_call.1} parent=23 // pred_fallthru
        _
      // Predicated region
      $region69: #{tpu_custom_call.1} parent=23 // pred_check
        %p538 = pneg %p339
      $region70: #{tpu_custom_call.1} parent=23 // pred_check_branch
        %540 = sbr.rel (%p538) target = $region72
      $region71: #{tpu_custom_call.1} parent=23 // pred_region
        %p541 = scmp.lt.s32.totalorder %s28, 1
        %s542 = scalar_select %p541, %s28, 1
        %s543 = smul.addr %s542, 16
        %s544 = smul.addr %s543, 4
        %s545 = scalar_lea.vmem %s11, %s544
      $region72: #{tpu_custom_call.1} parent=23 // pred_fallthru
        _
      // Predicated region
      $region73: #{tpu_custom_call.1} parent=23 // pred_check
        %p546 = pneg %p365
      $region74: #{tpu_custom_call.1} parent=23 // pred_check_branch
        %548 = sbr.rel (%p546) target = $region76
      $region75: #{tpu_custom_call.1} parent=23 // pred_region
        %p549 = scmp.lt.s32.totalorder %s28, 1
        %s550 = scalar_select %p549, %s28, 1
        %s551 = scalar_lea.vmem %s12, %s550
      $region76: #{tpu_custom_call.1} parent=23 // pred_fallthru
        _
    $region24: #{tpu_custom_call.1} parent=5 // pred_fallthru
      _
    %p552 = scmp.le.s32.totalorder 1, %s21
    %p553 = scmp.lt.s32.totalorder %s21, 5
    %p554 = pnand %p552, %p553
    %p555 = pneg %p554
    // Predicated region
    $region77: #{tpu_custom_call.1} parent=5 // pred_check
      _
    $region78: #{tpu_custom_call.1} parent=5 // pred_check_branch
      %557 = sbr.rel (%p554) target = $region80
    $region79: #{tpu_custom_call.1} parent=5 // pred_region
      %s558 = ssub.s32 %s21, 1
      %p559 = scmp.lt.s32.totalorder %s31, 1
      %s560 = scalar_select %p559, %s31, 1
      %s561 = smul.addr %s560, 16
      %s562 = smul.addr %s561, 4
      %s563 = scalar_lea.vmem %s0, %s562
      %p564 = pneg %p59
      %p565 = pneg %p56
      %p566 = scmp.lt.s32.totalorder %s30, 1
      %s567 = scalar_select %p566, %s30, 1
      %s568 = scalar_lea.vmem %s1, %s567
      %p569 = pneg %p85
      %p570 = pneg %p82
      %p571 = scmp.lt.s32.totalorder %s30, 1
      %s572 = scalar_select %p571, %s30, 1
      %s573 = scalar_lea.vmem %s2, %s572
      %p574 = pneg %p111
      %p575 = pneg %p108
      %p576 = scmp.lt.s32.totalorder %s30, 1
      %s577 = scalar_select %p576, %s30, 1
      %s578 = smul.addr %s577, 4
      %s579 = smul.addr %s578, 4
      %s580 = scalar_lea.vmem %s3, %s579
      %p581 = pneg %p137
      %p582 = pneg %p134
      %p583 = scmp.lt.s32.totalorder %s30, 1
      %s584 = scalar_select %p583, %s30, 1
      %s585 = scalar_lea.vmem %s4, %s584
      %p586 = pneg %p163
      %p587 = pneg %p160
      %p588 = scmp.lt.s32.totalorder %s30, 1
      %s589 = scalar_select %p588, %s30, 1
      %s590 = smul.addr %s589, 4
      %s591 = smul.addr %s590, 4
      %s592 = scalar_lea.vmem %s5, %s591
      %p593 = pneg %p189
      %p594 = pneg %p186
      %p595 = scmp.lt.s32.totalorder %s30, 1
      %s596 = scalar_select %p595, %s30, 1
      %s597 = scalar_lea.vmem %s6, %s596
      %p598 = pneg %p215
      %p599 = pneg %p212
      %p600 = scmp.lt.s32.totalorder %s30, 1
      %s601 = scalar_select %p600, %s30, 1
      %s602 = scalar_lea.vmem %s7, %s601
      %p603 = pneg %p241
      %p604 = pneg %p238
      %p605 = scmp.lt.s32.totalorder %s30, 1
      %s606 = scalar_select %p605, %s30, 1
      %s607 = scalar_lea.vmem %s8, %s606
      %p608 = pneg %p267
      %p609 = pneg %p264
      %p610 = scmp.lt.s32.totalorder %s30, 1
      %s611 = scalar_select %p610, %s30, 1
      %s612 = smul.addr %s611, 4
      %s613 = smul.addr %s612, 4
      %s614 = scalar_lea.vmem %s9, %s613
      %p615 = pneg %p293
      %p616 = pneg %p290
      %p617 = scmp.lt.s32.totalorder %s30, 1
      %s618 = scalar_select %p617, %s30, 1
      %s619 = scalar_lea.vmem %s10, %s618
      %p620 = pneg %p319
      %p621 = pneg %p316
      %p622 = scmp.lt.s32.totalorder %s30, 1
      %s623 = scalar_select %p622, %s30, 1
      %s624 = smul.addr %s623, 16
      %s625 = smul.addr %s624, 4
      %s626 = scalar_lea.vmem %s11, %s625
      %p627 = pneg %p345
      %p628 = pneg %p342
      %p629 = scmp.lt.s32.totalorder %s30, 1
      %s630 = scalar_select %p629, %s30, 1
      %s631 = scalar_lea.vmem %s12, %s630
      %p632 = pneg %p371
      %p633 = pneg %p368
      %p634 = pneg %p392
      %p635 = pneg %p389
      %p636 = pneg %p413
      %p637 = pneg %p410
      %p638 = pneg %p439
      %p639 = pneg %p436
      %p640 = scmp.lt.s32.totalorder %s31, 1
      %s641 = scalar_select %p640, %s31, 1
      %s642 = smul.addr %s641, 16
      %s643 = smul.addr %s642, 8
      %s644 = scalar_lea.vmem %s15, %s643
      %p645 = scmp.lt.s32.totalorder %s31, 1
      %s646 = scalar_select %p645, %s31, 1
      %s647 = smul.addr %s646, 16
      %s648 = smul.addr %s647, 4
      %s649 = scalar_lea.vmem %s0, %s648
      %p650 = scmp.lt.s32.totalorder %s30, 1
      %s651 = scalar_select %p650, %s30, 1
      %s652 = scalar_lea.vmem %s1, %s651
      %p653 = scmp.lt.s32.totalorder %s30, 1
      %s654 = scalar_select %p653, %s30, 1
      %s655 = scalar_lea.vmem %s2, %s654
      %p656 = scmp.lt.s32.totalorder %s30, 1
      %s657 = scalar_select %p656, %s30, 1
      %s658 = smul.addr %s657, 4
      %s659 = smul.addr %s658, 4
      %s660 = scalar_lea.vmem %s3, %s659
      %p661 = scmp.lt.s32.totalorder %s30, 1
      %s662 = scalar_select %p661, %s30, 1
      %s663 = scalar_lea.vmem %s4, %s662
      %p664 = scmp.lt.s32.totalorder %s30, 1
      %s665 = scalar_select %p664, %s30, 1
      %s666 = smul.addr %s665, 4
      %s667 = smul.addr %s666, 4
      %s668 = scalar_lea.vmem %s5, %s667
      %p669 = scmp.lt.s32.totalorder %s30, 1
      %s670 = scalar_select %p669, %s30, 1
      %s671 = scalar_lea.vmem %s6, %s670
      %p672 = scmp.lt.s32.totalorder %s30, 1
      %s673 = scalar_select %p672, %s30, 1
      %s674 = scalar_lea.vmem %s7, %s673
      %p675 = scmp.lt.s32.totalorder %s30, 1
      %s676 = scalar_select %p675, %s30, 1
      %s677 = scalar_lea.vmem %s8, %s676
      %p678 = scmp.lt.s32.totalorder %s30, 1
      %s679 = scalar_select %p678, %s30, 1
      %s680 = smul.addr %s679, 4
      %s681 = smul.addr %s680, 4
      %s682 = scalar_lea.vmem %s9, %s681
      %p683 = scmp.lt.s32.totalorder %s30, 1
      %s684 = scalar_select %p683, %s30, 1
      %s685 = scalar_lea.vmem %s10, %s684
      %p686 = scmp.lt.s32.totalorder %s30, 1
      %s687 = scalar_select %p686, %s30, 1
      %s688 = smul.addr %s687, 16
      %s689 = smul.addr %s688, 4
      %s690 = scalar_lea.vmem %s11, %s689
      %p691 = scmp.lt.s32.totalorder %s30, 1
      %s692 = scalar_select %p691, %s30, 1
      %s693 = scalar_lea.vmem %s12, %s692
      %p694 = scmp.lt.s32.totalorder %s31, 1
      %s695 = scalar_select %p694, %s31, 1
      %s696 = smul.addr %s695, 16
      %s697 = smul.addr %s696, 8
      %s698 = scalar_lea.vmem %s15, %s697
      %p700 = scmp.eq.s32.totalorder %s30, 0
      // Predicated region
      $region81: #{tpu_custom_call.1} parent=79 // pred_check
        %p701 = pneg %p700
      $region82: #{tpu_custom_call.1} parent=79 // pred_check_branch
        %703 = sbr.rel (%p701) target = $region84
      $region83: #{tpu_custom_call.1} parent=79 // pred_region
        %v704 = vld [vmem:[%s649] sm:$0xf]
        %v705 = vld [vmem:[%s649 + $0x4] sm:$0xf]
        %v706 = vld [vmem:[%s649 + $0x8] sm:$0xf]
        %v707 = vld [vmem:[%s649 + $0xc] sm:$0xf]
        %v708 = vld [vmem:[%s649 + $0x10] sm:$0xf]
        %v709 = vld [vmem:[%s649 + $0x14] sm:$0xf]
        %v710 = vld [vmem:[%s649 + $0x18] sm:$0xf]
        %v711 = vld [vmem:[%s649 + $0x1c] sm:$0xf]
        %v712 = vld [vmem:[%s649 + $0x20] sm:$0xf]
        %v713 = vld [vmem:[%s649 + $0x24] sm:$0xf]
        %v714 = vld [vmem:[%s649 + $0x28] sm:$0xf]
        %v715 = vld [vmem:[%s649 + $0x2c] sm:$0xf]
        %v716 = vld [vmem:[%s649 + $0x30] sm:$0xf]
        %v717 = vld [vmem:[%s649 + $0x34] sm:$0xf]
        %v718 = vld [vmem:[%s649 + $0x38] sm:$0xf]
        %v719 = vld [vmem:[%s649 + $0x3c] sm:$0xf]
        %v720 = vunpack.c.l.bf16 %v704
        %v721 = vunpack.c.l.bf16 %v705
        %v722 = vunpack.c.l.bf16 %v706
        %v723 = vunpack.c.l.bf16 %v707
        %v724 = vunpack.c.l.bf16 %v708
        %v725 = vunpack.c.l.bf16 %v709
        %v726 = vunpack.c.l.bf16 %v710
        %v727 = vunpack.c.l.bf16 %v711
        %v728 = vunpack.c.l.bf16 %v712
        %v729 = vunpack.c.l.bf16 %v713
        %v730 = vunpack.c.l.bf16 %v714
        %v731 = vunpack.c.l.bf16 %v715
        %v732 = vunpack.c.l.bf16 %v716
        %v733 = vunpack.c.l.bf16 %v717
        %v734 = vunpack.c.l.bf16 %v718
        %v735 = vunpack.c.l.bf16 %v719
        %s736 = smul.u32 %s31, 128
        %s737 = scalar_lea.vmem [#allocation2], %s736
        %vm738 = vcmask 261120
        %739 = vst.msk [vmem:[%s737] sm:$0xff] %vm738, %v720
        %740 = vst.msk [vmem:[%s737 + $0x8] sm:$0xff] %vm738, %v721
        %741 = vst.msk [vmem:[%s737 + $0x10] sm:$0xff] %vm738, %v722
        %742 = vst.msk [vmem:[%s737 + $0x18] sm:$0xff] %vm738, %v723
        %743 = vst.msk [vmem:[%s737 + $0x20] sm:$0xff] %vm738, %v724
        %744 = vst.msk [vmem:[%s737 + $0x28] sm:$0xff] %vm738, %v725
        %745 = vst.msk [vmem:[%s737 + $0x30] sm:$0xff] %vm738, %v726
        %746 = vst.msk [vmem:[%s737 + $0x38] sm:$0xff] %vm738, %v727
        %747 = vst.msk [vmem:[%s737 + $0x40] sm:$0xff] %vm738, %v728
        %748 = vst.msk [vmem:[%s737 + $0x48] sm:$0xff] %vm738, %v729
        %749 = vst.msk [vmem:[%s737 + $0x50] sm:$0xff] %vm738, %v730
        %750 = vst.msk [vmem:[%s737 + $0x58] sm:$0xff] %vm738, %v731
        %751 = vst.msk [vmem:[%s737 + $0x60] sm:$0xff] %vm738, %v732
        %752 = vst.msk [vmem:[%s737 + $0x68] sm:$0xff] %vm738, %v733
        %753 = vst.msk [vmem:[%s737 + $0x70] sm:$0xff] %vm738, %v734
        %754 = vst.msk [vmem:[%s737 + $0x78] sm:$0xff] %vm738, %v735
      $region84: #{tpu_custom_call.1} parent=79 // pred_fallthru
        _
      %s755 = smul.u32 %s31, 128
      %s756 = scalar_lea.vmem [#allocation2], %s755
      %v757 = vld [vmem:[%s756] sm:$0xff]
      %v758 = vld [vmem:[%s756 + $0x8] sm:$0xff]
      %v759 = vld [vmem:[%s756 + $0x10] sm:$0xff]
      %v760 = vld [vmem:[%s756 + $0x18] sm:$0xff]
      %v761 = vld [vmem:[%s756 + $0x20] sm:$0xff]
      %v762 = vld [vmem:[%s756 + $0x28] sm:$0xff]
      %v763 = vld [vmem:[%s756 + $0x30] sm:$0xff]
      %v764 = vld [vmem:[%s756 + $0x38] sm:$0xff]
      %v765 = vld [vmem:[%s756 + $0x40] sm:$0xff]
      %v766 = vld [vmem:[%s756 + $0x48] sm:$0xff]
      %v767 = vld [vmem:[%s756 + $0x50] sm:$0xff]
      %v768 = vld [vmem:[%s756 + $0x58] sm:$0xff]
      %v769 = vld [vmem:[%s756 + $0x60] sm:$0xff]
      %v770 = vld [vmem:[%s756 + $0x68] sm:$0xff]
      %v771 = vld [vmem:[%s756 + $0x70] sm:$0xff]
      %v772 = vld [vmem:[%s756 + $0x78] sm:$0xff]
      %v773 = vld [vmem:[%s652] sm:$0x1]
      %v774 = vld [vmem:[%s655] sm:$0x1]
      %vm775 = vcmask 261120
      %v776 = vsel %vm775, %v757, 0.0
      %777 = vadd.xlane.f32.xlu0 %v776
      %v778 = vpop.xlane.xlu0 %777
      %v779 = vsel %vm775, %v758, 0.0
      %780 = vadd.xlane.f32.xlu0 %v779
      %v781 = vpop.xlane.xlu0 %780
      %v782 = vsel %vm775, %v759, 0.0
      %783 = vadd.xlane.f32.xlu0 %v782
      %v784 = vpop.xlane.xlu0 %783
      %v785 = vsel %vm775, %v760, 0.0
      %786 = vadd.xlane.f32.xlu0 %v785
      %v787 = vpop.xlane.xlu0 %786
      %v788 = vsel %vm775, %v761, 0.0
      %789 = vadd.xlane.f32.xlu0 %v788
      %v790 = vpop.xlane.xlu0 %789
      %v791 = vsel %vm775, %v762, 0.0
      %792 = vadd.xlane.f32.xlu0 %v791
      %v793 = vpop.xlane.xlu0 %792
      %v794 = vsel %vm775, %v763, 0.0
      %795 = vadd.xlane.f32.xlu0 %v794
      %v796 = vpop.xlane.xlu0 %795
      %v797 = vsel %vm775, %v764, 0.0
      %798 = vadd.xlane.f32.xlu0 %v797
      %v799 = vpop.xlane.xlu0 %798
      %v800 = vsel %vm775, %v765, 0.0
      %801 = vadd.xlane.f32.xlu0 %v800
      %v802 = vpop.xlane.xlu0 %801
      %v803 = vsel %vm775, %v766, 0.0
      %804 = vadd.xlane.f32.xlu0 %v803
      %v805 = vpop.xlane.xlu0 %804
      %v806 = vsel %vm775, %v767, 0.0
      %807 = vadd.xlane.f32.xlu0 %v806
      %v808 = vpop.xlane.xlu0 %807
      %v809 = vsel %vm775, %v768, 0.0
      %810 = vadd.xlane.f32.xlu0 %v809
      %v811 = vpop.xlane.xlu0 %810
      %v812 = vsel %vm775, %v769, 0.0
      %813 = vadd.xlane.f32.xlu0 %v812
      %v814 = vpop.xlane.xlu0 %813
      %v815 = vsel %vm775, %v770, 0.0
      %816 = vadd.xlane.f32.xlu0 %v815
      %v817 = vpop.xlane.xlu0 %816
      %v818 = vsel %vm775, %v771, 0.0
      %819 = vadd.xlane.f32.xlu0 %v818
      %v820 = vpop.xlane.xlu0 %819
      %v821 = vsel %vm775, %v772, 0.0
      %822 = vadd.xlane.f32.xlu0 %v821
      %v823 = vpop.xlane.xlu0 %822
      %v824 = vrcp.pop 32.0
      %v825 = vmul.f32 %v778, %v824
      %v826 = vmul.f32 %v781, %v824
      %v827 = vmul.f32 %v784, %v824
      %v828 = vmul.f32 %v787, %v824
      %v829 = vmul.f32 %v790, %v824
      %v830 = vmul.f32 %v793, %v824
      %v831 = vmul.f32 %v796, %v824
      %v832 = vmul.f32 %v799, %v824
      %v833 = vmul.f32 %v802, %v824
      %v834 = vmul.f32 %v805, %v824
      %v835 = vmul.f32 %v808, %v824
      %v836 = vmul.f32 %v811, %v824
      %v837 = vmul.f32 %v814, %v824
      %v838 = vmul.f32 %v817, %v824
      %v839 = vmul.f32 %v820, %v824
      %v840 = vmul.f32 %v823, %v824
      %v841 = vsub.f32 %v757, %v825
      %v842 = vsub.f32 %v758, %v826
      %v843 = vsub.f32 %v759, %v827
      %v844 = vsub.f32 %v760, %v828
      %v845 = vsub.f32 %v761, %v829
      %v846 = vsub.f32 %v762, %v830
      %v847 = vsub.f32 %v763, %v831
      %v848 = vsub.f32 %v764, %v832
      %v849 = vsub.f32 %v765, %v833
      %v850 = vsub.f32 %v766, %v834
      %v851 = vsub.f32 %v767, %v835
      %v852 = vsub.f32 %v768, %v836
      %v853 = vsub.f32 %v769, %v837
      %v854 = vsub.f32 %v770, %v838
      %v855 = vsub.f32 %v771, %v839
      %v856 = vsub.f32 %v772, %v840
      %v857 = vmul.f32 %v841, %v841
      %v858 = vmul.f32 %v842, %v842
      %v859 = vmul.f32 %v843, %v843
      %v860 = vmul.f32 %v844, %v844
      %v861 = vmul.f32 %v845, %v845
      %v862 = vmul.f32 %v846, %v846
      %v863 = vmul.f32 %v847, %v847
      %v864 = vmul.f32 %v848, %v848
      %v865 = vmul.f32 %v849, %v849
      %v866 = vmul.f32 %v850, %v850
      %v867 = vmul.f32 %v851, %v851
      %v868 = vmul.f32 %v852, %v852
      %v869 = vmul.f32 %v853, %v853
      %v870 = vmul.f32 %v854, %v854
      %v871 = vmul.f32 %v855, %v855
      %v872 = vmul.f32 %v856, %v856
      %v873 = vsel %vm775, %v857, 0.0
      %874 = vadd.xlane.f32.xlu0 %v873
      %v875 = vpop.xlane.xlu0 %874
      %v876 = vsel %vm775, %v858, 0.0
      %877 = vadd.xlane.f32.xlu0 %v876
      %v878 = vpop.xlane.xlu0 %877
      %v879 = vsel %vm775, %v859, 0.0
      %880 = vadd.xlane.f32.xlu0 %v879
      %v881 = vpop.xlane.xlu0 %880
      %v882 = vsel %vm775, %v860, 0.0
      %883 = vadd.xlane.f32.xlu0 %v882
      %v884 = vpop.xlane.xlu0 %883
      %v885 = vsel %vm775, %v861, 0.0
      %886 = vadd.xlane.f32.xlu0 %v885
      %v887 = vpop.xlane.xlu0 %886
      %v888 = vsel %vm775, %v862, 0.0
      %889 = vadd.xlane.f32.xlu0 %v888
      %v890 = vpop.xlane.xlu0 %889
      %v891 = vsel %vm775, %v863, 0.0
      %892 = vadd.xlane.f32.xlu0 %v891
      %v893 = vpop.xlane.xlu0 %892
      %v894 = vsel %vm775, %v864, 0.0
      %895 = vadd.xlane.f32.xlu0 %v894
      %v896 = vpop.xlane.xlu0 %895
      %v897 = vsel %vm775, %v865, 0.0
      %898 = vadd.xlane.f32.xlu0 %v897
      %v899 = vpop.xlane.xlu0 %898
      %v900 = vsel %vm775, %v866, 0.0
      %901 = vadd.xlane.f32.xlu0 %v900
      %v902 = vpop.xlane.xlu0 %901
      %v903 = vsel %vm775, %v867, 0.0
      %904 = vadd.xlane.f32.xlu0 %v903
      %v905 = vpop.xlane.xlu0 %904
      %v906 = vsel %vm775, %v868, 0.0
      %907 = vadd.xlane.f32.xlu0 %v906
      %v908 = vpop.xlane.xlu0 %907
      %v909 = vsel %vm775, %v869, 0.0
      %910 = vadd.xlane.f32.xlu0 %v909
      %v911 = vpop.xlane.xlu0 %910
      %v912 = vsel %vm775, %v870, 0.0
      %913 = vadd.xlane.f32.xlu0 %v912
      %v914 = vpop.xlane.xlu0 %913
      %v915 = vsel %vm775, %v871, 0.0
      %916 = vadd.xlane.f32.xlu0 %v915
      %v917 = vpop.xlane.xlu0 %916
      %v918 = vsel %vm775, %v872, 0.0
      %919 = vadd.xlane.f32.xlu0 %v918
      %v920 = vpop.xlane.xlu0 %919
      %v921 = vmul.f32 %v875, %v824
      %v922 = vmul.f32 %v878, %v824
      %v923 = vmul.f32 %v881, %v824
      %v924 = vmul.f32 %v884, %v824
      %v925 = vmul.f32 %v887, %v824
      %v926 = vmul.f32 %v890, %v824
      %v927 = vmul.f32 %v893, %v824
      %v928 = vmul.f32 %v896, %v824
      %v929 = vmul.f32 %v899, %v824
      %v930 = vmul.f32 %v902, %v824
      %v931 = vmul.f32 %v905, %v824
      %v932 = vmul.f32 %v908, %v824
      %v933 = vmul.f32 %v911, %v824
      %v934 = vmul.f32 %v914, %v824
      %v935 = vmul.f32 %v917, %v824
      %v936 = vmul.f32 %v920, %v824
      %v937 = vadd.f32 %v921, 1e-05
      %v938 = vadd.f32 %v922, 1e-05
      %v939 = vadd.f32 %v923, 1e-05
      %v940 = vadd.f32 %v924, 1e-05
      %v941 = vadd.f32 %v925, 1e-05
      %v942 = vadd.f32 %v926, 1e-05
      %v943 = vadd.f32 %v927, 1e-05
      %v944 = vadd.f32 %v928, 1e-05
      %v945 = vadd.f32 %v929, 1e-05
      %v946 = vadd.f32 %v930, 1e-05
      %v947 = vadd.f32 %v931, 1e-05
      %v948 = vadd.f32 %v932, 1e-05
      %v949 = vadd.f32 %v933, 1e-05
      %v950 = vadd.f32 %v934, 1e-05
      %v951 = vadd.f32 %v935, 1e-05
      %v952 = vadd.f32 %v936, 1e-05
      %v953 = vrsqrt.pop %v937
      %v954 = vrsqrt.pop %v938
      %v955 = vrsqrt.pop %v939
      %v956 = vrsqrt.pop %v940
      %v957 = vrsqrt.pop %v941
      %v958 = vrsqrt.pop %v942
      %v959 = vrsqrt.pop %v943
      %v960 = vrsqrt.pop %v944
      %v961 = vrsqrt.pop %v945
      %v962 = vrsqrt.pop %v946
      %v963 = vrsqrt.pop %v947
      %v964 = vrsqrt.pop %v948
      %v965 = vrsqrt.pop %v949
      %v966 = vrsqrt.pop %v950
      %v967 = vrsqrt.pop %v951
      %v968 = vrsqrt.pop %v952
      %v969 = vmul.f32 %v841, %v953
      %v970 = vmul.f32 %v842, %v954
      %v971 = vmul.f32 %v843, %v955
      %v972 = vmul.f32 %v844, %v956
      %v973 = vmul.f32 %v845, %v957
      %v974 = vmul.f32 %v846, %v958
      %v975 = vmul.f32 %v847, %v959
      %v976 = vmul.f32 %v848, %v960
      %v977 = vmul.f32 %v849, %v961
      %v978 = vmul.f32 %v850, %v962
      %v979 = vmul.f32 %v851, %v963
      %v980 = vmul.f32 %v852, %v964
      %v981 = vmul.f32 %v853, %v965
      %v982 = vmul.f32 %v854, %v966
      %v983 = vmul.f32 %v855, %v967
      %v984 = vmul.f32 %v856, %v968
      %v986 = vlaneseq
      %v987 = vshrl.u32 %v986, 7
      %v988 = vsub.s32 0, %v987
      %v989 = vrot.slane %v773, %v988
      %v991 = vmul.f32 %v969, %v989
      %v992 = vmul.f32 %v970, %v989
      %v993 = vmul.f32 %v971, %v989
      %v994 = vmul.f32 %v972, %v989
      %v995 = vmul.f32 %v973, %v989
      %v996 = vmul.f32 %v974, %v989
      %v997 = vmul.f32 %v975, %v989
      %v998 = vmul.f32 %v976, %v989
      %v999 = vmul.f32 %v977, %v989
      %v1000 = vmul.f32 %v978, %v989
      %v1001 = vmul.f32 %v979, %v989
      %v1002 = vmul.f32 %v980, %v989
      %v1003 = vmul.f32 %v981, %v989
      %v1004 = vmul.f32 %v982, %v989
      %v1005 = vmul.f32 %v983, %v989
      %v1006 = vmul.f32 %v984, %v989
      %v1008 = vlaneseq
      %v1009 = vshrl.u32 %v1008, 7
      %v1010 = vsub.s32 0, %v1009
      %v1011 = vrot.slane %v774, %v1010
      %v1013 = vadd.f32 %v991, %v1011
      %v1014 = vadd.f32 %v992, %v1011
      %v1015 = vadd.f32 %v993, %v1011
      %v1016 = vadd.f32 %v994, %v1011
      %v1017 = vadd.f32 %v995, %v1011
      %v1018 = vadd.f32 %v996, %v1011
      %v1019 = vadd.f32 %v997, %v1011
      %v1020 = vadd.f32 %v998, %v1011
      %v1021 = vadd.f32 %v999, %v1011
      %v1022 = vadd.f32 %v1000, %v1011
      %v1023 = vadd.f32 %v1001, %v1011
      %v1024 = vadd.f32 %v1002, %v1011
      %v1025 = vadd.f32 %v1003, %v1011
      %v1026 = vadd.f32 %v1004, %v1011
      %v1027 = vadd.f32 %v1005, %v1011
      %v1028 = vadd.f32 %v1006, %v1011
      %v1029 = vpack.c.bf16 %v1014, %v1013
      %v1030 = vpack.c.bf16 %v1016, %v1015
      %v1031 = vpack.c.bf16 %v1018, %v1017
      %v1032 = vpack.c.bf16 %v1020, %v1019
      %v1033 = vpack.c.bf16 %v1022, %v1021
      %v1034 = vpack.c.bf16 %v1024, %v1023
      %v1035 = vpack.c.bf16 %v1026, %v1025
      %v1036 = vpack.c.bf16 %v1028, %v1027
      %v1037 = vld [vmem:[%s660] sm:$0xf]
      %v1038 = vld [vmem:[%s660 + $0x4] sm:$0xf]
      %v1039 = vld [vmem:[%s660 + $0x8] sm:$0xf]
      %v1040 = vld [vmem:[%s660 + $0xc] sm:$0xf]
      %v1041 = vld [vmem:[%s663] sm:$0x1]
      %v1043 = vlaneseq
      %v1044 = vshrl.u32 %v1043, 7
      %v1045 = vsub.s32 0, %v1044
      %v1046 = vrot.slane %v1041, %v1045
      %v1052 = vunpack.c.l.b16 %v1037
      %v1053 = vunpack.c.l.b16 %v1038
      %v1054 = vunpack.c.l.b16 %v1039
      %v1055 = vunpack.c.l.b16 %v1040
      %v1056 = vpack.c.b16 %v1053, %v1052
      %v1057 = vpack.c.b16 %v1055, %v1054
      %v1061 = vsel %vm775, %v1029, 0
      %v1064 = vsel %vm775, %v1030, 0
      %v1067 = vsel %vm775, %v1031, 0
      %v1070 = vsel %vm775, %v1032, 0
      %v1073 = vsel %vm775, %v1033, 0
      %v1076 = vsel %vm775, %v1034, 0
      %v1079 = vsel %vm775, %v1035, 0
      %v1082 = vsel %vm775, %v1036, 0
      %1084 = vmatprep.subr.bf16.mxu0 0
      %1085 = vmatpush1.bf16.msra.mxu0 %v1056
      %1086 = vmatprep.subr.bf16.mxu0 0
      %1087 = vmatpush1.bf16.msra.mxu0 %v1057
      %1088 = vmatprep.subr.bf16.mxu0 0
      %1089 = vmatpush1.bf16.msra.mxu0 0
      %1090 = vmatprep.subr.bf16.mxu0 0
      %1091 = vmatpush1.bf16.msra.mxu0 0
      %1092 = vmatprep.subr.bf16.mxu0 0
      %1093 = vmatpush1.bf16.msra.mxu0 0
      %1094 = vmatprep.subr.bf16.mxu0 0
      %1095 = vmatpush1.bf16.msra.mxu0 0
      %1096 = vmatprep.subr.bf16.mxu0 0
      %1097 = vmatpush1.bf16.msra.mxu0 0
      %1098 = vmatprep.subr.bf16.mxu0 0
      %1099 = vmatpush1.bf16.msra.mxu0 0
      %1100 = vmatprep.subr.bf16.mxu0 0
      %1101 = vmatpush1.bf16.msra.mxu0 0
      %1102 = vmatprep.subr.bf16.mxu0 0
      %1103 = vmatpush1.bf16.msra.mxu0 0
      %1104 = vmatprep.subr.bf16.mxu0 0
      %1105 = vmatpush1.bf16.msra.mxu0 0
      %1106 = vmatprep.subr.bf16.mxu0 0
      %1107 = vmatpush1.bf16.msra.mxu0 0
      %1108 = vmatprep.subr.bf16.mxu0 0
      %1109 = vmatpush1.bf16.msra.mxu0 0
      %1110 = vmatprep.subr.bf16.mxu0 0
      %1111 = vmatpush1.bf16.msra.mxu0 0
      %1112 = vmatprep.subr.bf16.mxu0 0
      %1113 = vmatpush1.bf16.msra.mxu0 0
      %1114 = vmatprep.subr.bf16.mxu0 0
      %1115 = vmatpush1.bf16.msra.mxu0 0
      %1116 = vmatprep.mubr.bf16.mxu0 0
      %1117 = vmatmul.mubr.bf16.gmra.mrb[0].mxu0 %v1061
      %v1118 = vpop.f32.mrb[0].mxu0
      %v1119 = vadd.f32 %v1046, %v1118
      %v1120 = vpop.f32.mrb[0].mxu0
      %v1121 = vpop.f32.mrb[0].mxu0
      %v1122 = vadd.f32 %v1046, %v1121
      %v1123 = vpop.f32.mrb[0].mxu0
      %1124 = vmatprep.mubr.bf16.mxu0 0
      %1125 = vmatmul.mubr.bf16.gmra.mrb[0].mxu0 %v1064
      %v1126 = vpop.f32.mrb[0].mxu0
      %v1127 = vadd.f32 %v1046, %v1126
      %v1128 = vpop.f32.mrb[0].mxu0
      %v1129 = vpop.f32.mrb[0].mxu0
      %v1130 = vadd.f32 %v1046, %v1129
      %v1131 = vpop.f32.mrb[0].mxu0
      %1132 = vmatprep.mubr.bf16.mxu0 0
      %1133 = vmatmul.mubr.bf16.gmra.mrb[0].mxu0 %v1067
      %v1134 = vpop.f32.mrb[0].mxu0
      %v1135 = vadd.f32 %v1046, %v1134
      %v1136 = vpop.f32.mrb[0].mxu0
      %v1137 = vpop.f32.mrb[0].mxu0
      %v1138 = vadd.f32 %v1046, %v1137
      %v1139 = vpop.f32.mrb[0].mxu0
      %1140 = vmatprep.mubr.bf16.mxu0 0
      %1141 = vmatmul.mubr.bf16.gmra.mrb[0].mxu0 %v1070
      %v1142 = vpop.f32.mrb[0].mxu0
      %v1143 = vadd.f32 %v1046, %v1142
      %v1144 = vpop.f32.mrb[0].mxu0
      %v1145 = vpop.f32.mrb[0].mxu0
      %v1146 = vadd.f32 %v1046, %v1145
      %v1147 = vpop.f32.mrb[0].mxu0
      %1148 = vmatprep.mubr.bf16.mxu0 0
      %1149 = vmatmul.mubr.bf16.gmra.mrb[0].mxu0 %v1073
      %v1150 = vpop.f32.mrb[0].mxu0
      %v1151 = vadd.f32 %v1046, %v1150
      %v1152 = vpop.f32.mrb[0].mxu0
      %v1153 = vpop.f32.mrb[0].mxu0
      %v1154 = vadd.f32 %v1046, %v1153
      %v1155 = vpop.f32.mrb[0].mxu0
      %1156 = vmatprep.mubr.bf16.mxu0 0
      %1157 = vmatmul.mubr.bf16.gmra.mrb[0].mxu0 %v1076
      %v1158 = vpop.f32.mrb[0].mxu0
      %v1159 = vadd.f32 %v1046, %v1158
      %v1160 = vpop.f32.mrb[0].mxu0
      %v1161 = vpop.f32.mrb[0].mxu0
      %v1162 = vadd.f32 %v1046, %v1161
      %v1163 = vpop.f32.mrb[0].mxu0
      %1164 = vmatprep.mubr.bf16.mxu0 0
      %1165 = vmatmul.mubr.bf16.gmra.mrb[0].mxu0 %v1079
      %v1166 = vpop.f32.mrb[0].mxu0
      %v1167 = vadd.f32 %v1046, %v1166
      %v1168 = vpop.f32.mrb[0].mxu0
      %v1169 = vpop.f32.mrb[0].mxu0
      %v1170 = vadd.f32 %v1046, %v1169
      %v1171 = vpop.f32.mrb[0].mxu0
      %1172 = vmatprep.mubr.bf16.mxu0 0
      %1173 = vmatmul.mubr.bf16.gmra.mrb[0].mxu0 %v1082
      %v1174 = vpop.f32.mrb[0].mxu0
      %v1175 = vadd.f32 %v1046, %v1174
      %v1176 = vpop.f32.mrb[0].mxu0
      %v1177 = vpop.f32.mrb[0].mxu0
      %v1178 = vadd.f32 %v1046, %v1177
      %v1179 = vpop.f32.mrb[0].mxu0
      %1180 = vdwg.mxu0
      %v1181 = vpack.c.bf16 %v1122, %v1119
      %v1182 = vpack.c.bf16 %v1130, %v1127
      %v1183 = vpack.c.bf16 %v1138, %v1135
      %v1184 = vpack.c.bf16 %v1146, %v1143
      %v1185 = vpack.c.bf16 %v1154, %v1151
      %v1186 = vpack.c.bf16 %v1162, %v1159
      %v1187 = vpack.c.bf16 %v1170, %v1167
      %v1188 = vpack.c.bf16 %v1178, %v1175
      %1197 = vrot.lane.b32.xlu0 %v1181, 120
      %v1198 = vpop.permute.xlu0 %1197
      %1199 = vrot.lane.b32.xlu0 %v1182, 120
      %v1200 = vpop.permute.xlu0 %1199
      %1201 = vrot.lane.b32.xlu0 %v1183, 120
      %v1202 = vpop.permute.xlu0 %1201
      %1203 = vrot.lane.b32.xlu0 %v1184, 120
      %v1204 = vpop.permute.xlu0 %1203
      %1205 = vrot.lane.b32.xlu0 %v1185, 120
      %v1206 = vpop.permute.xlu0 %1205
      %1207 = vrot.lane.b32.xlu0 %v1186, 120
      %v1208 = vpop.permute.xlu0 %1207
      %1209 = vrot.lane.b32.xlu0 %v1187, 120
      %v1210 = vpop.permute.xlu0 %1209
      %1211 = vrot.lane.b32.xlu0 %v1188, 120
      %v1212 = vpop.permute.xlu0 %1211
      %1213 = vrot.lane.b32.xlu0 %v1181, 112
      %v1214 = vpop.permute.xlu0 %1213
      %1215 = vrot.lane.b32.xlu0 %v1182, 112
      %v1216 = vpop.permute.xlu0 %1215
      %1217 = vrot.lane.b32.xlu0 %v1183, 112
      %v1218 = vpop.permute.xlu0 %1217
      %1219 = vrot.lane.b32.xlu0 %v1184, 112
      %v1220 = vpop.permute.xlu0 %1219
      %1221 = vrot.lane.b32.xlu0 %v1185, 112
      %v1222 = vpop.permute.xlu0 %1221
      %1223 = vrot.lane.b32.xlu0 %v1186, 112
      %v1224 = vpop.permute.xlu0 %1223
      %1225 = vrot.lane.b32.xlu0 %v1187, 112
      %v1226 = vpop.permute.xlu0 %1225
      %1227 = vrot.lane.b32.xlu0 %v1188, 112
      %v1228 = vpop.permute.xlu0 %1227
      %1229 = vrot.lane.b32.xlu0 %v1181, 104
      %v1230 = vpop.permute.xlu0 %1229
      %1231 = vrot.lane.b32.xlu0 %v1182, 104
      %v1232 = vpop.permute.xlu0 %1231
      %1233 = vrot.lane.b32.xlu0 %v1183, 104
      %v1234 = vpop.permute.xlu0 %1233
      %1235 = vrot.lane.b32.xlu0 %v1184, 104
      %v1236 = vpop.permute.xlu0 %1235
      %1237 = vrot.lane.b32.xlu0 %v1185, 104
      %v1238 = vpop.permute.xlu0 %1237
      %1239 = vrot.lane.b32.xlu0 %v1186, 104
      %v1240 = vpop.permute.xlu0 %1239
      %1241 = vrot.lane.b32.xlu0 %v1187, 104
      %v1242 = vpop.permute.xlu0 %1241
      %1243 = vrot.lane.b32.xlu0 %v1188, 104
      %v1244 = vpop.permute.xlu0 %1243
      %v1247 = vpack.i.b16 %v1198, %v1181
      %v1249 = vshrl.u32 %v1181, 16
      %v1250 = vshrl.u32 %v1198, 16
      %v1251 = vpack.i.b16 %v1250, %v1249
      %v1255 = vpack.i.b16 %v1230, %v1214
      %v1257 = vshrl.u32 %v1214, 16
      %v1258 = vshrl.u32 %v1230, 16
      %v1259 = vpack.i.b16 %v1258, %v1257
      %v1262 = vpack.i.b16 0, 0
      %v1264 = vshrl.u32 0, 16
      %v1265 = vpack.i.b16 %v1264, %v1264
      %v1269 = vpack.i.b16 %v1200, %v1182
      %v1271 = vshrl.u32 %v1182, 16
      %v1272 = vshrl.u32 %v1200, 16
      %v1273 = vpack.i.b16 %v1272, %v1271
      %v1277 = vpack.i.b16 %v1232, %v1216
      %v1279 = vshrl.u32 %v1216, 16
      %v1280 = vshrl.u32 %v1232, 16
      %v1281 = vpack.i.b16 %v1280, %v1279
      %v1285 = vpack.i.b16 %v1202, %v1183
      %v1287 = vshrl.u32 %v1183, 16
      %v1288 = vshrl.u32 %v1202, 16
      %v1289 = vpack.i.b16 %v1288, %v1287
      %v1293 = vpack.i.b16 %v1234, %v1218
      %v1295 = vshrl.u32 %v1218, 16
      %v1296 = vshrl.u32 %v1234, 16
      %v1297 = vpack.i.b16 %v1296, %v1295
      %v1301 = vpack.i.b16 %v1204, %v1184
      %v1303 = vshrl.u32 %v1184, 16
      %v1304 = vshrl.u32 %v1204, 16
      %v1305 = vpack.i.b16 %v1304, %v1303
      %v1309 = vpack.i.b16 %v1236, %v1220
      %v1311 = vshrl.u32 %v1220, 16
      %v1312 = vshrl.u32 %v1236, 16
      %v1313 = vpack.i.b16 %v1312, %v1311
      %v1317 = vpack.i.b16 %v1206, %v1185
      %v1319 = vshrl.u32 %v1185, 16
      %v1320 = vshrl.u32 %v1206, 16
      %v1321 = vpack.i.b16 %v1320, %v1319
      %v1325 = vpack.i.b16 %v1238, %v1222
      %v1327 = vshrl.u32 %v1222, 16
      %v1328 = vshrl.u32 %v1238, 16
      %v1329 = vpack.i.b16 %v1328, %v1327
      %v1333 = vpack.i.b16 %v1208, %v1186
      %v1335 = vshrl.u32 %v1186, 16
      %v1336 = vshrl.u32 %v1208, 16
      %v1337 = vpack.i.b16 %v1336, %v1335
      %v1341 = vpack.i.b16 %v1240, %v1224
      %v1343 = vshrl.u32 %v1224, 16
      %v1344 = vshrl.u32 %v1240, 16
      %v1345 = vpack.i.b16 %v1344, %v1343
      %v1349 = vpack.i.b16 %v1210, %v1187
      %v1351 = vshrl.u32 %v1187, 16
      %v1352 = vshrl.u32 %v1210, 16
      %v1353 = vpack.i.b16 %v1352, %v1351
      %v1357 = vpack.i.b16 %v1242, %v1226
      %v1359 = vshrl.u32 %v1226, 16
      %v1360 = vshrl.u32 %v1242, 16
      %v1361 = vpack.i.b16 %v1360, %v1359
      %v1365 = vpack.i.b16 %v1212, %v1188
      %v1367 = vshrl.u32 %v1188, 16
      %v1368 = vshrl.u32 %v1212, 16
      %v1369 = vpack.i.b16 %v1368, %v1367
      %v1373 = vpack.i.b16 %v1244, %v1228
      %v1375 = vshrl.u32 %v1228, 16
      %v1376 = vshrl.u32 %v1244, 16
      %v1377 = vpack.i.b16 %v1376, %v1375
      %v1379 = vcombine.high %v1247, %v1262
      %v1381 = vunpack.c.l.s4 1983009808
      %v1382 = vunpack.c.0.s8 %v1381
      %v1383 = vlaneseq
      %v1384 = vshrl.u32 %v1383, 7
      %v1385 = vsub.s32 %v1382, %v1384
      %v1386 = vrot.slane %v1247, %v1385
      %v1388 = vunpack.c.l.s4 1983009808
      %v1389 = vunpack.c.0.s8 %v1388
      %v1390 = vlaneseq
      %v1391 = vshrl.u32 %v1390, 7
      %v1392 = vsub.s32 %v1389, %v1391
      %v1393 = vrot.slane %v1379, %v1392
      %v1394 = vcombine.high %v1255, %v1262
      %v1396 = vunpack.c.l.s4 1983009808
      %v1397 = vunpack.c.0.s8 %v1396
      %v1398 = vlaneseq
      %v1399 = vshrl.u32 %v1398, 7
      %v1400 = vsub.s32 %v1397, %v1399
      %v1401 = vrot.slane %v1255, %v1400
      %v1403 = vunpack.c.l.s4 1983009808
      %v1404 = vunpack.c.0.s8 %v1403
      %v1405 = vlaneseq
      %v1406 = vshrl.u32 %v1405, 7
      %v1407 = vsub.s32 %v1404, %v1406
      %v1408 = vrot.slane %v1394, %v1407
      %v1409 = vcombine.low %v1386, %v1401
      %v1410 = vcombine.high %v1386, %v1401
      %v1412 = vunpack.c.l.s4 1934713408
      %v1413 = vunpack.c.0.s8 %v1412
      %v1414 = vlaneseq
      %v1415 = vshrl.u32 %v1414, 7
      %v1416 = vsub.s32 %v1413, %v1415
      %v1417 = vrot.slane %v1409, %v1416
      %v1419 = vunpack.c.l.s4 1934713408
      %v1420 = vunpack.c.0.s8 %v1419
      %v1421 = vlaneseq
      %v1422 = vshrl.u32 %v1421, 7
      %v1423 = vsub.s32 %v1420, %v1422
      %v1424 = vrot.slane %v1410, %v1423
      %v1425 = vcombine.low %v1393, %v1408
      %v1426 = vcombine.high %v1393, %v1408
      %v1428 = vunpack.c.l.s4 1934713408
      %v1429 = vunpack.c.0.s8 %v1428
      %v1430 = vlaneseq
      %v1431 = vshrl.u32 %v1430, 7
      %v1432 = vsub.s32 %v1429, %v1431
      %v1433 = vrot.slane %v1425, %v1432
      %v1435 = vunpack.c.l.s4 1934713408
      %v1436 = vunpack.c.0.s8 %v1435
      %v1437 = vlaneseq
      %v1438 = vshrl.u32 %v1437, 7
      %v1439 = vsub.s32 %v1436, %v1438
      %v1440 = vrot.slane %v1426, %v1439
      %v1441 = vcombine.high %v1417, 0
      %v1442 = vcombine.high %v1424, 0
      %v1443 = vcombine.high %v1433, 0
      %v1444 = vcombine.high %v1440, 0
      %v1445 = vcombine.high %v1251, %v1265
      %v1447 = vunpack.c.l.s4 1983009808
      %v1448 = vunpack.c.0.s8 %v1447
      %v1449 = vlaneseq
      %v1450 = vshrl.u32 %v1449, 7
      %v1451 = vsub.s32 %v1448, %v1450
      %v1452 = vrot.slane %v1251, %v1451
      %v1454 = vunpack.c.l.s4 1983009808
      %v1455 = vunpack.c.0.s8 %v1454
      %v1456 = vlaneseq
      %v1457 = vshrl.u32 %v1456, 7
      %v1458 = vsub.s32 %v1455, %v1457
      %v1459 = vrot.slane %v1445, %v1458
      %v1460 = vcombine.high %v1259, %v1265
      %v1462 = vunpack.c.l.s4 1983009808
      %v1463 = vunpack.c.0.s8 %v1462
      %v1464 = vlaneseq
      %v1465 = vshrl.u32 %v1464, 7
      %v1466 = vsub.s32 %v1463, %v1465
      %v1467 = vrot.slane %v1259, %v1466
      %v1469 = vunpack.c.l.s4 1983009808
      %v1470 = vunpack.c.0.s8 %v1469
      %v1471 = vlaneseq
      %v1472 = vshrl.u32 %v1471, 7
      %v1473 = vsub.s32 %v1470, %v1472
      %v1474 = vrot.slane %v1460, %v1473
      %v1475 = vcombine.low %v1452, %v1467
      %v1476 = vcombine.high %v1452, %v1467
      %v1478 = vunpack.c.l.s4 1934713408
      %v1479 = vunpack.c.0.s8 %v1478
      %v1480 = vlaneseq
      %v1481 = vshrl.u32 %v1480, 7
      %v1482 = vsub.s32 %v1479, %v1481
      %v1483 = vrot.slane %v1475, %v1482
      %v1485 = vunpack.c.l.s4 1934713408
      %v1486 = vunpack.c.0.s8 %v1485
      %v1487 = vlaneseq
      %v1488 = vshrl.u32 %v1487, 7
      %v1489 = vsub.s32 %v1486, %v1488
      %v1490 = vrot.slane %v1476, %v1489
      %v1491 = vcombine.low %v1459, %v1474
      %v1492 = vcombine.high %v1459, %v1474
      %v1494 = vunpack.c.l.s4 1934713408
      %v1495 = vunpack.c.0.s8 %v1494
      %v1496 = vlaneseq
      %v1497 = vshrl.u32 %v1496, 7
      %v1498 = vsub.s32 %v1495, %v1497
      %v1499 = vrot.slane %v1491, %v1498
      %v1501 = vunpack.c.l.s4 1934713408
      %v1502 = vunpack.c.0.s8 %v1501
      %v1503 = vlaneseq
      %v1504 = vshrl.u32 %v1503, 7
      %v1505 = vsub.s32 %v1502, %v1504
      %v1506 = vrot.slane %v1492, %v1505
      %v1507 = vcombine.high %v1483, 0
      %v1508 = vcombine.high %v1490, 0
      %v1509 = vcombine.high %v1499, 0
      %v1510 = vcombine.high %v1506, 0
      %v1511 = vcombine.high %v1269, %v1262
      %v1513 = vunpack.c.l.s4 1983009808
      %v1514 = vunpack.c.0.s8 %v1513
      %v1515 = vlaneseq
      %v1516 = vshrl.u32 %v1515, 7
      %v1517 = vsub.s32 %v1514, %v1516
      %v1518 = vrot.slane %v1269, %v1517
      %v1520 = vunpack.c.l.s4 1983009808
      %v1521 = vunpack.c.0.s8 %v1520
      %v1522 = vlaneseq
      %v1523 = vshrl.u32 %v1522, 7
      %v1524 = vsub.s32 %v1521, %v1523
      %v1525 = vrot.slane %v1511, %v1524
      %v1526 = vcombine.high %v1277, %v1262
      %v1528 = vunpack.c.l.s4 1983009808
      %v1529 = vunpack.c.0.s8 %v1528
      %v1530 = vlaneseq
      %v1531 = vshrl.u32 %v1530, 7
      %v1532 = vsub.s32 %v1529, %v1531
      %v1533 = vrot.slane %v1277, %v1532
      %v1535 = vunpack.c.l.s4 1983009808
      %v1536 = vunpack.c.0.s8 %v1535
      %v1537 = vlaneseq
      %v1538 = vshrl.u32 %v1537, 7
      %v1539 = vsub.s32 %v1536, %v1538
      %v1540 = vrot.slane %v1526, %v1539
      %v1541 = vcombine.low %v1518, %v1533
      %v1542 = vcombine.high %v1518, %v1533
      %v1544 = vunpack.c.l.s4 1934713408
      %v1545 = vunpack.c.0.s8 %v1544
      %v1546 = vlaneseq
      %v1547 = vshrl.u32 %v1546, 7
      %v1548 = vsub.s32 %v1545, %v1547
      %v1549 = vrot.slane %v1541, %v1548
      %v1551 = vunpack.c.l.s4 1934713408
      %v1552 = vunpack.c.0.s8 %v1551
      %v1553 = vlaneseq
      %v1554 = vshrl.u32 %v1553, 7
      %v1555 = vsub.s32 %v1552, %v1554
      %v1556 = vrot.slane %v1542, %v1555
      %v1557 = vcombine.low %v1525, %v1540
      %v1558 = vcombine.high %v1525, %v1540
      %v1560 = vunpack.c.l.s4 1934713408
      %v1561 = vunpack.c.0.s8 %v1560
      %v1562 = vlaneseq
      %v1563 = vshrl.u32 %v1562, 7
      %v1564 = vsub.s32 %v1561, %v1563
      %v1565 = vrot.slane %v1557, %v1564
      %v1567 = vunpack.c.l.s4 1934713408
      %v1568 = vunpack.c.0.s8 %v1567
      %v1569 = vlaneseq
      %v1570 = vshrl.u32 %v1569, 7
      %v1571 = vsub.s32 %v1568, %v1570
      %v1572 = vrot.slane %v1558, %v1571
      %v1573 = vcombine.high %v1549, 0
      %v1574 = vcombine.high %v1556, 0
      %v1575 = vcombine.high %v1565, 0
      %v1576 = vcombine.high %v1572, 0
      %v1577 = vcombine.high %v1273, %v1265
      %v1579 = vunpack.c.l.s4 1983009808
      %v1580 = vunpack.c.0.s8 %v1579
      %v1581 = vlaneseq
      %v1582 = vshrl.u32 %v1581, 7
      %v1583 = vsub.s32 %v1580, %v1582
      %v1584 = vrot.slane %v1273, %v1583
      %v1586 = vunpack.c.l.s4 1983009808
      %v1587 = vunpack.c.0.s8 %v1586
      %v1588 = vlaneseq
      %v1589 = vshrl.u32 %v1588, 7
      %v1590 = vsub.s32 %v1587, %v1589
      %v1591 = vrot.slane %v1577, %v1590
      %v1592 = vcombine.high %v1281, %v1265
      %v1594 = vunpack.c.l.s4 1983009808
      %v1595 = vunpack.c.0.s8 %v1594
      %v1596 = vlaneseq
      %v1597 = vshrl.u32 %v1596, 7
      %v1598 = vsub.s32 %v1595, %v1597
      %v1599 = vrot.slane %v1281, %v1598
      %v1601 = vunpack.c.l.s4 1983009808
      %v1602 = vunpack.c.0.s8 %v1601
      %v1603 = vlaneseq
      %v1604 = vshrl.u32 %v1603, 7
      %v1605 = vsub.s32 %v1602, %v1604
      %v1606 = vrot.slane %v1592, %v1605
      %v1607 = vcombine.low %v1584, %v1599
      %v1608 = vcombine.high %v1584, %v1599
      %v1610 = vunpack.c.l.s4 1934713408
      %v1611 = vunpack.c.0.s8 %v1610
      %v1612 = vlaneseq
      %v1613 = vshrl.u32 %v1612, 7
      %v1614 = vsub.s32 %v1611, %v1613
      %v1615 = vrot.slane %v1607, %v1614
      %v1617 = vunpack.c.l.s4 1934713408
      %v1618 = vunpack.c.0.s8 %v1617
      %v1619 = vlaneseq
      %v1620 = vshrl.u32 %v1619, 7
      %v1621 = vsub.s32 %v1618, %v1620
      %v1622 = vrot.slane %v1608, %v1621
      %v1623 = vcombine.low %v1591, %v1606
      %v1624 = vcombine.high %v1591, %v1606
      %v1626 = vunpack.c.l.s4 1934713408
      %v1627 = vunpack.c.0.s8 %v1626
      %v1628 = vlaneseq
      %v1629 = vshrl.u32 %v1628, 7
      %v1630 = vsub.s32 %v1627, %v1629
      %v1631 = vrot.slane %v1623, %v1630
      %v1633 = vunpack.c.l.s4 1934713408
      %v1634 = vunpack.c.0.s8 %v1633
      %v1635 = vlaneseq
      %v1636 = vshrl.u32 %v1635, 7
      %v1637 = vsub.s32 %v1634, %v1636
      %v1638 = vrot.slane %v1624, %v1637
      %v1639 = vcombine.high %v1615, 0
      %v1640 = vcombine.high %v1622, 0
      %v1641 = vcombine.high %v1631, 0
      %v1642 = vcombine.high %v1638, 0
      %v1643 = vcombine.high %v1285, %v1262
      %v1645 = vunpack.c.l.s4 1983009808
      %v1646 = vunpack.c.0.s8 %v1645
      %v1647 = vlaneseq
      %v1648 = vshrl.u32 %v1647, 7
      %v1649 = vsub.s32 %v1646, %v1648
      %v1650 = vrot.slane %v1285, %v1649
      %v1652 = vunpack.c.l.s4 1983009808
      %v1653 = vunpack.c.0.s8 %v1652
      %v1654 = vlaneseq
      %v1655 = vshrl.u32 %v1654, 7
      %v1656 = vsub.s32 %v1653, %v1655
      %v1657 = vrot.slane %v1643, %v1656
      %v1658 = vcombine.high %v1293, %v1262
      %v1660 = vunpack.c.l.s4 1983009808
      %v1661 = vunpack.c.0.s8 %v1660
      %v1662 = vlaneseq
      %v1663 = vshrl.u32 %v1662, 7
      %v1664 = vsub.s32 %v1661, %v1663
      %v1665 = vrot.slane %v1293, %v1664
      %v1667 = vunpack.c.l.s4 1983009808
      %v1668 = vunpack.c.0.s8 %v1667
      %v1669 = vlaneseq
      %v1670 = vshrl.u32 %v1669, 7
      %v1671 = vsub.s32 %v1668, %v1670
      %v1672 = vrot.slane %v1658, %v1671
      %v1673 = vcombine.low %v1650, %v1665
      %v1674 = vcombine.high %v1650, %v1665
      %v1676 = vunpack.c.l.s4 1934713408
      %v1677 = vunpack.c.0.s8 %v1676
      %v1678 = vlaneseq
      %v1679 = vshrl.u32 %v1678, 7
      %v1680 = vsub.s32 %v1677, %v1679
      %v1681 = vrot.slane %v1673, %v1680
      %v1683 = vunpack.c.l.s4 1934713408
      %v1684 = vunpack.c.0.s8 %v1683
      %v1685 = vlaneseq
      %v1686 = vshrl.u32 %v1685, 7
      %v1687 = vsub.s32 %v1684, %v1686
      %v1688 = vrot.slane %v1674, %v1687
      %v1689 = vcombine.low %v1657, %v1672
      %v1690 = vcombine.high %v1657, %v1672
      %v1692 = vunpack.c.l.s4 1934713408
      %v1693 = vunpack.c.0.s8 %v1692
      %v1694 = vlaneseq
      %v1695 = vshrl.u32 %v1694, 7
      %v1696 = vsub.s32 %v1693, %v1695
      %v1697 = vrot.slane %v1689, %v1696
      %v1699 = vunpack.c.l.s4 1934713408
      %v1700 = vunpack.c.0.s8 %v1699
      %v1701 = vlaneseq
      %v1702 = vshrl.u32 %v1701, 7
      %v1703 = vsub.s32 %v1700, %v1702
      %v1704 = vrot.slane %v1690, %v1703
      %v1705 = vcombine.high %v1681, 0
      %v1706 = vcombine.high %v1688, 0
      %v1707 = vcombine.high %v1697, 0
      %v1708 = vcombine.high %v1704, 0
      %v1709 = vcombine.high %v1289, %v1265
      %v1711 = vunpack.c.l.s4 1983009808
      %v1712 = vunpack.c.0.s8 %v1711
      %v1713 = vlaneseq
      %v1714 = vshrl.u32 %v1713, 7
      %v1715 = vsub.s32 %v1712, %v1714
      %v1716 = vrot.slane %v1289, %v1715
      %v1718 = vunpack.c.l.s4 1983009808
      %v1719 = vunpack.c.0.s8 %v1718
      %v1720 = vlaneseq
      %v1721 = vshrl.u32 %v1720, 7
      %v1722 = vsub.s32 %v1719, %v1721
      %v1723 = vrot.slane %v1709, %v1722
      %v1724 = vcombine.high %v1297, %v1265
      %v1726 = vunpack.c.l.s4 1983009808
      %v1727 = vunpack.c.0.s8 %v1726
      %v1728 = vlaneseq
      %v1729 = vshrl.u32 %v1728, 7
      %v1730 = vsub.s32 %v1727, %v1729
      %v1731 = vrot.slane %v1297, %v1730
      %v1733 = vunpack.c.l.s4 1983009808
      %v1734 = vunpack.c.0.s8 %v1733
      %v1735 = vlaneseq
      %v1736 = vshrl.u32 %v1735, 7
      %v1737 = vsub.s32 %v1734, %v1736
      %v1738 = vrot.slane %v1724, %v1737
      %v1739 = vcombine.low %v1716, %v1731
      %v1740 = vcombine.high %v1716, %v1731
      %v1742 = vunpack.c.l.s4 1934713408
      %v1743 = vunpack.c.0.s8 %v1742
      %v1744 = vlaneseq
      %v1745 = vshrl.u32 %v1744, 7
      %v1746 = vsub.s32 %v1743, %v1745
      %v1747 = vrot.slane %v1739, %v1746
      %v1749 = vunpack.c.l.s4 1934713408
      %v1750 = vunpack.c.0.s8 %v1749
      %v1751 = vlaneseq
      %v1752 = vshrl.u32 %v1751, 7
      %v1753 = vsub.s32 %v1750, %v1752
      %v1754 = vrot.slane %v1740, %v1753
      %v1755 = vcombine.low %v1723, %v1738
      %v1756 = vcombine.high %v1723, %v1738
      %v1758 = vunpack.c.l.s4 1934713408
      %v1759 = vunpack.c.0.s8 %v1758
      %v1760 = vlaneseq
      %v1761 = vshrl.u32 %v1760, 7
      %v1762 = vsub.s32 %v1759, %v1761
      %v1763 = vrot.slane %v1755, %v1762
      %v1765 = vunpack.c.l.s4 1934713408
      %v1766 = vunpack.c.0.s8 %v1765
      %v1767 = vlaneseq
      %v1768 = vshrl.u32 %v1767, 7
      %v1769 = vsub.s32 %v1766, %v1768
      %v1770 = vrot.slane %v1756, %v1769
      %v1771 = vcombine.high %v1747, 0
      %v1772 = vcombine.high %v1754, 0
      %v1773 = vcombine.high %v1763, 0
      %v1774 = vcombine.high %v1770, 0
      %v1775 = vcombine.high %v1301, %v1262
      %v1777 = vunpack.c.l.s4 1983009808
      %v1778 = vunpack.c.0.s8 %v1777
      %v1779 = vlaneseq
      %v1780 = vshrl.u32 %v1779, 7
      %v1781 = vsub.s32 %v1778, %v1780
      %v1782 = vrot.slane %v1301, %v1781
      %v1784 = vunpack.c.l.s4 1983009808
      %v1785 = vunpack.c.0.s8 %v1784
      %v1786 = vlaneseq
      %v1787 = vshrl.u32 %v1786, 7
      %v1788 = vsub.s32 %v1785, %v1787
      %v1789 = vrot.slane %v1775, %v1788
      %v1790 = vcombine.high %v1309, %v1262
      %v1792 = vunpack.c.l.s4 1983009808
      %v1793 = vunpack.c.0.s8 %v1792
      %v1794 = vlaneseq
      %v1795 = vshrl.u32 %v1794, 7
      %v1796 = vsub.s32 %v1793, %v1795
      %v1797 = vrot.slane %v1309, %v1796
      %v1799 = vunpack.c.l.s4 1983009808
      %v1800 = vunpack.c.0.s8 %v1799
      %v1801 = vlaneseq
      %v1802 = vshrl.u32 %v1801, 7
      %v1803 = vsub.s32 %v1800, %v1802
      %v1804 = vrot.slane %v1790, %v1803
      %v1805 = vcombine.low %v1782, %v1797
      %v1806 = vcombine.high %v1782, %v1797
      %v1808 = vunpack.c.l.s4 1934713408
      %v1809 = vunpack.c.0.s8 %v1808
      %v1810 = vlaneseq
      %v1811 = vshrl.u32 %v1810, 7
      %v1812 = vsub.s32 %v1809, %v1811
      %v1813 = vrot.slane %v1805, %v1812
      %v1815 = vunpack.c.l.s4 1934713408
      %v1816 = vunpack.c.0.s8 %v1815
      %v1817 = vlaneseq
      %v1818 = vshrl.u32 %v1817, 7
      %v1819 = vsub.s32 %v1816, %v1818
      %v1820 = vrot.slane %v1806, %v1819
      %v1821 = vcombine.low %v1789, %v1804
      %v1822 = vcombine.high %v1789, %v1804
      %v1824 = vunpack.c.l.s4 1934713408
      %v1825 = vunpack.c.0.s8 %v1824
      %v1826 = vlaneseq
      %v1827 = vshrl.u32 %v1826, 7
      %v1828 = vsub.s32 %v1825, %v1827
      %v1829 = vrot.slane %v1821, %v1828
      %v1831 = vunpack.c.l.s4 1934713408
      %v1832 = vunpack.c.0.s8 %v1831
      %v1833 = vlaneseq
      %v1834 = vshrl.u32 %v1833, 7
      %v1835 = vsub.s32 %v1832, %v1834
      %v1836 = vrot.slane %v1822, %v1835
      %v1837 = vcombine.high %v1813, 0
      %v1838 = vcombine.high %v1820, 0
      %v1839 = vcombine.high %v1829, 0
      %v1840 = vcombine.high %v1836, 0
      %v1841 = vcombine.high %v1305, %v1265
      %v1843 = vunpack.c.l.s4 1983009808
      %v1844 = vunpack.c.0.s8 %v1843
      %v1845 = vlaneseq
      %v1846 = vshrl.u32 %v1845, 7
      %v1847 = vsub.s32 %v1844, %v1846
      %v1848 = vrot.slane %v1305, %v1847
      %v1850 = vunpack.c.l.s4 1983009808
      %v1851 = vunpack.c.0.s8 %v1850
      %v1852 = vlaneseq
      %v1853 = vshrl.u32 %v1852, 7
      %v1854 = vsub.s32 %v1851, %v1853
      %v1855 = vrot.slane %v1841, %v1854
      %v1856 = vcombine.high %v1313, %v1265
      %v1858 = vunpack.c.l.s4 1983009808
      %v1859 = vunpack.c.0.s8 %v1858
      %v1860 = vlaneseq
      %v1861 = vshrl.u32 %v1860, 7
      %v1862 = vsub.s32 %v1859, %v1861
      %v1863 = vrot.slane %v1313, %v1862
      %v1865 = vunpack.c.l.s4 1983009808
      %v1866 = vunpack.c.0.s8 %v1865
      %v1867 = vlaneseq
      %v1868 = vshrl.u32 %v1867, 7
      %v1869 = vsub.s32 %v1866, %v1868
      %v1870 = vrot.slane %v1856, %v1869
      %v1871 = vcombine.low %v1848, %v1863
      %v1872 = vcombine.high %v1848, %v1863
      %v1874 = vunpack.c.l.s4 1934713408
      %v1875 = vunpack.c.0.s8 %v1874
      %v1876 = vlaneseq
      %v1877 = vshrl.u32 %v1876, 7
      %v1878 = vsub.s32 %v1875, %v1877
      %v1879 = vrot.slane %v1871, %v1878
      %v1881 = vunpack.c.l.s4 1934713408
      %v1882 = vunpack.c.0.s8 %v1881
      %v1883 = vlaneseq
      %v1884 = vshrl.u32 %v1883, 7
      %v1885 = vsub.s32 %v1882, %v1884
      %v1886 = vrot.slane %v1872, %v1885
      %v1887 = vcombine.low %v1855, %v1870
      %v1888 = vcombine.high %v1855, %v1870
      %v1890 = vunpack.c.l.s4 1934713408
      %v1891 = vunpack.c.0.s8 %v1890
      %v1892 = vlaneseq
      %v1893 = vshrl.u32 %v1892, 7
      %v1894 = vsub.s32 %v1891, %v1893
      %v1895 = vrot.slane %v1887, %v1894
      %v1897 = vunpack.c.l.s4 1934713408
      %v1898 = vunpack.c.0.s8 %v1897
      %v1899 = vlaneseq
      %v1900 = vshrl.u32 %v1899, 7
      %v1901 = vsub.s32 %v1898, %v1900
      %v1902 = vrot.slane %v1888, %v1901
      %v1903 = vcombine.high %v1879, 0
      %v1904 = vcombine.high %v1886, 0
      %v1905 = vcombine.high %v1895, 0
      %v1906 = vcombine.high %v1902, 0
      %v1907 = vcombine.high %v1317, %v1262
      %v1909 = vunpack.c.l.s4 1983009808
      %v1910 = vunpack.c.0.s8 %v1909
      %v1911 = vlaneseq
      %v1912 = vshrl.u32 %v1911, 7
      %v1913 = vsub.s32 %v1910, %v1912
      %v1914 = vrot.slane %v1317, %v1913
      %v1916 = vunpack.c.l.s4 1983009808
      %v1917 = vunpack.c.0.s8 %v1916
      %v1918 = vlaneseq
      %v1919 = vshrl.u32 %v1918, 7
      %v1920 = vsub.s32 %v1917, %v1919
      %v1921 = vrot.slane %v1907, %v1920
      %v1922 = vcombine.high %v1325, %v1262
      %v1924 = vunpack.c.l.s4 1983009808
      %v1925 = vunpack.c.0.s8 %v1924
      %v1926 = vlaneseq
      %v1927 = vshrl.u32 %v1926, 7
      %v1928 = vsub.s32 %v1925, %v1927
      %v1929 = vrot.slane %v1325, %v1928
      %v1931 = vunpack.c.l.s4 1983009808
      %v1932 = vunpack.c.0.s8 %v1931
      %v1933 = vlaneseq
      %v1934 = vshrl.u32 %v1933, 7
      %v1935 = vsub.s32 %v1932, %v1934
      %v1936 = vrot.slane %v1922, %v1935
      %v1937 = vcombine.low %v1914, %v1929
      %v1938 = vcombine.high %v1914, %v1929
      %v1940 = vunpack.c.l.s4 1934713408
      %v1941 = vunpack.c.0.s8 %v1940
      %v1942 = vlaneseq
      %v1943 = vshrl.u32 %v1942, 7
      %v1944 = vsub.s32 %v1941, %v1943
      %v1945 = vrot.slane %v1937, %v1944
      %v1947 = vunpack.c.l.s4 1934713408
      %v1948 = vunpack.c.0.s8 %v1947
      %v1949 = vlaneseq
      %v1950 = vshrl.u32 %v1949, 7
      %v1951 = vsub.s32 %v1948, %v1950
      %v1952 = vrot.slane %v1938, %v1951
      %v1953 = vcombine.low %v1921, %v1936
      %v1954 = vcombine.high %v1921, %v1936
      %v1956 = vunpack.c.l.s4 1934713408
      %v1957 = vunpack.c.0.s8 %v1956
      %v1958 = vlaneseq
      %v1959 = vshrl.u32 %v1958, 7
      %v1960 = vsub.s32 %v1957, %v1959
      %v1961 = vrot.slane %v1953, %v1960
      %v1963 = vunpack.c.l.s4 1934713408
      %v1964 = vunpack.c.0.s8 %v1963
      %v1965 = vlaneseq
      %v1966 = vshrl.u32 %v1965, 7
      %v1967 = vsub.s32 %v1964, %v1966
      %v1968 = vrot.slane %v1954, %v1967
      %v1969 = vcombine.high %v1945, 0
      %v1970 = vcombine.high %v1952, 0
      %v1971 = vcombine.high %v1961, 0
      %v1972 = vcombine.high %v1968, 0
      %v1973 = vcombine.high %v1321, %v1265
      %v1975 = vunpack.c.l.s4 1983009808
      %v1976 = vunpack.c.0.s8 %v1975
      %v1977 = vlaneseq
      %v1978 = vshrl.u32 %v1977, 7
      %v1979 = vsub.s32 %v1976, %v1978
      %v1980 = vrot.slane %v1321, %v1979
      %v1982 = vunpack.c.l.s4 1983009808
      %v1983 = vunpack.c.0.s8 %v1982
      %v1984 = vlaneseq
      %v1985 = vshrl.u32 %v1984, 7
      %v1986 = vsub.s32 %v1983, %v1985
      %v1987 = vrot.slane %v1973, %v1986
      %v1988 = vcombine.high %v1329, %v1265
      %v1990 = vunpack.c.l.s4 1983009808
      %v1991 = vunpack.c.0.s8 %v1990
      %v1992 = vlaneseq
      %v1993 = vshrl.u32 %v1992, 7
      %v1994 = vsub.s32 %v1991, %v1993
      %v1995 = vrot.slane %v1329, %v1994
      %v1997 = vunpack.c.l.s4 1983009808
      %v1998 = vunpack.c.0.s8 %v1997
      %v1999 = vlaneseq
      %v2000 = vshrl.u32 %v1999, 7
      %v2001 = vsub.s32 %v1998, %v2000
      %v2002 = vrot.slane %v1988, %v2001
      %v2003 = vcombine.low %v1980, %v1995
      %v2004 = vcombine.high %v1980, %v1995
      %v2006 = vunpack.c.l.s4 1934713408
      %v2007 = vunpack.c.0.s8 %v2006
      %v2008 = vlaneseq
      %v2009 = vshrl.u32 %v2008, 7
      %v2010 = vsub.s32 %v2007, %v2009
      %v2011 = vrot.slane %v2003, %v2010
      %v2013 = vunpack.c.l.s4 1934713408
      %v2014 = vunpack.c.0.s8 %v2013
      %v2015 = vlaneseq
      %v2016 = vshrl.u32 %v2015, 7
      %v2017 = vsub.s32 %v2014, %v2016
      %v2018 = vrot.slane %v2004, %v2017
      %v2019 = vcombine.low %v1987, %v2002
      %v2020 = vcombine.high %v1987, %v2002
      %v2022 = vunpack.c.l.s4 1934713408
      %v2023 = vunpack.c.0.s8 %v2022
      %v2024 = vlaneseq
      %v2025 = vshrl.u32 %v2024, 7
      %v2026 = vsub.s32 %v2023, %v2025
      %v2027 = vrot.slane %v2019, %v2026
      %v2029 = vunpack.c.l.s4 1934713408
      %v2030 = vunpack.c.0.s8 %v2029
      %v2031 = vlaneseq
      %v2032 = vshrl.u32 %v2031, 7
      %v2033 = vsub.s32 %v2030, %v2032
      %v2034 = vrot.slane %v2020, %v2033
      %v2035 = vcombine.high %v2011, 0
      %v2036 = vcombine.high %v2018, 0
      %v2037 = vcombine.high %v2027, 0
      %v2038 = vcombine.high %v2034, 0
      %v2039 = vcombine.high %v1333, %v1262
      %v2041 = vunpack.c.l.s4 1983009808
      %v2042 = vunpack.c.0.s8 %v2041
      %v2043 = vlaneseq
      %v2044 = vshrl.u32 %v2043, 7
      %v2045 = vsub.s32 %v2042, %v2044
      %v2046 = vrot.slane %v1333, %v2045
      %v2048 = vunpack.c.l.s4 1983009808
      %v2049 = vunpack.c.0.s8 %v2048
      %v2050 = vlaneseq
      %v2051 = vshrl.u32 %v2050, 7
      %v2052 = vsub.s32 %v2049, %v2051
      %v2053 = vrot.slane %v2039, %v2052
      %v2054 = vcombine.high %v1341, %v1262
      %v2056 = vunpack.c.l.s4 1983009808
      %v2057 = vunpack.c.0.s8 %v2056
      %v2058 = vlaneseq
      %v2059 = vshrl.u32 %v2058, 7
      %v2060 = vsub.s32 %v2057, %v2059
      %v2061 = vrot.slane %v1341, %v2060
      %v2063 = vunpack.c.l.s4 1983009808
      %v2064 = vunpack.c.0.s8 %v2063
      %v2065 = vlaneseq
      %v2066 = vshrl.u32 %v2065, 7
      %v2067 = vsub.s32 %v2064, %v2066
      %v2068 = vrot.slane %v2054, %v2067
      %v2069 = vcombine.low %v2046, %v2061
      %v2070 = vcombine.high %v2046, %v2061
      %v2072 = vunpack.c.l.s4 1934713408
      %v2073 = vunpack.c.0.s8 %v2072
      %v2074 = vlaneseq
      %v2075 = vshrl.u32 %v2074, 7
      %v2076 = vsub.s32 %v2073, %v2075
      %v2077 = vrot.slane %v2069, %v2076
      %v2079 = vunpack.c.l.s4 1934713408
      %v2080 = vunpack.c.0.s8 %v2079
      %v2081 = vlaneseq
      %v2082 = vshrl.u32 %v2081, 7
      %v2083 = vsub.s32 %v2080, %v2082
      %v2084 = vrot.slane %v2070, %v2083
      %v2085 = vcombine.low %v2053, %v2068
      %v2086 = vcombine.high %v2053, %v2068
      %v2088 = vunpack.c.l.s4 1934713408
      %v2089 = vunpack.c.0.s8 %v2088
      %v2090 = vlaneseq
      %v2091 = vshrl.u32 %v2090, 7
      %v2092 = vsub.s32 %v2089, %v2091
      %v2093 = vrot.slane %v2085, %v2092
      %v2095 = vunpack.c.l.s4 1934713408
      %v2096 = vunpack.c.0.s8 %v2095
      %v2097 = vlaneseq
      %v2098 = vshrl.u32 %v2097, 7
      %v2099 = vsub.s32 %v2096, %v2098
      %v2100 = vrot.slane %v2086, %v2099
      %v2101 = vcombine.high %v2077, 0
      %v2102 = vcombine.high %v2084, 0
      %v2103 = vcombine.high %v2093, 0
      %v2104 = vcombine.high %v2100, 0
      %v2105 = vcombine.high %v1337, %v1265
      %v2107 = vunpack.c.l.s4 1983009808
      %v2108 = vunpack.c.0.s8 %v2107
      %v2109 = vlaneseq
      %v2110 = vshrl.u32 %v2109, 7
      %v2111 = vsub.s32 %v2108, %v2110
      %v2112 = vrot.slane %v1337, %v2111
      %v2114 = vunpack.c.l.s4 1983009808
      %v2115 = vunpack.c.0.s8 %v2114
      %v2116 = vlaneseq
      %v2117 = vshrl.u32 %v2116, 7
      %v2118 = vsub.s32 %v2115, %v2117
      %v2119 = vrot.slane %v2105, %v2118
      %v2120 = vcombine.high %v1345, %v1265
      %v2122 = vunpack.c.l.s4 1983009808
      %v2123 = vunpack.c.0.s8 %v2122
      %v2124 = vlaneseq
      %v2125 = vshrl.u32 %v2124, 7
      %v2126 = vsub.s32 %v2123, %v2125
      %v2127 = vrot.slane %v1345, %v2126
      %v2129 = vunpack.c.l.s4 1983009808
      %v2130 = vunpack.c.0.s8 %v2129
      %v2131 = vlaneseq
      %v2132 = vshrl.u32 %v2131, 7
      %v2133 = vsub.s32 %v2130, %v2132
      %v2134 = vrot.slane %v2120, %v2133
      %v2135 = vcombine.low %v2112, %v2127
      %v2136 = vcombine.high %v2112, %v2127
      %v2138 = vunpack.c.l.s4 1934713408
      %v2139 = vunpack.c.0.s8 %v2138
      %v2140 = vlaneseq
      %v2141 = vshrl.u32 %v2140, 7
      %v2142 = vsub.s32 %v2139, %v2141
      %v2143 = vrot.slane %v2135, %v2142
      %v2145 = vunpack.c.l.s4 1934713408
      %v2146 = vunpack.c.0.s8 %v2145
      %v2147 = vlaneseq
      %v2148 = vshrl.u32 %v2147, 7
      %v2149 = vsub.s32 %v2146, %v2148
      %v2150 = vrot.slane %v2136, %v2149
      %v2151 = vcombine.low %v2119, %v2134
      %v2152 = vcombine.high %v2119, %v2134
      %v2154 = vunpack.c.l.s4 1934713408
      %v2155 = vunpack.c.0.s8 %v2154
      %v2156 = vlaneseq
      %v2157 = vshrl.u32 %v2156, 7
      %v2158 = vsub.s32 %v2155, %v2157
      %v2159 = vrot.slane %v2151, %v2158
      %v2161 = vunpack.c.l.s4 1934713408
      %v2162 = vunpack.c.0.s8 %v2161
      %v2163 = vlaneseq
      %v2164 = vshrl.u32 %v2163, 7
      %v2165 = vsub.s32 %v2162, %v2164
      %v2166 = vrot.slane %v2152, %v2165
      %v2167 = vcombine.high %v2143, 0
      %v2168 = vcombine.high %v2150, 0
      %v2169 = vcombine.high %v2159, 0
      %v2170 = vcombine.high %v2166, 0
      %v2171 = vcombine.high %v1349, %v1262
      %v2173 = vunpack.c.l.s4 1983009808
      %v2174 = vunpack.c.0.s8 %v2173
      %v2175 = vlaneseq
      %v2176 = vshrl.u32 %v2175, 7
      %v2177 = vsub.s32 %v2174, %v2176
      %v2178 = vrot.slane %v1349, %v2177
      %v2180 = vunpack.c.l.s4 1983009808
      %v2181 = vunpack.c.0.s8 %v2180
      %v2182 = vlaneseq
      %v2183 = vshrl.u32 %v2182, 7
      %v2184 = vsub.s32 %v2181, %v2183
      %v2185 = vrot.slane %v2171, %v2184
      %v2186 = vcombine.high %v1357, %v1262
      %v2188 = vunpack.c.l.s4 1983009808
      %v2189 = vunpack.c.0.s8 %v2188
      %v2190 = vlaneseq
      %v2191 = vshrl.u32 %v2190, 7
      %v2192 = vsub.s32 %v2189, %v2191
      %v2193 = vrot.slane %v1357, %v2192
      %v2195 = vunpack.c.l.s4 1983009808
      %v2196 = vunpack.c.0.s8 %v2195
      %v2197 = vlaneseq
      %v2198 = vshrl.u32 %v2197, 7
      %v2199 = vsub.s32 %v2196, %v2198
      %v2200 = vrot.slane %v2186, %v2199
      %v2201 = vcombine.low %v2178, %v2193
      %v2202 = vcombine.high %v2178, %v2193
      %v2204 = vunpack.c.l.s4 1934713408
      %v2205 = vunpack.c.0.s8 %v2204
      %v2206 = vlaneseq
      %v2207 = vshrl.u32 %v2206, 7
      %v2208 = vsub.s32 %v2205, %v2207
      %v2209 = vrot.slane %v2201, %v2208
      %v2211 = vunpack.c.l.s4 1934713408
      %v2212 = vunpack.c.0.s8 %v2211
      %v2213 = vlaneseq
      %v2214 = vshrl.u32 %v2213, 7
      %v2215 = vsub.s32 %v2212, %v2214
      %v2216 = vrot.slane %v2202, %v2215
      %v2217 = vcombine.low %v2185, %v2200
      %v2218 = vcombine.high %v2185, %v2200
      %v2220 = vunpack.c.l.s4 1934713408
      %v2221 = vunpack.c.0.s8 %v2220
      %v2222 = vlaneseq
      %v2223 = vshrl.u32 %v2222, 7
      %v2224 = vsub.s32 %v2221, %v2223
      %v2225 = vrot.slane %v2217, %v2224
      %v2227 = vunpack.c.l.s4 1934713408
      %v2228 = vunpack.c.0.s8 %v2227
      %v2229 = vlaneseq
      %v2230 = vshrl.u32 %v2229, 7
      %v2231 = vsub.s32 %v2228, %v2230
      %v2232 = vrot.slane %v2218, %v2231
      %v2233 = vcombine.high %v2209, 0
      %v2234 = vcombine.high %v2216, 0
      %v2235 = vcombine.high %v2225, 0
      %v2236 = vcombine.high %v2232, 0
      %v2237 = vcombine.high %v1353, %v1265
      %v2239 = vunpack.c.l.s4 1983009808
      %v2240 = vunpack.c.0.s8 %v2239
      %v2241 = vlaneseq
      %v2242 = vshrl.u32 %v2241, 7
      %v2243 = vsub.s32 %v2240, %v2242
      %v2244 = vrot.slane %v1353, %v2243
      %v2246 = vunpack.c.l.s4 1983009808
      %v2247 = vunpack.c.0.s8 %v2246
      %v2248 = vlaneseq
      %v2249 = vshrl.u32 %v2248, 7
      %v2250 = vsub.s32 %v2247, %v2249
      %v2251 = vrot.slane %v2237, %v2250
      %v2252 = vcombine.high %v1361, %v1265
      %v2254 = vunpack.c.l.s4 1983009808
      %v2255 = vunpack.c.0.s8 %v2254
      %v2256 = vlaneseq
      %v2257 = vshrl.u32 %v2256, 7
      %v2258 = vsub.s32 %v2255, %v2257
      %v2259 = vrot.slane %v1361, %v2258
      %v2261 = vunpack.c.l.s4 1983009808
      %v2262 = vunpack.c.0.s8 %v2261
      %v2263 = vlaneseq
      %v2264 = vshrl.u32 %v2263, 7
      %v2265 = vsub.s32 %v2262, %v2264
      %v2266 = vrot.slane %v2252, %v2265
      %v2267 = vcombine.low %v2244, %v2259
      %v2268 = vcombine.high %v2244, %v2259
      %v2270 = vunpack.c.l.s4 1934713408
      %v2271 = vunpack.c.0.s8 %v2270
      %v2272 = vlaneseq
      %v2273 = vshrl.u32 %v2272, 7
      %v2274 = vsub.s32 %v2271, %v2273
      %v2275 = vrot.slane %v2267, %v2274
      %v2277 = vunpack.c.l.s4 1934713408
      %v2278 = vunpack.c.0.s8 %v2277
      %v2279 = vlaneseq
      %v2280 = vshrl.u32 %v2279, 7
      %v2281 = vsub.s32 %v2278, %v2280
      %v2282 = vrot.slane %v2268, %v2281
      %v2283 = vcombine.low %v2251, %v2266
      %v2284 = vcombine.high %v2251, %v2266
      %v2286 = vunpack.c.l.s4 1934713408
      %v2287 = vunpack.c.0.s8 %v2286
      %v2288 = vlaneseq
      %v2289 = vshrl.u32 %v2288, 7
      %v2290 = vsub.s32 %v2287, %v2289
      %v2291 = vrot.slane %v2283, %v2290
      %v2293 = vunpack.c.l.s4 1934713408
      %v2294 = vunpack.c.0.s8 %v2293
      %v2295 = vlaneseq
      %v2296 = vshrl.u32 %v2295, 7
      %v2297 = vsub.s32 %v2294, %v2296
      %v2298 = vrot.slane %v2284, %v2297
      %v2299 = vcombine.high %v2275, 0
      %v2300 = vcombine.high %v2282, 0
      %v2301 = vcombine.high %v2291, 0
      %v2302 = vcombine.high %v2298, 0
      %v2303 = vcombine.high %v1365, %v1262
      %v2305 = vunpack.c.l.s4 1983009808
      %v2306 = vunpack.c.0.s8 %v2305
      %v2307 = vlaneseq
      %v2308 = vshrl.u32 %v2307, 7
      %v2309 = vsub.s32 %v2306, %v2308
      %v2310 = vrot.slane %v1365, %v2309
      %v2312 = vunpack.c.l.s4 1983009808
      %v2313 = vunpack.c.0.s8 %v2312
      %v2314 = vlaneseq
      %v2315 = vshrl.u32 %v2314, 7
      %v2316 = vsub.s32 %v2313, %v2315
      %v2317 = vrot.slane %v2303, %v2316
      %v2318 = vcombine.high %v1373, %v1262
      %v2320 = vunpack.c.l.s4 1983009808
      %v2321 = vunpack.c.0.s8 %v2320
      %v2322 = vlaneseq
      %v2323 = vshrl.u32 %v2322, 7
      %v2324 = vsub.s32 %v2321, %v2323
      %v2325 = vrot.slane %v1373, %v2324
      %v2327 = vunpack.c.l.s4 1983009808
      %v2328 = vunpack.c.0.s8 %v2327
      %v2329 = vlaneseq
      %v2330 = vshrl.u32 %v2329, 7
      %v2331 = vsub.s32 %v2328, %v2330
      %v2332 = vrot.slane %v2318, %v2331
      %v2333 = vcombine.low %v2310, %v2325
      %v2334 = vcombine.high %v2310, %v2325
      %v2336 = vunpack.c.l.s4 1934713408
      %v2337 = vunpack.c.0.s8 %v2336
      %v2338 = vlaneseq
      %v2339 = vshrl.u32 %v2338, 7
      %v2340 = vsub.s32 %v2337, %v2339
      %v2341 = vrot.slane %v2333, %v2340
      %v2343 = vunpack.c.l.s4 1934713408
      %v2344 = vunpack.c.0.s8 %v2343
      %v2345 = vlaneseq
      %v2346 = vshrl.u32 %v2345, 7
      %v2347 = vsub.s32 %v2344, %v2346
      %v2348 = vrot.slane %v2334, %v2347
      %v2349 = vcombine.low %v2317, %v2332
      %v2350 = vcombine.high %v2317, %v2332
      %v2352 = vunpack.c.l.s4 1934713408
      %v2353 = vunpack.c.0.s8 %v2352
      %v2354 = vlaneseq
      %v2355 = vshrl.u32 %v2354, 7
      %v2356 = vsub.s32 %v2353, %v2355
      %v2357 = vrot.slane %v2349, %v2356
      %v2359 = vunpack.c.l.s4 1934713408
      %v2360 = vunpack.c.0.s8 %v2359
      %v2361 = vlaneseq
      %v2362 = vshrl.u32 %v2361, 7
      %v2363 = vsub.s32 %v2360, %v2362
      %v2364 = vrot.slane %v2350, %v2363
      %v2365 = vcombine.high %v2341, 0
      %v2366 = vcombine.high %v2348, 0
      %v2367 = vcombine.high %v2357, 0
      %v2368 = vcombine.high %v2364, 0
      %v2369 = vcombine.high %v1369, %v1265
      %v2371 = vunpack.c.l.s4 1983009808
      %v2372 = vunpack.c.0.s8 %v2371
      %v2373 = vlaneseq
      %v2374 = vshrl.u32 %v2373, 7
      %v2375 = vsub.s32 %v2372, %v2374
      %v2376 = vrot.slane %v1369, %v2375
      %v2378 = vunpack.c.l.s4 1983009808
      %v2379 = vunpack.c.0.s8 %v2378
      %v2380 = vlaneseq
      %v2381 = vshrl.u32 %v2380, 7
      %v2382 = vsub.s32 %v2379, %v2381
      %v2383 = vrot.slane %v2369, %v2382
      %v2384 = vcombine.high %v1377, %v1265
      %v2386 = vunpack.c.l.s4 1983009808
      %v2387 = vunpack.c.0.s8 %v2386
      %v2388 = vlaneseq
      %v2389 = vshrl.u32 %v2388, 7
      %v2390 = vsub.s32 %v2387, %v2389
      %v2391 = vrot.slane %v1377, %v2390
      %v2393 = vunpack.c.l.s4 1983009808
      %v2394 = vunpack.c.0.s8 %v2393
      %v2395 = vlaneseq
      %v2396 = vshrl.u32 %v2395, 7
      %v2397 = vsub.s32 %v2394, %v2396
      %v2398 = vrot.slane %v2384, %v2397
      %v2399 = vcombine.low %v2376, %v2391
      %v2400 = vcombine.high %v2376, %v2391
      %v2402 = vunpack.c.l.s4 1934713408
      %v2403 = vunpack.c.0.s8 %v2402
      %v2404 = vlaneseq
      %v2405 = vshrl.u32 %v2404, 7
      %v2406 = vsub.s32 %v2403, %v2405
      %v2407 = vrot.slane %v2399, %v2406
      %v2409 = vunpack.c.l.s4 1934713408
      %v2410 = vunpack.c.0.s8 %v2409
      %v2411 = vlaneseq
      %v2412 = vshrl.u32 %v2411, 7
      %v2413 = vsub.s32 %v2410, %v2412
      %v2414 = vrot.slane %v2400, %v2413
      %v2415 = vcombine.low %v2383, %v2398
      %v2416 = vcombine.high %v2383, %v2398
      %v2418 = vunpack.c.l.s4 1934713408
      %v2419 = vunpack.c.0.s8 %v2418
      %v2420 = vlaneseq
      %v2421 = vshrl.u32 %v2420, 7
      %v2422 = vsub.s32 %v2419, %v2421
      %v2423 = vrot.slane %v2415, %v2422
      %v2425 = vunpack.c.l.s4 1934713408
      %v2426 = vunpack.c.0.s8 %v2425
      %v2427 = vlaneseq
      %v2428 = vshrl.u32 %v2427, 7
      %v2429 = vsub.s32 %v2426, %v2428
      %v2430 = vrot.slane %v2416, %v2429
      %v2431 = vcombine.high %v2407, 0
      %v2432 = vcombine.high %v2414, 0
      %v2433 = vcombine.high %v2423, 0
      %v2434 = vcombine.high %v2430, 0
      %v2435 = vcombine.low %v1417, %v1424
      %v2437 = vunpack.c.l.s4 1983009808
      %v2438 = vunpack.c.0.s8 %v2437
      %v2439 = vlaneseq
      %v2440 = vshrl.u32 %v2439, 7
      %v2441 = vsub.s32 %v2438, %v2440
      %v2442 = vrot.slane %v2435, %v2441
      %v2443 = vcombine.low %v1441, %v1442
      %v2445 = vunpack.c.l.s4 1983009808
      %v2446 = vunpack.c.0.s8 %v2445
      %v2447 = vlaneseq
      %v2448 = vshrl.u32 %v2447, 7
      %v2449 = vsub.s32 %v2446, %v2448
      %v2450 = vrot.slane %v2443, %v2449
      %v2451 = vcombine.low %v1433, %v1440
      %v2453 = vunpack.c.l.s4 1983009808
      %v2454 = vunpack.c.0.s8 %v2453
      %v2455 = vlaneseq
      %v2456 = vshrl.u32 %v2455, 7
      %v2457 = vsub.s32 %v2454, %v2456
      %v2458 = vrot.slane %v2451, %v2457
      %v2459 = vcombine.low %v1443, %v1444
      %v2461 = vunpack.c.l.s4 1983009808
      %v2462 = vunpack.c.0.s8 %v2461
      %v2463 = vlaneseq
      %v2464 = vshrl.u32 %v2463, 7
      %v2465 = vsub.s32 %v2462, %v2464
      %v2466 = vrot.slane %v2459, %v2465
      %v2467 = vcombine.low %v2442, %v2450
      %v2469 = vunpack.c.l.s4 1934713408
      %v2470 = vunpack.c.0.s8 %v2469
      %v2471 = vlaneseq
      %v2472 = vshrl.u32 %v2471, 7
      %v2473 = vsub.s32 %v2470, %v2472
      %v2474 = vrot.slane %v2467, %v2473
      %v2475 = vcombine.low %v2458, %v2466
      %v2477 = vunpack.c.l.s4 1934713408
      %v2478 = vunpack.c.0.s8 %v2477
      %v2479 = vlaneseq
      %v2480 = vshrl.u32 %v2479, 7
      %v2481 = vsub.s32 %v2478, %v2480
      %v2482 = vrot.slane %v2475, %v2481
      %v2483 = vcombine.low %v2474, %v2482
      %v2484 = vcombine.high %v2474, %v2482
      %v2485 = vcombine.low %v1483, %v1490
      %v2487 = vunpack.c.l.s4 1983009808
      %v2488 = vunpack.c.0.s8 %v2487
      %v2489 = vlaneseq
      %v2490 = vshrl.u32 %v2489, 7
      %v2491 = vsub.s32 %v2488, %v2490
      %v2492 = vrot.slane %v2485, %v2491
      %v2493 = vcombine.low %v1507, %v1508
      %v2495 = vunpack.c.l.s4 1983009808
      %v2496 = vunpack.c.0.s8 %v2495
      %v2497 = vlaneseq
      %v2498 = vshrl.u32 %v2497, 7
      %v2499 = vsub.s32 %v2496, %v2498
      %v2500 = vrot.slane %v2493, %v2499
      %v2501 = vcombine.low %v1499, %v1506
      %v2503 = vunpack.c.l.s4 1983009808
      %v2504 = vunpack.c.0.s8 %v2503
      %v2505 = vlaneseq
      %v2506 = vshrl.u32 %v2505, 7
      %v2507 = vsub.s32 %v2504, %v2506
      %v2508 = vrot.slane %v2501, %v2507
      %v2509 = vcombine.low %v1509, %v1510
      %v2511 = vunpack.c.l.s4 1983009808
      %v2512 = vunpack.c.0.s8 %v2511
      %v2513 = vlaneseq
      %v2514 = vshrl.u32 %v2513, 7
      %v2515 = vsub.s32 %v2512, %v2514
      %v2516 = vrot.slane %v2509, %v2515
      %v2517 = vcombine.low %v2492, %v2500
      %v2519 = vunpack.c.l.s4 1934713408
      %v2520 = vunpack.c.0.s8 %v2519
      %v2521 = vlaneseq
      %v2522 = vshrl.u32 %v2521, 7
      %v2523 = vsub.s32 %v2520, %v2522
      %v2524 = vrot.slane %v2517, %v2523
      %v2525 = vcombine.low %v2508, %v2516
      %v2527 = vunpack.c.l.s4 1934713408
      %v2528 = vunpack.c.0.s8 %v2527
      %v2529 = vlaneseq
      %v2530 = vshrl.u32 %v2529, 7
      %v2531 = vsub.s32 %v2528, %v2530
      %v2532 = vrot.slane %v2525, %v2531
      %v2533 = vcombine.low %v2524, %v2532
      %v2534 = vcombine.high %v2524, %v2532
      %v2535 = vcombine.low %v1549, %v1556
      %v2537 = vunpack.c.l.s4 1983009808
      %v2538 = vunpack.c.0.s8 %v2537
      %v2539 = vlaneseq
      %v2540 = vshrl.u32 %v2539, 7
      %v2541 = vsub.s32 %v2538, %v2540
      %v2542 = vrot.slane %v2535, %v2541
      %v2543 = vcombine.low %v1573, %v1574
      %v2545 = vunpack.c.l.s4 1983009808
      %v2546 = vunpack.c.0.s8 %v2545
      %v2547 = vlaneseq
      %v2548 = vshrl.u32 %v2547, 7
      %v2549 = vsub.s32 %v2546, %v2548
      %v2550 = vrot.slane %v2543, %v2549
      %v2551 = vcombine.low %v1565, %v1572
      %v2553 = vunpack.c.l.s4 1983009808
      %v2554 = vunpack.c.0.s8 %v2553
      %v2555 = vlaneseq
      %v2556 = vshrl.u32 %v2555, 7
      %v2557 = vsub.s32 %v2554, %v2556
      %v2558 = vrot.slane %v2551, %v2557
      %v2559 = vcombine.low %v1575, %v1576
      %v2561 = vunpack.c.l.s4 1983009808
      %v2562 = vunpack.c.0.s8 %v2561
      %v2563 = vlaneseq
      %v2564 = vshrl.u32 %v2563, 7
      %v2565 = vsub.s32 %v2562, %v2564
      %v2566 = vrot.slane %v2559, %v2565
      %v2567 = vcombine.low %v2542, %v2550
      %v2569 = vunpack.c.l.s4 1934713408
      %v2570 = vunpack.c.0.s8 %v2569
      %v2571 = vlaneseq
      %v2572 = vshrl.u32 %v2571, 7
      %v2573 = vsub.s32 %v2570, %v2572
      %v2574 = vrot.slane %v2567, %v2573
      %v2575 = vcombine.low %v2558, %v2566
      %v2577 = vunpack.c.l.s4 1934713408
      %v2578 = vunpack.c.0.s8 %v2577
      %v2579 = vlaneseq
      %v2580 = vshrl.u32 %v2579, 7
      %v2581 = vsub.s32 %v2578, %v2580
      %v2582 = vrot.slane %v2575, %v2581
      %v2583 = vcombine.low %v2574, %v2582
      %v2584 = vcombine.high %v2574, %v2582
      %v2585 = vcombine.low %v1615, %v1622
      %v2587 = vunpack.c.l.s4 1983009808
      %v2588 = vunpack.c.0.s8 %v2587
      %v2589 = vlaneseq
      %v2590 = vshrl.u32 %v2589, 7
      %v2591 = vsub.s32 %v2588, %v2590
      %v2592 = vrot.slane %v2585, %v2591
      %v2593 = vcombine.low %v1639, %v1640
      %v2595 = vunpack.c.l.s4 1983009808
      %v2596 = vunpack.c.0.s8 %v2595
      %v2597 = vlaneseq
      %v2598 = vshrl.u32 %v2597, 7
      %v2599 = vsub.s32 %v2596, %v2598
      %v2600 = vrot.slane %v2593, %v2599
      %v2601 = vcombine.low %v1631, %v1638
      %v2603 = vunpack.c.l.s4 1983009808
      %v2604 = vunpack.c.0.s8 %v2603
      %v2605 = vlaneseq
      %v2606 = vshrl.u32 %v2605, 7
      %v2607 = vsub.s32 %v2604, %v2606
      %v2608 = vrot.slane %v2601, %v2607
      %v2609 = vcombine.low %v1641, %v1642
      %v2611 = vunpack.c.l.s4 1983009808
      %v2612 = vunpack.c.0.s8 %v2611
      %v2613 = vlaneseq
      %v2614 = vshrl.u32 %v2613, 7
      %v2615 = vsub.s32 %v2612, %v2614
      %v2616 = vrot.slane %v2609, %v2615
      %v2617 = vcombine.low %v2592, %v2600
      %v2619 = vunpack.c.l.s4 1934713408
      %v2620 = vunpack.c.0.s8 %v2619
      %v2621 = vlaneseq
      %v2622 = vshrl.u32 %v2621, 7
      %v2623 = vsub.s32 %v2620, %v2622
      %v2624 = vrot.slane %v2617, %v2623
      %v2625 = vcombine.low %v2608, %v2616
      %v2627 = vunpack.c.l.s4 1934713408
      %v2628 = vunpack.c.0.s8 %v2627
      %v2629 = vlaneseq
      %v2630 = vshrl.u32 %v2629, 7
      %v2631 = vsub.s32 %v2628, %v2630
      %v2632 = vrot.slane %v2625, %v2631
      %v2633 = vcombine.low %v2624, %v2632
      %v2634 = vcombine.high %v2624, %v2632
      %v2635 = vcombine.low %v1681, %v1688
      %v2637 = vunpack.c.l.s4 1983009808
      %v2638 = vunpack.c.0.s8 %v2637
      %v2639 = vlaneseq
      %v2640 = vshrl.u32 %v2639, 7
      %v2641 = vsub.s32 %v2638, %v2640
      %v2642 = vrot.slane %v2635, %v2641
      %v2643 = vcombine.low %v1705, %v1706
      %v2645 = vunpack.c.l.s4 1983009808
      %v2646 = vunpack.c.0.s8 %v2645
      %v2647 = vlaneseq
      %v2648 = vshrl.u32 %v2647, 7
      %v2649 = vsub.s32 %v2646, %v2648
      %v2650 = vrot.slane %v2643, %v2649
      %v2651 = vcombine.low %v1697, %v1704
      %v2653 = vunpack.c.l.s4 1983009808
      %v2654 = vunpack.c.0.s8 %v2653
      %v2655 = vlaneseq
      %v2656 = vshrl.u32 %v2655, 7
      %v2657 = vsub.s32 %v2654, %v2656
      %v2658 = vrot.slane %v2651, %v2657
      %v2659 = vcombine.low %v1707, %v1708
      %v2661 = vunpack.c.l.s4 1983009808
      %v2662 = vunpack.c.0.s8 %v2661
      %v2663 = vlaneseq
      %v2664 = vshrl.u32 %v2663, 7
      %v2665 = vsub.s32 %v2662, %v2664
      %v2666 = vrot.slane %v2659, %v2665
      %v2667 = vcombine.low %v2642, %v2650
      %v2669 = vunpack.c.l.s4 1934713408
      %v2670 = vunpack.c.0.s8 %v2669
      %v2671 = vlaneseq
      %v2672 = vshrl.u32 %v2671, 7
      %v2673 = vsub.s32 %v2670, %v2672
      %v2674 = vrot.slane %v2667, %v2673
      %v2675 = vcombine.low %v2658, %v2666
      %v2677 = vunpack.c.l.s4 1934713408
      %v2678 = vunpack.c.0.s8 %v2677
      %v2679 = vlaneseq
      %v2680 = vshrl.u32 %v2679, 7
      %v2681 = vsub.s32 %v2678, %v2680
      %v2682 = vrot.slane %v2675, %v2681
      %v2683 = vcombine.low %v2674, %v2682
      %v2684 = vcombine.high %v2674, %v2682
      %v2685 = vcombine.low %v1747, %v1754
      %v2687 = vunpack.c.l.s4 1983009808
      %v2688 = vunpack.c.0.s8 %v2687
      %v2689 = vlaneseq
      %v2690 = vshrl.u32 %v2689, 7
      %v2691 = vsub.s32 %v2688, %v2690
      %v2692 = vrot.slane %v2685, %v2691
      %v2693 = vcombine.low %v1771, %v1772
      %v2695 = vunpack.c.l.s4 1983009808
      %v2696 = vunpack.c.0.s8 %v2695
      %v2697 = vlaneseq
      %v2698 = vshrl.u32 %v2697, 7
      %v2699 = vsub.s32 %v2696, %v2698
      %v2700 = vrot.slane %v2693, %v2699
      %v2701 = vcombine.low %v1763, %v1770
      %v2703 = vunpack.c.l.s4 1983009808
      %v2704 = vunpack.c.0.s8 %v2703
      %v2705 = vlaneseq
      %v2706 = vshrl.u32 %v2705, 7
      %v2707 = vsub.s32 %v2704, %v2706
      %v2708 = vrot.slane %v2701, %v2707
      %v2709 = vcombine.low %v1773, %v1774
      %v2711 = vunpack.c.l.s4 1983009808
      %v2712 = vunpack.c.0.s8 %v2711
      %v2713 = vlaneseq
      %v2714 = vshrl.u32 %v2713, 7
      %v2715 = vsub.s32 %v2712, %v2714
      %v2716 = vrot.slane %v2709, %v2715
      %v2717 = vcombine.low %v2692, %v2700
      %v2719 = vunpack.c.l.s4 1934713408
      %v2720 = vunpack.c.0.s8 %v2719
      %v2721 = vlaneseq
      %v2722 = vshrl.u32 %v2721, 7
      %v2723 = vsub.s32 %v2720, %v2722
      %v2724 = vrot.slane %v2717, %v2723
      %v2725 = vcombine.low %v2708, %v2716
      %v2727 = vunpack.c.l.s4 1934713408
      %v2728 = vunpack.c.0.s8 %v2727
      %v2729 = vlaneseq
      %v2730 = vshrl.u32 %v2729, 7
      %v2731 = vsub.s32 %v2728, %v2730
      %v2732 = vrot.slane %v2725, %v2731
      %v2733 = vcombine.low %v2724, %v2732
      %v2734 = vcombine.high %v2724, %v2732
      %v2735 = vcombine.low %v1813, %v1820
      %v2737 = vunpack.c.l.s4 1983009808
      %v2738 = vunpack.c.0.s8 %v2737
      %v2739 = vlaneseq
      %v2740 = vshrl.u32 %v2739, 7
      %v2741 = vsub.s32 %v2738, %v2740
      %v2742 = vrot.slane %v2735, %v2741
      %v2743 = vcombine.low %v1837, %v1838
      %v2745 = vunpack.c.l.s4 1983009808
      %v2746 = vunpack.c.0.s8 %v2745
      %v2747 = vlaneseq
      %v2748 = vshrl.u32 %v2747, 7
      %v2749 = vsub.s32 %v2746, %v2748
      %v2750 = vrot.slane %v2743, %v2749
      %v2751 = vcombine.low %v1829, %v1836
      %v2753 = vunpack.c.l.s4 1983009808
      %v2754 = vunpack.c.0.s8 %v2753
      %v2755 = vlaneseq
      %v2756 = vshrl.u32 %v2755, 7
      %v2757 = vsub.s32 %v2754, %v2756
      %v2758 = vrot.slane %v2751, %v2757
      %v2759 = vcombine.low %v1839, %v1840
      %v2761 = vunpack.c.l.s4 1983009808
      %v2762 = vunpack.c.0.s8 %v2761
      %v2763 = vlaneseq
      %v2764 = vshrl.u32 %v2763, 7
      %v2765 = vsub.s32 %v2762, %v2764
      %v2766 = vrot.slane %v2759, %v2765
      %v2767 = vcombine.low %v2742, %v2750
      %v2769 = vunpack.c.l.s4 1934713408
      %v2770 = vunpack.c.0.s8 %v2769
      %v2771 = vlaneseq
      %v2772 = vshrl.u32 %v2771, 7
      %v2773 = vsub.s32 %v2770, %v2772
      %v2774 = vrot.slane %v2767, %v2773
      %v2775 = vcombine.low %v2758, %v2766
      %v2777 = vunpack.c.l.s4 1934713408
      %v2778 = vunpack.c.0.s8 %v2777
      %v2779 = vlaneseq
      %v2780 = vshrl.u32 %v2779, 7
      %v2781 = vsub.s32 %v2778, %v2780
      %v2782 = vrot.slane %v2775, %v2781
      %v2783 = vcombine.low %v2774, %v2782
      %v2784 = vcombine.high %v2774, %v2782
      %v2785 = vcombine.low %v1879, %v1886
      %v2787 = vunpack.c.l.s4 1983009808
      %v2788 = vunpack.c.0.s8 %v2787
      %v2789 = vlaneseq
      %v2790 = vshrl.u32 %v2789, 7
      %v2791 = vsub.s32 %v2788, %v2790
      %v2792 = vrot.slane %v2785, %v2791
      %v2793 = vcombine.low %v1903, %v1904
      %v2795 = vunpack.c.l.s4 1983009808
      %v2796 = vunpack.c.0.s8 %v2795
      %v2797 = vlaneseq
      %v2798 = vshrl.u32 %v2797, 7
      %v2799 = vsub.s32 %v2796, %v2798
      %v2800 = vrot.slane %v2793, %v2799
      %v2801 = vcombine.low %v1895, %v1902
      %v2803 = vunpack.c.l.s4 1983009808
      %v2804 = vunpack.c.0.s8 %v2803
      %v2805 = vlaneseq
      %v2806 = vshrl.u32 %v2805, 7
      %v2807 = vsub.s32 %v2804, %v2806
      %v2808 = vrot.slane %v2801, %v2807
      %v2809 = vcombine.low %v1905, %v1906
      %v2811 = vunpack.c.l.s4 1983009808
      %v2812 = vunpack.c.0.s8 %v2811
      %v2813 = vlaneseq
      %v2814 = vshrl.u32 %v2813, 7
      %v2815 = vsub.s32 %v2812, %v2814
      %v2816 = vrot.slane %v2809, %v2815
      %v2817 = vcombine.low %v2792, %v2800
      %v2819 = vunpack.c.l.s4 1934713408
      %v2820 = vunpack.c.0.s8 %v2819
      %v2821 = vlaneseq
      %v2822 = vshrl.u32 %v2821, 7
      %v2823 = vsub.s32 %v2820, %v2822
      %v2824 = vrot.slane %v2817, %v2823
      %v2825 = vcombine.low %v2808, %v2816
      %v2827 = vunpack.c.l.s4 1934713408
      %v2828 = vunpack.c.0.s8 %v2827
      %v2829 = vlaneseq
      %v2830 = vshrl.u32 %v2829, 7
      %v2831 = vsub.s32 %v2828, %v2830
      %v2832 = vrot.slane %v2825, %v2831
      %v2833 = vcombine.low %v2824, %v2832
      %v2834 = vcombine.high %v2824, %v2832
      %v2835 = vcombine.low %v1945, %v1952
      %v2837 = vunpack.c.l.s4 1983009808
      %v2838 = vunpack.c.0.s8 %v2837
      %v2839 = vlaneseq
      %v2840 = vshrl.u32 %v2839, 7
      %v2841 = vsub.s32 %v2838, %v2840
      %v2842 = vrot.slane %v2835, %v2841
      %v2843 = vcombine.low %v1969, %v1970
      %v2845 = vunpack.c.l.s4 1983009808
      %v2846 = vunpack.c.0.s8 %v2845
      %v2847 = vlaneseq
      %v2848 = vshrl.u32 %v2847, 7
      %v2849 = vsub.s32 %v2846, %v2848
      %v2850 = vrot.slane %v2843, %v2849
      %v2851 = vcombine.low %v1961, %v1968
      %v2853 = vunpack.c.l.s4 1983009808
      %v2854 = vunpack.c.0.s8 %v2853
      %v2855 = vlaneseq
      %v2856 = vshrl.u32 %v2855, 7
      %v2857 = vsub.s32 %v2854, %v2856
      %v2858 = vrot.slane %v2851, %v2857
      %v2859 = vcombine.low %v1971, %v1972
      %v2861 = vunpack.c.l.s4 1983009808
      %v2862 = vunpack.c.0.s8 %v2861
      %v2863 = vlaneseq
      %v2864 = vshrl.u32 %v2863, 7
      %v2865 = vsub.s32 %v2862, %v2864
      %v2866 = vrot.slane %v2859, %v2865
      %v2867 = vcombine.low %v2842, %v2850
      %v2869 = vunpack.c.l.s4 1934713408
      %v2870 = vunpack.c.0.s8 %v2869
      %v2871 = vlaneseq
      %v2872 = vshrl.u32 %v2871, 7
      %v2873 = vsub.s32 %v2870, %v2872
      %v2874 = vrot.slane %v2867, %v2873
      %v2875 = vcombine.low %v2858, %v2866
      %v2877 = vunpack.c.l.s4 1934713408
      %v2878 = vunpack.c.0.s8 %v2877
      %v2879 = vlaneseq
      %v2880 = vshrl.u32 %v2879, 7
      %v2881 = vsub.s32 %v2878, %v2880
      %v2882 = vrot.slane %v2875, %v2881
      %v2883 = vcombine.low %v2874, %v2882
      %v2884 = vcombine.high %v2874, %v2882
      %v2885 = vcombine.low %v2011, %v2018
      %v2887 = vunpack.c.l.s4 1983009808
      %v2888 = vunpack.c.0.s8 %v2887
      %v2889 = vlaneseq
      %v2890 = vshrl.u32 %v2889, 7
      %v2891 = vsub.s32 %v2888, %v2890
      %v2892 = vrot.slane %v2885, %v2891
      %v2893 = vcombine.low %v2035, %v2036
      %v2895 = vunpack.c.l.s4 1983009808
      %v2896 = vunpack.c.0.s8 %v2895
      %v2897 = vlaneseq
      %v2898 = vshrl.u32 %v2897, 7
      %v2899 = vsub.s32 %v2896, %v2898
      %v2900 = vrot.slane %v2893, %v2899
      %v2901 = vcombine.low %v2027, %v2034
      %v2903 = vunpack.c.l.s4 1983009808
      %v2904 = vunpack.c.0.s8 %v2903
      %v2905 = vlaneseq
      %v2906 = vshrl.u32 %v2905, 7
      %v2907 = vsub.s32 %v2904, %v2906
      %v2908 = vrot.slane %v2901, %v2907
      %v2909 = vcombine.low %v2037, %v2038
      %v2911 = vunpack.c.l.s4 1983009808
      %v2912 = vunpack.c.0.s8 %v2911
      %v2913 = vlaneseq
      %v2914 = vshrl.u32 %v2913, 7
      %v2915 = vsub.s32 %v2912, %v2914
      %v2916 = vrot.slane %v2909, %v2915
      %v2917 = vcombine.low %v2892, %v2900
      %v2919 = vunpack.c.l.s4 1934713408
      %v2920 = vunpack.c.0.s8 %v2919
      %v2921 = vlaneseq
      %v2922 = vshrl.u32 %v2921, 7
      %v2923 = vsub.s32 %v2920, %v2922
      %v2924 = vrot.slane %v2917, %v2923
      %v2925 = vcombine.low %v2908, %v2916
      %v2927 = vunpack.c.l.s4 1934713408
      %v2928 = vunpack.c.0.s8 %v2927
      %v2929 = vlaneseq
      %v2930 = vshrl.u32 %v2929, 7
      %v2931 = vsub.s32 %v2928, %v2930
      %v2932 = vrot.slane %v2925, %v2931
      %v2933 = vcombine.low %v2924, %v2932
      %v2934 = vcombine.high %v2924, %v2932
      %v2935 = vcombine.low %v2077, %v2084
      %v2937 = vunpack.c.l.s4 1983009808
      %v2938 = vunpack.c.0.s8 %v2937
      %v2939 = vlaneseq
      %v2940 = vshrl.u32 %v2939, 7
      %v2941 = vsub.s32 %v2938, %v2940
      %v2942 = vrot.slane %v2935, %v2941
      %v2943 = vcombine.low %v2101, %v2102
      %v2945 = vunpack.c.l.s4 1983009808
      %v2946 = vunpack.c.0.s8 %v2945
      %v2947 = vlaneseq
      %v2948 = vshrl.u32 %v2947, 7
      %v2949 = vsub.s32 %v2946, %v2948
      %v2950 = vrot.slane %v2943, %v2949
      %v2951 = vcombine.low %v2093, %v2100
      %v2953 = vunpack.c.l.s4 1983009808
      %v2954 = vunpack.c.0.s8 %v2953
      %v2955 = vlaneseq
      %v2956 = vshrl.u32 %v2955, 7
      %v2957 = vsub.s32 %v2954, %v2956
      %v2958 = vrot.slane %v2951, %v2957
      %v2959 = vcombine.low %v2103, %v2104
      %v2961 = vunpack.c.l.s4 1983009808
      %v2962 = vunpack.c.0.s8 %v2961
      %v2963 = vlaneseq
      %v2964 = vshrl.u32 %v2963, 7
      %v2965 = vsub.s32 %v2962, %v2964
      %v2966 = vrot.slane %v2959, %v2965
      %v2967 = vcombine.low %v2942, %v2950
      %v2969 = vunpack.c.l.s4 1934713408
      %v2970 = vunpack.c.0.s8 %v2969
      %v2971 = vlaneseq
      %v2972 = vshrl.u32 %v2971, 7
      %v2973 = vsub.s32 %v2970, %v2972
      %v2974 = vrot.slane %v2967, %v2973
      %v2975 = vcombine.low %v2958, %v2966
      %v2977 = vunpack.c.l.s4 1934713408
      %v2978 = vunpack.c.0.s8 %v2977
      %v2979 = vlaneseq
      %v2980 = vshrl.u32 %v2979, 7
      %v2981 = vsub.s32 %v2978, %v2980
      %v2982 = vrot.slane %v2975, %v2981
      %v2983 = vcombine.low %v2974, %v2982
      %v2984 = vcombine.high %v2974, %v2982
      %v2985 = vcombine.low %v2143, %v2150
      %v2987 = vunpack.c.l.s4 1983009808
      %v2988 = vunpack.c.0.s8 %v2987
      %v2989 = vlaneseq
      %v2990 = vshrl.u32 %v2989, 7
      %v2991 = vsub.s32 %v2988, %v2990
      %v2992 = vrot.slane %v2985, %v2991
      %v2993 = vcombine.low %v2167, %v2168
      %v2995 = vunpack.c.l.s4 1983009808
      %v2996 = vunpack.c.0.s8 %v2995
      %v2997 = vlaneseq
      %v2998 = vshrl.u32 %v2997, 7
      %v2999 = vsub.s32 %v2996, %v2998
      %v3000 = vrot.slane %v2993, %v2999
      %v3001 = vcombine.low %v2159, %v2166
      %v3003 = vunpack.c.l.s4 1983009808
      %v3004 = vunpack.c.0.s8 %v3003
      %v3005 = vlaneseq
      %v3006 = vshrl.u32 %v3005, 7
      %v3007 = vsub.s32 %v3004, %v3006
      %v3008 = vrot.slane %v3001, %v3007
      %v3009 = vcombine.low %v2169, %v2170
      %v3011 = vunpack.c.l.s4 1983009808
      %v3012 = vunpack.c.0.s8 %v3011
      %v3013 = vlaneseq
      %v3014 = vshrl.u32 %v3013, 7
      %v3015 = vsub.s32 %v3012, %v3014
      %v3016 = vrot.slane %v3009, %v3015
      %v3017 = vcombine.low %v2992, %v3000
      %v3019 = vunpack.c.l.s4 1934713408
      %v3020 = vunpack.c.0.s8 %v3019
      %v3021 = vlaneseq
      %v3022 = vshrl.u32 %v3021, 7
      %v3023 = vsub.s32 %v3020, %v3022
      %v3024 = vrot.slane %v3017, %v3023
      %v3025 = vcombine.low %v3008, %v3016
      %v3027 = vunpack.c.l.s4 1934713408
      %v3028 = vunpack.c.0.s8 %v3027
      %v3029 = vlaneseq
      %v3030 = vshrl.u32 %v3029, 7
      %v3031 = vsub.s32 %v3028, %v3030
      %v3032 = vrot.slane %v3025, %v3031
      %v3033 = vcombine.low %v3024, %v3032
      %v3034 = vcombine.high %v3024, %v3032
      %v3035 = vcombine.low %v2209, %v2216
      %v3037 = vunpack.c.l.s4 1983009808
      %v3038 = vunpack.c.0.s8 %v3037
      %v3039 = vlaneseq
      %v3040 = vshrl.u32 %v3039, 7
      %v3041 = vsub.s32 %v3038, %v3040
      %v3042 = vrot.slane %v3035, %v3041
      %v3043 = vcombine.low %v2233, %v2234
      %v3045 = vunpack.c.l.s4 1983009808
      %v3046 = vunpack.c.0.s8 %v3045
      %v3047 = vlaneseq
      %v3048 = vshrl.u32 %v3047, 7
      %v3049 = vsub.s32 %v3046, %v3048
      %v3050 = vrot.slane %v3043, %v3049
      %v3051 = vcombine.low %v2225, %v2232
      %v3053 = vunpack.c.l.s4 1983009808
      %v3054 = vunpack.c.0.s8 %v3053
      %v3055 = vlaneseq
      %v3056 = vshrl.u32 %v3055, 7
      %v3057 = vsub.s32 %v3054, %v3056
      %v3058 = vrot.slane %v3051, %v3057
      %v3059 = vcombine.low %v2235, %v2236
      %v3061 = vunpack.c.l.s4 1983009808
      %v3062 = vunpack.c.0.s8 %v3061
      %v3063 = vlaneseq
      %v3064 = vshrl.u32 %v3063, 7
      %v3065 = vsub.s32 %v3062, %v3064
      %v3066 = vrot.slane %v3059, %v3065
      %v3067 = vcombine.low %v3042, %v3050
      %v3069 = vunpack.c.l.s4 1934713408
      %v3070 = vunpack.c.0.s8 %v3069
      %v3071 = vlaneseq
      %v3072 = vshrl.u32 %v3071, 7
      %v3073 = vsub.s32 %v3070, %v3072
      %v3074 = vrot.slane %v3067, %v3073
      %v3075 = vcombine.low %v3058, %v3066
      %v3077 = vunpack.c.l.s4 1934713408
      %v3078 = vunpack.c.0.s8 %v3077
      %v3079 = vlaneseq
      %v3080 = vshrl.u32 %v3079, 7
      %v3081 = vsub.s32 %v3078, %v3080
      %v3082 = vrot.slane %v3075, %v3081
      %v3083 = vcombine.low %v3074, %v3082
      %v3084 = vcombine.high %v3074, %v3082
      %v3085 = vcombine.low %v2275, %v2282
      %v3087 = vunpack.c.l.s4 1983009808
      %v3088 = vunpack.c.0.s8 %v3087
      %v3089 = vlaneseq
      %v3090 = vshrl.u32 %v3089, 7
      %v3091 = vsub.s32 %v3088, %v3090
      %v3092 = vrot.slane %v3085, %v3091
      %v3093 = vcombine.low %v2299, %v2300
      %v3095 = vunpack.c.l.s4 1983009808
      %v3096 = vunpack.c.0.s8 %v3095
      %v3097 = vlaneseq
      %v3098 = vshrl.u32 %v3097, 7
      %v3099 = vsub.s32 %v3096, %v3098
      %v3100 = vrot.slane %v3093, %v3099
      %v3101 = vcombine.low %v2291, %v2298
      %v3103 = vunpack.c.l.s4 1983009808
      %v3104 = vunpack.c.0.s8 %v3103
      %v3105 = vlaneseq
      %v3106 = vshrl.u32 %v3105, 7
      %v3107 = vsub.s32 %v3104, %v3106
      %v3108 = vrot.slane %v3101, %v3107
      %v3109 = vcombine.low %v2301, %v2302
      %v3111 = vunpack.c.l.s4 1983009808
      %v3112 = vunpack.c.0.s8 %v3111
      %v3113 = vlaneseq
      %v3114 = vshrl.u32 %v3113, 7
      %v3115 = vsub.s32 %v3112, %v3114
      %v3116 = vrot.slane %v3109, %v3115
      %v3117 = vcombine.low %v3092, %v3100
      %v3119 = vunpack.c.l.s4 1934713408
      %v3120 = vunpack.c.0.s8 %v3119
      %v3121 = vlaneseq
      %v3122 = vshrl.u32 %v3121, 7
      %v3123 = vsub.s32 %v3120, %v3122
      %v3124 = vrot.slane %v3117, %v3123
      %v3125 = vcombine.low %v3108, %v3116
      %v3127 = vunpack.c.l.s4 1934713408
      %v3128 = vunpack.c.0.s8 %v3127
      %v3129 = vlaneseq
      %v3130 = vshrl.u32 %v3129, 7
      %v3131 = vsub.s32 %v3128, %v3130
      %v3132 = vrot.slane %v3125, %v3131
      %v3133 = vcombine.low %v3124, %v3132
      %v3134 = vcombine.high %v3124, %v3132
      %v3135 = vcombine.low %v2341, %v2348
      %v3137 = vunpack.c.l.s4 1983009808
      %v3138 = vunpack.c.0.s8 %v3137
      %v3139 = vlaneseq
      %v3140 = vshrl.u32 %v3139, 7
      %v3141 = vsub.s32 %v3138, %v3140
      %v3142 = vrot.slane %v3135, %v3141
      %v3143 = vcombine.low %v2365, %v2366
      %v3145 = vunpack.c.l.s4 1983009808
      %v3146 = vunpack.c.0.s8 %v3145
      %v3147 = vlaneseq
      %v3148 = vshrl.u32 %v3147, 7
      %v3149 = vsub.s32 %v3146, %v3148
      %v3150 = vrot.slane %v3143, %v3149
      %v3151 = vcombine.low %v2357, %v2364
      %v3153 = vunpack.c.l.s4 1983009808
      %v3154 = vunpack.c.0.s8 %v3153
      %v3155 = vlaneseq
      %v3156 = vshrl.u32 %v3155, 7
      %v3157 = vsub.s32 %v3154, %v3156
      %v3158 = vrot.slane %v3151, %v3157
      %v3159 = vcombine.low %v2367, %v2368
      %v3161 = vunpack.c.l.s4 1983009808
      %v3162 = vunpack.c.0.s8 %v3161
      %v3163 = vlaneseq
      %v3164 = vshrl.u32 %v3163, 7
      %v3165 = vsub.s32 %v3162, %v3164
      %v3166 = vrot.slane %v3159, %v3165
      %v3167 = vcombine.low %v3142, %v3150
      %v3169 = vunpack.c.l.s4 1934713408
      %v3170 = vunpack.c.0.s8 %v3169
      %v3171 = vlaneseq
      %v3172 = vshrl.u32 %v3171, 7
      %v3173 = vsub.s32 %v3170, %v3172
      %v3174 = vrot.slane %v3167, %v3173
      %v3175 = vcombine.low %v3158, %v3166
      %v3177 = vunpack.c.l.s4 1934713408
      %v3178 = vunpack.c.0.s8 %v3177
      %v3179 = vlaneseq
      %v3180 = vshrl.u32 %v3179, 7
      %v3181 = vsub.s32 %v3178, %v3180
      %v3182 = vrot.slane %v3175, %v3181
      %v3183 = vcombine.low %v3174, %v3182
      %v3184 = vcombine.high %v3174, %v3182
      %v3185 = vcombine.low %v2407, %v2414
      %v3187 = vunpack.c.l.s4 1983009808
      %v3188 = vunpack.c.0.s8 %v3187
      %v3189 = vlaneseq
      %v3190 = vshrl.u32 %v3189, 7
      %v3191 = vsub.s32 %v3188, %v3190
      %v3192 = vrot.slane %v3185, %v3191
      %v3193 = vcombine.low %v2431, %v2432
      %v3195 = vunpack.c.l.s4 1983009808
      %v3196 = vunpack.c.0.s8 %v3195
      %v3197 = vlaneseq
      %v3198 = vshrl.u32 %v3197, 7
      %v3199 = vsub.s32 %v3196, %v3198
      %v3200 = vrot.slane %v3193, %v3199
      %v3201 = vcombine.low %v2423, %v2430
      %v3203 = vunpack.c.l.s4 1983009808
      %v3204 = vunpack.c.0.s8 %v3203
      %v3205 = vlaneseq
      %v3206 = vshrl.u32 %v3205, 7
      %v3207 = vsub.s32 %v3204, %v3206
      %v3208 = vrot.slane %v3201, %v3207
      %v3209 = vcombine.low %v2433, %v2434
      %v3211 = vunpack.c.l.s4 1983009808
      %v3212 = vunpack.c.0.s8 %v3211
      %v3213 = vlaneseq
      %v3214 = vshrl.u32 %v3213, 7
      %v3215 = vsub.s32 %v3212, %v3214
      %v3216 = vrot.slane %v3209, %v3215
      %v3217 = vcombine.low %v3192, %v3200
      %v3219 = vunpack.c.l.s4 1934713408
      %v3220 = vunpack.c.0.s8 %v3219
      %v3221 = vlaneseq
      %v3222 = vshrl.u32 %v3221, 7
      %v3223 = vsub.s32 %v3220, %v3222
      %v3224 = vrot.slane %v3217, %v3223
      %v3225 = vcombine.low %v3208, %v3216
      %v3227 = vunpack.c.l.s4 1934713408
      %v3228 = vunpack.c.0.s8 %v3227
      %v3229 = vlaneseq
      %v3230 = vshrl.u32 %v3229, 7
      %v3231 = vsub.s32 %v3228, %v3230
      %v3232 = vrot.slane %v3225, %v3231
      %v3233 = vcombine.low %v3224, %v3232
      %v3234 = vcombine.high %v3224, %v3232
      %v3237 = vpack.i.b16 %v2533, %v2483
      %v3238 = vshrl.u32 %v2483, 16
      %v3239 = vshrl.u32 %v2533, 16
      %v3240 = vpack.i.b16 %v3239, %v3238
      %v3243 = vpack.i.b16 %v2534, %v2484
      %v3244 = vshrl.u32 %v2484, 16
      %v3245 = vshrl.u32 %v2534, 16
      %v3246 = vpack.i.b16 %v3245, %v3244
      %v3249 = vpack.i.b16 %v2633, %v2583
      %v3250 = vshrl.u32 %v2583, 16
      %v3251 = vshrl.u32 %v2633, 16
      %v3252 = vpack.i.b16 %v3251, %v3250
      %v3255 = vpack.i.b16 %v2634, %v2584
      %v3256 = vshrl.u32 %v2584, 16
      %v3257 = vshrl.u32 %v2634, 16
      %v3258 = vpack.i.b16 %v3257, %v3256
      %v3261 = vpack.i.b16 %v2733, %v2683
      %v3262 = vshrl.u32 %v2683, 16
      %v3263 = vshrl.u32 %v2733, 16
      %v3264 = vpack.i.b16 %v3263, %v3262
      %v3267 = vpack.i.b16 %v2734, %v2684
      %v3268 = vshrl.u32 %v2684, 16
      %v3269 = vshrl.u32 %v2734, 16
      %v3270 = vpack.i.b16 %v3269, %v3268
      %v3273 = vpack.i.b16 %v2833, %v2783
      %v3274 = vshrl.u32 %v2783, 16
      %v3275 = vshrl.u32 %v2833, 16
      %v3276 = vpack.i.b16 %v3275, %v3274
      %v3279 = vpack.i.b16 %v2834, %v2784
      %v3280 = vshrl.u32 %v2784, 16
      %v3281 = vshrl.u32 %v2834, 16
      %v3282 = vpack.i.b16 %v3281, %v3280
      %v3285 = vpack.i.b16 %v2933, %v2883
      %v3286 = vshrl.u32 %v2883, 16
      %v3287 = vshrl.u32 %v2933, 16
      %v3288 = vpack.i.b16 %v3287, %v3286
      %v3291 = vpack.i.b16 %v2934, %v2884
      %v3292 = vshrl.u32 %v2884, 16
      %v3293 = vshrl.u32 %v2934, 16
      %v3294 = vpack.i.b16 %v3293, %v3292
      %v3297 = vpack.i.b16 %v3033, %v2983
      %v3298 = vshrl.u32 %v2983, 16
      %v3299 = vshrl.u32 %v3033, 16
      %v3300 = vpack.i.b16 %v3299, %v3298
      %v3303 = vpack.i.b16 %v3034, %v2984
      %v3304 = vshrl.u32 %v2984, 16
      %v3305 = vshrl.u32 %v3034, 16
      %v3306 = vpack.i.b16 %v3305, %v3304
      %v3309 = vpack.i.b16 %v3133, %v3083
      %v3310 = vshrl.u32 %v3083, 16
      %v3311 = vshrl.u32 %v3133, 16
      %v3312 = vpack.i.b16 %v3311, %v3310
      %v3315 = vpack.i.b16 %v3134, %v3084
      %v3316 = vshrl.u32 %v3084, 16
      %v3317 = vshrl.u32 %v3134, 16
      %v3318 = vpack.i.b16 %v3317, %v3316
      %v3321 = vpack.i.b16 %v3233, %v3183
      %v3322 = vshrl.u32 %v3183, 16
      %v3323 = vshrl.u32 %v3233, 16
      %v3324 = vpack.i.b16 %v3323, %v3322
      %v3327 = vpack.i.b16 %v3234, %v3184
      %v3328 = vshrl.u32 %v3184, 16
      %v3329 = vshrl.u32 %v3234, 16
      %v3330 = vpack.i.b16 %v3329, %v3328
      %3331 = vrot.lane.b32.xlu0 %v1181, 96
      %v3332 = vpop.permute.xlu0 %3331
      %3333 = vrot.lane.b32.xlu0 %v1182, 96
      %v3334 = vpop.permute.xlu0 %3333
      %3335 = vrot.lane.b32.xlu0 %v1183, 96
      %v3336 = vpop.permute.xlu0 %3335
      %3337 = vrot.lane.b32.xlu0 %v1184, 96
      %v3338 = vpop.permute.xlu0 %3337
      %3339 = vrot.lane.b32.xlu0 %v1185, 96
      %v3340 = vpop.permute.xlu0 %3339
      %3341 = vrot.lane.b32.xlu0 %v1186, 96
      %v3342 = vpop.permute.xlu0 %3341
      %3343 = vrot.lane.b32.xlu0 %v1187, 96
      %v3344 = vpop.permute.xlu0 %3343
      %3345 = vrot.lane.b32.xlu0 %v1188, 96
      %v3346 = vpop.permute.xlu0 %3345
      %3347 = vrot.lane.b32.xlu0 %v1198, 96
      %v3348 = vpop.permute.xlu0 %3347
      %3349 = vrot.lane.b32.xlu0 %v1200, 96
      %v3350 = vpop.permute.xlu0 %3349
      %3351 = vrot.lane.b32.xlu0 %v1202, 96
      %v3352 = vpop.permute.xlu0 %3351
      %3353 = vrot.lane.b32.xlu0 %v1204, 96
      %v3354 = vpop.permute.xlu0 %3353
      %3355 = vrot.lane.b32.xlu0 %v1206, 96
      %v3356 = vpop.permute.xlu0 %3355
      %3357 = vrot.lane.b32.xlu0 %v1208, 96
      %v3358 = vpop.permute.xlu0 %3357
      %3359 = vrot.lane.b32.xlu0 %v1210, 96
      %v3360 = vpop.permute.xlu0 %3359
      %3361 = vrot.lane.b32.xlu0 %v1212, 96
      %v3362 = vpop.permute.xlu0 %3361
      %3363 = vrot.lane.b32.xlu0 %v1214, 96
      %v3364 = vpop.permute.xlu0 %3363
      %3365 = vrot.lane.b32.xlu0 %v1216, 96
      %v3366 = vpop.permute.xlu0 %3365
      %3367 = vrot.lane.b32.xlu0 %v1218, 96
      %v3368 = vpop.permute.xlu0 %3367
      %3369 = vrot.lane.b32.xlu0 %v1220, 96
      %v3370 = vpop.permute.xlu0 %3369
      %3371 = vrot.lane.b32.xlu0 %v1222, 96
      %v3372 = vpop.permute.xlu0 %3371
      %3373 = vrot.lane.b32.xlu0 %v1224, 96
      %v3374 = vpop.permute.xlu0 %3373
      %3375 = vrot.lane.b32.xlu0 %v1226, 96
      %v3376 = vpop.permute.xlu0 %3375
      %3377 = vrot.lane.b32.xlu0 %v1228, 96
      %v3378 = vpop.permute.xlu0 %3377
      %3379 = vrot.lane.b32.xlu0 %v1230, 96
      %v3380 = vpop.permute.xlu0 %3379
      %3381 = vrot.lane.b32.xlu0 %v1232, 96
      %v3382 = vpop.permute.xlu0 %3381
      %3383 = vrot.lane.b32.xlu0 %v1234, 96
      %v3384 = vpop.permute.xlu0 %3383
      %3385 = vrot.lane.b32.xlu0 %v1236, 96
      %v3386 = vpop.permute.xlu0 %3385
      %3387 = vrot.lane.b32.xlu0 %v1238, 96
      %v3388 = vpop.permute.xlu0 %3387
      %3389 = vrot.lane.b32.xlu0 %v1240, 96
      %v3390 = vpop.permute.xlu0 %3389
      %3391 = vrot.lane.b32.xlu0 %v1242, 96
      %v3392 = vpop.permute.xlu0 %3391
      %3393 = vrot.lane.b32.xlu0 %v1244, 96
      %v3394 = vpop.permute.xlu0 %3393
      %v3397 = vpack.i.b16 %v3348, %v3332
      %v3399 = vshrl.u32 %v3332, 16
      %v3400 = vshrl.u32 %v3348, 16
      %v3401 = vpack.i.b16 %v3400, %v3399
      %v3405 = vpack.i.b16 %v3380, %v3364
      %v3407 = vshrl.u32 %v3364, 16
      %v3408 = vshrl.u32 %v3380, 16
      %v3409 = vpack.i.b16 %v3408, %v3407
      %v3413 = vpack.i.b16 %v3350, %v3334
      %v3415 = vshrl.u32 %v3334, 16
      %v3416 = vshrl.u32 %v3350, 16
      %v3417 = vpack.i.b16 %v3416, %v3415
      %v3421 = vpack.i.b16 %v3382, %v3366
      %v3423 = vshrl.u32 %v3366, 16
      %v3424 = vshrl.u32 %v3382, 16
      %v3425 = vpack.i.b16 %v3424, %v3423
      %v3429 = vpack.i.b16 %v3352, %v3336
      %v3431 = vshrl.u32 %v3336, 16
      %v3432 = vshrl.u32 %v3352, 16
      %v3433 = vpack.i.b16 %v3432, %v3431
      %v3437 = vpack.i.b16 %v3384, %v3368
      %v3439 = vshrl.u32 %v3368, 16
      %v3440 = vshrl.u32 %v3384, 16
      %v3441 = vpack.i.b16 %v3440, %v3439
      %v3445 = vpack.i.b16 %v3354, %v3338
      %v3447 = vshrl.u32 %v3338, 16
      %v3448 = vshrl.u32 %v3354, 16
      %v3449 = vpack.i.b16 %v3448, %v3447
      %v3453 = vpack.i.b16 %v3386, %v3370
      %v3455 = vshrl.u32 %v3370, 16
      %v3456 = vshrl.u32 %v3386, 16
      %v3457 = vpack.i.b16 %v3456, %v3455
      %v3461 = vpack.i.b16 %v3356, %v3340
      %v3463 = vshrl.u32 %v3340, 16
      %v3464 = vshrl.u32 %v3356, 16
      %v3465 = vpack.i.b16 %v3464, %v3463
      %v3469 = vpack.i.b16 %v3388, %v3372
      %v3471 = vshrl.u32 %v3372, 16
      %v3472 = vshrl.u32 %v3388, 16
      %v3473 = vpack.i.b16 %v3472, %v3471
      %v3477 = vpack.i.b16 %v3358, %v3342
      %v3479 = vshrl.u32 %v3342, 16
      %v3480 = vshrl.u32 %v3358, 16
      %v3481 = vpack.i.b16 %v3480, %v3479
      %v3485 = vpack.i.b16 %v3390, %v3374
      %v3487 = vshrl.u32 %v3374, 16
      %v3488 = vshrl.u32 %v3390, 16
      %v3489 = vpack.i.b16 %v3488, %v3487
      %v3493 = vpack.i.b16 %v3360, %v3344
      %v3495 = vshrl.u32 %v3344, 16
      %v3496 = vshrl.u32 %v3360, 16
      %v3497 = vpack.i.b16 %v3496, %v3495
      %v3501 = vpack.i.b16 %v3392, %v3376
      %v3503 = vshrl.u32 %v3376, 16
      %v3504 = vshrl.u32 %v3392, 16
      %v3505 = vpack.i.b16 %v3504, %v3503
      %v3509 = vpack.i.b16 %v3362, %v3346
      %v3511 = vshrl.u32 %v3346, 16
      %v3512 = vshrl.u32 %v3362, 16
      %v3513 = vpack.i.b16 %v3512, %v3511
      %v3517 = vpack.i.b16 %v3394, %v3378
      %v3519 = vshrl.u32 %v3378, 16
      %v3520 = vshrl.u32 %v3394, 16
      %v3521 = vpack.i.b16 %v3520, %v3519
      %v3523 = vcombine.high %v3397, %v1262
      %v3525 = vunpack.c.l.s4 1983009808
      %v3526 = vunpack.c.0.s8 %v3525
      %v3527 = vlaneseq
      %v3528 = vshrl.u32 %v3527, 7
      %v3529 = vsub.s32 %v3526, %v3528
      %v3530 = vrot.slane %v3397, %v3529
      %v3532 = vunpack.c.l.s4 1983009808
      %v3533 = vunpack.c.0.s8 %v3532
      %v3534 = vlaneseq
      %v3535 = vshrl.u32 %v3534, 7
      %v3536 = vsub.s32 %v3533, %v3535
      %v3537 = vrot.slane %v3523, %v3536
      %v3538 = vcombine.high %v3405, %v1262
      %v3540 = vunpack.c.l.s4 1983009808
      %v3541 = vunpack.c.0.s8 %v3540
      %v3542 = vlaneseq
      %v3543 = vshrl.u32 %v3542, 7
      %v3544 = vsub.s32 %v3541, %v3543
      %v3545 = vrot.slane %v3405, %v3544
      %v3547 = vunpack.c.l.s4 1983009808
      %v3548 = vunpack.c.0.s8 %v3547
      %v3549 = vlaneseq
      %v3550 = vshrl.u32 %v3549, 7
      %v3551 = vsub.s32 %v3548, %v3550
      %v3552 = vrot.slane %v3538, %v3551
      %v3553 = vcombine.low %v3530, %v3545
      %v3554 = vcombine.high %v3530, %v3545
      %v3556 = vunpack.c.l.s4 1934713408
      %v3557 = vunpack.c.0.s8 %v3556
      %v3558 = vlaneseq
      %v3559 = vshrl.u32 %v3558, 7
      %v3560 = vsub.s32 %v3557, %v3559
      %v3561 = vrot.slane %v3553, %v3560
      %v3563 = vunpack.c.l.s4 1934713408
      %v3564 = vunpack.c.0.s8 %v3563
      %v3565 = vlaneseq
      %v3566 = vshrl.u32 %v3565, 7
      %v3567 = vsub.s32 %v3564, %v3566
      %v3568 = vrot.slane %v3554, %v3567
      %v3569 = vcombine.low %v3537, %v3552
      %v3570 = vcombine.high %v3537, %v3552
      %v3572 = vunpack.c.l.s4 1934713408
      %v3573 = vunpack.c.0.s8 %v3572
      %v3574 = vlaneseq
      %v3575 = vshrl.u32 %v3574, 7
      %v3576 = vsub.s32 %v3573, %v3575
      %v3577 = vrot.slane %v3569, %v3576
      %v3579 = vunpack.c.l.s4 1934713408
      %v3580 = vunpack.c.0.s8 %v3579
      %v3581 = vlaneseq
      %v3582 = vshrl.u32 %v3581, 7
      %v3583 = vsub.s32 %v3580, %v3582
      %v3584 = vrot.slane %v3570, %v3583
      %v3585 = vcombine.high %v3561, 0
      %v3586 = vcombine.high %v3568, 0
      %v3587 = vcombine.high %v3577, 0
      %v3588 = vcombine.high %v3584, 0
      %v3589 = vcombine.high %v3401, %v1265
      %v3591 = vunpack.c.l.s4 1983009808
      %v3592 = vunpack.c.0.s8 %v3591
      %v3593 = vlaneseq
      %v3594 = vshrl.u32 %v3593, 7
      %v3595 = vsub.s32 %v3592, %v3594
      %v3596 = vrot.slane %v3401, %v3595
      %v3598 = vunpack.c.l.s4 1983009808
      %v3599 = vunpack.c.0.s8 %v3598
      %v3600 = vlaneseq
      %v3601 = vshrl.u32 %v3600, 7
      %v3602 = vsub.s32 %v3599, %v3601
      %v3603 = vrot.slane %v3589, %v3602
      %v3604 = vcombine.high %v3409, %v1265
      %v3606 = vunpack.c.l.s4 1983009808
      %v3607 = vunpack.c.0.s8 %v3606
      %v3608 = vlaneseq
      %v3609 = vshrl.u32 %v3608, 7
      %v3610 = vsub.s32 %v3607, %v3609
      %v3611 = vrot.slane %v3409, %v3610
      %v3613 = vunpack.c.l.s4 1983009808
      %v3614 = vunpack.c.0.s8 %v3613
      %v3615 = vlaneseq
      %v3616 = vshrl.u32 %v3615, 7
      %v3617 = vsub.s32 %v3614, %v3616
      %v3618 = vrot.slane %v3604, %v3617
      %v3619 = vcombine.low %v3596, %v3611
      %v3620 = vcombine.high %v3596, %v3611
      %v3622 = vunpack.c.l.s4 1934713408
      %v3623 = vunpack.c.0.s8 %v3622
      %v3624 = vlaneseq
      %v3625 = vshrl.u32 %v3624, 7
      %v3626 = vsub.s32 %v3623, %v3625
      %v3627 = vrot.slane %v3619, %v3626
      %v3629 = vunpack.c.l.s4 1934713408
      %v3630 = vunpack.c.0.s8 %v3629
      %v3631 = vlaneseq
      %v3632 = vshrl.u32 %v3631, 7
      %v3633 = vsub.s32 %v3630, %v3632
      %v3634 = vrot.slane %v3620, %v3633
      %v3635 = vcombine.low %v3603, %v3618
      %v3636 = vcombine.high %v3603, %v3618
      %v3638 = vunpack.c.l.s4 1934713408
      %v3639 = vunpack.c.0.s8 %v3638
      %v3640 = vlaneseq
      %v3641 = vshrl.u32 %v3640, 7
      %v3642 = vsub.s32 %v3639, %v3641
      %v3643 = vrot.slane %v3635, %v3642
      %v3645 = vunpack.c.l.s4 1934713408
      %v3646 = vunpack.c.0.s8 %v3645
      %v3647 = vlaneseq
      %v3648 = vshrl.u32 %v3647, 7
      %v3649 = vsub.s32 %v3646, %v3648
      %v3650 = vrot.slane %v3636, %v3649
      %v3651 = vcombine.high %v3627, 0
      %v3652 = vcombine.high %v3634, 0
      %v3653 = vcombine.high %v3643, 0
      %v3654 = vcombine.high %v3650, 0
      %v3655 = vcombine.high %v3413, %v1262
      %v3657 = vunpack.c.l.s4 1983009808
      %v3658 = vunpack.c.0.s8 %v3657
      %v3659 = vlaneseq
      %v3660 = vshrl.u32 %v3659, 7
      %v3661 = vsub.s32 %v3658, %v3660
      %v3662 = vrot.slane %v3413, %v3661
      %v3664 = vunpack.c.l.s4 1983009808
      %v3665 = vunpack.c.0.s8 %v3664
      %v3666 = vlaneseq
      %v3667 = vshrl.u32 %v3666, 7
      %v3668 = vsub.s32 %v3665, %v3667
      %v3669 = vrot.slane %v3655, %v3668
      %v3670 = vcombine.high %v3421, %v1262
      %v3672 = vunpack.c.l.s4 1983009808
      %v3673 = vunpack.c.0.s8 %v3672
      %v3674 = vlaneseq
      %v3675 = vshrl.u32 %v3674, 7
      %v3676 = vsub.s32 %v3673, %v3675
      %v3677 = vrot.slane %v3421, %v3676
      %v3679 = vunpack.c.l.s4 1983009808
      %v3680 = vunpack.c.0.s8 %v3679
      %v3681 = vlaneseq
      %v3682 = vshrl.u32 %v3681, 7
      %v3683 = vsub.s32 %v3680, %v3682
      %v3684 = vrot.slane %v3670, %v3683
      %v3685 = vcombine.low %v3662, %v3677
      %v3686 = vcombine.high %v3662, %v3677
      %v3688 = vunpack.c.l.s4 1934713408
      %v3689 = vunpack.c.0.s8 %v3688
      %v3690 = vlaneseq
      %v3691 = vshrl.u32 %v3690, 7
      %v3692 = vsub.s32 %v3689, %v3691
      %v3693 = vrot.slane %v3685, %v3692
      %v3695 = vunpack.c.l.s4 1934713408
      %v3696 = vunpack.c.0.s8 %v3695
      %v3697 = vlaneseq
      %v3698 = vshrl.u32 %v3697, 7
      %v3699 = vsub.s32 %v3696, %v3698
      %v3700 = vrot.slane %v3686, %v3699
      %v3701 = vcombine.low %v3669, %v3684
      %v3702 = vcombine.high %v3669, %v3684
      %v3704 = vunpack.c.l.s4 1934713408
      %v3705 = vunpack.c.0.s8 %v3704
      %v3706 = vlaneseq
      %v3707 = vshrl.u32 %v3706, 7
      %v3708 = vsub.s32 %v3705, %v3707
      %v3709 = vrot.slane %v3701, %v3708
      %v3711 = vunpack.c.l.s4 1934713408
      %v3712 = vunpack.c.0.s8 %v3711
      %v3713 = vlaneseq
      %v3714 = vshrl.u32 %v3713, 7
      %v3715 = vsub.s32 %v3712, %v3714
      %v3716 = vrot.slane %v3702, %v3715
      %v3717 = vcombine.high %v3693, 0
      %v3718 = vcombine.high %v3700, 0
      %v3719 = vcombine.high %v3709, 0
      %v3720 = vcombine.high %v3716, 0
      %v3721 = vcombine.high %v3417, %v1265
      %v3723 = vunpack.c.l.s4 1983009808
      %v3724 = vunpack.c.0.s8 %v3723
      %v3725 = vlaneseq
      %v3726 = vshrl.u32 %v3725, 7
      %v3727 = vsub.s32 %v3724, %v3726
      %v3728 = vrot.slane %v3417, %v3727
      %v3730 = vunpack.c.l.s4 1983009808
      %v3731 = vunpack.c.0.s8 %v3730
      %v3732 = vlaneseq
      %v3733 = vshrl.u32 %v3732, 7
      %v3734 = vsub.s32 %v3731, %v3733
      %v3735 = vrot.slane %v3721, %v3734
      %v3736 = vcombine.high %v3425, %v1265
      %v3738 = vunpack.c.l.s4 1983009808
      %v3739 = vunpack.c.0.s8 %v3738
      %v3740 = vlaneseq
      %v3741 = vshrl.u32 %v3740, 7
      %v3742 = vsub.s32 %v3739, %v3741
      %v3743 = vrot.slane %v3425, %v3742
      %v3745 = vunpack.c.l.s4 1983009808
      %v3746 = vunpack.c.0.s8 %v3745
      %v3747 = vlaneseq
      %v3748 = vshrl.u32 %v3747, 7
      %v3749 = vsub.s32 %v3746, %v3748
      %v3750 = vrot.slane %v3736, %v3749
      %v3751 = vcombine.low %v3728, %v3743
      %v3752 = vcombine.high %v3728, %v3743
      %v3754 = vunpack.c.l.s4 1934713408
      %v3755 = vunpack.c.0.s8 %v3754
      %v3756 = vlaneseq
      %v3757 = vshrl.u32 %v3756, 7
      %v3758 = vsub.s32 %v3755, %v3757
      %v3759 = vrot.slane %v3751, %v3758
      %v3761 = vunpack.c.l.s4 1934713408
      %v3762 = vunpack.c.0.s8 %v3761
      %v3763 = vlaneseq
      %v3764 = vshrl.u32 %v3763, 7
      %v3765 = vsub.s32 %v3762, %v3764
      %v3766 = vrot.slane %v3752, %v3765
      %v3767 = vcombine.low %v3735, %v3750
      %v3768 = vcombine.high %v3735, %v3750
      %v3770 = vunpack.c.l.s4 1934713408
      %v3771 = vunpack.c.0.s8 %v3770
      %v3772 = vlaneseq
      %v3773 = vshrl.u32 %v3772, 7
      %v3774 = vsub.s32 %v3771, %v3773
      %v3775 = vrot.slane %v3767, %v3774
      %v3777 = vunpack.c.l.s4 1934713408
      %v3778 = vunpack.c.0.s8 %v3777
      %v3779 = vlaneseq
      %v3780 = vshrl.u32 %v3779, 7
      %v3781 = vsub.s32 %v3778, %v3780
      %v3782 = vrot.slane %v3768, %v3781
      %v3783 = vcombine.high %v3759, 0
      %v3784 = vcombine.high %v3766, 0
      %v3785 = vcombine.high %v3775, 0
      %v3786 = vcombine.high %v3782, 0
      %v3787 = vcombine.high %v3429, %v1262
      %v3789 = vunpack.c.l.s4 1983009808
      %v3790 = vunpack.c.0.s8 %v3789
      %v3791 = vlaneseq
      %v3792 = vshrl.u32 %v3791, 7
      %v3793 = vsub.s32 %v3790, %v3792
      %v3794 = vrot.slane %v3429, %v3793
      %v3796 = vunpack.c.l.s4 1983009808
      %v3797 = vunpack.c.0.s8 %v3796
      %v3798 = vlaneseq
      %v3799 = vshrl.u32 %v3798, 7
      %v3800 = vsub.s32 %v3797, %v3799
      %v3801 = vrot.slane %v3787, %v3800
      %v3802 = vcombine.high %v3437, %v1262
      %v3804 = vunpack.c.l.s4 1983009808
      %v3805 = vunpack.c.0.s8 %v3804
      %v3806 = vlaneseq
      %v3807 = vshrl.u32 %v3806, 7
      %v3808 = vsub.s32 %v3805, %v3807
      %v3809 = vrot.slane %v3437, %v3808
      %v3811 = vunpack.c.l.s4 1983009808
      %v3812 = vunpack.c.0.s8 %v3811
      %v3813 = vlaneseq
      %v3814 = vshrl.u32 %v3813, 7
      %v3815 = vsub.s32 %v3812, %v3814
      %v3816 = vrot.slane %v3802, %v3815
      %v3817 = vcombine.low %v3794, %v3809
      %v3818 = vcombine.high %v3794, %v3809
      %v3820 = vunpack.c.l.s4 1934713408
      %v3821 = vunpack.c.0.s8 %v3820
      %v3822 = vlaneseq
      %v3823 = vshrl.u32 %v3822, 7
      %v3824 = vsub.s32 %v3821, %v3823
      %v3825 = vrot.slane %v3817, %v3824
      %v3827 = vunpack.c.l.s4 1934713408
      %v3828 = vunpack.c.0.s8 %v3827
      %v3829 = vlaneseq
      %v3830 = vshrl.u32 %v3829, 7
      %v3831 = vsub.s32 %v3828, %v3830
      %v3832 = vrot.slane %v3818, %v3831
      %v3833 = vcombine.low %v3801, %v3816
      %v3834 = vcombine.high %v3801, %v3816
      %v3836 = vunpack.c.l.s4 1934713408
      %v3837 = vunpack.c.0.s8 %v3836
      %v3838 = vlaneseq
      %v3839 = vshrl.u32 %v3838, 7
      %v3840 = vsub.s32 %v3837, %v3839
      %v3841 = vrot.slane %v3833, %v3840
      %v3843 = vunpack.c.l.s4 1934713408
      %v3844 = vunpack.c.0.s8 %v3843
      %v3845 = vlaneseq
      %v3846 = vshrl.u32 %v3845, 7
      %v3847 = vsub.s32 %v3844, %v3846
      %v3848 = vrot.slane %v3834, %v3847
      %v3849 = vcombine.high %v3825, 0
      %v3850 = vcombine.high %v3832, 0
      %v3851 = vcombine.high %v3841, 0
      %v3852 = vcombine.high %v3848, 0
      %v3853 = vcombine.high %v3433, %v1265
      %v3855 = vunpack.c.l.s4 1983009808
      %v3856 = vunpack.c.0.s8 %v3855
      %v3857 = vlaneseq
      %v3858 = vshrl.u32 %v3857, 7
      %v3859 = vsub.s32 %v3856, %v3858
      %v3860 = vrot.slane %v3433, %v3859
      %v3862 = vunpack.c.l.s4 1983009808
      %v3863 = vunpack.c.0.s8 %v3862
      %v3864 = vlaneseq
      %v3865 = vshrl.u32 %v3864, 7
      %v3866 = vsub.s32 %v3863, %v3865
      %v3867 = vrot.slane %v3853, %v3866
      %v3868 = vcombine.high %v3441, %v1265
      %v3870 = vunpack.c.l.s4 1983009808
      %v3871 = vunpack.c.0.s8 %v3870
      %v3872 = vlaneseq
      %v3873 = vshrl.u32 %v3872, 7
      %v3874 = vsub.s32 %v3871, %v3873
      %v3875 = vrot.slane %v3441, %v3874
      %v3877 = vunpack.c.l.s4 1983009808
      %v3878 = vunpack.c.0.s8 %v3877
      %v3879 = vlaneseq
      %v3880 = vshrl.u32 %v3879, 7
      %v3881 = vsub.s32 %v3878, %v3880
      %v3882 = vrot.slane %v3868, %v3881
      %v3883 = vcombine.low %v3860, %v3875
      %v3884 = vcombine.high %v3860, %v3875
      %v3886 = vunpack.c.l.s4 1934713408
      %v3887 = vunpack.c.0.s8 %v3886
      %v3888 = vlaneseq
      %v3889 = vshrl.u32 %v3888, 7
      %v3890 = vsub.s32 %v3887, %v3889
      %v3891 = vrot.slane %v3883, %v3890
      %v3893 = vunpack.c.l.s4 1934713408
      %v3894 = vunpack.c.0.s8 %v3893
      %v3895 = vlaneseq
      %v3896 = vshrl.u32 %v3895, 7
      %v3897 = vsub.s32 %v3894, %v3896
      %v3898 = vrot.slane %v3884, %v3897
      %v3899 = vcombine.low %v3867, %v3882
      %v3900 = vcombine.high %v3867, %v3882
      %v3902 = vunpack.c.l.s4 1934713408
      %v3903 = vunpack.c.0.s8 %v3902
      %v3904 = vlaneseq
      %v3905 = vshrl.u32 %v3904, 7
      %v3906 = vsub.s32 %v3903, %v3905
      %v3907 = vrot.slane %v3899, %v3906
      %v3909 = vunpack.c.l.s4 1934713408
      %v3910 = vunpack.c.0.s8 %v3909
      %v3911 = vlaneseq
      %v3912 = vshrl.u32 %v3911, 7
      %v3913 = vsub.s32 %v3910, %v3912
      %v3914 = vrot.slane %v3900, %v3913
      %v3915 = vcombine.high %v3891, 0
      %v3916 = vcombine.high %v3898, 0
      %v3917 = vcombine.high %v3907, 0
      %v3918 = vcombine.high %v3914, 0
      %v3919 = vcombine.high %v3445, %v1262
      %v3921 = vunpack.c.l.s4 1983009808
      %v3922 = vunpack.c.0.s8 %v3921
      %v3923 = vlaneseq
      %v3924 = vshrl.u32 %v3923, 7
      %v3925 = vsub.s32 %v3922, %v3924
      %v3926 = vrot.slane %v3445, %v3925
      %v3928 = vunpack.c.l.s4 1983009808
      %v3929 = vunpack.c.0.s8 %v3928
      %v3930 = vlaneseq
      %v3931 = vshrl.u32 %v3930, 7
      %v3932 = vsub.s32 %v3929, %v3931
      %v3933 = vrot.slane %v3919, %v3932
      %v3934 = vcombine.high %v3453, %v1262
      %v3936 = vunpack.c.l.s4 1983009808
      %v3937 = vunpack.c.0.s8 %v3936
      %v3938 = vlaneseq
      %v3939 = vshrl.u32 %v3938, 7
      %v3940 = vsub.s32 %v3937, %v3939
      %v3941 = vrot.slane %v3453, %v3940
      %v3943 = vunpack.c.l.s4 1983009808
      %v3944 = vunpack.c.0.s8 %v3943
      %v3945 = vlaneseq
      %v3946 = vshrl.u32 %v3945, 7
      %v3947 = vsub.s32 %v3944, %v3946
      %v3948 = vrot.slane %v3934, %v3947
      %v3949 = vcombine.low %v3926, %v3941
      %v3950 = vcombine.high %v3926, %v3941
      %v3952 = vunpack.c.l.s4 1934713408
      %v3953 = vunpack.c.0.s8 %v3952
      %v3954 = vlaneseq
      %v3955 = vshrl.u32 %v3954, 7
      %v3956 = vsub.s32 %v3953, %v3955
      %v3957 = vrot.slane %v3949, %v3956
      %v3959 = vunpack.c.l.s4 1934713408
      %v3960 = vunpack.c.0.s8 %v3959
      %v3961 = vlaneseq
      %v3962 = vshrl.u32 %v3961, 7
      %v3963 = vsub.s32 %v3960, %v3962
      %v3964 = vrot.slane %v3950, %v3963
      %v3965 = vcombine.low %v3933, %v3948
      %v3966 = vcombine.high %v3933, %v3948
      %v3968 = vunpack.c.l.s4 1934713408
      %v3969 = vunpack.c.0.s8 %v3968
      %v3970 = vlaneseq
      %v3971 = vshrl.u32 %v3970, 7
      %v3972 = vsub.s32 %v3969, %v3971
      %v3973 = vrot.slane %v3965, %v3972
      %v3975 = vunpack.c.l.s4 1934713408
      %v3976 = vunpack.c.0.s8 %v3975
      %v3977 = vlaneseq
      %v3978 = vshrl.u32 %v3977, 7
      %v3979 = vsub.s32 %v3976, %v3978
      %v3980 = vrot.slane %v3966, %v3979
      %v3981 = vcombine.high %v3957, 0
      %v3982 = vcombine.high %v3964, 0
      %v3983 = vcombine.high %v3973, 0
      %v3984 = vcombine.high %v3980, 0
      %v3985 = vcombine.high %v3449, %v1265
      %v3987 = vunpack.c.l.s4 1983009808
      %v3988 = vunpack.c.0.s8 %v3987
      %v3989 = vlaneseq
      %v3990 = vshrl.u32 %v3989, 7
      %v3991 = vsub.s32 %v3988, %v3990
      %v3992 = vrot.slane %v3449, %v3991
      %v3994 = vunpack.c.l.s4 1983009808
      %v3995 = vunpack.c.0.s8 %v3994
      %v3996 = vlaneseq
      %v3997 = vshrl.u32 %v3996, 7
      %v3998 = vsub.s32 %v3995, %v3997
      %v3999 = vrot.slane %v3985, %v3998
      %v4000 = vcombine.high %v3457, %v1265
      %v4002 = vunpack.c.l.s4 1983009808
      %v4003 = vunpack.c.0.s8 %v4002
      %v4004 = vlaneseq
      %v4005 = vshrl.u32 %v4004, 7
      %v4006 = vsub.s32 %v4003, %v4005
      %v4007 = vrot.slane %v3457, %v4006
      %v4009 = vunpack.c.l.s4 1983009808
      %v4010 = vunpack.c.0.s8 %v4009
      %v4011 = vlaneseq
      %v4012 = vshrl.u32 %v4011, 7
      %v4013 = vsub.s32 %v4010, %v4012
      %v4014 = vrot.slane %v4000, %v4013
      %v4015 = vcombine.low %v3992, %v4007
      %v4016 = vcombine.high %v3992, %v4007
      %v4018 = vunpack.c.l.s4 1934713408
      %v4019 = vunpack.c.0.s8 %v4018
      %v4020 = vlaneseq
      %v4021 = vshrl.u32 %v4020, 7
      %v4022 = vsub.s32 %v4019, %v4021
      %v4023 = vrot.slane %v4015, %v4022
      %v4025 = vunpack.c.l.s4 1934713408
      %v4026 = vunpack.c.0.s8 %v4025
      %v4027 = vlaneseq
      %v4028 = vshrl.u32 %v4027, 7
      %v4029 = vsub.s32 %v4026, %v4028
      %v4030 = vrot.slane %v4016, %v4029
      %v4031 = vcombine.low %v3999, %v4014
      %v4032 = vcombine.high %v3999, %v4014
      %v4034 = vunpack.c.l.s4 1934713408
      %v4035 = vunpack.c.0.s8 %v4034
      %v4036 = vlaneseq
      %v4037 = vshrl.u32 %v4036, 7
      %v4038 = vsub.s32 %v4035, %v4037
      %v4039 = vrot.slane %v4031, %v4038
      %v4041 = vunpack.c.l.s4 1934713408
      %v4042 = vunpack.c.0.s8 %v4041
      %v4043 = vlaneseq
      %v4044 = vshrl.u32 %v4043, 7
      %v4045 = vsub.s32 %v4042, %v4044
      %v4046 = vrot.slane %v4032, %v4045
      %v4047 = vcombine.high %v4023, 0
      %v4048 = vcombine.high %v4030, 0
      %v4049 = vcombine.high %v4039, 0
      %v4050 = vcombine.high %v4046, 0
      %v4051 = vcombine.high %v3461, %v1262
      %v4053 = vunpack.c.l.s4 1983009808
      %v4054 = vunpack.c.0.s8 %v4053
      %v4055 = vlaneseq
      %v4056 = vshrl.u32 %v4055, 7
      %v4057 = vsub.s32 %v4054, %v4056
      %v4058 = vrot.slane %v3461, %v4057
      %v4060 = vunpack.c.l.s4 1983009808
      %v4061 = vunpack.c.0.s8 %v4060
      %v4062 = vlaneseq
      %v4063 = vshrl.u32 %v4062, 7
      %v4064 = vsub.s32 %v4061, %v4063
      %v4065 = vrot.slane %v4051, %v4064
      %v4066 = vcombine.high %v3469, %v1262
      %v4068 = vunpack.c.l.s4 1983009808
      %v4069 = vunpack.c.0.s8 %v4068
      %v4070 = vlaneseq
      %v4071 = vshrl.u32 %v4070, 7
      %v4072 = vsub.s32 %v4069, %v4071
      %v4073 = vrot.slane %v3469, %v4072
      %v4075 = vunpack.c.l.s4 1983009808
      %v4076 = vunpack.c.0.s8 %v4075
      %v4077 = vlaneseq
      %v4078 = vshrl.u32 %v4077, 7
      %v4079 = vsub.s32 %v4076, %v4078
      %v4080 = vrot.slane %v4066, %v4079
      %v4081 = vcombine.low %v4058, %v4073
      %v4082 = vcombine.high %v4058, %v4073
      %v4084 = vunpack.c.l.s4 1934713408
      %v4085 = vunpack.c.0.s8 %v4084
      %v4086 = vlaneseq
      %v4087 = vshrl.u32 %v4086, 7
      %v4088 = vsub.s32 %v4085, %v4087
      %v4089 = vrot.slane %v4081, %v4088
      %v4091 = vunpack.c.l.s4 1934713408
      %v4092 = vunpack.c.0.s8 %v4091
      %v4093 = vlaneseq
      %v4094 = vshrl.u32 %v4093, 7
      %v4095 = vsub.s32 %v4092, %v4094
      %v4096 = vrot.slane %v4082, %v4095
      %v4097 = vcombine.low %v4065, %v4080
      %v4098 = vcombine.high %v4065, %v4080
      %v4100 = vunpack.c.l.s4 1934713408
      %v4101 = vunpack.c.0.s8 %v4100
      %v4102 = vlaneseq
      %v4103 = vshrl.u32 %v4102, 7
      %v4104 = vsub.s32 %v4101, %v4103
      %v4105 = vrot.slane %v4097, %v4104
      %v4107 = vunpack.c.l.s4 1934713408
      %v4108 = vunpack.c.0.s8 %v4107
      %v4109 = vlaneseq
      %v4110 = vshrl.u32 %v4109, 7
      %v4111 = vsub.s32 %v4108, %v4110
      %v4112 = vrot.slane %v4098, %v4111
      %v4113 = vcombine.high %v4089, 0
      %v4114 = vcombine.high %v4096, 0
      %v4115 = vcombine.high %v4105, 0
      %v4116 = vcombine.high %v4112, 0
      %v4117 = vcombine.high %v3465, %v1265
      %v4119 = vunpack.c.l.s4 1983009808
      %v4120 = vunpack.c.0.s8 %v4119
      %v4121 = vlaneseq
      %v4122 = vshrl.u32 %v4121, 7
      %v4123 = vsub.s32 %v4120, %v4122
      %v4124 = vrot.slane %v3465, %v4123
      %v4126 = vunpack.c.l.s4 1983009808
      %v4127 = vunpack.c.0.s8 %v4126
      %v4128 = vlaneseq
      %v4129 = vshrl.u32 %v4128, 7
      %v4130 = vsub.s32 %v4127, %v4129
      %v4131 = vrot.slane %v4117, %v4130
      %v4132 = vcombine.high %v3473, %v1265
      %v4134 = vunpack.c.l.s4 1983009808
      %v4135 = vunpack.c.0.s8 %v4134
      %v4136 = vlaneseq
      %v4137 = vshrl.u32 %v4136, 7
      %v4138 = vsub.s32 %v4135, %v4137
      %v4139 = vrot.slane %v3473, %v4138
      %v4141 = vunpack.c.l.s4 1983009808
      %v4142 = vunpack.c.0.s8 %v4141
      %v4143 = vlaneseq
      %v4144 = vshrl.u32 %v4143, 7
      %v4145 = vsub.s32 %v4142, %v4144
      %v4146 = vrot.slane %v4132, %v4145
      %v4147 = vcombine.low %v4124, %v4139
      %v4148 = vcombine.high %v4124, %v4139
      %v4150 = vunpack.c.l.s4 1934713408
      %v4151 = vunpack.c.0.s8 %v4150
      %v4152 = vlaneseq
      %v4153 = vshrl.u32 %v4152, 7
      %v4154 = vsub.s32 %v4151, %v4153
      %v4155 = vrot.slane %v4147, %v4154
      %v4157 = vunpack.c.l.s4 1934713408
      %v4158 = vunpack.c.0.s8 %v4157
      %v4159 = vlaneseq
      %v4160 = vshrl.u32 %v4159, 7
      %v4161 = vsub.s32 %v4158, %v4160
      %v4162 = vrot.slane %v4148, %v4161
      %v4163 = vcombine.low %v4131, %v4146
      %v4164 = vcombine.high %v4131, %v4146
      %v4166 = vunpack.c.l.s4 1934713408
      %v4167 = vunpack.c.0.s8 %v4166
      %v4168 = vlaneseq
      %v4169 = vshrl.u32 %v4168, 7
      %v4170 = vsub.s32 %v4167, %v4169
      %v4171 = vrot.slane %v4163, %v4170
      %v4173 = vunpack.c.l.s4 1934713408
      %v4174 = vunpack.c.0.s8 %v4173
      %v4175 = vlaneseq
      %v4176 = vshrl.u32 %v4175, 7
      %v4177 = vsub.s32 %v4174, %v4176
      %v4178 = vrot.slane %v4164, %v4177
      %v4179 = vcombine.high %v4155, 0
      %v4180 = vcombine.high %v4162, 0
      %v4181 = vcombine.high %v4171, 0
      %v4182 = vcombine.high %v4178, 0
      %v4183 = vcombine.high %v3477, %v1262
      %v4185 = vunpack.c.l.s4 1983009808
      %v4186 = vunpack.c.0.s8 %v4185
      %v4187 = vlaneseq
      %v4188 = vshrl.u32 %v4187, 7
      %v4189 = vsub.s32 %v4186, %v4188
      %v4190 = vrot.slane %v3477, %v4189
      %v4192 = vunpack.c.l.s4 1983009808
      %v4193 = vunpack.c.0.s8 %v4192
      %v4194 = vlaneseq
      %v4195 = vshrl.u32 %v4194, 7
      %v4196 = vsub.s32 %v4193, %v4195
      %v4197 = vrot.slane %v4183, %v4196
      %v4198 = vcombine.high %v3485, %v1262
      %v4200 = vunpack.c.l.s4 1983009808
      %v4201 = vunpack.c.0.s8 %v4200
      %v4202 = vlaneseq
      %v4203 = vshrl.u32 %v4202, 7
      %v4204 = vsub.s32 %v4201, %v4203
      %v4205 = vrot.slane %v3485, %v4204
      %v4207 = vunpack.c.l.s4 1983009808
      %v4208 = vunpack.c.0.s8 %v4207
      %v4209 = vlaneseq
      %v4210 = vshrl.u32 %v4209, 7
      %v4211 = vsub.s32 %v4208, %v4210
      %v4212 = vrot.slane %v4198, %v4211
      %v4213 = vcombine.low %v4190, %v4205
      %v4214 = vcombine.high %v4190, %v4205
      %v4216 = vunpack.c.l.s4 1934713408
      %v4217 = vunpack.c.0.s8 %v4216
      %v4218 = vlaneseq
      %v4219 = vshrl.u32 %v4218, 7
      %v4220 = vsub.s32 %v4217, %v4219
      %v4221 = vrot.slane %v4213, %v4220
      %v4223 = vunpack.c.l.s4 1934713408
      %v4224 = vunpack.c.0.s8 %v4223
      %v4225 = vlaneseq
      %v4226 = vshrl.u32 %v4225, 7
      %v4227 = vsub.s32 %v4224, %v4226
      %v4228 = vrot.slane %v4214, %v4227
      %v4229 = vcombine.low %v4197, %v4212
      %v4230 = vcombine.high %v4197, %v4212
      %v4232 = vunpack.c.l.s4 1934713408
      %v4233 = vunpack.c.0.s8 %v4232
      %v4234 = vlaneseq
      %v4235 = vshrl.u32 %v4234, 7
      %v4236 = vsub.s32 %v4233, %v4235
      %v4237 = vrot.slane %v4229, %v4236
      %v4239 = vunpack.c.l.s4 1934713408
      %v4240 = vunpack.c.0.s8 %v4239
      %v4241 = vlaneseq
      %v4242 = vshrl.u32 %v4241, 7
      %v4243 = vsub.s32 %v4240, %v4242
      %v4244 = vrot.slane %v4230, %v4243
      %v4245 = vcombine.high %v4221, 0
      %v4246 = vcombine.high %v4228, 0
      %v4247 = vcombine.high %v4237, 0
      %v4248 = vcombine.high %v4244, 0
      %v4249 = vcombine.high %v3481, %v1265
      %v4251 = vunpack.c.l.s4 1983009808
      %v4252 = vunpack.c.0.s8 %v4251
      %v4253 = vlaneseq
      %v4254 = vshrl.u32 %v4253, 7
      %v4255 = vsub.s32 %v4252, %v4254
      %v4256 = vrot.slane %v3481, %v4255
      %v4258 = vunpack.c.l.s4 1983009808
      %v4259 = vunpack.c.0.s8 %v4258
      %v4260 = vlaneseq
      %v4261 = vshrl.u32 %v4260, 7
      %v4262 = vsub.s32 %v4259, %v4261
      %v4263 = vrot.slane %v4249, %v4262
      %v4264 = vcombine.high %v3489, %v1265
      %v4266 = vunpack.c.l.s4 1983009808
      %v4267 = vunpack.c.0.s8 %v4266
      %v4268 = vlaneseq
      %v4269 = vshrl.u32 %v4268, 7
      %v4270 = vsub.s32 %v4267, %v4269
      %v4271 = vrot.slane %v3489, %v4270
      %v4273 = vunpack.c.l.s4 1983009808
      %v4274 = vunpack.c.0.s8 %v4273
      %v4275 = vlaneseq
      %v4276 = vshrl.u32 %v4275, 7
      %v4277 = vsub.s32 %v4274, %v4276
      %v4278 = vrot.slane %v4264, %v4277
      %v4279 = vcombine.low %v4256, %v4271
      %v4280 = vcombine.high %v4256, %v4271
      %v4282 = vunpack.c.l.s4 1934713408
      %v4283 = vunpack.c.0.s8 %v4282
      %v4284 = vlaneseq
      %v4285 = vshrl.u32 %v4284, 7
      %v4286 = vsub.s32 %v4283, %v4285
      %v4287 = vrot.slane %v4279, %v4286
      %v4289 = vunpack.c.l.s4 1934713408
      %v4290 = vunpack.c.0.s8 %v4289
      %v4291 = vlaneseq
      %v4292 = vshrl.u32 %v4291, 7
      %v4293 = vsub.s32 %v4290, %v4292
      %v4294 = vrot.slane %v4280, %v4293
      %v4295 = vcombine.low %v4263, %v4278
      %v4296 = vcombine.high %v4263, %v4278
      %v4298 = vunpack.c.l.s4 1934713408
      %v4299 = vunpack.c.0.s8 %v4298
      %v4300 = vlaneseq
      %v4301 = vshrl.u32 %v4300, 7
      %v4302 = vsub.s32 %v4299, %v4301
      %v4303 = vrot.slane %v4295, %v4302
      %v4305 = vunpack.c.l.s4 1934713408
      %v4306 = vunpack.c.0.s8 %v4305
      %v4307 = vlaneseq
      %v4308 = vshrl.u32 %v4307, 7
      %v4309 = vsub.s32 %v4306, %v4308
      %v4310 = vrot.slane %v4296, %v4309
      %v4311 = vcombine.high %v4287, 0
      %v4312 = vcombine.high %v4294, 0
      %v4313 = vcombine.high %v4303, 0
      %v4314 = vcombine.high %v4310, 0
      %v4315 = vcombine.high %v3493, %v1262
      %v4317 = vunpack.c.l.s4 1983009808
      %v4318 = vunpack.c.0.s8 %v4317
      %v4319 = vlaneseq
      %v4320 = vshrl.u32 %v4319, 7
      %v4321 = vsub.s32 %v4318, %v4320
      %v4322 = vrot.slane %v3493, %v4321
      %v4324 = vunpack.c.l.s4 1983009808
      %v4325 = vunpack.c.0.s8 %v4324
      %v4326 = vlaneseq
      %v4327 = vshrl.u32 %v4326, 7
      %v4328 = vsub.s32 %v4325, %v4327
      %v4329 = vrot.slane %v4315, %v4328
      %v4330 = vcombine.high %v3501, %v1262
      %v4332 = vunpack.c.l.s4 1983009808
      %v4333 = vunpack.c.0.s8 %v4332
      %v4334 = vlaneseq
      %v4335 = vshrl.u32 %v4334, 7
      %v4336 = vsub.s32 %v4333, %v4335
      %v4337 = vrot.slane %v3501, %v4336
      %v4339 = vunpack.c.l.s4 1983009808
      %v4340 = vunpack.c.0.s8 %v4339
      %v4341 = vlaneseq
      %v4342 = vshrl.u32 %v4341, 7
      %v4343 = vsub.s32 %v4340, %v4342
      %v4344 = vrot.slane %v4330, %v4343
      %v4345 = vcombine.low %v4322, %v4337
      %v4346 = vcombine.high %v4322, %v4337
      %v4348 = vunpack.c.l.s4 1934713408
      %v4349 = vunpack.c.0.s8 %v4348
      %v4350 = vlaneseq
      %v4351 = vshrl.u32 %v4350, 7
      %v4352 = vsub.s32 %v4349, %v4351
      %v4353 = vrot.slane %v4345, %v4352
      %v4355 = vunpack.c.l.s4 1934713408
      %v4356 = vunpack.c.0.s8 %v4355
      %v4357 = vlaneseq
      %v4358 = vshrl.u32 %v4357, 7
      %v4359 = vsub.s32 %v4356, %v4358
      %v4360 = vrot.slane %v4346, %v4359
      %v4361 = vcombine.low %v4329, %v4344
      %v4362 = vcombine.high %v4329, %v4344
      %v4364 = vunpack.c.l.s4 1934713408
      %v4365 = vunpack.c.0.s8 %v4364
      %v4366 = vlaneseq
      %v4367 = vshrl.u32 %v4366, 7
      %v4368 = vsub.s32 %v4365, %v4367
      %v4369 = vrot.slane %v4361, %v4368
      %v4371 = vunpack.c.l.s4 1934713408
      %v4372 = vunpack.c.0.s8 %v4371
      %v4373 = vlaneseq
      %v4374 = vshrl.u32 %v4373, 7
      %v4375 = vsub.s32 %v4372, %v4374
      %v4376 = vrot.slane %v4362, %v4375
      %v4377 = vcombine.high %v4353, 0
      %v4378 = vcombine.high %v4360, 0
      %v4379 = vcombine.high %v4369, 0
      %v4380 = vcombine.high %v4376, 0
      %v4381 = vcombine.high %v3497, %v1265
      %v4383 = vunpack.c.l.s4 1983009808
      %v4384 = vunpack.c.0.s8 %v4383
      %v4385 = vlaneseq
      %v4386 = vshrl.u32 %v4385, 7
      %v4387 = vsub.s32 %v4384, %v4386
      %v4388 = vrot.slane %v3497, %v4387
      %v4390 = vunpack.c.l.s4 1983009808
      %v4391 = vunpack.c.0.s8 %v4390
      %v4392 = vlaneseq
      %v4393 = vshrl.u32 %v4392, 7
      %v4394 = vsub.s32 %v4391, %v4393
      %v4395 = vrot.slane %v4381, %v4394
      %v4396 = vcombine.high %v3505, %v1265
      %v4398 = vunpack.c.l.s4 1983009808
      %v4399 = vunpack.c.0.s8 %v4398
      %v4400 = vlaneseq
      %v4401 = vshrl.u32 %v4400, 7
      %v4402 = vsub.s32 %v4399, %v4401
      %v4403 = vrot.slane %v3505, %v4402
      %v4405 = vunpack.c.l.s4 1983009808
      %v4406 = vunpack.c.0.s8 %v4405
      %v4407 = vlaneseq
      %v4408 = vshrl.u32 %v4407, 7
      %v4409 = vsub.s32 %v4406, %v4408
      %v4410 = vrot.slane %v4396, %v4409
      %v4411 = vcombine.low %v4388, %v4403
      %v4412 = vcombine.high %v4388, %v4403
      %v4414 = vunpack.c.l.s4 1934713408
      %v4415 = vunpack.c.0.s8 %v4414
      %v4416 = vlaneseq
      %v4417 = vshrl.u32 %v4416, 7
      %v4418 = vsub.s32 %v4415, %v4417
      %v4419 = vrot.slane %v4411, %v4418
      %v4421 = vunpack.c.l.s4 1934713408
      %v4422 = vunpack.c.0.s8 %v4421
      %v4423 = vlaneseq
      %v4424 = vshrl.u32 %v4423, 7
      %v4425 = vsub.s32 %v4422, %v4424
      %v4426 = vrot.slane %v4412, %v4425
      %v4427 = vcombine.low %v4395, %v4410
      %v4428 = vcombine.high %v4395, %v4410
      %v4430 = vunpack.c.l.s4 1934713408
      %v4431 = vunpack.c.0.s8 %v4430
      %v4432 = vlaneseq
      %v4433 = vshrl.u32 %v4432, 7
      %v4434 = vsub.s32 %v4431, %v4433
      %v4435 = vrot.slane %v4427, %v4434
      %v4437 = vunpack.c.l.s4 1934713408
      %v4438 = vunpack.c.0.s8 %v4437
      %v4439 = vlaneseq
      %v4440 = vshrl.u32 %v4439, 7
      %v4441 = vsub.s32 %v4438, %v4440
      %v4442 = vrot.slane %v4428, %v4441
      %v4443 = vcombine.high %v4419, 0
      %v4444 = vcombine.high %v4426, 0
      %v4445 = vcombine.high %v4435, 0
      %v4446 = vcombine.high %v4442, 0
      %v4447 = vcombine.high %v3509, %v1262
      %v4449 = vunpack.c.l.s4 1983009808
      %v4450 = vunpack.c.0.s8 %v4449
      %v4451 = vlaneseq
      %v4452 = vshrl.u32 %v4451, 7
      %v4453 = vsub.s32 %v4450, %v4452
      %v4454 = vrot.slane %v3509, %v4453
      %v4456 = vunpack.c.l.s4 1983009808
      %v4457 = vunpack.c.0.s8 %v4456
      %v4458 = vlaneseq
      %v4459 = vshrl.u32 %v4458, 7
      %v4460 = vsub.s32 %v4457, %v4459
      %v4461 = vrot.slane %v4447, %v4460
      %v4462 = vcombine.high %v3517, %v1262
      %v4464 = vunpack.c.l.s4 1983009808
      %v4465 = vunpack.c.0.s8 %v4464
      %v4466 = vlaneseq
      %v4467 = vshrl.u32 %v4466, 7
      %v4468 = vsub.s32 %v4465, %v4467
      %v4469 = vrot.slane %v3517, %v4468
      %v4471 = vunpack.c.l.s4 1983009808
      %v4472 = vunpack.c.0.s8 %v4471
      %v4473 = vlaneseq
      %v4474 = vshrl.u32 %v4473, 7
      %v4475 = vsub.s32 %v4472, %v4474
      %v4476 = vrot.slane %v4462, %v4475
      %v4477 = vcombine.low %v4454, %v4469
      %v4478 = vcombine.high %v4454, %v4469
      %v4480 = vunpack.c.l.s4 1934713408
      %v4481 = vunpack.c.0.s8 %v4480
      %v4482 = vlaneseq
      %v4483 = vshrl.u32 %v4482, 7
      %v4484 = vsub.s32 %v4481, %v4483
      %v4485 = vrot.slane %v4477, %v4484
      %v4487 = vunpack.c.l.s4 1934713408
      %v4488 = vunpack.c.0.s8 %v4487
      %v4489 = vlaneseq
      %v4490 = vshrl.u32 %v4489, 7
      %v4491 = vsub.s32 %v4488, %v4490
      %v4492 = vrot.slane %v4478, %v4491
      %v4493 = vcombine.low %v4461, %v4476
      %v4494 = vcombine.high %v4461, %v4476
      %v4496 = vunpack.c.l.s4 1934713408
      %v4497 = vunpack.c.0.s8 %v4496
      %v4498 = vlaneseq
      %v4499 = vshrl.u32 %v4498, 7
      %v4500 = vsub.s32 %v4497, %v4499
      %v4501 = vrot.slane %v4493, %v4500
      %v4503 = vunpack.c.l.s4 1934713408
      %v4504 = vunpack.c.0.s8 %v4503
      %v4505 = vlaneseq
      %v4506 = vshrl.u32 %v4505, 7
      %v4507 = vsub.s32 %v4504, %v4506
      %v4508 = vrot.slane %v4494, %v4507
      %v4509 = vcombine.high %v4485, 0
      %v4510 = vcombine.high %v4492, 0
      %v4511 = vcombine.high %v4501, 0
      %v4512 = vcombine.high %v4508, 0
      %v4513 = vcombine.high %v3513, %v1265
      %v4515 = vunpack.c.l.s4 1983009808
      %v4516 = vunpack.c.0.s8 %v4515
      %v4517 = vlaneseq
      %v4518 = vshrl.u32 %v4517, 7
      %v4519 = vsub.s32 %v4516, %v4518
      %v4520 = vrot.slane %v3513, %v4519
      %v4522 = vunpack.c.l.s4 1983009808
      %v4523 = vunpack.c.0.s8 %v4522
      %v4524 = vlaneseq
      %v4525 = vshrl.u32 %v4524, 7
      %v4526 = vsub.s32 %v4523, %v4525
      %v4527 = vrot.slane %v4513, %v4526
      %v4528 = vcombine.high %v3521, %v1265
      %v4530 = vunpack.c.l.s4 1983009808
      %v4531 = vunpack.c.0.s8 %v4530
      %v4532 = vlaneseq
      %v4533 = vshrl.u32 %v4532, 7
      %v4534 = vsub.s32 %v4531, %v4533
      %v4535 = vrot.slane %v3521, %v4534
      %v4537 = vunpack.c.l.s4 1983009808
      %v4538 = vunpack.c.0.s8 %v4537
      %v4539 = vlaneseq
      %v4540 = vshrl.u32 %v4539, 7
      %v4541 = vsub.s32 %v4538, %v4540
      %v4542 = vrot.slane %v4528, %v4541
      %v4543 = vcombine.low %v4520, %v4535
      %v4544 = vcombine.high %v4520, %v4535
      %v4546 = vunpack.c.l.s4 1934713408
      %v4547 = vunpack.c.0.s8 %v4546
      %v4548 = vlaneseq
      %v4549 = vshrl.u32 %v4548, 7
      %v4550 = vsub.s32 %v4547, %v4549
      %v4551 = vrot.slane %v4543, %v4550
      %v4553 = vunpack.c.l.s4 1934713408
      %v4554 = vunpack.c.0.s8 %v4553
      %v4555 = vlaneseq
      %v4556 = vshrl.u32 %v4555, 7
      %v4557 = vsub.s32 %v4554, %v4556
      %v4558 = vrot.slane %v4544, %v4557
      %v4559 = vcombine.low %v4527, %v4542
      %v4560 = vcombine.high %v4527, %v4542
      %v4562 = vunpack.c.l.s4 1934713408
      %v4563 = vunpack.c.0.s8 %v4562
      %v4564 = vlaneseq
      %v4565 = vshrl.u32 %v4564, 7
      %v4566 = vsub.s32 %v4563, %v4565
      %v4567 = vrot.slane %v4559, %v4566
      %v4569 = vunpack.c.l.s4 1934713408
      %v4570 = vunpack.c.0.s8 %v4569
      %v4571 = vlaneseq
      %v4572 = vshrl.u32 %v4571, 7
      %v4573 = vsub.s32 %v4570, %v4572
      %v4574 = vrot.slane %v4560, %v4573
      %v4575 = vcombine.high %v4551, 0
      %v4576 = vcombine.high %v4558, 0
      %v4577 = vcombine.high %v4567, 0
      %v4578 = vcombine.high %v4574, 0
      %v4579 = vcombine.low %v3561, %v3568
      %v4581 = vunpack.c.l.s4 1983009808
      %v4582 = vunpack.c.0.s8 %v4581
      %v4583 = vlaneseq
      %v4584 = vshrl.u32 %v4583, 7
      %v4585 = vsub.s32 %v4582, %v4584
      %v4586 = vrot.slane %v4579, %v4585
      %v4587 = vcombine.low %v3585, %v3586
      %v4589 = vunpack.c.l.s4 1983009808
      %v4590 = vunpack.c.0.s8 %v4589
      %v4591 = vlaneseq
      %v4592 = vshrl.u32 %v4591, 7
      %v4593 = vsub.s32 %v4590, %v4592
      %v4594 = vrot.slane %v4587, %v4593
      %v4595 = vcombine.low %v3577, %v3584
      %v4597 = vunpack.c.l.s4 1983009808
      %v4598 = vunpack.c.0.s8 %v4597
      %v4599 = vlaneseq
      %v4600 = vshrl.u32 %v4599, 7
      %v4601 = vsub.s32 %v4598, %v4600
      %v4602 = vrot.slane %v4595, %v4601
      %v4603 = vcombine.low %v3587, %v3588
      %v4605 = vunpack.c.l.s4 1983009808
      %v4606 = vunpack.c.0.s8 %v4605
      %v4607 = vlaneseq
      %v4608 = vshrl.u32 %v4607, 7
      %v4609 = vsub.s32 %v4606, %v4608
      %v4610 = vrot.slane %v4603, %v4609
      %v4611 = vcombine.low %v4586, %v4594
      %v4613 = vunpack.c.l.s4 1934713408
      %v4614 = vunpack.c.0.s8 %v4613
      %v4615 = vlaneseq
      %v4616 = vshrl.u32 %v4615, 7
      %v4617 = vsub.s32 %v4614, %v4616
      %v4618 = vrot.slane %v4611, %v4617
      %v4619 = vcombine.low %v4602, %v4610
      %v4621 = vunpack.c.l.s4 1934713408
      %v4622 = vunpack.c.0.s8 %v4621
      %v4623 = vlaneseq
      %v4624 = vshrl.u32 %v4623, 7
      %v4625 = vsub.s32 %v4622, %v4624
      %v4626 = vrot.slane %v4619, %v4625
      %v4627 = vcombine.low %v4618, %v4626
      %v4628 = vcombine.high %v4618, %v4626
      %v4629 = vcombine.low %v3627, %v3634
      %v4631 = vunpack.c.l.s4 1983009808
      %v4632 = vunpack.c.0.s8 %v4631
      %v4633 = vlaneseq
      %v4634 = vshrl.u32 %v4633, 7
      %v4635 = vsub.s32 %v4632, %v4634
      %v4636 = vrot.slane %v4629, %v4635
      %v4637 = vcombine.low %v3651, %v3652
      %v4639 = vunpack.c.l.s4 1983009808
      %v4640 = vunpack.c.0.s8 %v4639
      %v4641 = vlaneseq
      %v4642 = vshrl.u32 %v4641, 7
      %v4643 = vsub.s32 %v4640, %v4642
      %v4644 = vrot.slane %v4637, %v4643
      %v4645 = vcombine.low %v3643, %v3650
      %v4647 = vunpack.c.l.s4 1983009808
      %v4648 = vunpack.c.0.s8 %v4647
      %v4649 = vlaneseq
      %v4650 = vshrl.u32 %v4649, 7
      %v4651 = vsub.s32 %v4648, %v4650
      %v4652 = vrot.slane %v4645, %v4651
      %v4653 = vcombine.low %v3653, %v3654
      %v4655 = vunpack.c.l.s4 1983009808
      %v4656 = vunpack.c.0.s8 %v4655
      %v4657 = vlaneseq
      %v4658 = vshrl.u32 %v4657, 7
      %v4659 = vsub.s32 %v4656, %v4658
      %v4660 = vrot.slane %v4653, %v4659
      %v4661 = vcombine.low %v4636, %v4644
      %v4663 = vunpack.c.l.s4 1934713408
      %v4664 = vunpack.c.0.s8 %v4663
      %v4665 = vlaneseq
      %v4666 = vshrl.u32 %v4665, 7
      %v4667 = vsub.s32 %v4664, %v4666
      %v4668 = vrot.slane %v4661, %v4667
      %v4669 = vcombine.low %v4652, %v4660
      %v4671 = vunpack.c.l.s4 1934713408
      %v4672 = vunpack.c.0.s8 %v4671
      %v4673 = vlaneseq
      %v4674 = vshrl.u32 %v4673, 7
      %v4675 = vsub.s32 %v4672, %v4674
      %v4676 = vrot.slane %v4669, %v4675
      %v4677 = vcombine.low %v4668, %v4676
      %v4678 = vcombine.high %v4668, %v4676
      %v4679 = vcombine.low %v3693, %v3700
      %v4681 = vunpack.c.l.s4 1983009808
      %v4682 = vunpack.c.0.s8 %v4681
      %v4683 = vlaneseq
      %v4684 = vshrl.u32 %v4683, 7
      %v4685 = vsub.s32 %v4682, %v4684
      %v4686 = vrot.slane %v4679, %v4685
      %v4687 = vcombine.low %v3717, %v3718
      %v4689 = vunpack.c.l.s4 1983009808
      %v4690 = vunpack.c.0.s8 %v4689
      %v4691 = vlaneseq
      %v4692 = vshrl.u32 %v4691, 7
      %v4693 = vsub.s32 %v4690, %v4692
      %v4694 = vrot.slane %v4687, %v4693
      %v4695 = vcombine.low %v3709, %v3716
      %v4697 = vunpack.c.l.s4 1983009808
      %v4698 = vunpack.c.0.s8 %v4697
      %v4699 = vlaneseq
      %v4700 = vshrl.u32 %v4699, 7
      %v4701 = vsub.s32 %v4698, %v4700
      %v4702 = vrot.slane %v4695, %v4701
      %v4703 = vcombine.low %v3719, %v3720
      %v4705 = vunpack.c.l.s4 1983009808
      %v4706 = vunpack.c.0.s8 %v4705
      %v4707 = vlaneseq
      %v4708 = vshrl.u32 %v4707, 7
      %v4709 = vsub.s32 %v4706, %v4708
      %v4710 = vrot.slane %v4703, %v4709
      %v4711 = vcombine.low %v4686, %v4694
      %v4713 = vunpack.c.l.s4 1934713408
      %v4714 = vunpack.c.0.s8 %v4713
      %v4715 = vlaneseq
      %v4716 = vshrl.u32 %v4715, 7
      %v4717 = vsub.s32 %v4714, %v4716
      %v4718 = vrot.slane %v4711, %v4717
      %v4719 = vcombine.low %v4702, %v4710
      %v4721 = vunpack.c.l.s4 1934713408
      %v4722 = vunpack.c.0.s8 %v4721
      %v4723 = vlaneseq
      %v4724 = vshrl.u32 %v4723, 7
      %v4725 = vsub.s32 %v4722, %v4724
      %v4726 = vrot.slane %v4719, %v4725
      %v4727 = vcombine.low %v4718, %v4726
      %v4728 = vcombine.high %v4718, %v4726
      %v4729 = vcombine.low %v3759, %v3766
      %v4731 = vunpack.c.l.s4 1983009808
      %v4732 = vunpack.c.0.s8 %v4731
      %v4733 = vlaneseq
      %v4734 = vshrl.u32 %v4733, 7
      %v4735 = vsub.s32 %v4732, %v4734
      %v4736 = vrot.slane %v4729, %v4735
      %v4737 = vcombine.low %v3783, %v3784
      %v4739 = vunpack.c.l.s4 1983009808
      %v4740 = vunpack.c.0.s8 %v4739
      %v4741 = vlaneseq
      %v4742 = vshrl.u32 %v4741, 7
      %v4743 = vsub.s32 %v4740, %v4742
      %v4744 = vrot.slane %v4737, %v4743
      %v4745 = vcombine.low %v3775, %v3782
      %v4747 = vunpack.c.l.s4 1983009808
      %v4748 = vunpack.c.0.s8 %v4747
      %v4749 = vlaneseq
      %v4750 = vshrl.u32 %v4749, 7
      %v4751 = vsub.s32 %v4748, %v4750
      %v4752 = vrot.slane %v4745, %v4751
      %v4753 = vcombine.low %v3785, %v3786
      %v4755 = vunpack.c.l.s4 1983009808
      %v4756 = vunpack.c.0.s8 %v4755
      %v4757 = vlaneseq
      %v4758 = vshrl.u32 %v4757, 7
      %v4759 = vsub.s32 %v4756, %v4758
      %v4760 = vrot.slane %v4753, %v4759
      %v4761 = vcombine.low %v4736, %v4744
      %v4763 = vunpack.c.l.s4 1934713408
      %v4764 = vunpack.c.0.s8 %v4763
      %v4765 = vlaneseq
      %v4766 = vshrl.u32 %v4765, 7
      %v4767 = vsub.s32 %v4764, %v4766
      %v4768 = vrot.slane %v4761, %v4767
      %v4769 = vcombine.low %v4752, %v4760
      %v4771 = vunpack.c.l.s4 1934713408
      %v4772 = vunpack.c.0.s8 %v4771
      %v4773 = vlaneseq
      %v4774 = vshrl.u32 %v4773, 7
      %v4775 = vsub.s32 %v4772, %v4774
      %v4776 = vrot.slane %v4769, %v4775
      %v4777 = vcombine.low %v4768, %v4776
      %v4778 = vcombine.high %v4768, %v4776
      %v4779 = vcombine.low %v3825, %v3832
      %v4781 = vunpack.c.l.s4 1983009808
      %v4782 = vunpack.c.0.s8 %v4781
      %v4783 = vlaneseq
      %v4784 = vshrl.u32 %v4783, 7
      %v4785 = vsub.s32 %v4782, %v4784
      %v4786 = vrot.slane %v4779, %v4785
      %v4787 = vcombine.low %v3849, %v3850
      %v4789 = vunpack.c.l.s4 1983009808
      %v4790 = vunpack.c.0.s8 %v4789
      %v4791 = vlaneseq
      %v4792 = vshrl.u32 %v4791, 7
      %v4793 = vsub.s32 %v4790, %v4792
      %v4794 = vrot.slane %v4787, %v4793
      %v4795 = vcombine.low %v3841, %v3848
      %v4797 = vunpack.c.l.s4 1983009808
      %v4798 = vunpack.c.0.s8 %v4797
      %v4799 = vlaneseq
      %v4800 = vshrl.u32 %v4799, 7
      %v4801 = vsub.s32 %v4798, %v4800
      %v4802 = vrot.slane %v4795, %v4801
      %v4803 = vcombine.low %v3851, %v3852
      %v4805 = vunpack.c.l.s4 1983009808
      %v4806 = vunpack.c.0.s8 %v4805
      %v4807 = vlaneseq
      %v4808 = vshrl.u32 %v4807, 7
      %v4809 = vsub.s32 %v4806, %v4808
      %v4810 = vrot.slane %v4803, %v4809
      %v4811 = vcombine.low %v4786, %v4794
      %v4813 = vunpack.c.l.s4 1934713408
      %v4814 = vunpack.c.0.s8 %v4813
      %v4815 = vlaneseq
      %v4816 = vshrl.u32 %v4815, 7
      %v4817 = vsub.s32 %v4814, %v4816
      %v4818 = vrot.slane %v4811, %v4817
      %v4819 = vcombine.low %v4802, %v4810
      %v4821 = vunpack.c.l.s4 1934713408
      %v4822 = vunpack.c.0.s8 %v4821
      %v4823 = vlaneseq
      %v4824 = vshrl.u32 %v4823, 7
      %v4825 = vsub.s32 %v4822, %v4824
      %v4826 = vrot.slane %v4819, %v4825
      %v4827 = vcombine.low %v4818, %v4826
      %v4828 = vcombine.high %v4818, %v4826
      %v4829 = vcombine.low %v3891, %v3898
      %v4831 = vunpack.c.l.s4 1983009808
      %v4832 = vunpack.c.0.s8 %v4831
      %v4833 = vlaneseq
      %v4834 = vshrl.u32 %v4833, 7
      %v4835 = vsub.s32 %v4832, %v4834
      %v4836 = vrot.slane %v4829, %v4835
      %v4837 = vcombine.low %v3915, %v3916
      %v4839 = vunpack.c.l.s4 1983009808
      %v4840 = vunpack.c.0.s8 %v4839
      %v4841 = vlaneseq
      %v4842 = vshrl.u32 %v4841, 7
      %v4843 = vsub.s32 %v4840, %v4842
      %v4844 = vrot.slane %v4837, %v4843
      %v4845 = vcombine.low %v3907, %v3914
      %v4847 = vunpack.c.l.s4 1983009808
      %v4848 = vunpack.c.0.s8 %v4847
      %v4849 = vlaneseq
      %v4850 = vshrl.u32 %v4849, 7
      %v4851 = vsub.s32 %v4848, %v4850
      %v4852 = vrot.slane %v4845, %v4851
      %v4853 = vcombine.low %v3917, %v3918
      %v4855 = vunpack.c.l.s4 1983009808
      %v4856 = vunpack.c.0.s8 %v4855
      %v4857 = vlaneseq
      %v4858 = vshrl.u32 %v4857, 7
      %v4859 = vsub.s32 %v4856, %v4858
      %v4860 = vrot.slane %v4853, %v4859
      %v4861 = vcombine.low %v4836, %v4844
      %v4863 = vunpack.c.l.s4 1934713408
      %v4864 = vunpack.c.0.s8 %v4863
      %v4865 = vlaneseq
      %v4866 = vshrl.u32 %v4865, 7
      %v4867 = vsub.s32 %v4864, %v4866
      %v4868 = vrot.slane %v4861, %v4867
      %v4869 = vcombine.low %v4852, %v4860
      %v4871 = vunpack.c.l.s4 1934713408
      %v4872 = vunpack.c.0.s8 %v4871
      %v4873 = vlaneseq
      %v4874 = vshrl.u32 %v4873, 7
      %v4875 = vsub.s32 %v4872, %v4874
      %v4876 = vrot.slane %v4869, %v4875
      %v4877 = vcombine.low %v4868, %v4876
      %v4878 = vcombine.high %v4868, %v4876
      %v4879 = vcombine.low %v3957, %v3964
      %v4881 = vunpack.c.l.s4 1983009808
      %v4882 = vunpack.c.0.s8 %v4881
      %v4883 = vlaneseq
      %v4884 = vshrl.u32 %v4883, 7
      %v4885 = vsub.s32 %v4882, %v4884
      %v4886 = vrot.slane %v4879, %v4885
      %v4887 = vcombine.low %v3981, %v3982
      %v4889 = vunpack.c.l.s4 1983009808
      %v4890 = vunpack.c.0.s8 %v4889
      %v4891 = vlaneseq
      %v4892 = vshrl.u32 %v4891, 7
      %v4893 = vsub.s32 %v4890, %v4892
      %v4894 = vrot.slane %v4887, %v4893
      %v4895 = vcombine.low %v3973, %v3980
      %v4897 = vunpack.c.l.s4 1983009808
      %v4898 = vunpack.c.0.s8 %v4897
      %v4899 = vlaneseq
      %v4900 = vshrl.u32 %v4899, 7
      %v4901 = vsub.s32 %v4898, %v4900
      %v4902 = vrot.slane %v4895, %v4901
      %v4903 = vcombine.low %v3983, %v3984
      %v4905 = vunpack.c.l.s4 1983009808
      %v4906 = vunpack.c.0.s8 %v4905
      %v4907 = vlaneseq
      %v4908 = vshrl.u32 %v4907, 7
      %v4909 = vsub.s32 %v4906, %v4908
      %v4910 = vrot.slane %v4903, %v4909
      %v4911 = vcombine.low %v4886, %v4894
      %v4913 = vunpack.c.l.s4 1934713408
      %v4914 = vunpack.c.0.s8 %v4913
      %v4915 = vlaneseq
      %v4916 = vshrl.u32 %v4915, 7
      %v4917 = vsub.s32 %v4914, %v4916
      %v4918 = vrot.slane %v4911, %v4917
      %v4919 = vcombine.low %v4902, %v4910
      %v4921 = vunpack.c.l.s4 1934713408
      %v4922 = vunpack.c.0.s8 %v4921
      %v4923 = vlaneseq
      %v4924 = vshrl.u32 %v4923, 7
      %v4925 = vsub.s32 %v4922, %v4924
      %v4926 = vrot.slane %v4919, %v4925
      %v4927 = vcombine.low %v4918, %v4926
      %v4928 = vcombine.high %v4918, %v4926
      %v4929 = vcombine.low %v4023, %v4030
      %v4931 = vunpack.c.l.s4 1983009808
      %v4932 = vunpack.c.0.s8 %v4931
      %v4933 = vlaneseq
      %v4934 = vshrl.u32 %v4933, 7
      %v4935 = vsub.s32 %v4932, %v4934
      %v4936 = vrot.slane %v4929, %v4935
      %v4937 = vcombine.low %v4047, %v4048
      %v4939 = vunpack.c.l.s4 1983009808
      %v4940 = vunpack.c.0.s8 %v4939
      %v4941 = vlaneseq
      %v4942 = vshrl.u32 %v4941, 7
      %v4943 = vsub.s32 %v4940, %v4942
      %v4944 = vrot.slane %v4937, %v4943
      %v4945 = vcombine.low %v4039, %v4046
      %v4947 = vunpack.c.l.s4 1983009808
      %v4948 = vunpack.c.0.s8 %v4947
      %v4949 = vlaneseq
      %v4950 = vshrl.u32 %v4949, 7
      %v4951 = vsub.s32 %v4948, %v4950
      %v4952 = vrot.slane %v4945, %v4951
      %v4953 = vcombine.low %v4049, %v4050
      %v4955 = vunpack.c.l.s4 1983009808
      %v4956 = vunpack.c.0.s8 %v4955
      %v4957 = vlaneseq
      %v4958 = vshrl.u32 %v4957, 7
      %v4959 = vsub.s32 %v4956, %v4958
      %v4960 = vrot.slane %v4953, %v4959
      %v4961 = vcombine.low %v4936, %v4944
      %v4963 = vunpack.c.l.s4 1934713408
      %v4964 = vunpack.c.0.s8 %v4963
      %v4965 = vlaneseq
      %v4966 = vshrl.u32 %v4965, 7
      %v4967 = vsub.s32 %v4964, %v4966
      %v4968 = vrot.slane %v4961, %v4967
      %v4969 = vcombine.low %v4952, %v4960
      %v4971 = vunpack.c.l.s4 1934713408
      %v4972 = vunpack.c.0.s8 %v4971
      %v4973 = vlaneseq
      %v4974 = vshrl.u32 %v4973, 7
      %v4975 = vsub.s32 %v4972, %v4974
      %v4976 = vrot.slane %v4969, %v4975
      %v4977 = vcombine.low %v4968, %v4976
      %v4978 = vcombine.high %v4968, %v4976
      %v4979 = vcombine.low %v4089, %v4096
      %v4981 = vunpack.c.l.s4 1983009808
      %v4982 = vunpack.c.0.s8 %v4981
      %v4983 = vlaneseq
      %v4984 = vshrl.u32 %v4983, 7
      %v4985 = vsub.s32 %v4982, %v4984
      %v4986 = vrot.slane %v4979, %v4985
      %v4987 = vcombine.low %v4113, %v4114
      %v4989 = vunpack.c.l.s4 1983009808
      %v4990 = vunpack.c.0.s8 %v4989
      %v4991 = vlaneseq
      %v4992 = vshrl.u32 %v4991, 7
      %v4993 = vsub.s32 %v4990, %v4992
      %v4994 = vrot.slane %v4987, %v4993
      %v4995 = vcombine.low %v4105, %v4112
      %v4997 = vunpack.c.l.s4 1983009808
      %v4998 = vunpack.c.0.s8 %v4997
      %v4999 = vlaneseq
      %v5000 = vshrl.u32 %v4999, 7
      %v5001 = vsub.s32 %v4998, %v5000
      %v5002 = vrot.slane %v4995, %v5001
      %v5003 = vcombine.low %v4115, %v4116
      %v5005 = vunpack.c.l.s4 1983009808
      %v5006 = vunpack.c.0.s8 %v5005
      %v5007 = vlaneseq
      %v5008 = vshrl.u32 %v5007, 7
      %v5009 = vsub.s32 %v5006, %v5008
      %v5010 = vrot.slane %v5003, %v5009
      %v5011 = vcombine.low %v4986, %v4994
      %v5013 = vunpack.c.l.s4 1934713408
      %v5014 = vunpack.c.0.s8 %v5013
      %v5015 = vlaneseq
      %v5016 = vshrl.u32 %v5015, 7
      %v5017 = vsub.s32 %v5014, %v5016
      %v5018 = vrot.slane %v5011, %v5017
      %v5019 = vcombine.low %v5002, %v5010
      %v5021 = vunpack.c.l.s4 1934713408
      %v5022 = vunpack.c.0.s8 %v5021
      %v5023 = vlaneseq
      %v5024 = vshrl.u32 %v5023, 7
      %v5025 = vsub.s32 %v5022, %v5024
      %v5026 = vrot.slane %v5019, %v5025
      %v5027 = vcombine.low %v5018, %v5026
      %v5028 = vcombine.high %v5018, %v5026
      %v5029 = vcombine.low %v4155, %v4162
      %v5031 = vunpack.c.l.s4 1983009808
      %v5032 = vunpack.c.0.s8 %v5031
      %v5033 = vlaneseq
      %v5034 = vshrl.u32 %v5033, 7
      %v5035 = vsub.s32 %v5032, %v5034
      %v5036 = vrot.slane %v5029, %v5035
      %v5037 = vcombine.low %v4179, %v4180
      %v5039 = vunpack.c.l.s4 1983009808
      %v5040 = vunpack.c.0.s8 %v5039
      %v5041 = vlaneseq
      %v5042 = vshrl.u32 %v5041, 7
      %v5043 = vsub.s32 %v5040, %v5042
      %v5044 = vrot.slane %v5037, %v5043
      %v5045 = vcombine.low %v4171, %v4178
      %v5047 = vunpack.c.l.s4 1983009808
      %v5048 = vunpack.c.0.s8 %v5047
      %v5049 = vlaneseq
      %v5050 = vshrl.u32 %v5049, 7
      %v5051 = vsub.s32 %v5048, %v5050
      %v5052 = vrot.slane %v5045, %v5051
      %v5053 = vcombine.low %v4181, %v4182
      %v5055 = vunpack.c.l.s4 1983009808
      %v5056 = vunpack.c.0.s8 %v5055
      %v5057 = vlaneseq
      %v5058 = vshrl.u32 %v5057, 7
      %v5059 = vsub.s32 %v5056, %v5058
      %v5060 = vrot.slane %v5053, %v5059
      %v5061 = vcombine.low %v5036, %v5044
      %v5063 = vunpack.c.l.s4 1934713408
      %v5064 = vunpack.c.0.s8 %v5063
      %v5065 = vlaneseq
      %v5066 = vshrl.u32 %v5065, 7
      %v5067 = vsub.s32 %v5064, %v5066
      %v5068 = vrot.slane %v5061, %v5067
      %v5069 = vcombine.low %v5052, %v5060
      %v5071 = vunpack.c.l.s4 1934713408
      %v5072 = vunpack.c.0.s8 %v5071
      %v5073 = vlaneseq
      %v5074 = vshrl.u32 %v5073, 7
      %v5075 = vsub.s32 %v5072, %v5074
      %v5076 = vrot.slane %v5069, %v5075
      %v5077 = vcombine.low %v5068, %v5076
      %v5078 = vcombine.high %v5068, %v5076
      %v5079 = vcombine.low %v4221, %v4228
      %v5081 = vunpack.c.l.s4 1983009808
      %v5082 = vunpack.c.0.s8 %v5081
      %v5083 = vlaneseq
      %v5084 = vshrl.u32 %v5083, 7
      %v5085 = vsub.s32 %v5082, %v5084
      %v5086 = vrot.slane %v5079, %v5085
      %v5087 = vcombine.low %v4245, %v4246
      %v5089 = vunpack.c.l.s4 1983009808
      %v5090 = vunpack.c.0.s8 %v5089
      %v5091 = vlaneseq
      %v5092 = vshrl.u32 %v5091, 7
      %v5093 = vsub.s32 %v5090, %v5092
      %v5094 = vrot.slane %v5087, %v5093
      %v5095 = vcombine.low %v4237, %v4244
      %v5097 = vunpack.c.l.s4 1983009808
      %v5098 = vunpack.c.0.s8 %v5097
      %v5099 = vlaneseq
      %v5100 = vshrl.u32 %v5099, 7
      %v5101 = vsub.s32 %v5098, %v5100
      %v5102 = vrot.slane %v5095, %v5101
      %v5103 = vcombine.low %v4247, %v4248
      %v5105 = vunpack.c.l.s4 1983009808
      %v5106 = vunpack.c.0.s8 %v5105
      %v5107 = vlaneseq
      %v5108 = vshrl.u32 %v5107, 7
      %v5109 = vsub.s32 %v5106, %v5108
      %v5110 = vrot.slane %v5103, %v5109
      %v5111 = vcombine.low %v5086, %v5094
      %v5113 = vunpack.c.l.s4 1934713408
      %v5114 = vunpack.c.0.s8 %v5113
      %v5115 = vlaneseq
      %v5116 = vshrl.u32 %v5115, 7
      %v5117 = vsub.s32 %v5114, %v5116
      %v5118 = vrot.slane %v5111, %v5117
      %v5119 = vcombine.low %v5102, %v5110
      %v5121 = vunpack.c.l.s4 1934713408
      %v5122 = vunpack.c.0.s8 %v5121
      %v5123 = vlaneseq
      %v5124 = vshrl.u32 %v5123, 7
      %v5125 = vsub.s32 %v5122, %v5124
      %v5126 = vrot.slane %v5119, %v5125
      %v5127 = vcombine.low %v5118, %v5126
      %v5128 = vcombine.high %v5118, %v5126
      %v5129 = vcombine.low %v4287, %v4294
      %v5131 = vunpack.c.l.s4 1983009808
      %v5132 = vunpack.c.0.s8 %v5131
      %v5133 = vlaneseq
      %v5134 = vshrl.u32 %v5133, 7
      %v5135 = vsub.s32 %v5132, %v5134
      %v5136 = vrot.slane %v5129, %v5135
      %v5137 = vcombine.low %v4311, %v4312
      %v5139 = vunpack.c.l.s4 1983009808
      %v5140 = vunpack.c.0.s8 %v5139
      %v5141 = vlaneseq
      %v5142 = vshrl.u32 %v5141, 7
      %v5143 = vsub.s32 %v5140, %v5142
      %v5144 = vrot.slane %v5137, %v5143
      %v5145 = vcombine.low %v4303, %v4310
      %v5147 = vunpack.c.l.s4 1983009808
      %v5148 = vunpack.c.0.s8 %v5147
      %v5149 = vlaneseq
      %v5150 = vshrl.u32 %v5149, 7
      %v5151 = vsub.s32 %v5148, %v5150
      %v5152 = vrot.slane %v5145, %v5151
      %v5153 = vcombine.low %v4313, %v4314
      %v5155 = vunpack.c.l.s4 1983009808
      %v5156 = vunpack.c.0.s8 %v5155
      %v5157 = vlaneseq
      %v5158 = vshrl.u32 %v5157, 7
      %v5159 = vsub.s32 %v5156, %v5158
      %v5160 = vrot.slane %v5153, %v5159
      %v5161 = vcombine.low %v5136, %v5144
      %v5163 = vunpack.c.l.s4 1934713408
      %v5164 = vunpack.c.0.s8 %v5163
      %v5165 = vlaneseq
      %v5166 = vshrl.u32 %v5165, 7
      %v5167 = vsub.s32 %v5164, %v5166
      %v5168 = vrot.slane %v5161, %v5167
      %v5169 = vcombine.low %v5152, %v5160
      %v5171 = vunpack.c.l.s4 1934713408
      %v5172 = vunpack.c.0.s8 %v5171
      %v5173 = vlaneseq
      %v5174 = vshrl.u32 %v5173, 7
      %v5175 = vsub.s32 %v5172, %v5174
      %v5176 = vrot.slane %v5169, %v5175
      %v5177 = vcombine.low %v5168, %v5176
      %v5178 = vcombine.high %v5168, %v5176
      %v5179 = vcombine.low %v4353, %v4360
      %v5181 = vunpack.c.l.s4 1983009808
      %v5182 = vunpack.c.0.s8 %v5181
      %v5183 = vlaneseq
      %v5184 = vshrl.u32 %v5183, 7
      %v5185 = vsub.s32 %v5182, %v5184
      %v5186 = vrot.slane %v5179, %v5185
      %v5187 = vcombine.low %v4377, %v4378
      %v5189 = vunpack.c.l.s4 1983009808
      %v5190 = vunpack.c.0.s8 %v5189
      %v5191 = vlaneseq
      %v5192 = vshrl.u32 %v5191, 7
      %v5193 = vsub.s32 %v5190, %v5192
      %v5194 = vrot.slane %v5187, %v5193
      %v5195 = vcombine.low %v4369, %v4376
      %v5197 = vunpack.c.l.s4 1983009808
      %v5198 = vunpack.c.0.s8 %v5197
      %v5199 = vlaneseq
      %v5200 = vshrl.u32 %v5199, 7
      %v5201 = vsub.s32 %v5198, %v5200
      %v5202 = vrot.slane %v5195, %v5201
      %v5203 = vcombine.low %v4379, %v4380
      %v5205 = vunpack.c.l.s4 1983009808
      %v5206 = vunpack.c.0.s8 %v5205
      %v5207 = vlaneseq
      %v5208 = vshrl.u32 %v5207, 7
      %v5209 = vsub.s32 %v5206, %v5208
      %v5210 = vrot.slane %v5203, %v5209
      %v5211 = vcombine.low %v5186, %v5194
      %v5213 = vunpack.c.l.s4 1934713408
      %v5214 = vunpack.c.0.s8 %v5213
      %v5215 = vlaneseq
      %v5216 = vshrl.u32 %v5215, 7
      %v5217 = vsub.s32 %v5214, %v5216
      %v5218 = vrot.slane %v5211, %v5217
      %v5219 = vcombine.low %v5202, %v5210
      %v5221 = vunpack.c.l.s4 1934713408
      %v5222 = vunpack.c.0.s8 %v5221
      %v5223 = vlaneseq
      %v5224 = vshrl.u32 %v5223, 7
      %v5225 = vsub.s32 %v5222, %v5224
      %v5226 = vrot.slane %v5219, %v5225
      %v5227 = vcombine.low %v5218, %v5226
      %v5228 = vcombine.high %v5218, %v5226
      %v5229 = vcombine.low %v4419, %v4426
      %v5231 = vunpack.c.l.s4 1983009808
      %v5232 = vunpack.c.0.s8 %v5231
      %v5233 = vlaneseq
      %v5234 = vshrl.u32 %v5233, 7
      %v5235 = vsub.s32 %v5232, %v5234
      %v5236 = vrot.slane %v5229, %v5235
      %v5237 = vcombine.low %v4443, %v4444
      %v5239 = vunpack.c.l.s4 1983009808
      %v5240 = vunpack.c.0.s8 %v5239
      %v5241 = vlaneseq
      %v5242 = vshrl.u32 %v5241, 7
      %v5243 = vsub.s32 %v5240, %v5242
      %v5244 = vrot.slane %v5237, %v5243
      %v5245 = vcombine.low %v4435, %v4442
      %v5247 = vunpack.c.l.s4 1983009808
      %v5248 = vunpack.c.0.s8 %v5247
      %v5249 = vlaneseq
      %v5250 = vshrl.u32 %v5249, 7
      %v5251 = vsub.s32 %v5248, %v5250
      %v5252 = vrot.slane %v5245, %v5251
      %v5253 = vcombine.low %v4445, %v4446
      %v5255 = vunpack.c.l.s4 1983009808
      %v5256 = vunpack.c.0.s8 %v5255
      %v5257 = vlaneseq
      %v5258 = vshrl.u32 %v5257, 7
      %v5259 = vsub.s32 %v5256, %v5258
      %v5260 = vrot.slane %v5253, %v5259
      %v5261 = vcombine.low %v5236, %v5244
      %v5263 = vunpack.c.l.s4 1934713408
      %v5264 = vunpack.c.0.s8 %v5263
      %v5265 = vlaneseq
      %v5266 = vshrl.u32 %v5265, 7
      %v5267 = vsub.s32 %v5264, %v5266
      %v5268 = vrot.slane %v5261, %v5267
      %v5269 = vcombine.low %v5252, %v5260
      %v5271 = vunpack.c.l.s4 1934713408
      %v5272 = vunpack.c.0.s8 %v5271
      %v5273 = vlaneseq
      %v5274 = vshrl.u32 %v5273, 7
      %v5275 = vsub.s32 %v5272, %v5274
      %v5276 = vrot.slane %v5269, %v5275
      %v5277 = vcombine.low %v5268, %v5276
      %v5278 = vcombine.high %v5268, %v5276
      %v5279 = vcombine.low %v4485, %v4492
      %v5281 = vunpack.c.l.s4 1983009808
      %v5282 = vunpack.c.0.s8 %v5281
      %v5283 = vlaneseq
      %v5284 = vshrl.u32 %v5283, 7
      %v5285 = vsub.s32 %v5282, %v5284
      %v5286 = vrot.slane %v5279, %v5285
      %v5287 = vcombine.low %v4509, %v4510
      %v5289 = vunpack.c.l.s4 1983009808
      %v5290 = vunpack.c.0.s8 %v5289
      %v5291 = vlaneseq
      %v5292 = vshrl.u32 %v5291, 7
      %v5293 = vsub.s32 %v5290, %v5292
      %v5294 = vrot.slane %v5287, %v5293
      %v5295 = vcombine.low %v4501, %v4508
      %v5297 = vunpack.c.l.s4 1983009808
      %v5298 = vunpack.c.0.s8 %v5297
      %v5299 = vlaneseq
      %v5300 = vshrl.u32 %v5299, 7
      %v5301 = vsub.s32 %v5298, %v5300
      %v5302 = vrot.slane %v5295, %v5301
      %v5303 = vcombine.low %v4511, %v4512
      %v5305 = vunpack.c.l.s4 1983009808
      %v5306 = vunpack.c.0.s8 %v5305
      %v5307 = vlaneseq
      %v5308 = vshrl.u32 %v5307, 7
      %v5309 = vsub.s32 %v5306, %v5308
      %v5310 = vrot.slane %v5303, %v5309
      %v5311 = vcombine.low %v5286, %v5294
      %v5313 = vunpack.c.l.s4 1934713408
      %v5314 = vunpack.c.0.s8 %v5313
      %v5315 = vlaneseq
      %v5316 = vshrl.u32 %v5315, 7
      %v5317 = vsub.s32 %v5314, %v5316
      %v5318 = vrot.slane %v5311, %v5317
      %v5319 = vcombine.low %v5302, %v5310
      %v5321 = vunpack.c.l.s4 1934713408
      %v5322 = vunpack.c.0.s8 %v5321
      %v5323 = vlaneseq
      %v5324 = vshrl.u32 %v5323, 7
      %v5325 = vsub.s32 %v5322, %v5324
      %v5326 = vrot.slane %v5319, %v5325
      %v5327 = vcombine.low %v5318, %v5326
      %v5328 = vcombine.high %v5318, %v5326
      %v5329 = vcombine.low %v4551, %v4558
      %v5331 = vunpack.c.l.s4 1983009808
      %v5332 = vunpack.c.0.s8 %v5331
      %v5333 = vlaneseq
      %v5334 = vshrl.u32 %v5333, 7
      %v5335 = vsub.s32 %v5332, %v5334
      %v5336 = vrot.slane %v5329, %v5335
      %v5337 = vcombine.low %v4575, %v4576
      %v5339 = vunpack.c.l.s4 1983009808
      %v5340 = vunpack.c.0.s8 %v5339
      %v5341 = vlaneseq
      %v5342 = vshrl.u32 %v5341, 7
      %v5343 = vsub.s32 %v5340, %v5342
      %v5344 = vrot.slane %v5337, %v5343
      %v5345 = vcombine.low %v4567, %v4574
      %v5347 = vunpack.c.l.s4 1983009808
      %v5348 = vunpack.c.0.s8 %v5347
      %v5349 = vlaneseq
      %v5350 = vshrl.u32 %v5349, 7
      %v5351 = vsub.s32 %v5348, %v5350
      %v5352 = vrot.slane %v5345, %v5351
      %v5353 = vcombine.low %v4577, %v4578
      %v5355 = vunpack.c.l.s4 1983009808
      %v5356 = vunpack.c.0.s8 %v5355
      %v5357 = vlaneseq
      %v5358 = vshrl.u32 %v5357, 7
      %v5359 = vsub.s32 %v5356, %v5358
      %v5360 = vrot.slane %v5353, %v5359
      %v5361 = vcombine.low %v5336, %v5344
      %v5363 = vunpack.c.l.s4 1934713408
      %v5364 = vunpack.c.0.s8 %v5363
      %v5365 = vlaneseq
      %v5366 = vshrl.u32 %v5365, 7
      %v5367 = vsub.s32 %v5364, %v5366
      %v5368 = vrot.slane %v5361, %v5367
      %v5369 = vcombine.low %v5352, %v5360
      %v5371 = vunpack.c.l.s4 1934713408
      %v5372 = vunpack.c.0.s8 %v5371
      %v5373 = vlaneseq
      %v5374 = vshrl.u32 %v5373, 7
      %v5375 = vsub.s32 %v5372, %v5374
      %v5376 = vrot.slane %v5369, %v5375
      %v5377 = vcombine.low %v5368, %v5376
      %v5378 = vcombine.high %v5368, %v5376
      %v5381 = vpack.i.b16 %v4677, %v4627
      %v5382 = vshrl.u32 %v4627, 16
      %v5383 = vshrl.u32 %v4677, 16
      %v5384 = vpack.i.b16 %v5383, %v5382
      %v5387 = vpack.i.b16 %v4678, %v4628
      %v5388 = vshrl.u32 %v4628, 16
      %v5389 = vshrl.u32 %v4678, 16
      %v5390 = vpack.i.b16 %v5389, %v5388
      %v5393 = vpack.i.b16 %v4777, %v4727
      %v5394 = vshrl.u32 %v4727, 16
      %v5395 = vshrl.u32 %v4777, 16
      %v5396 = vpack.i.b16 %v5395, %v5394
      %v5399 = vpack.i.b16 %v4778, %v4728
      %v5400 = vshrl.u32 %v4728, 16
      %v5401 = vshrl.u32 %v4778, 16
      %v5402 = vpack.i.b16 %v5401, %v5400
      %v5405 = vpack.i.b16 %v4877, %v4827
      %v5406 = vshrl.u32 %v4827, 16
      %v5407 = vshrl.u32 %v4877, 16
      %v5408 = vpack.i.b16 %v5407, %v5406
      %v5411 = vpack.i.b16 %v4878, %v4828
      %v5412 = vshrl.u32 %v4828, 16
      %v5413 = vshrl.u32 %v4878, 16
      %v5414 = vpack.i.b16 %v5413, %v5412
      %v5417 = vpack.i.b16 %v4977, %v4927
      %v5418 = vshrl.u32 %v4927, 16
      %v5419 = vshrl.u32 %v4977, 16
      %v5420 = vpack.i.b16 %v5419, %v5418
      %v5423 = vpack.i.b16 %v4978, %v4928
      %v5424 = vshrl.u32 %v4928, 16
      %v5425 = vshrl.u32 %v4978, 16
      %v5426 = vpack.i.b16 %v5425, %v5424
      %v5429 = vpack.i.b16 %v5077, %v5027
      %v5430 = vshrl.u32 %v5027, 16
      %v5431 = vshrl.u32 %v5077, 16
      %v5432 = vpack.i.b16 %v5431, %v5430
      %v5435 = vpack.i.b16 %v5078, %v5028
      %v5436 = vshrl.u32 %v5028, 16
      %v5437 = vshrl.u32 %v5078, 16
      %v5438 = vpack.i.b16 %v5437, %v5436
      %v5441 = vpack.i.b16 %v5177, %v5127
      %v5442 = vshrl.u32 %v5127, 16
      %v5443 = vshrl.u32 %v5177, 16
      %v5444 = vpack.i.b16 %v5443, %v5442
      %v5447 = vpack.i.b16 %v5178, %v5128
      %v5448 = vshrl.u32 %v5128, 16
      %v5449 = vshrl.u32 %v5178, 16
      %v5450 = vpack.i.b16 %v5449, %v5448
      %v5453 = vpack.i.b16 %v5277, %v5227
      %v5454 = vshrl.u32 %v5227, 16
      %v5455 = vshrl.u32 %v5277, 16
      %v5456 = vpack.i.b16 %v5455, %v5454
      %v5459 = vpack.i.b16 %v5278, %v5228
      %v5460 = vshrl.u32 %v5228, 16
      %v5461 = vshrl.u32 %v5278, 16
      %v5462 = vpack.i.b16 %v5461, %v5460
      %v5465 = vpack.i.b16 %v5377, %v5327
      %v5466 = vshrl.u32 %v5327, 16
      %v5467 = vshrl.u32 %v5377, 16
      %v5468 = vpack.i.b16 %v5467, %v5466
      %v5471 = vpack.i.b16 %v5378, %v5328
      %v5472 = vshrl.u32 %v5328, 16
      %v5473 = vshrl.u32 %v5378, 16
      %v5474 = vpack.i.b16 %v5473, %v5472
      %5475 = vrot.lane.b32.xlu0 %v1181, 64
      %v5476 = vpop.permute.xlu0 %5475
      %5477 = vrot.lane.b32.xlu0 %v1182, 64
      %v5478 = vpop.permute.xlu0 %5477
      %5479 = vrot.lane.b32.xlu0 %v1183, 64
      %v5480 = vpop.permute.xlu0 %5479
      %5481 = vrot.lane.b32.xlu0 %v1184, 64
      %v5482 = vpop.permute.xlu0 %5481
      %5483 = vrot.lane.b32.xlu0 %v1185, 64
      %v5484 = vpop.permute.xlu0 %5483
      %5485 = vrot.lane.b32.xlu0 %v1186, 64
      %v5486 = vpop.permute.xlu0 %5485
      %5487 = vrot.lane.b32.xlu0 %v1187, 64
      %v5488 = vpop.permute.xlu0 %5487
      %5489 = vrot.lane.b32.xlu0 %v1188, 64
      %v5490 = vpop.permute.xlu0 %5489
      %5491 = vrot.lane.b32.xlu0 %v1198, 64
      %v5492 = vpop.permute.xlu0 %5491
      %5493 = vrot.lane.b32.xlu0 %v1200, 64
      %v5494 = vpop.permute.xlu0 %5493
      %5495 = vrot.lane.b32.xlu0 %v1202, 64
      %v5496 = vpop.permute.xlu0 %5495
      %5497 = vrot.lane.b32.xlu0 %v1204, 64
      %v5498 = vpop.permute.xlu0 %5497
      %5499 = vrot.lane.b32.xlu0 %v1206, 64
      %v5500 = vpop.permute.xlu0 %5499
      %5501 = vrot.lane.b32.xlu0 %v1208, 64
      %v5502 = vpop.permute.xlu0 %5501
      %5503 = vrot.lane.b32.xlu0 %v1210, 64
      %v5504 = vpop.permute.xlu0 %5503
      %5505 = vrot.lane.b32.xlu0 %v1212, 64
      %v5506 = vpop.permute.xlu0 %5505
      %5507 = vrot.lane.b32.xlu0 %v1214, 64
      %v5508 = vpop.permute.xlu0 %5507
      %5509 = vrot.lane.b32.xlu0 %v1216, 64
      %v5510 = vpop.permute.xlu0 %5509
      %5511 = vrot.lane.b32.xlu0 %v1218, 64
      %v5512 = vpop.permute.xlu0 %5511
      %5513 = vrot.lane.b32.xlu0 %v1220, 64
      %v5514 = vpop.permute.xlu0 %5513
      %5515 = vrot.lane.b32.xlu0 %v1222, 64
      %v5516 = vpop.permute.xlu0 %5515
      %5517 = vrot.lane.b32.xlu0 %v1224, 64
      %v5518 = vpop.permute.xlu0 %5517
      %5519 = vrot.lane.b32.xlu0 %v1226, 64
      %v5520 = vpop.permute.xlu0 %5519
      %5521 = vrot.lane.b32.xlu0 %v1228, 64
      %v5522 = vpop.permute.xlu0 %5521
      %5523 = vrot.lane.b32.xlu0 %v1230, 64
      %v5524 = vpop.permute.xlu0 %5523
      %5525 = vrot.lane.b32.xlu0 %v1232, 64
      %v5526 = vpop.permute.xlu0 %5525
      %5527 = vrot.lane.b32.xlu0 %v1234, 64
      %v5528 = vpop.permute.xlu0 %5527
      %5529 = vrot.lane.b32.xlu0 %v1236, 64
      %v5530 = vpop.permute.xlu0 %5529
      %5531 = vrot.lane.b32.xlu0 %v1238, 64
      %v5532 = vpop.permute.xlu0 %5531
      %5533 = vrot.lane.b32.xlu0 %v1240, 64
      %v5534 = vpop.permute.xlu0 %5533
      %5535 = vrot.lane.b32.xlu0 %v1242, 64
      %v5536 = vpop.permute.xlu0 %5535
      %5537 = vrot.lane.b32.xlu0 %v1244, 64
      %v5538 = vpop.permute.xlu0 %5537
      %v5541 = vpack.i.b16 %v5492, %v5476
      %v5543 = vshrl.u32 %v5476, 16
      %v5544 = vshrl.u32 %v5492, 16
      %v5545 = vpack.i.b16 %v5544, %v5543
      %v5549 = vpack.i.b16 %v5524, %v5508
      %v5551 = vshrl.u32 %v5508, 16
      %v5552 = vshrl.u32 %v5524, 16
      %v5553 = vpack.i.b16 %v5552, %v5551
      %v5557 = vpack.i.b16 %v5494, %v5478
      %v5559 = vshrl.u32 %v5478, 16
      %v5560 = vshrl.u32 %v5494, 16
      %v5561 = vpack.i.b16 %v5560, %v5559
      %v5565 = vpack.i.b16 %v5526, %v5510
      %v5567 = vshrl.u32 %v5510, 16
      %v5568 = vshrl.u32 %v5526, 16
      %v5569 = vpack.i.b16 %v5568, %v5567
      %v5573 = vpack.i.b16 %v5496, %v5480
      %v5575 = vshrl.u32 %v5480, 16
      %v5576 = vshrl.u32 %v5496, 16
      %v5577 = vpack.i.b16 %v5576, %v5575
      %v5581 = vpack.i.b16 %v5528, %v5512
      %v5583 = vshrl.u32 %v5512, 16
      %v5584 = vshrl.u32 %v5528, 16
      %v5585 = vpack.i.b16 %v5584, %v5583
      %v5589 = vpack.i.b16 %v5498, %v5482
      %v5591 = vshrl.u32 %v5482, 16
      %v5592 = vshrl.u32 %v5498, 16
      %v5593 = vpack.i.b16 %v5592, %v5591
      %v5597 = vpack.i.b16 %v5530, %v5514
      %v5599 = vshrl.u32 %v5514, 16
      %v5600 = vshrl.u32 %v5530, 16
      %v5601 = vpack.i.b16 %v5600, %v5599
      %v5605 = vpack.i.b16 %v5500, %v5484
      %v5607 = vshrl.u32 %v5484, 16
      %v5608 = vshrl.u32 %v5500, 16
      %v5609 = vpack.i.b16 %v5608, %v5607
      %v5613 = vpack.i.b16 %v5532, %v5516
      %v5615 = vshrl.u32 %v5516, 16
      %v5616 = vshrl.u32 %v5532, 16
      %v5617 = vpack.i.b16 %v5616, %v5615
      %v5621 = vpack.i.b16 %v5502, %v5486
      %v5623 = vshrl.u32 %v5486, 16
      %v5624 = vshrl.u32 %v5502, 16
      %v5625 = vpack.i.b16 %v5624, %v5623
      %v5629 = vpack.i.b16 %v5534, %v5518
      %v5631 = vshrl.u32 %v5518, 16
      %v5632 = vshrl.u32 %v5534, 16
      %v5633 = vpack.i.b16 %v5632, %v5631
      %v5637 = vpack.i.b16 %v5504, %v5488
      %v5639 = vshrl.u32 %v5488, 16
      %v5640 = vshrl.u32 %v5504, 16
      %v5641 = vpack.i.b16 %v5640, %v5639
      %v5645 = vpack.i.b16 %v5536, %v5520
      %v5647 = vshrl.u32 %v5520, 16
      %v5648 = vshrl.u32 %v5536, 16
      %v5649 = vpack.i.b16 %v5648, %v5647
      %v5653 = vpack.i.b16 %v5506, %v5490
      %v5655 = vshrl.u32 %v5490, 16
      %v5656 = vshrl.u32 %v5506, 16
      %v5657 = vpack.i.b16 %v5656, %v5655
      %v5661 = vpack.i.b16 %v5538, %v5522
      %v5663 = vshrl.u32 %v5522, 16
      %v5664 = vshrl.u32 %v5538, 16
      %v5665 = vpack.i.b16 %v5664, %v5663
      %v5667 = vcombine.high %v5541, %v1262
      %v5669 = vunpack.c.l.s4 1983009808
      %v5670 = vunpack.c.0.s8 %v5669
      %v5671 = vlaneseq
      %v5672 = vshrl.u32 %v5671, 7
      %v5673 = vsub.s32 %v5670, %v5672
      %v5674 = vrot.slane %v5541, %v5673
      %v5676 = vunpack.c.l.s4 1983009808
      %v5677 = vunpack.c.0.s8 %v5676
      %v5678 = vlaneseq
      %v5679 = vshrl.u32 %v5678, 7
      %v5680 = vsub.s32 %v5677, %v5679
      %v5681 = vrot.slane %v5667, %v5680
      %v5682 = vcombine.high %v5549, %v1262
      %v5684 = vunpack.c.l.s4 1983009808
      %v5685 = vunpack.c.0.s8 %v5684
      %v5686 = vlaneseq
      %v5687 = vshrl.u32 %v5686, 7
      %v5688 = vsub.s32 %v5685, %v5687
      %v5689 = vrot.slane %v5549, %v5688
      %v5691 = vunpack.c.l.s4 1983009808
      %v5692 = vunpack.c.0.s8 %v5691
      %v5693 = vlaneseq
      %v5694 = vshrl.u32 %v5693, 7
      %v5695 = vsub.s32 %v5692, %v5694
      %v5696 = vrot.slane %v5682, %v5695
      %v5697 = vcombine.low %v5674, %v5689
      %v5698 = vcombine.high %v5674, %v5689
      %v5700 = vunpack.c.l.s4 1934713408
      %v5701 = vunpack.c.0.s8 %v5700
      %v5702 = vlaneseq
      %v5703 = vshrl.u32 %v5702, 7
      %v5704 = vsub.s32 %v5701, %v5703
      %v5705 = vrot.slane %v5697, %v5704
      %v5707 = vunpack.c.l.s4 1934713408
      %v5708 = vunpack.c.0.s8 %v5707
      %v5709 = vlaneseq
      %v5710 = vshrl.u32 %v5709, 7
      %v5711 = vsub.s32 %v5708, %v5710
      %v5712 = vrot.slane %v5698, %v5711
      %v5713 = vcombine.low %v5681, %v5696
      %v5714 = vcombine.high %v5681, %v5696
      %v5716 = vunpack.c.l.s4 1934713408
      %v5717 = vunpack.c.0.s8 %v5716
      %v5718 = vlaneseq
      %v5719 = vshrl.u32 %v5718, 7
      %v5720 = vsub.s32 %v5717, %v5719
      %v5721 = vrot.slane %v5713, %v5720
      %v5723 = vunpack.c.l.s4 1934713408
      %v5724 = vunpack.c.0.s8 %v5723
      %v5725 = vlaneseq
      %v5726 = vshrl.u32 %v5725, 7
      %v5727 = vsub.s32 %v5724, %v5726
      %v5728 = vrot.slane %v5714, %v5727
      %v5729 = vcombine.high %v5705, 0
      %v5730 = vcombine.high %v5712, 0
      %v5731 = vcombine.high %v5721, 0
      %v5732 = vcombine.high %v5728, 0
      %v5733 = vcombine.high %v5545, %v1265
      %v5735 = vunpack.c.l.s4 1983009808
      %v5736 = vunpack.c.0.s8 %v5735
      %v5737 = vlaneseq
      %v5738 = vshrl.u32 %v5737, 7
      %v5739 = vsub.s32 %v5736, %v5738
      %v5740 = vrot.slane %v5545, %v5739
      %v5742 = vunpack.c.l.s4 1983009808
      %v5743 = vunpack.c.0.s8 %v5742
      %v5744 = vlaneseq
      %v5745 = vshrl.u32 %v5744, 7
      %v5746 = vsub.s32 %v5743, %v5745
      %v5747 = vrot.slane %v5733, %v5746
      %v5748 = vcombine.high %v5553, %v1265
      %v5750 = vunpack.c.l.s4 1983009808
      %v5751 = vunpack.c.0.s8 %v5750
      %v5752 = vlaneseq
      %v5753 = vshrl.u32 %v5752, 7
      %v5754 = vsub.s32 %v5751, %v5753
      %v5755 = vrot.slane %v5553, %v5754
      %v5757 = vunpack.c.l.s4 1983009808
      %v5758 = vunpack.c.0.s8 %v5757
      %v5759 = vlaneseq
      %v5760 = vshrl.u32 %v5759, 7
      %v5761 = vsub.s32 %v5758, %v5760
      %v5762 = vrot.slane %v5748, %v5761
      %v5763 = vcombine.low %v5740, %v5755
      %v5764 = vcombine.high %v5740, %v5755
      %v5766 = vunpack.c.l.s4 1934713408
      %v5767 = vunpack.c.0.s8 %v5766
      %v5768 = vlaneseq
      %v5769 = vshrl.u32 %v5768, 7
      %v5770 = vsub.s32 %v5767, %v5769
      %v5771 = vrot.slane %v5763, %v5770
      %v5773 = vunpack.c.l.s4 1934713408
      %v5774 = vunpack.c.0.s8 %v5773
      %v5775 = vlaneseq
      %v5776 = vshrl.u32 %v5775, 7
      %v5777 = vsub.s32 %v5774, %v5776
      %v5778 = vrot.slane %v5764, %v5777
      %v5779 = vcombine.low %v5747, %v5762
      %v5780 = vcombine.high %v5747, %v5762
      %v5782 = vunpack.c.l.s4 1934713408
      %v5783 = vunpack.c.0.s8 %v5782
      %v5784 = vlaneseq
      %v5785 = vshrl.u32 %v5784, 7
      %v5786 = vsub.s32 %v5783, %v5785
      %v5787 = vrot.slane %v5779, %v5786
      %v5789 = vunpack.c.l.s4 1934713408
      %v5790 = vunpack.c.0.s8 %v5789
      %v5791 = vlaneseq
      %v5792 = vshrl.u32 %v5791, 7
      %v5793 = vsub.s32 %v5790, %v5792
      %v5794 = vrot.slane %v5780, %v5793
      %v5795 = vcombine.high %v5771, 0
      %v5796 = vcombine.high %v5778, 0
      %v5797 = vcombine.high %v5787, 0
      %v5798 = vcombine.high %v5794, 0
      %v5799 = vcombine.high %v5557, %v1262
      %v5801 = vunpack.c.l.s4 1983009808
      %v5802 = vunpack.c.0.s8 %v5801
      %v5803 = vlaneseq
      %v5804 = vshrl.u32 %v5803, 7
      %v5805 = vsub.s32 %v5802, %v5804
      %v5806 = vrot.slane %v5557, %v5805
      %v5808 = vunpack.c.l.s4 1983009808
      %v5809 = vunpack.c.0.s8 %v5808
      %v5810 = vlaneseq
      %v5811 = vshrl.u32 %v5810, 7
      %v5812 = vsub.s32 %v5809, %v5811
      %v5813 = vrot.slane %v5799, %v5812
      %v5814 = vcombine.high %v5565, %v1262
      %v5816 = vunpack.c.l.s4 1983009808
      %v5817 = vunpack.c.0.s8 %v5816
      %v5818 = vlaneseq
      %v5819 = vshrl.u32 %v5818, 7
      %v5820 = vsub.s32 %v5817, %v5819
      %v5821 = vrot.slane %v5565, %v5820
      %v5823 = vunpack.c.l.s4 1983009808
      %v5824 = vunpack.c.0.s8 %v5823
      %v5825 = vlaneseq
      %v5826 = vshrl.u32 %v5825, 7
      %v5827 = vsub.s32 %v5824, %v5826
      %v5828 = vrot.slane %v5814, %v5827
      %v5829 = vcombine.low %v5806, %v5821
      %v5830 = vcombine.high %v5806, %v5821
      %v5832 = vunpack.c.l.s4 1934713408
      %v5833 = vunpack.c.0.s8 %v5832
      %v5834 = vlaneseq
      %v5835 = vshrl.u32 %v5834, 7
      %v5836 = vsub.s32 %v5833, %v5835
      %v5837 = vrot.slane %v5829, %v5836
      %v5839 = vunpack.c.l.s4 1934713408
      %v5840 = vunpack.c.0.s8 %v5839
      %v5841 = vlaneseq
      %v5842 = vshrl.u32 %v5841, 7
      %v5843 = vsub.s32 %v5840, %v5842
      %v5844 = vrot.slane %v5830, %v5843
      %v5845 = vcombine.low %v5813, %v5828
      %v5846 = vcombine.high %v5813, %v5828
      %v5848 = vunpack.c.l.s4 1934713408
      %v5849 = vunpack.c.0.s8 %v5848
      %v5850 = vlaneseq
      %v5851 = vshrl.u32 %v5850, 7
      %v5852 = vsub.s32 %v5849, %v5851
      %v5853 = vrot.slane %v5845, %v5852
      %v5855 = vunpack.c.l.s4 1934713408
      %v5856 = vunpack.c.0.s8 %v5855
      %v5857 = vlaneseq
      %v5858 = vshrl.u32 %v5857, 7
      %v5859 = vsub.s32 %v5856, %v5858
      %v5860 = vrot.slane %v5846, %v5859
      %v5861 = vcombine.high %v5837, 0
      %v5862 = vcombine.high %v5844, 0
      %v5863 = vcombine.high %v5853, 0
      %v5864 = vcombine.high %v5860, 0
      %v5865 = vcombine.high %v5561, %v1265
      %v5867 = vunpack.c.l.s4 1983009808
      %v5868 = vunpack.c.0.s8 %v5867
      %v5869 = vlaneseq
      %v5870 = vshrl.u32 %v5869, 7
      %v5871 = vsub.s32 %v5868, %v5870
      %v5872 = vrot.slane %v5561, %v5871
      %v5874 = vunpack.c.l.s4 1983009808
      %v5875 = vunpack.c.0.s8 %v5874
      %v5876 = vlaneseq
      %v5877 = vshrl.u32 %v5876, 7
      %v5878 = vsub.s32 %v5875, %v5877
      %v5879 = vrot.slane %v5865, %v5878
      %v5880 = vcombine.high %v5569, %v1265
      %v5882 = vunpack.c.l.s4 1983009808
      %v5883 = vunpack.c.0.s8 %v5882
      %v5884 = vlaneseq
      %v5885 = vshrl.u32 %v5884, 7
      %v5886 = vsub.s32 %v5883, %v5885
      %v5887 = vrot.slane %v5569, %v5886
      %v5889 = vunpack.c.l.s4 1983009808
      %v5890 = vunpack.c.0.s8 %v5889
      %v5891 = vlaneseq
      %v5892 = vshrl.u32 %v5891, 7
      %v5893 = vsub.s32 %v5890, %v5892
      %v5894 = vrot.slane %v5880, %v5893
      %v5895 = vcombine.low %v5872, %v5887
      %v5896 = vcombine.high %v5872, %v5887
      %v5898 = vunpack.c.l.s4 1934713408
      %v5899 = vunpack.c.0.s8 %v5898
      %v5900 = vlaneseq
      %v5901 = vshrl.u32 %v5900, 7
      %v5902 = vsub.s32 %v5899, %v5901
      %v5903 = vrot.slane %v5895, %v5902
      %v5905 = vunpack.c.l.s4 1934713408
      %v5906 = vunpack.c.0.s8 %v5905
      %v5907 = vlaneseq
      %v5908 = vshrl.u32 %v5907, 7
      %v5909 = vsub.s32 %v5906, %v5908
      %v5910 = vrot.slane %v5896, %v5909
      %v5911 = vcombine.low %v5879, %v5894
      %v5912 = vcombine.high %v5879, %v5894
      %v5914 = vunpack.c.l.s4 1934713408
      %v5915 = vunpack.c.0.s8 %v5914
      %v5916 = vlaneseq
      %v5917 = vshrl.u32 %v5916, 7
      %v5918 = vsub.s32 %v5915, %v5917
      %v5919 = vrot.slane %v5911, %v5918
      %v5921 = vunpack.c.l.s4 1934713408
      %v5922 = vunpack.c.0.s8 %v5921
      %v5923 = vlaneseq
      %v5924 = vshrl.u32 %v5923, 7
      %v5925 = vsub.s32 %v5922, %v5924
      %v5926 = vrot.slane %v5912, %v5925
      %v5927 = vcombine.high %v5903, 0
      %v5928 = vcombine.high %v5910, 0
      %v5929 = vcombine.high %v5919, 0
      %v5930 = vcombine.high %v5926, 0
      %v5931 = vcombine.high %v5573, %v1262
      %v5933 = vunpack.c.l.s4 1983009808
      %v5934 = vunpack.c.0.s8 %v5933
      %v5935 = vlaneseq
      %v5936 = vshrl.u32 %v5935, 7
      %v5937 = vsub.s32 %v5934, %v5936
      %v5938 = vrot.slane %v5573, %v5937
      %v5940 = vunpack.c.l.s4 1983009808
      %v5941 = vunpack.c.0.s8 %v5940
      %v5942 = vlaneseq
      %v5943 = vshrl.u32 %v5942, 7
      %v5944 = vsub.s32 %v5941, %v5943
      %v5945 = vrot.slane %v5931, %v5944
      %v5946 = vcombine.high %v5581, %v1262
      %v5948 = vunpack.c.l.s4 1983009808
      %v5949 = vunpack.c.0.s8 %v5948
      %v5950 = vlaneseq
      %v5951 = vshrl.u32 %v5950, 7
      %v5952 = vsub.s32 %v5949, %v5951
      %v5953 = vrot.slane %v5581, %v5952
      %v5955 = vunpack.c.l.s4 1983009808
      %v5956 = vunpack.c.0.s8 %v5955
      %v5957 = vlaneseq
      %v5958 = vshrl.u32 %v5957, 7
      %v5959 = vsub.s32 %v5956, %v5958
      %v5960 = vrot.slane %v5946, %v5959
      %v5961 = vcombine.low %v5938, %v5953
      %v5962 = vcombine.high %v5938, %v5953
      %v5964 = vunpack.c.l.s4 1934713408
      %v5965 = vunpack.c.0.s8 %v5964
      %v5966 = vlaneseq
      %v5967 = vshrl.u32 %v5966, 7
      %v5968 = vsub.s32 %v5965, %v5967
      %v5969 = vrot.slane %v5961, %v5968
      %v5971 = vunpack.c.l.s4 1934713408
      %v5972 = vunpack.c.0.s8 %v5971
      %v5973 = vlaneseq
      %v5974 = vshrl.u32 %v5973, 7
      %v5975 = vsub.s32 %v5972, %v5974
      %v5976 = vrot.slane %v5962, %v5975
      %v5977 = vcombine.low %v5945, %v5960
      %v5978 = vcombine.high %v5945, %v5960
      %v5980 = vunpack.c.l.s4 1934713408
      %v5981 = vunpack.c.0.s8 %v5980
      %v5982 = vlaneseq
      %v5983 = vshrl.u32 %v5982, 7
      %v5984 = vsub.s32 %v5981, %v5983
      %v5985 = vrot.slane %v5977, %v5984
      %v5987 = vunpack.c.l.s4 1934713408
      %v5988 = vunpack.c.0.s8 %v5987
      %v5989 = vlaneseq
      %v5990 = vshrl.u32 %v5989, 7
      %v5991 = vsub.s32 %v5988, %v5990
      %v5992 = vrot.slane %v5978, %v5991
      %v5993 = vcombine.high %v5969, 0
      %v5994 = vcombine.high %v5976, 0
      %v5995 = vcombine.high %v5985, 0
      %v5996 = vcombine.high %v5992, 0
      %v5997 = vcombine.high %v5577, %v1265
      %v5999 = vunpack.c.l.s4 1983009808
      %v6000 = vunpack.c.0.s8 %v5999
      %v6001 = vlaneseq
      %v6002 = vshrl.u32 %v6001, 7
      %v6003 = vsub.s32 %v6000, %v6002
      %v6004 = vrot.slane %v5577, %v6003
      %v6006 = vunpack.c.l.s4 1983009808
      %v6007 = vunpack.c.0.s8 %v6006
      %v6008 = vlaneseq
      %v6009 = vshrl.u32 %v6008, 7
      %v6010 = vsub.s32 %v6007, %v6009
      %v6011 = vrot.slane %v5997, %v6010
      %v6012 = vcombine.high %v5585, %v1265
      %v6014 = vunpack.c.l.s4 1983009808
      %v6015 = vunpack.c.0.s8 %v6014
      %v6016 = vlaneseq
      %v6017 = vshrl.u32 %v6016, 7
      %v6018 = vsub.s32 %v6015, %v6017
      %v6019 = vrot.slane %v5585, %v6018
      %v6021 = vunpack.c.l.s4 1983009808
      %v6022 = vunpack.c.0.s8 %v6021
      %v6023 = vlaneseq
      %v6024 = vshrl.u32 %v6023, 7
      %v6025 = vsub.s32 %v6022, %v6024
      %v6026 = vrot.slane %v6012, %v6025
      %v6027 = vcombine.low %v6004, %v6019
      %v6028 = vcombine.high %v6004, %v6019
      %v6030 = vunpack.c.l.s4 1934713408
      %v6031 = vunpack.c.0.s8 %v6030
      %v6032 = vlaneseq
      %v6033 = vshrl.u32 %v6032, 7
      %v6034 = vsub.s32 %v6031, %v6033
      %v6035 = vrot.slane %v6027, %v6034
      %v6037 = vunpack.c.l.s4 1934713408
      %v6038 = vunpack.c.0.s8 %v6037
      %v6039 = vlaneseq
      %v6040 = vshrl.u32 %v6039, 7
      %v6041 = vsub.s32 %v6038, %v6040
      %v6042 = vrot.slane %v6028, %v6041
      %v6043 = vcombine.low %v6011, %v6026
      %v6044 = vcombine.high %v6011, %v6026
      %v6046 = vunpack.c.l.s4 1934713408
      %v6047 = vunpack.c.0.s8 %v6046
      %v6048 = vlaneseq
      %v6049 = vshrl.u32 %v6048, 7
      %v6050 = vsub.s32 %v6047, %v6049
      %v6051 = vrot.slane %v6043, %v6050
      %v6053 = vunpack.c.l.s4 1934713408
      %v6054 = vunpack.c.0.s8 %v6053
      %v6055 = vlaneseq
      %v6056 = vshrl.u32 %v6055, 7
      %v6057 = vsub.s32 %v6054, %v6056
      %v6058 = vrot.slane %v6044, %v6057
      %v6059 = vcombine.high %v6035, 0
      %v6060 = vcombine.high %v6042, 0
      %v6061 = vcombine.high %v6051, 0
      %v6062 = vcombine.high %v6058, 0
      %v6063 = vcombine.high %v5589, %v1262
      %v6065 = vunpack.c.l.s4 1983009808
      %v6066 = vunpack.c.0.s8 %v6065
      %v6067 = vlaneseq
      %v6068 = vshrl.u32 %v6067, 7
      %v6069 = vsub.s32 %v6066, %v6068
      %v6070 = vrot.slane %v5589, %v6069
      %v6072 = vunpack.c.l.s4 1983009808
      %v6073 = vunpack.c.0.s8 %v6072
      %v6074 = vlaneseq
      %v6075 = vshrl.u32 %v6074, 7
      %v6076 = vsub.s32 %v6073, %v6075
      %v6077 = vrot.slane %v6063, %v6076
      %v6078 = vcombine.high %v5597, %v1262
      %v6080 = vunpack.c.l.s4 1983009808
      %v6081 = vunpack.c.0.s8 %v6080
      %v6082 = vlaneseq
      %v6083 = vshrl.u32 %v6082, 7
      %v6084 = vsub.s32 %v6081, %v6083
      %v6085 = vrot.slane %v5597, %v6084
      %v6087 = vunpack.c.l.s4 1983009808
      %v6088 = vunpack.c.0.s8 %v6087
      %v6089 = vlaneseq
      %v6090 = vshrl.u32 %v6089, 7
      %v6091 = vsub.s32 %v6088, %v6090
      %v6092 = vrot.slane %v6078, %v6091
      %v6093 = vcombine.low %v6070, %v6085
      %v6094 = vcombine.high %v6070, %v6085
      %v6096 = vunpack.c.l.s4 1934713408
      %v6097 = vunpack.c.0.s8 %v6096
      %v6098 = vlaneseq
      %v6099 = vshrl.u32 %v6098, 7
      %v6100 = vsub.s32 %v6097, %v6099
      %v6101 = vrot.slane %v6093, %v6100
      %v6103 = vunpack.c.l.s4 1934713408
      %v6104 = vunpack.c.0.s8 %v6103
      %v6105 = vlaneseq
      %v6106 = vshrl.u32 %v6105, 7
      %v6107 = vsub.s32 %v6104, %v6106
      %v6108 = vrot.slane %v6094, %v6107
      %v6109 = vcombine.low %v6077, %v6092
      %v6110 = vcombine.high %v6077, %v6092
      %v6112 = vunpack.c.l.s4 1934713408
      %v6113 = vunpack.c.0.s8 %v6112
      %v6114 = vlaneseq
      %v6115 = vshrl.u32 %v6114, 7
      %v6116 = vsub.s32 %v6113, %v6115
      %v6117 = vrot.slane %v6109, %v6116
      %v6119 = vunpack.c.l.s4 1934713408
      %v6120 = vunpack.c.0.s8 %v6119
      %v6121 = vlaneseq
      %v6122 = vshrl.u32 %v6121, 7
      %v6123 = vsub.s32 %v6120, %v6122
      %v6124 = vrot.slane %v6110, %v6123
      %v6125 = vcombine.high %v6101, 0
      %v6126 = vcombine.high %v6108, 0
      %v6127 = vcombine.high %v6117, 0
      %v6128 = vcombine.high %v6124, 0
      %v6129 = vcombine.high %v5593, %v1265
      %v6131 = vunpack.c.l.s4 1983009808
      %v6132 = vunpack.c.0.s8 %v6131
      %v6133 = vlaneseq
      %v6134 = vshrl.u32 %v6133, 7
      %v6135 = vsub.s32 %v6132, %v6134
      %v6136 = vrot.slane %v5593, %v6135
      %v6138 = vunpack.c.l.s4 1983009808
      %v6139 = vunpack.c.0.s8 %v6138
      %v6140 = vlaneseq
      %v6141 = vshrl.u32 %v6140, 7
      %v6142 = vsub.s32 %v6139, %v6141
      %v6143 = vrot.slane %v6129, %v6142
      %v6144 = vcombine.high %v5601, %v1265
      %v6146 = vunpack.c.l.s4 1983009808
      %v6147 = vunpack.c.0.s8 %v6146
      %v6148 = vlaneseq
      %v6149 = vshrl.u32 %v6148, 7
      %v6150 = vsub.s32 %v6147, %v6149
      %v6151 = vrot.slane %v5601, %v6150
      %v6153 = vunpack.c.l.s4 1983009808
      %v6154 = vunpack.c.0.s8 %v6153
      %v6155 = vlaneseq
      %v6156 = vshrl.u32 %v6155, 7
      %v6157 = vsub.s32 %v6154, %v6156
      %v6158 = vrot.slane %v6144, %v6157
      %v6159 = vcombine.low %v6136, %v6151
      %v6160 = vcombine.high %v6136, %v6151
      %v6162 = vunpack.c.l.s4 1934713408
      %v6163 = vunpack.c.0.s8 %v6162
      %v6164 = vlaneseq
      %v6165 = vshrl.u32 %v6164, 7
      %v6166 = vsub.s32 %v6163, %v6165
      %v6167 = vrot.slane %v6159, %v6166
      %v6169 = vunpack.c.l.s4 1934713408
      %v6170 = vunpack.c.0.s8 %v6169
      %v6171 = vlaneseq
      %v6172 = vshrl.u32 %v6171, 7
      %v6173 = vsub.s32 %v6170, %v6172
      %v6174 = vrot.slane %v6160, %v6173
      %v6175 = vcombine.low %v6143, %v6158
      %v6176 = vcombine.high %v6143, %v6158
      %v6178 = vunpack.c.l.s4 1934713408
      %v6179 = vunpack.c.0.s8 %v6178
      %v6180 = vlaneseq
      %v6181 = vshrl.u32 %v6180, 7
      %v6182 = vsub.s32 %v6179, %v6181
      %v6183 = vrot.slane %v6175, %v6182
      %v6185 = vunpack.c.l.s4 1934713408
      %v6186 = vunpack.c.0.s8 %v6185
      %v6187 = vlaneseq
      %v6188 = vshrl.u32 %v6187, 7
      %v6189 = vsub.s32 %v6186, %v6188
      %v6190 = vrot.slane %v6176, %v6189
      %v6191 = vcombine.high %v6167, 0
      %v6192 = vcombine.high %v6174, 0
      %v6193 = vcombine.high %v6183, 0
      %v6194 = vcombine.high %v6190, 0
      %v6195 = vcombine.high %v5605, %v1262
      %v6197 = vunpack.c.l.s4 1983009808
      %v6198 = vunpack.c.0.s8 %v6197
      %v6199 = vlaneseq
      %v6200 = vshrl.u32 %v6199, 7
      %v6201 = vsub.s32 %v6198, %v6200
      %v6202 = vrot.slane %v5605, %v6201
      %v6204 = vunpack.c.l.s4 1983009808
      %v6205 = vunpack.c.0.s8 %v6204
      %v6206 = vlaneseq
      %v6207 = vshrl.u32 %v6206, 7
      %v6208 = vsub.s32 %v6205, %v6207
      %v6209 = vrot.slane %v6195, %v6208
      %v6210 = vcombine.high %v5613, %v1262
      %v6212 = vunpack.c.l.s4 1983009808
      %v6213 = vunpack.c.0.s8 %v6212
      %v6214 = vlaneseq
      %v6215 = vshrl.u32 %v6214, 7
      %v6216 = vsub.s32 %v6213, %v6215
      %v6217 = vrot.slane %v5613, %v6216
      %v6219 = vunpack.c.l.s4 1983009808
      %v6220 = vunpack.c.0.s8 %v6219
      %v6221 = vlaneseq
      %v6222 = vshrl.u32 %v6221, 7
      %v6223 = vsub.s32 %v6220, %v6222
      %v6224 = vrot.slane %v6210, %v6223
      %v6225 = vcombine.low %v6202, %v6217
      %v6226 = vcombine.high %v6202, %v6217
      %v6228 = vunpack.c.l.s4 1934713408
      %v6229 = vunpack.c.0.s8 %v6228
      %v6230 = vlaneseq
      %v6231 = vshrl.u32 %v6230, 7
      %v6232 = vsub.s32 %v6229, %v6231
      %v6233 = vrot.slane %v6225, %v6232
      %v6235 = vunpack.c.l.s4 1934713408
      %v6236 = vunpack.c.0.s8 %v6235
      %v6237 = vlaneseq
      %v6238 = vshrl.u32 %v6237, 7
      %v6239 = vsub.s32 %v6236, %v6238
      %v6240 = vrot.slane %v6226, %v6239
      %v6241 = vcombine.low %v6209, %v6224
      %v6242 = vcombine.high %v6209, %v6224
      %v6244 = vunpack.c.l.s4 1934713408
      %v6245 = vunpack.c.0.s8 %v6244
      %v6246 = vlaneseq
      %v6247 = vshrl.u32 %v6246, 7
      %v6248 = vsub.s32 %v6245, %v6247
      %v6249 = vrot.slane %v6241, %v6248
      %v6251 = vunpack.c.l.s4 1934713408
      %v6252 = vunpack.c.0.s8 %v6251
      %v6253 = vlaneseq
      %v6254 = vshrl.u32 %v6253, 7
      %v6255 = vsub.s32 %v6252, %v6254
      %v6256 = vrot.slane %v6242, %v6255
      %v6257 = vcombine.high %v6233, 0
      %v6258 = vcombine.high %v6240, 0
      %v6259 = vcombine.high %v6249, 0
      %v6260 = vcombine.high %v6256, 0
      %v6261 = vcombine.high %v5609, %v1265
      %v6263 = vunpack.c.l.s4 1983009808
      %v6264 = vunpack.c.0.s8 %v6263
      %v6265 = vlaneseq
      %v6266 = vshrl.u32 %v6265, 7
      %v6267 = vsub.s32 %v6264, %v6266
      %v6268 = vrot.slane %v5609, %v6267
      %v6270 = vunpack.c.l.s4 1983009808
      %v6271 = vunpack.c.0.s8 %v6270
      %v6272 = vlaneseq
      %v6273 = vshrl.u32 %v6272, 7
      %v6274 = vsub.s32 %v6271, %v6273
      %v6275 = vrot.slane %v6261, %v6274
      %v6276 = vcombine.high %v5617, %v1265
      %v6278 = vunpack.c.l.s4 1983009808
      %v6279 = vunpack.c.0.s8 %v6278
      %v6280 = vlaneseq
      %v6281 = vshrl.u32 %v6280, 7
      %v6282 = vsub.s32 %v6279, %v6281
      %v6283 = vrot.slane %v5617, %v6282
      %v6285 = vunpack.c.l.s4 1983009808
      %v6286 = vunpack.c.0.s8 %v6285
      %v6287 = vlaneseq
      %v6288 = vshrl.u32 %v6287, 7
      %v6289 = vsub.s32 %v6286, %v6288
      %v6290 = vrot.slane %v6276, %v6289
      %v6291 = vcombine.low %v6268, %v6283
      %v6292 = vcombine.high %v6268, %v6283
      %v6294 = vunpack.c.l.s4 1934713408
      %v6295 = vunpack.c.0.s8 %v6294
      %v6296 = vlaneseq
      %v6297 = vshrl.u32 %v6296, 7
      %v6298 = vsub.s32 %v6295, %v6297
      %v6299 = vrot.slane %v6291, %v6298
      %v6301 = vunpack.c.l.s4 1934713408
      %v6302 = vunpack.c.0.s8 %v6301
      %v6303 = vlaneseq
      %v6304 = vshrl.u32 %v6303, 7
      %v6305 = vsub.s32 %v6302, %v6304
      %v6306 = vrot.slane %v6292, %v6305
      %v6307 = vcombine.low %v6275, %v6290
      %v6308 = vcombine.high %v6275, %v6290
      %v6310 = vunpack.c.l.s4 1934713408
      %v6311 = vunpack.c.0.s8 %v6310
      %v6312 = vlaneseq
      %v6313 = vshrl.u32 %v6312, 7
      %v6314 = vsub.s32 %v6311, %v6313
      %v6315 = vrot.slane %v6307, %v6314
      %v6317 = vunpack.c.l.s4 1934713408
      %v6318 = vunpack.c.0.s8 %v6317
      %v6319 = vlaneseq
      %v6320 = vshrl.u32 %v6319, 7
      %v6321 = vsub.s32 %v6318, %v6320
      %v6322 = vrot.slane %v6308, %v6321
      %v6323 = vcombine.high %v6299, 0
      %v6324 = vcombine.high %v6306, 0
      %v6325 = vcombine.high %v6315, 0
      %v6326 = vcombine.high %v6322, 0
      %v6327 = vcombine.high %v5621, %v1262
      %v6329 = vunpack.c.l.s4 1983009808
      %v6330 = vunpack.c.0.s8 %v6329
      %v6331 = vlaneseq
      %v6332 = vshrl.u32 %v6331, 7
      %v6333 = vsub.s32 %v6330, %v6332
      %v6334 = vrot.slane %v5621, %v6333
      %v6336 = vunpack.c.l.s4 1983009808
      %v6337 = vunpack.c.0.s8 %v6336
      %v6338 = vlaneseq
      %v6339 = vshrl.u32 %v6338, 7
      %v6340 = vsub.s32 %v6337, %v6339
      %v6341 = vrot.slane %v6327, %v6340
      %v6342 = vcombine.high %v5629, %v1262
      %v6344 = vunpack.c.l.s4 1983009808
      %v6345 = vunpack.c.0.s8 %v6344
      %v6346 = vlaneseq
      %v6347 = vshrl.u32 %v6346, 7
      %v6348 = vsub.s32 %v6345, %v6347
      %v6349 = vrot.slane %v5629, %v6348
      %v6351 = vunpack.c.l.s4 1983009808
      %v6352 = vunpack.c.0.s8 %v6351
      %v6353 = vlaneseq
      %v6354 = vshrl.u32 %v6353, 7
      %v6355 = vsub.s32 %v6352, %v6354
      %v6356 = vrot.slane %v6342, %v6355
      %v6357 = vcombine.low %v6334, %v6349
      %v6358 = vcombine.high %v6334, %v6349
      %v6360 = vunpack.c.l.s4 1934713408
      %v6361 = vunpack.c.0.s8 %v6360
      %v6362 = vlaneseq
      %v6363 = vshrl.u32 %v6362, 7
      %v6364 = vsub.s32 %v6361, %v6363
      %v6365 = vrot.slane %v6357, %v6364
      %v6367 = vunpack.c.l.s4 1934713408
      %v6368 = vunpack.c.0.s8 %v6367
      %v6369 = vlaneseq
      %v6370 = vshrl.u32 %v6369, 7
      %v6371 = vsub.s32 %v6368, %v6370
      %v6372 = vrot.slane %v6358, %v6371
      %v6373 = vcombine.low %v6341, %v6356
      %v6374 = vcombine.high %v6341, %v6356
      %v6376 = vunpack.c.l.s4 1934713408
      %v6377 = vunpack.c.0.s8 %v6376
      %v6378 = vlaneseq
      %v6379 = vshrl.u32 %v6378, 7
      %v6380 = vsub.s32 %v6377, %v6379
      %v6381 = vrot.slane %v6373, %v6380
      %v6383 = vunpack.c.l.s4 1934713408
      %v6384 = vunpack.c.0.s8 %v6383
      %v6385 = vlaneseq
      %v6386 = vshrl.u32 %v6385, 7
      %v6387 = vsub.s32 %v6384, %v6386
      %v6388 = vrot.slane %v6374, %v6387
      %v6389 = vcombine.high %v6365, 0
      %v6390 = vcombine.high %v6372, 0
      %v6391 = vcombine.high %v6381, 0
      %v6392 = vcombine.high %v6388, 0
      %v6393 = vcombine.high %v5625, %v1265
      %v6395 = vunpack.c.l.s4 1983009808
      %v6396 = vunpack.c.0.s8 %v6395
      %v6397 = vlaneseq
      %v6398 = vshrl.u32 %v6397, 7
      %v6399 = vsub.s32 %v6396, %v6398
      %v6400 = vrot.slane %v5625, %v6399
      %v6402 = vunpack.c.l.s4 1983009808
      %v6403 = vunpack.c.0.s8 %v6402
      %v6404 = vlaneseq
      %v6405 = vshrl.u32 %v6404, 7
      %v6406 = vsub.s32 %v6403, %v6405
      %v6407 = vrot.slane %v6393, %v6406
      %v6408 = vcombine.high %v5633, %v1265
      %v6410 = vunpack.c.l.s4 1983009808
      %v6411 = vunpack.c.0.s8 %v6410
      %v6412 = vlaneseq
      %v6413 = vshrl.u32 %v6412, 7
      %v6414 = vsub.s32 %v6411, %v6413
      %v6415 = vrot.slane %v5633, %v6414
      %v6417 = vunpack.c.l.s4 1983009808
      %v6418 = vunpack.c.0.s8 %v6417
      %v6419 = vlaneseq
      %v6420 = vshrl.u32 %v6419, 7
      %v6421 = vsub.s32 %v6418, %v6420
      %v6422 = vrot.slane %v6408, %v6421
      %v6423 = vcombine.low %v6400, %v6415
      %v6424 = vcombine.high %v6400, %v6415
      %v6426 = vunpack.c.l.s4 1934713408
      %v6427 = vunpack.c.0.s8 %v6426
      %v6428 = vlaneseq
      %v6429 = vshrl.u32 %v6428, 7
      %v6430 = vsub.s32 %v6427, %v6429
      %v6431 = vrot.slane %v6423, %v6430
      %v6433 = vunpack.c.l.s4 1934713408
      %v6434 = vunpack.c.0.s8 %v6433
      %v6435 = vlaneseq
      %v6436 = vshrl.u32 %v6435, 7
      %v6437 = vsub.s32 %v6434, %v6436
      %v6438 = vrot.slane %v6424, %v6437
      %v6439 = vcombine.low %v6407, %v6422
      %v6440 = vcombine.high %v6407, %v6422
      %v6442 = vunpack.c.l.s4 1934713408
      %v6443 = vunpack.c.0.s8 %v6442
      %v6444 = vlaneseq
      %v6445 = vshrl.u32 %v6444, 7
      %v6446 = vsub.s32 %v6443, %v6445
      %v6447 = vrot.slane %v6439, %v6446
      %v6449 = vunpack.c.l.s4 1934713408
      %v6450 = vunpack.c.0.s8 %v6449
      %v6451 = vlaneseq
      %v6452 = vshrl.u32 %v6451, 7
      %v6453 = vsub.s32 %v6450, %v6452
      %v6454 = vrot.slane %v6440, %v6453
      %v6455 = vcombine.high %v6431, 0
      %v6456 = vcombine.high %v6438, 0
      %v6457 = vcombine.high %v6447, 0
      %v6458 = vcombine.high %v6454, 0
      %v6459 = vcombine.high %v5637, %v1262
      %v6461 = vunpack.c.l.s4 1983009808
      %v6462 = vunpack.c.0.s8 %v6461
      %v6463 = vlaneseq
      %v6464 = vshrl.u32 %v6463, 7
      %v6465 = vsub.s32 %v6462, %v6464
      %v6466 = vrot.slane %v5637, %v6465
      %v6468 = vunpack.c.l.s4 1983009808
      %v6469 = vunpack.c.0.s8 %v6468
      %v6470 = vlaneseq
      %v6471 = vshrl.u32 %v6470, 7
      %v6472 = vsub.s32 %v6469, %v6471
      %v6473 = vrot.slane %v6459, %v6472
      %v6474 = vcombine.high %v5645, %v1262
      %v6476 = vunpack.c.l.s4 1983009808
      %v6477 = vunpack.c.0.s8 %v6476
      %v6478 = vlaneseq
      %v6479 = vshrl.u32 %v6478, 7
      %v6480 = vsub.s32 %v6477, %v6479
      %v6481 = vrot.slane %v5645, %v6480
      %v6483 = vunpack.c.l.s4 1983009808
      %v6484 = vunpack.c.0.s8 %v6483
      %v6485 = vlaneseq
      %v6486 = vshrl.u32 %v6485, 7
      %v6487 = vsub.s32 %v6484, %v6486
      %v6488 = vrot.slane %v6474, %v6487
      %v6489 = vcombine.low %v6466, %v6481
      %v6490 = vcombine.high %v6466, %v6481
      %v6492 = vunpack.c.l.s4 1934713408
      %v6493 = vunpack.c.0.s8 %v6492
      %v6494 = vlaneseq
      %v6495 = vshrl.u32 %v6494, 7
      %v6496 = vsub.s32 %v6493, %v6495
      %v6497 = vrot.slane %v6489, %v6496
      %v6499 = vunpack.c.l.s4 1934713408
      %v6500 = vunpack.c.0.s8 %v6499
      %v6501 = vlaneseq
      %v6502 = vshrl.u32 %v6501, 7
      %v6503 = vsub.s32 %v6500, %v6502
      %v6504 = vrot.slane %v6490, %v6503
      %v6505 = vcombine.low %v6473, %v6488
      %v6506 = vcombine.high %v6473, %v6488
      %v6508 = vunpack.c.l.s4 1934713408
      %v6509 = vunpack.c.0.s8 %v6508
      %v6510 = vlaneseq
      %v6511 = vshrl.u32 %v6510, 7
      %v6512 = vsub.s32 %v6509, %v6511
      %v6513 = vrot.slane %v6505, %v6512
      %v6515 = vunpack.c.l.s4 1934713408
      %v6516 = vunpack.c.0.s8 %v6515
      %v6517 = vlaneseq
      %v6518 = vshrl.u32 %v6517, 7
      %v6519 = vsub.s32 %v6516, %v6518
      %v6520 = vrot.slane %v6506, %v6519
      %v6521 = vcombine.high %v6497, 0
      %v6522 = vcombine.high %v6504, 0
      %v6523 = vcombine.high %v6513, 0
      %v6524 = vcombine.high %v6520, 0
      %v6525 = vcombine.high %v5641, %v1265
      %v6527 = vunpack.c.l.s4 1983009808
      %v6528 = vunpack.c.0.s8 %v6527
      %v6529 = vlaneseq
      %v6530 = vshrl.u32 %v6529, 7
      %v6531 = vsub.s32 %v6528, %v6530
      %v6532 = vrot.slane %v5641, %v6531
      %v6534 = vunpack.c.l.s4 1983009808
      %v6535 = vunpack.c.0.s8 %v6534
      %v6536 = vlaneseq
      %v6537 = vshrl.u32 %v6536, 7
      %v6538 = vsub.s32 %v6535, %v6537
      %v6539 = vrot.slane %v6525, %v6538
      %v6540 = vcombine.high %v5649, %v1265
      %v6542 = vunpack.c.l.s4 1983009808
      %v6543 = vunpack.c.0.s8 %v6542
      %v6544 = vlaneseq
      %v6545 = vshrl.u32 %v6544, 7
      %v6546 = vsub.s32 %v6543, %v6545
      %v6547 = vrot.slane %v5649, %v6546
      %v6549 = vunpack.c.l.s4 1983009808
      %v6550 = vunpack.c.0.s8 %v6549
      %v6551 = vlaneseq
      %v6552 = vshrl.u32 %v6551, 7
      %v6553 = vsub.s32 %v6550, %v6552
      %v6554 = vrot.slane %v6540, %v6553
      %v6555 = vcombine.low %v6532, %v6547
      %v6556 = vcombine.high %v6532, %v6547
      %v6558 = vunpack.c.l.s4 1934713408
      %v6559 = vunpack.c.0.s8 %v6558
      %v6560 = vlaneseq
      %v6561 = vshrl.u32 %v6560, 7
      %v6562 = vsub.s32 %v6559, %v6561
      %v6563 = vrot.slane %v6555, %v6562
      %v6565 = vunpack.c.l.s4 1934713408
      %v6566 = vunpack.c.0.s8 %v6565
      %v6567 = vlaneseq
      %v6568 = vshrl.u32 %v6567, 7
      %v6569 = vsub.s32 %v6566, %v6568
      %v6570 = vrot.slane %v6556, %v6569
      %v6571 = vcombine.low %v6539, %v6554
      %v6572 = vcombine.high %v6539, %v6554
      %v6574 = vunpack.c.l.s4 1934713408
      %v6575 = vunpack.c.0.s8 %v6574
      %v6576 = vlaneseq
      %v6577 = vshrl.u32 %v6576, 7
      %v6578 = vsub.s32 %v6575, %v6577
      %v6579 = vrot.slane %v6571, %v6578
      %v6581 = vunpack.c.l.s4 1934713408
      %v6582 = vunpack.c.0.s8 %v6581
      %v6583 = vlaneseq
      %v6584 = vshrl.u32 %v6583, 7
      %v6585 = vsub.s32 %v6582, %v6584
      %v6586 = vrot.slane %v6572, %v6585
      %v6587 = vcombine.high %v6563, 0
      %v6588 = vcombine.high %v6570, 0
      %v6589 = vcombine.high %v6579, 0
      %v6590 = vcombine.high %v6586, 0
      %v6591 = vcombine.high %v5653, %v1262
      %v6593 = vunpack.c.l.s4 1983009808
      %v6594 = vunpack.c.0.s8 %v6593
      %v6595 = vlaneseq
      %v6596 = vshrl.u32 %v6595, 7
      %v6597 = vsub.s32 %v6594, %v6596
      %v6598 = vrot.slane %v5653, %v6597
      %v6600 = vunpack.c.l.s4 1983009808
      %v6601 = vunpack.c.0.s8 %v6600
      %v6602 = vlaneseq
      %v6603 = vshrl.u32 %v6602, 7
      %v6604 = vsub.s32 %v6601, %v6603
      %v6605 = vrot.slane %v6591, %v6604
      %v6606 = vcombine.high %v5661, %v1262
      %v6608 = vunpack.c.l.s4 1983009808
      %v6609 = vunpack.c.0.s8 %v6608
      %v6610 = vlaneseq
      %v6611 = vshrl.u32 %v6610, 7
      %v6612 = vsub.s32 %v6609, %v6611
      %v6613 = vrot.slane %v5661, %v6612
      %v6615 = vunpack.c.l.s4 1983009808
      %v6616 = vunpack.c.0.s8 %v6615
      %v6617 = vlaneseq
      %v6618 = vshrl.u32 %v6617, 7
      %v6619 = vsub.s32 %v6616, %v6618
      %v6620 = vrot.slane %v6606, %v6619
      %v6621 = vcombine.low %v6598, %v6613
      %v6622 = vcombine.high %v6598, %v6613
      %v6624 = vunpack.c.l.s4 1934713408
      %v6625 = vunpack.c.0.s8 %v6624
      %v6626 = vlaneseq
      %v6627 = vshrl.u32 %v6626, 7
      %v6628 = vsub.s32 %v6625, %v6627
      %v6629 = vrot.slane %v6621, %v6628
      %v6631 = vunpack.c.l.s4 1934713408
      %v6632 = vunpack.c.0.s8 %v6631
      %v6633 = vlaneseq
      %v6634 = vshrl.u32 %v6633, 7
      %v6635 = vsub.s32 %v6632, %v6634
      %v6636 = vrot.slane %v6622, %v6635
      %v6637 = vcombine.low %v6605, %v6620
      %v6638 = vcombine.high %v6605, %v6620
      %v6640 = vunpack.c.l.s4 1934713408
      %v6641 = vunpack.c.0.s8 %v6640
      %v6642 = vlaneseq
      %v6643 = vshrl.u32 %v6642, 7
      %v6644 = vsub.s32 %v6641, %v6643
      %v6645 = vrot.slane %v6637, %v6644
      %v6647 = vunpack.c.l.s4 1934713408
      %v6648 = vunpack.c.0.s8 %v6647
      %v6649 = vlaneseq
      %v6650 = vshrl.u32 %v6649, 7
      %v6651 = vsub.s32 %v6648, %v6650
      %v6652 = vrot.slane %v6638, %v6651
      %v6653 = vcombine.high %v6629, 0
      %v6654 = vcombine.high %v6636, 0
      %v6655 = vcombine.high %v6645, 0
      %v6656 = vcombine.high %v6652, 0
      %v6657 = vcombine.high %v5657, %v1265
      %v6659 = vunpack.c.l.s4 1983009808
      %v6660 = vunpack.c.0.s8 %v6659
      %v6661 = vlaneseq
      %v6662 = vshrl.u32 %v6661, 7
      %v6663 = vsub.s32 %v6660, %v6662
      %v6664 = vrot.slane %v5657, %v6663
      %v6666 = vunpack.c.l.s4 1983009808
      %v6667 = vunpack.c.0.s8 %v6666
      %v6668 = vlaneseq
      %v6669 = vshrl.u32 %v6668, 7
      %v6670 = vsub.s32 %v6667, %v6669
      %v6671 = vrot.slane %v6657, %v6670
      %v6672 = vcombine.high %v5665, %v1265
      %v6674 = vunpack.c.l.s4 1983009808
      %v6675 = vunpack.c.0.s8 %v6674
      %v6676 = vlaneseq
      %v6677 = vshrl.u32 %v6676, 7
      %v6678 = vsub.s32 %v6675, %v6677
      %v6679 = vrot.slane %v5665, %v6678
      %v6681 = vunpack.c.l.s4 1983009808
      %v6682 = vunpack.c.0.s8 %v6681
      %v6683 = vlaneseq
      %v6684 = vshrl.u32 %v6683, 7
      %v6685 = vsub.s32 %v6682, %v6684
      %v6686 = vrot.slane %v6672, %v6685
      %v6687 = vcombine.low %v6664, %v6679
      %v6688 = vcombine.high %v6664, %v6679
      %v6690 = vunpack.c.l.s4 1934713408
      %v6691 = vunpack.c.0.s8 %v6690
      %v6692 = vlaneseq
      %v6693 = vshrl.u32 %v6692, 7
      %v6694 = vsub.s32 %v6691, %v6693
      %v6695 = vrot.slane %v6687, %v6694
      %v6697 = vunpack.c.l.s4 1934713408
      %v6698 = vunpack.c.0.s8 %v6697
      %v6699 = vlaneseq
      %v6700 = vshrl.u32 %v6699, 7
      %v6701 = vsub.s32 %v6698, %v6700
      %v6702 = vrot.slane %v6688, %v6701
      %v6703 = vcombine.low %v6671, %v6686
      %v6704 = vcombine.high %v6671, %v6686
      %v6706 = vunpack.c.l.s4 1934713408
      %v6707 = vunpack.c.0.s8 %v6706
      %v6708 = vlaneseq
      %v6709 = vshrl.u32 %v6708, 7
      %v6710 = vsub.s32 %v6707, %v6709
      %v6711 = vrot.slane %v6703, %v6710
      %v6713 = vunpack.c.l.s4 1934713408
      %v6714 = vunpack.c.0.s8 %v6713
      %v6715 = vlaneseq
      %v6716 = vshrl.u32 %v6715, 7
      %v6717 = vsub.s32 %v6714, %v6716
      %v6718 = vrot.slane %v6704, %v6717
      %v6719 = vcombine.high %v6695, 0
      %v6720 = vcombine.high %v6702, 0
      %v6721 = vcombine.high %v6711, 0
      %v6722 = vcombine.high %v6718, 0
      %v6723 = vcombine.low %v5705, %v5712
      %v6725 = vunpack.c.l.s4 1983009808
      %v6726 = vunpack.c.0.s8 %v6725
      %v6727 = vlaneseq
      %v6728 = vshrl.u32 %v6727, 7
      %v6729 = vsub.s32 %v6726, %v6728
      %v6730 = vrot.slane %v6723, %v6729
      %v6731 = vcombine.low %v5729, %v5730
      %v6733 = vunpack.c.l.s4 1983009808
      %v6734 = vunpack.c.0.s8 %v6733
      %v6735 = vlaneseq
      %v6736 = vshrl.u32 %v6735, 7
      %v6737 = vsub.s32 %v6734, %v6736
      %v6738 = vrot.slane %v6731, %v6737
      %v6739 = vcombine.low %v5721, %v5728
      %v6741 = vunpack.c.l.s4 1983009808
      %v6742 = vunpack.c.0.s8 %v6741
      %v6743 = vlaneseq
      %v6744 = vshrl.u32 %v6743, 7
      %v6745 = vsub.s32 %v6742, %v6744
      %v6746 = vrot.slane %v6739, %v6745
      %v6747 = vcombine.low %v5731, %v5732
      %v6749 = vunpack.c.l.s4 1983009808
      %v6750 = vunpack.c.0.s8 %v6749
      %v6751 = vlaneseq
      %v6752 = vshrl.u32 %v6751, 7
      %v6753 = vsub.s32 %v6750, %v6752
      %v6754 = vrot.slane %v6747, %v6753
      %v6755 = vcombine.low %v6730, %v6738
      %v6757 = vunpack.c.l.s4 1934713408
      %v6758 = vunpack.c.0.s8 %v6757
      %v6759 = vlaneseq
      %v6760 = vshrl.u32 %v6759, 7
      %v6761 = vsub.s32 %v6758, %v6760
      %v6762 = vrot.slane %v6755, %v6761
      %v6763 = vcombine.low %v6746, %v6754
      %v6765 = vunpack.c.l.s4 1934713408
      %v6766 = vunpack.c.0.s8 %v6765
      %v6767 = vlaneseq
      %v6768 = vshrl.u32 %v6767, 7
      %v6769 = vsub.s32 %v6766, %v6768
      %v6770 = vrot.slane %v6763, %v6769
      %v6771 = vcombine.low %v6762, %v6770
      %v6772 = vcombine.high %v6762, %v6770
      %v6773 = vcombine.low %v5771, %v5778
      %v6775 = vunpack.c.l.s4 1983009808
      %v6776 = vunpack.c.0.s8 %v6775
      %v6777 = vlaneseq
      %v6778 = vshrl.u32 %v6777, 7
      %v6779 = vsub.s32 %v6776, %v6778
      %v6780 = vrot.slane %v6773, %v6779
      %v6781 = vcombine.low %v5795, %v5796
      %v6783 = vunpack.c.l.s4 1983009808
      %v6784 = vunpack.c.0.s8 %v6783
      %v6785 = vlaneseq
      %v6786 = vshrl.u32 %v6785, 7
      %v6787 = vsub.s32 %v6784, %v6786
      %v6788 = vrot.slane %v6781, %v6787
      %v6789 = vcombine.low %v5787, %v5794
      %v6791 = vunpack.c.l.s4 1983009808
      %v6792 = vunpack.c.0.s8 %v6791
      %v6793 = vlaneseq
      %v6794 = vshrl.u32 %v6793, 7
      %v6795 = vsub.s32 %v6792, %v6794
      %v6796 = vrot.slane %v6789, %v6795
      %v6797 = vcombine.low %v5797, %v5798
      %v6799 = vunpack.c.l.s4 1983009808
      %v6800 = vunpack.c.0.s8 %v6799
      %v6801 = vlaneseq
      %v6802 = vshrl.u32 %v6801, 7
      %v6803 = vsub.s32 %v6800, %v6802
      %v6804 = vrot.slane %v6797, %v6803
      %v6805 = vcombine.low %v6780, %v6788
      %v6807 = vunpack.c.l.s4 1934713408
      %v6808 = vunpack.c.0.s8 %v6807
      %v6809 = vlaneseq
      %v6810 = vshrl.u32 %v6809, 7
      %v6811 = vsub.s32 %v6808, %v6810
      %v6812 = vrot.slane %v6805, %v6811
      %v6813 = vcombine.low %v6796, %v6804
      %v6815 = vunpack.c.l.s4 1934713408
      %v6816 = vunpack.c.0.s8 %v6815
      %v6817 = vlaneseq
      %v6818 = vshrl.u32 %v6817, 7
      %v6819 = vsub.s32 %v6816, %v6818
      %v6820 = vrot.slane %v6813, %v6819
      %v6821 = vcombine.low %v6812, %v6820
      %v6822 = vcombine.high %v6812, %v6820
      %v6823 = vcombine.low %v5837, %v5844
      %v6825 = vunpack.c.l.s4 1983009808
      %v6826 = vunpack.c.0.s8 %v6825
      %v6827 = vlaneseq
      %v6828 = vshrl.u32 %v6827, 7
      %v6829 = vsub.s32 %v6826, %v6828
      %v6830 = vrot.slane %v6823, %v6829
      %v6831 = vcombine.low %v5861, %v5862
      %v6833 = vunpack.c.l.s4 1983009808
      %v6834 = vunpack.c.0.s8 %v6833
      %v6835 = vlaneseq
      %v6836 = vshrl.u32 %v6835, 7
      %v6837 = vsub.s32 %v6834, %v6836
      %v6838 = vrot.slane %v6831, %v6837
      %v6839 = vcombine.low %v5853, %v5860
      %v6841 = vunpack.c.l.s4 1983009808
      %v6842 = vunpack.c.0.s8 %v6841
      %v6843 = vlaneseq
      %v6844 = vshrl.u32 %v6843, 7
      %v6845 = vsub.s32 %v6842, %v6844
      %v6846 = vrot.slane %v6839, %v6845
      %v6847 = vcombine.low %v5863, %v5864
      %v6849 = vunpack.c.l.s4 1983009808
      %v6850 = vunpack.c.0.s8 %v6849
      %v6851 = vlaneseq
      %v6852 = vshrl.u32 %v6851, 7
      %v6853 = vsub.s32 %v6850, %v6852
      %v6854 = vrot.slane %v6847, %v6853
      %v6855 = vcombine.low %v6830, %v6838
      %v6857 = vunpack.c.l.s4 1934713408
      %v6858 = vunpack.c.0.s8 %v6857
      %v6859 = vlaneseq
      %v6860 = vshrl.u32 %v6859, 7
      %v6861 = vsub.s32 %v6858, %v6860
      %v6862 = vrot.slane %v6855, %v6861
      %v6863 = vcombine.low %v6846, %v6854
      %v6865 = vunpack.c.l.s4 1934713408
      %v6866 = vunpack.c.0.s8 %v6865
      %v6867 = vlaneseq
      %v6868 = vshrl.u32 %v6867, 7
      %v6869 = vsub.s32 %v6866, %v6868
      %v6870 = vrot.slane %v6863, %v6869
      %v6871 = vcombine.low %v6862, %v6870
      %v6872 = vcombine.high %v6862, %v6870
      %v6873 = vcombine.low %v5903, %v5910
      %v6875 = vunpack.c.l.s4 1983009808
      %v6876 = vunpack.c.0.s8 %v6875
      %v6877 = vlaneseq
      %v6878 = vshrl.u32 %v6877, 7
      %v6879 = vsub.s32 %v6876, %v6878
      %v6880 = vrot.slane %v6873, %v6879
      %v6881 = vcombine.low %v5927, %v5928
      %v6883 = vunpack.c.l.s4 1983009808
      %v6884 = vunpack.c.0.s8 %v6883
      %v6885 = vlaneseq
      %v6886 = vshrl.u32 %v6885, 7
      %v6887 = vsub.s32 %v6884, %v6886
      %v6888 = vrot.slane %v6881, %v6887
      %v6889 = vcombine.low %v5919, %v5926
      %v6891 = vunpack.c.l.s4 1983009808
      %v6892 = vunpack.c.0.s8 %v6891
      %v6893 = vlaneseq
      %v6894 = vshrl.u32 %v6893, 7
      %v6895 = vsub.s32 %v6892, %v6894
      %v6896 = vrot.slane %v6889, %v6895
      %v6897 = vcombine.low %v5929, %v5930
      %v6899 = vunpack.c.l.s4 1983009808
      %v6900 = vunpack.c.0.s8 %v6899
      %v6901 = vlaneseq
      %v6902 = vshrl.u32 %v6901, 7
      %v6903 = vsub.s32 %v6900, %v6902
      %v6904 = vrot.slane %v6897, %v6903
      %v6905 = vcombine.low %v6880, %v6888
      %v6907 = vunpack.c.l.s4 1934713408
      %v6908 = vunpack.c.0.s8 %v6907
      %v6909 = vlaneseq
      %v6910 = vshrl.u32 %v6909, 7
      %v6911 = vsub.s32 %v6908, %v6910
      %v6912 = vrot.slane %v6905, %v6911
      %v6913 = vcombine.low %v6896, %v6904
      %v6915 = vunpack.c.l.s4 1934713408
      %v6916 = vunpack.c.0.s8 %v6915
      %v6917 = vlaneseq
      %v6918 = vshrl.u32 %v6917, 7
      %v6919 = vsub.s32 %v6916, %v6918
      %v6920 = vrot.slane %v6913, %v6919
      %v6921 = vcombine.low %v6912, %v6920
      %v6922 = vcombine.high %v6912, %v6920
      %v6923 = vcombine.low %v5969, %v5976
      %v6925 = vunpack.c.l.s4 1983009808
      %v6926 = vunpack.c.0.s8 %v6925
      %v6927 = vlaneseq
      %v6928 = vshrl.u32 %v6927, 7
      %v6929 = vsub.s32 %v6926, %v6928
      %v6930 = vrot.slane %v6923, %v6929
      %v6931 = vcombine.low %v5993, %v5994
      %v6933 = vunpack.c.l.s4 1983009808
      %v6934 = vunpack.c.0.s8 %v6933
      %v6935 = vlaneseq
      %v6936 = vshrl.u32 %v6935, 7
      %v6937 = vsub.s32 %v6934, %v6936
      %v6938 = vrot.slane %v6931, %v6937
      %v6939 = vcombine.low %v5985, %v5992
      %v6941 = vunpack.c.l.s4 1983009808
      %v6942 = vunpack.c.0.s8 %v6941
      %v6943 = vlaneseq
      %v6944 = vshrl.u32 %v6943, 7
      %v6945 = vsub.s32 %v6942, %v6944
      %v6946 = vrot.slane %v6939, %v6945
      %v6947 = vcombine.low %v5995, %v5996
      %v6949 = vunpack.c.l.s4 1983009808
      %v6950 = vunpack.c.0.s8 %v6949
      %v6951 = vlaneseq
      %v6952 = vshrl.u32 %v6951, 7
      %v6953 = vsub.s32 %v6950, %v6952
      %v6954 = vrot.slane %v6947, %v6953
      %v6955 = vcombine.low %v6930, %v6938
      %v6957 = vunpack.c.l.s4 1934713408
      %v6958 = vunpack.c.0.s8 %v6957
      %v6959 = vlaneseq
      %v6960 = vshrl.u32 %v6959, 7
      %v6961 = vsub.s32 %v6958, %v6960
      %v6962 = vrot.slane %v6955, %v6961
      %v6963 = vcombine.low %v6946, %v6954
      %v6965 = vunpack.c.l.s4 1934713408
      %v6966 = vunpack.c.0.s8 %v6965
      %v6967 = vlaneseq
      %v6968 = vshrl.u32 %v6967, 7
      %v6969 = vsub.s32 %v6966, %v6968
      %v6970 = vrot.slane %v6963, %v6969
      %v6971 = vcombine.low %v6962, %v6970
      %v6972 = vcombine.high %v6962, %v6970
      %v6973 = vcombine.low %v6035, %v6042
      %v6975 = vunpack.c.l.s4 1983009808
      %v6976 = vunpack.c.0.s8 %v6975
      %v6977 = vlaneseq
      %v6978 = vshrl.u32 %v6977, 7
      %v6979 = vsub.s32 %v6976, %v6978
      %v6980 = vrot.slane %v6973, %v6979
      %v6981 = vcombine.low %v6059, %v6060
      %v6983 = vunpack.c.l.s4 1983009808
      %v6984 = vunpack.c.0.s8 %v6983
      %v6985 = vlaneseq
      %v6986 = vshrl.u32 %v6985, 7
      %v6987 = vsub.s32 %v6984, %v6986
      %v6988 = vrot.slane %v6981, %v6987
      %v6989 = vcombine.low %v6051, %v6058
      %v6991 = vunpack.c.l.s4 1983009808
      %v6992 = vunpack.c.0.s8 %v6991
      %v6993 = vlaneseq
      %v6994 = vshrl.u32 %v6993, 7
      %v6995 = vsub.s32 %v6992, %v6994
      %v6996 = vrot.slane %v6989, %v6995
      %v6997 = vcombine.low %v6061, %v6062
      %v6999 = vunpack.c.l.s4 1983009808
      %v7000 = vunpack.c.0.s8 %v6999
      %v7001 = vlaneseq
      %v7002 = vshrl.u32 %v7001, 7
      %v7003 = vsub.s32 %v7000, %v7002
      %v7004 = vrot.slane %v6997, %v7003
      %v7005 = vcombine.low %v6980, %v6988
      %v7007 = vunpack.c.l.s4 1934713408
      %v7008 = vunpack.c.0.s8 %v7007
      %v7009 = vlaneseq
      %v7010 = vshrl.u32 %v7009, 7
      %v7011 = vsub.s32 %v7008, %v7010
      %v7012 = vrot.slane %v7005, %v7011
      %v7013 = vcombine.low %v6996, %v7004
      %v7015 = vunpack.c.l.s4 1934713408
      %v7016 = vunpack.c.0.s8 %v7015
      %v7017 = vlaneseq
      %v7018 = vshrl.u32 %v7017, 7
      %v7019 = vsub.s32 %v7016, %v7018
      %v7020 = vrot.slane %v7013, %v7019
      %v7021 = vcombine.low %v7012, %v7020
      %v7022 = vcombine.high %v7012, %v7020
      %v7023 = vcombine.low %v6101, %v6108
      %v7025 = vunpack.c.l.s4 1983009808
      %v7026 = vunpack.c.0.s8 %v7025
      %v7027 = vlaneseq
      %v7028 = vshrl.u32 %v7027, 7
      %v7029 = vsub.s32 %v7026, %v7028
      %v7030 = vrot.slane %v7023, %v7029
      %v7031 = vcombine.low %v6125, %v6126
      %v7033 = vunpack.c.l.s4 1983009808
      %v7034 = vunpack.c.0.s8 %v7033
      %v7035 = vlaneseq
      %v7036 = vshrl.u32 %v7035, 7
      %v7037 = vsub.s32 %v7034, %v7036
      %v7038 = vrot.slane %v7031, %v7037
      %v7039 = vcombine.low %v6117, %v6124
      %v7041 = vunpack.c.l.s4 1983009808
      %v7042 = vunpack.c.0.s8 %v7041
      %v7043 = vlaneseq
      %v7044 = vshrl.u32 %v7043, 7
      %v7045 = vsub.s32 %v7042, %v7044
      %v7046 = vrot.slane %v7039, %v7045
      %v7047 = vcombine.low %v6127, %v6128
      %v7049 = vunpack.c.l.s4 1983009808
      %v7050 = vunpack.c.0.s8 %v7049
      %v7051 = vlaneseq
      %v7052 = vshrl.u32 %v7051, 7
      %v7053 = vsub.s32 %v7050, %v7052
      %v7054 = vrot.slane %v7047, %v7053
      %v7055 = vcombine.low %v7030, %v7038
      %v7057 = vunpack.c.l.s4 1934713408
      %v7058 = vunpack.c.0.s8 %v7057
      %v7059 = vlaneseq
      %v7060 = vshrl.u32 %v7059, 7
      %v7061 = vsub.s32 %v7058, %v7060
      %v7062 = vrot.slane %v7055, %v7061
      %v7063 = vcombine.low %v7046, %v7054
      %v7065 = vunpack.c.l.s4 1934713408
      %v7066 = vunpack.c.0.s8 %v7065
      %v7067 = vlaneseq
      %v7068 = vshrl.u32 %v7067, 7
      %v7069 = vsub.s32 %v7066, %v7068
      %v7070 = vrot.slane %v7063, %v7069
      %v7071 = vcombine.low %v7062, %v7070
      %v7072 = vcombine.high %v7062, %v7070
      %v7073 = vcombine.low %v6167, %v6174
      %v7075 = vunpack.c.l.s4 1983009808
      %v7076 = vunpack.c.0.s8 %v7075
      %v7077 = vlaneseq
      %v7078 = vshrl.u32 %v7077, 7
      %v7079 = vsub.s32 %v7076, %v7078
      %v7080 = vrot.slane %v7073, %v7079
      %v7081 = vcombine.low %v6191, %v6192
      %v7083 = vunpack.c.l.s4 1983009808
      %v7084 = vunpack.c.0.s8 %v7083
      %v7085 = vlaneseq
      %v7086 = vshrl.u32 %v7085, 7
      %v7087 = vsub.s32 %v7084, %v7086
      %v7088 = vrot.slane %v7081, %v7087
      %v7089 = vcombine.low %v6183, %v6190
      %v7091 = vunpack.c.l.s4 1983009808
      %v7092 = vunpack.c.0.s8 %v7091
      %v7093 = vlaneseq
      %v7094 = vshrl.u32 %v7093, 7
      %v7095 = vsub.s32 %v7092, %v7094
      %v7096 = vrot.slane %v7089, %v7095
      %v7097 = vcombine.low %v6193, %v6194
      %v7099 = vunpack.c.l.s4 1983009808
      %v7100 = vunpack.c.0.s8 %v7099
      %v7101 = vlaneseq
      %v7102 = vshrl.u32 %v7101, 7
      %v7103 = vsub.s32 %v7100, %v7102
      %v7104 = vrot.slane %v7097, %v7103
      %v7105 = vcombine.low %v7080, %v7088
      %v7107 = vunpack.c.l.s4 1934713408
      %v7108 = vunpack.c.0.s8 %v7107
      %v7109 = vlaneseq
      %v7110 = vshrl.u32 %v7109, 7
      %v7111 = vsub.s32 %v7108, %v7110
      %v7112 = vrot.slane %v7105, %v7111
      %v7113 = vcombine.low %v7096, %v7104
      %v7115 = vunpack.c.l.s4 1934713408
      %v7116 = vunpack.c.0.s8 %v7115
      %v7117 = vlaneseq
      %v7118 = vshrl.u32 %v7117, 7
      %v7119 = vsub.s32 %v7116, %v7118
      %v7120 = vrot.slane %v7113, %v7119
      %v7121 = vcombine.low %v7112, %v7120
      %v7122 = vcombine.high %v7112, %v7120
      %v7123 = vcombine.low %v6233, %v6240
      %v7125 = vunpack.c.l.s4 1983009808
      %v7126 = vunpack.c.0.s8 %v7125
      %v7127 = vlaneseq
      %v7128 = vshrl.u32 %v7127, 7
      %v7129 = vsub.s32 %v7126, %v7128
      %v7130 = vrot.slane %v7123, %v7129
      %v7131 = vcombine.low %v6257, %v6258
      %v7133 = vunpack.c.l.s4 1983009808
      %v7134 = vunpack.c.0.s8 %v7133
      %v7135 = vlaneseq
      %v7136 = vshrl.u32 %v7135, 7
      %v7137 = vsub.s32 %v7134, %v7136
      %v7138 = vrot.slane %v7131, %v7137
      %v7139 = vcombine.low %v6249, %v6256
      %v7141 = vunpack.c.l.s4 1983009808
      %v7142 = vunpack.c.0.s8 %v7141
      %v7143 = vlaneseq
      %v7144 = vshrl.u32 %v7143, 7
      %v7145 = vsub.s32 %v7142, %v7144
      %v7146 = vrot.slane %v7139, %v7145
      %v7147 = vcombine.low %v6259, %v6260
      %v7149 = vunpack.c.l.s4 1983009808
      %v7150 = vunpack.c.0.s8 %v7149
      %v7151 = vlaneseq
      %v7152 = vshrl.u32 %v7151, 7
      %v7153 = vsub.s32 %v7150, %v7152
      %v7154 = vrot.slane %v7147, %v7153
      %v7155 = vcombine.low %v7130, %v7138
      %v7157 = vunpack.c.l.s4 1934713408
      %v7158 = vunpack.c.0.s8 %v7157
      %v7159 = vlaneseq
      %v7160 = vshrl.u32 %v7159, 7
      %v7161 = vsub.s32 %v7158, %v7160
      %v7162 = vrot.slane %v7155, %v7161
      %v7163 = vcombine.low %v7146, %v7154
      %v7165 = vunpack.c.l.s4 1934713408
      %v7166 = vunpack.c.0.s8 %v7165
      %v7167 = vlaneseq
      %v7168 = vshrl.u32 %v7167, 7
      %v7169 = vsub.s32 %v7166, %v7168
      %v7170 = vrot.slane %v7163, %v7169
      %v7171 = vcombine.low %v7162, %v7170
      %v7172 = vcombine.high %v7162, %v7170
      %v7173 = vcombine.low %v6299, %v6306
      %v7175 = vunpack.c.l.s4 1983009808
      %v7176 = vunpack.c.0.s8 %v7175
      %v7177 = vlaneseq
      %v7178 = vshrl.u32 %v7177, 7
      %v7179 = vsub.s32 %v7176, %v7178
      %v7180 = vrot.slane %v7173, %v7179
      %v7181 = vcombine.low %v6323, %v6324
      %v7183 = vunpack.c.l.s4 1983009808
      %v7184 = vunpack.c.0.s8 %v7183
      %v7185 = vlaneseq
      %v7186 = vshrl.u32 %v7185, 7
      %v7187 = vsub.s32 %v7184, %v7186
      %v7188 = vrot.slane %v7181, %v7187
      %v7189 = vcombine.low %v6315, %v6322
      %v7191 = vunpack.c.l.s4 1983009808
      %v7192 = vunpack.c.0.s8 %v7191
      %v7193 = vlaneseq
      %v7194 = vshrl.u32 %v7193, 7
      %v7195 = vsub.s32 %v7192, %v7194
      %v7196 = vrot.slane %v7189, %v7195
      %v7197 = vcombine.low %v6325, %v6326
      %v7199 = vunpack.c.l.s4 1983009808
      %v7200 = vunpack.c.0.s8 %v7199
      %v7201 = vlaneseq
      %v7202 = vshrl.u32 %v7201, 7
      %v7203 = vsub.s32 %v7200, %v7202
      %v7204 = vrot.slane %v7197, %v7203
      %v7205 = vcombine.low %v7180, %v7188
      %v7207 = vunpack.c.l.s4 1934713408
      %v7208 = vunpack.c.0.s8 %v7207
      %v7209 = vlaneseq
      %v7210 = vshrl.u32 %v7209, 7
      %v7211 = vsub.s32 %v7208, %v7210
      %v7212 = vrot.slane %v7205, %v7211
      %v7213 = vcombine.low %v7196, %v7204
      %v7215 = vunpack.c.l.s4 1934713408
      %v7216 = vunpack.c.0.s8 %v7215
      %v7217 = vlaneseq
      %v7218 = vshrl.u32 %v7217, 7
      %v7219 = vsub.s32 %v7216, %v7218
      %v7220 = vrot.slane %v7213, %v7219
      %v7221 = vcombine.low %v7212, %v7220
      %v7222 = vcombine.high %v7212, %v7220
      %v7223 = vcombine.low %v6365, %v6372
      %v7225 = vunpack.c.l.s4 1983009808
      %v7226 = vunpack.c.0.s8 %v7225
      %v7227 = vlaneseq
      %v7228 = vshrl.u32 %v7227, 7
      %v7229 = vsub.s32 %v7226, %v7228
      %v7230 = vrot.slane %v7223, %v7229
      %v7231 = vcombine.low %v6389, %v6390
      %v7233 = vunpack.c.l.s4 1983009808
      %v7234 = vunpack.c.0.s8 %v7233
      %v7235 = vlaneseq
      %v7236 = vshrl.u32 %v7235, 7
      %v7237 = vsub.s32 %v7234, %v7236
      %v7238 = vrot.slane %v7231, %v7237
      %v7239 = vcombine.low %v6381, %v6388
      %v7241 = vunpack.c.l.s4 1983009808
      %v7242 = vunpack.c.0.s8 %v7241
      %v7243 = vlaneseq
      %v7244 = vshrl.u32 %v7243, 7
      %v7245 = vsub.s32 %v7242, %v7244
      %v7246 = vrot.slane %v7239, %v7245
      %v7247 = vcombine.low %v6391, %v6392
      %v7249 = vunpack.c.l.s4 1983009808
      %v7250 = vunpack.c.0.s8 %v7249
      %v7251 = vlaneseq
      %v7252 = vshrl.u32 %v7251, 7
      %v7253 = vsub.s32 %v7250, %v7252
      %v7254 = vrot.slane %v7247, %v7253
      %v7255 = vcombine.low %v7230, %v7238
      %v7257 = vunpack.c.l.s4 1934713408
      %v7258 = vunpack.c.0.s8 %v7257
      %v7259 = vlaneseq
      %v7260 = vshrl.u32 %v7259, 7
      %v7261 = vsub.s32 %v7258, %v7260
      %v7262 = vrot.slane %v7255, %v7261
      %v7263 = vcombine.low %v7246, %v7254
      %v7265 = vunpack.c.l.s4 1934713408
      %v7266 = vunpack.c.0.s8 %v7265
      %v7267 = vlaneseq
      %v7268 = vshrl.u32 %v7267, 7
      %v7269 = vsub.s32 %v7266, %v7268
      %v7270 = vrot.slane %v7263, %v7269
      %v7271 = vcombine.low %v7262, %v7270
      %v7272 = vcombine.high %v7262, %v7270
      %v7273 = vcombine.low %v6431, %v6438
      %v7275 = vunpack.c.l.s4 1983009808
      %v7276 = vunpack.c.0.s8 %v7275
      %v7277 = vlaneseq
      %v7278 = vshrl.u32 %v7277, 7
      %v7279 = vsub.s32 %v7276, %v7278
      %v7280 = vrot.slane %v7273, %v7279
      %v7281 = vcombine.low %v6455, %v6456
      %v7283 = vunpack.c.l.s4 1983009808
      %v7284 = vunpack.c.0.s8 %v7283
      %v7285 = vlaneseq
      %v7286 = vshrl.u32 %v7285, 7
      %v7287 = vsub.s32 %v7284, %v7286
      %v7288 = vrot.slane %v7281, %v7287
      %v7289 = vcombine.low %v6447, %v6454
      %v7291 = vunpack.c.l.s4 1983009808
      %v7292 = vunpack.c.0.s8 %v7291
      %v7293 = vlaneseq
      %v7294 = vshrl.u32 %v7293, 7
      %v7295 = vsub.s32 %v7292, %v7294
      %v7296 = vrot.slane %v7289, %v7295
      %v7297 = vcombine.low %v6457, %v6458
      %v7299 = vunpack.c.l.s4 1983009808
      %v7300 = vunpack.c.0.s8 %v7299
      %v7301 = vlaneseq
      %v7302 = vshrl.u32 %v7301, 7
      %v7303 = vsub.s32 %v7300, %v7302
      %v7304 = vrot.slane %v7297, %v7303
      %v7305 = vcombine.low %v7280, %v7288
      %v7307 = vunpack.c.l.s4 1934713408
      %v7308 = vunpack.c.0.s8 %v7307
      %v7309 = vlaneseq
      %v7310 = vshrl.u32 %v7309, 7
      %v7311 = vsub.s32 %v7308, %v7310
      %v7312 = vrot.slane %v7305, %v7311
      %v7313 = vcombine.low %v7296, %v7304
      %v7315 = vunpack.c.l.s4 1934713408
      %v7316 = vunpack.c.0.s8 %v7315
      %v7317 = vlaneseq
      %v7318 = vshrl.u32 %v7317, 7
      %v7319 = vsub.s32 %v7316, %v7318
      %v7320 = vrot.slane %v7313, %v7319
      %v7321 = vcombine.low %v7312, %v7320
      %v7322 = vcombine.high %v7312, %v7320
      %v7323 = vcombine.low %v6497, %v6504
      %v7325 = vunpack.c.l.s4 1983009808
      %v7326 = vunpack.c.0.s8 %v7325
      %v7327 = vlaneseq
      %v7328 = vshrl.u32 %v7327, 7
      %v7329 = vsub.s32 %v7326, %v7328
      %v7330 = vrot.slane %v7323, %v7329
      %v7331 = vcombine.low %v6521, %v6522
      %v7333 = vunpack.c.l.s4 1983009808
      %v7334 = vunpack.c.0.s8 %v7333
      %v7335 = vlaneseq
      %v7336 = vshrl.u32 %v7335, 7
      %v7337 = vsub.s32 %v7334, %v7336
      %v7338 = vrot.slane %v7331, %v7337
      %v7339 = vcombine.low %v6513, %v6520
      %v7341 = vunpack.c.l.s4 1983009808
      %v7342 = vunpack.c.0.s8 %v7341
      %v7343 = vlaneseq
      %v7344 = vshrl.u32 %v7343, 7
      %v7345 = vsub.s32 %v7342, %v7344
      %v7346 = vrot.slane %v7339, %v7345
      %v7347 = vcombine.low %v6523, %v6524
      %v7349 = vunpack.c.l.s4 1983009808
      %v7350 = vunpack.c.0.s8 %v7349
      %v7351 = vlaneseq
      %v7352 = vshrl.u32 %v7351, 7
      %v7353 = vsub.s32 %v7350, %v7352
      %v7354 = vrot.slane %v7347, %v7353
      %v7355 = vcombine.low %v7330, %v7338
      %v7357 = vunpack.c.l.s4 1934713408
      %v7358 = vunpack.c.0.s8 %v7357
      %v7359 = vlaneseq
      %v7360 = vshrl.u32 %v7359, 7
      %v7361 = vsub.s32 %v7358, %v7360
      %v7362 = vrot.slane %v7355, %v7361
      %v7363 = vcombine.low %v7346, %v7354
      %v7365 = vunpack.c.l.s4 1934713408
      %v7366 = vunpack.c.0.s8 %v7365
      %v7367 = vlaneseq
      %v7368 = vshrl.u32 %v7367, 7
      %v7369 = vsub.s32 %v7366, %v7368
      %v7370 = vrot.slane %v7363, %v7369
      %v7371 = vcombine.low %v7362, %v7370
      %v7372 = vcombine.high %v7362, %v7370
      %v7373 = vcombine.low %v6563, %v6570
      %v7375 = vunpack.c.l.s4 1983009808
      %v7376 = vunpack.c.0.s8 %v7375
      %v7377 = vlaneseq
      %v7378 = vshrl.u32 %v7377, 7
      %v7379 = vsub.s32 %v7376, %v7378
      %v7380 = vrot.slane %v7373, %v7379
      %v7381 = vcombine.low %v6587, %v6588
      %v7383 = vunpack.c.l.s4 1983009808
      %v7384 = vunpack.c.0.s8 %v7383
      %v7385 = vlaneseq
      %v7386 = vshrl.u32 %v7385, 7
      %v7387 = vsub.s32 %v7384, %v7386
      %v7388 = vrot.slane %v7381, %v7387
      %v7389 = vcombine.low %v6579, %v6586
      %v7391 = vunpack.c.l.s4 1983009808
      %v7392 = vunpack.c.0.s8 %v7391
      %v7393 = vlaneseq
      %v7394 = vshrl.u32 %v7393, 7
      %v7395 = vsub.s32 %v7392, %v7394
      %v7396 = vrot.slane %v7389, %v7395
      %v7397 = vcombine.low %v6589, %v6590
      %v7399 = vunpack.c.l.s4 1983009808
      %v7400 = vunpack.c.0.s8 %v7399
      %v7401 = vlaneseq
      %v7402 = vshrl.u32 %v7401, 7
      %v7403 = vsub.s32 %v7400, %v7402
      %v7404 = vrot.slane %v7397, %v7403
      %v7405 = vcombine.low %v7380, %v7388
      %v7407 = vunpack.c.l.s4 1934713408
      %v7408 = vunpack.c.0.s8 %v7407
      %v7409 = vlaneseq
      %v7410 = vshrl.u32 %v7409, 7
      %v7411 = vsub.s32 %v7408, %v7410
      %v7412 = vrot.slane %v7405, %v7411
      %v7413 = vcombine.low %v7396, %v7404
      %v7415 = vunpack.c.l.s4 1934713408
      %v7416 = vunpack.c.0.s8 %v7415
      %v7417 = vlaneseq
      %v7418 = vshrl.u32 %v7417, 7
      %v7419 = vsub.s32 %v7416, %v7418
      %v7420 = vrot.slane %v7413, %v7419
      %v7421 = vcombine.low %v7412, %v7420
      %v7422 = vcombine.high %v7412, %v7420
      %v7423 = vcombine.low %v6629, %v6636
      %v7425 = vunpack.c.l.s4 1983009808
      %v7426 = vunpack.c.0.s8 %v7425
      %v7427 = vlaneseq
      %v7428 = vshrl.u32 %v7427, 7
      %v7429 = vsub.s32 %v7426, %v7428
      %v7430 = vrot.slane %v7423, %v7429
      %v7431 = vcombine.low %v6653, %v6654
      %v7433 = vunpack.c.l.s4 1983009808
      %v7434 = vunpack.c.0.s8 %v7433
      %v7435 = vlaneseq
      %v7436 = vshrl.u32 %v7435, 7
      %v7437 = vsub.s32 %v7434, %v7436
      %v7438 = vrot.slane %v7431, %v7437
      %v7439 = vcombine.low %v6645, %v6652
      %v7441 = vunpack.c.l.s4 1983009808
      %v7442 = vunpack.c.0.s8 %v7441
      %v7443 = vlaneseq
      %v7444 = vshrl.u32 %v7443, 7
      %v7445 = vsub.s32 %v7442, %v7444
      %v7446 = vrot.slane %v7439, %v7445
      %v7447 = vcombine.low %v6655, %v6656
      %v7449 = vunpack.c.l.s4 1983009808
      %v7450 = vunpack.c.0.s8 %v7449
      %v7451 = vlaneseq
      %v7452 = vshrl.u32 %v7451, 7
      %v7453 = vsub.s32 %v7450, %v7452
      %v7454 = vrot.slane %v7447, %v7453
      %v7455 = vcombine.low %v7430, %v7438
      %v7457 = vunpack.c.l.s4 1934713408
      %v7458 = vunpack.c.0.s8 %v7457
      %v7459 = vlaneseq
      %v7460 = vshrl.u32 %v7459, 7
      %v7461 = vsub.s32 %v7458, %v7460
      %v7462 = vrot.slane %v7455, %v7461
      %v7463 = vcombine.low %v7446, %v7454
      %v7465 = vunpack.c.l.s4 1934713408
      %v7466 = vunpack.c.0.s8 %v7465
      %v7467 = vlaneseq
      %v7468 = vshrl.u32 %v7467, 7
      %v7469 = vsub.s32 %v7466, %v7468
      %v7470 = vrot.slane %v7463, %v7469
      %v7471 = vcombine.low %v7462, %v7470
      %v7472 = vcombine.high %v7462, %v7470
      %v7473 = vcombine.low %v6695, %v6702
      %v7475 = vunpack.c.l.s4 1983009808
      %v7476 = vunpack.c.0.s8 %v7475
      %v7477 = vlaneseq
      %v7478 = vshrl.u32 %v7477, 7
      %v7479 = vsub.s32 %v7476, %v7478
      %v7480 = vrot.slane %v7473, %v7479
      %v7481 = vcombine.low %v6719, %v6720
      %v7483 = vunpack.c.l.s4 1983009808
      %v7484 = vunpack.c.0.s8 %v7483
      %v7485 = vlaneseq
      %v7486 = vshrl.u32 %v7485, 7
      %v7487 = vsub.s32 %v7484, %v7486
      %v7488 = vrot.slane %v7481, %v7487
      %v7489 = vcombine.low %v6711, %v6718
      %v7491 = vunpack.c.l.s4 1983009808
      %v7492 = vunpack.c.0.s8 %v7491
      %v7493 = vlaneseq
      %v7494 = vshrl.u32 %v7493, 7
      %v7495 = vsub.s32 %v7492, %v7494
      %v7496 = vrot.slane %v7489, %v7495
      %v7497 = vcombine.low %v6721, %v6722
      %v7499 = vunpack.c.l.s4 1983009808
      %v7500 = vunpack.c.0.s8 %v7499
      %v7501 = vlaneseq
      %v7502 = vshrl.u32 %v7501, 7
      %v7503 = vsub.s32 %v7500, %v7502
      %v7504 = vrot.slane %v7497, %v7503
      %v7505 = vcombine.low %v7480, %v7488
      %v7507 = vunpack.c.l.s4 1934713408
      %v7508 = vunpack.c.0.s8 %v7507
      %v7509 = vlaneseq
      %v7510 = vshrl.u32 %v7509, 7
      %v7511 = vsub.s32 %v7508, %v7510
      %v7512 = vrot.slane %v7505, %v7511
      %v7513 = vcombine.low %v7496, %v7504
      %v7515 = vunpack.c.l.s4 1934713408
      %v7516 = vunpack.c.0.s8 %v7515
      %v7517 = vlaneseq
      %v7518 = vshrl.u32 %v7517, 7
      %v7519 = vsub.s32 %v7516, %v7518
      %v7520 = vrot.slane %v7513, %v7519
      %v7521 = vcombine.low %v7512, %v7520
      %v7522 = vcombine.high %v7512, %v7520
      %v7525 = vpack.i.b16 %v6821, %v6771
      %v7527 = vshrl.u32 %v6771, 16
      %v7528 = vshrl.u32 %v6821, 16
      %v7529 = vpack.i.b16 %v7528, %v7527
      %v7533 = vpack.i.b16 %v6822, %v6772
      %v7535 = vshrl.u32 %v6772, 16
      %v7536 = vshrl.u32 %v6822, 16
      %v7537 = vpack.i.b16 %v7536, %v7535
      %v7541 = vpack.i.b16 %v6921, %v6871
      %v7543 = vshrl.u32 %v6871, 16
      %v7544 = vshrl.u32 %v6921, 16
      %v7545 = vpack.i.b16 %v7544, %v7543
      %v7549 = vpack.i.b16 %v6922, %v6872
      %v7551 = vshrl.u32 %v6872, 16
      %v7552 = vshrl.u32 %v6922, 16
      %v7553 = vpack.i.b16 %v7552, %v7551
      %v7557 = vpack.i.b16 %v7021, %v6971
      %v7559 = vshrl.u32 %v6971, 16
      %v7560 = vshrl.u32 %v7021, 16
      %v7561 = vpack.i.b16 %v7560, %v7559
      %v7565 = vpack.i.b16 %v7022, %v6972
      %v7567 = vshrl.u32 %v6972, 16
      %v7568 = vshrl.u32 %v7022, 16
      %v7569 = vpack.i.b16 %v7568, %v7567
      %v7573 = vpack.i.b16 %v7121, %v7071
      %v7575 = vshrl.u32 %v7071, 16
      %v7576 = vshrl.u32 %v7121, 16
      %v7577 = vpack.i.b16 %v7576, %v7575
      %v7581 = vpack.i.b16 %v7122, %v7072
      %v7583 = vshrl.u32 %v7072, 16
      %v7584 = vshrl.u32 %v7122, 16
      %v7585 = vpack.i.b16 %v7584, %v7583
      %v7589 = vpack.i.b16 %v7221, %v7171
      %v7591 = vshrl.u32 %v7171, 16
      %v7592 = vshrl.u32 %v7221, 16
      %v7593 = vpack.i.b16 %v7592, %v7591
      %v7597 = vpack.i.b16 %v7222, %v7172
      %v7599 = vshrl.u32 %v7172, 16
      %v7600 = vshrl.u32 %v7222, 16
      %v7601 = vpack.i.b16 %v7600, %v7599
      %v7605 = vpack.i.b16 %v7321, %v7271
      %v7607 = vshrl.u32 %v7271, 16
      %v7608 = vshrl.u32 %v7321, 16
      %v7609 = vpack.i.b16 %v7608, %v7607
      %v7613 = vpack.i.b16 %v7322, %v7272
      %v7615 = vshrl.u32 %v7272, 16
      %v7616 = vshrl.u32 %v7322, 16
      %v7617 = vpack.i.b16 %v7616, %v7615
      %v7621 = vpack.i.b16 %v7421, %v7371
      %v7623 = vshrl.u32 %v7371, 16
      %v7624 = vshrl.u32 %v7421, 16
      %v7625 = vpack.i.b16 %v7624, %v7623
      %v7629 = vpack.i.b16 %v7422, %v7372
      %v7631 = vshrl.u32 %v7372, 16
      %v7632 = vshrl.u32 %v7422, 16
      %v7633 = vpack.i.b16 %v7632, %v7631
      %v7637 = vpack.i.b16 %v7521, %v7471
      %v7639 = vshrl.u32 %v7471, 16
      %v7640 = vshrl.u32 %v7521, 16
      %v7641 = vpack.i.b16 %v7640, %v7639
      %v7645 = vpack.i.b16 %v7522, %v7472
      %v7647 = vshrl.u32 %v7472, 16
      %v7648 = vshrl.u32 %v7522, 16
      %v7649 = vpack.i.b16 %v7648, %v7647
      %vm7651 = vcmask 64512
      %v7653 = vsel %vm7651, %v3237, 0
      %v7656 = vsel %vm7651, %v3249, 0
      %v7659 = vsel %vm7651, %v3261, 0
      %v7662 = vsel %vm7651, %v3273, 0
      %v7665 = vsel %vm7651, %v3285, 0
      %v7668 = vsel %vm7651, %v3297, 0
      %v7671 = vsel %vm7651, %v3309, 0
      %v7674 = vsel %vm7651, %v3321, 0
      %v7677 = vsel %vm7651, %v5381, 0
      %v7680 = vsel %vm7651, %v5393, 0
      %v7683 = vsel %vm7651, %v5405, 0
      %v7686 = vsel %vm7651, %v5417, 0
      %v7689 = vsel %vm7651, %v5429, 0
      %v7692 = vsel %vm7651, %v5441, 0
      %v7695 = vsel %vm7651, %v5453, 0
      %v7698 = vsel %vm7651, %v5465, 0
      %7700 = vmatprep.subr.bf16.mxu0 0
      %7701 = vmatpush1.bf16.xpose.msra.mxu0 %v7677
      %7702 = vmatprep.subr.bf16.mxu0 0
      %7703 = vmatpush1.bf16.xpose.msra.mxu0 %v7680
      %7704 = vmatprep.subr.bf16.mxu0 0
      %7705 = vmatpush1.bf16.xpose.msra.mxu0 %v7683
      %7706 = vmatprep.subr.bf16.mxu0 0
      %7707 = vmatpush1.bf16.xpose.msra.mxu0 %v7686
      %7708 = vmatprep.subr.bf16.mxu0 0
      %7709 = vmatpush1.bf16.xpose.msra.mxu0 %v7689
      %7710 = vmatprep.subr.bf16.mxu0 0
      %7711 = vmatpush1.bf16.xpose.msra.mxu0 %v7692
      %7712 = vmatprep.subr.bf16.mxu0 0
      %7713 = vmatpush1.bf16.xpose.msra.mxu0 %v7695
      %7714 = vmatprep.subr.bf16.mxu0 0
      %7715 = vmatpush1.bf16.xpose.msra.mxu0 %v7698
      %7716 = vmatprep.subr.bf16.mxu0 0
      %7717 = vmatpush1.bf16.xpose.msra.mxu0 0
      %7718 = vmatprep.subr.bf16.mxu0 0
      %7719 = vmatpush1.bf16.xpose.msra.mxu0 0
      %7720 = vmatprep.subr.bf16.mxu0 0
      %7721 = vmatpush1.bf16.xpose.msra.mxu0 0
      %7722 = vmatprep.subr.bf16.mxu0 0
      %7723 = vmatpush1.bf16.xpose.msra.mxu0 0
      %7724 = vmatprep.subr.bf16.mxu0 0
      %7725 = vmatpush1.bf16.xpose.msra.mxu0 0
      %7726 = vmatprep.subr.bf16.mxu0 0
      %7727 = vmatpush1.bf16.xpose.msra.mxu0 0
      %7728 = vmatprep.subr.bf16.mxu0 0
      %7729 = vmatpush1.bf16.xpose.msra.mxu0 0
      %7730 = vmatprep.subr.bf16.mxu0 0
      %7731 = vmatpush1.bf16.xpose.msra.mxu0 0
      %7732 = vmatprep.mubr.bf16.mxu0 0
      %7733 = vmatmul.mubr.bf16.gmra.mrb[0].mxu0 %v7653
      %v7734 = vpop.f32.mrb[0].mxu0
      %v7735 = vadd.f32 0.0, %v7734
      %v7736 = vpop.f32.mrb[0].mxu0
      %v7737 = vpop.f32.mrb[0].mxu0
      %v7738 = vadd.f32 0.0, %v7737
      %v7739 = vpop.f32.mrb[0].mxu0
      %7740 = vmatprep.mubr.bf16.mxu0 0
      %7741 = vmatmul.mubr.bf16.gmra.mrb[0].mxu0 %v7656
      %v7742 = vpop.f32.mrb[0].mxu0
      %v7743 = vadd.f32 0.0, %v7742
      %v7744 = vpop.f32.mrb[0].mxu0
      %v7745 = vpop.f32.mrb[0].mxu0
      %v7746 = vadd.f32 0.0, %v7745
      %v7747 = vpop.f32.mrb[0].mxu0
      %7748 = vmatprep.mubr.bf16.mxu0 0
      %7749 = vmatmul.mubr.bf16.gmra.mrb[0].mxu0 %v7659
      %v7750 = vpop.f32.mrb[0].mxu0
      %v7751 = vadd.f32 0.0, %v7750
      %v7752 = vpop.f32.mrb[0].mxu0
      %v7753 = vpop.f32.mrb[0].mxu0
      %v7754 = vadd.f32 0.0, %v7753
      %v7755 = vpop.f32.mrb[0].mxu0
      %7756 = vmatprep.mubr.bf16.mxu0 0
      %7757 = vmatmul.mubr.bf16.gmra.mrb[0].mxu0 %v7662
      %v7758 = vpop.f32.mrb[0].mxu0
      %v7759 = vadd.f32 0.0, %v7758
      %v7760 = vpop.f32.mrb[0].mxu0
      %v7761 = vpop.f32.mrb[0].mxu0
      %v7762 = vadd.f32 0.0, %v7761
      %v7763 = vpop.f32.mrb[0].mxu0
      %7764 = vmatprep.mubr.bf16.mxu0 0
      %7765 = vmatmul.mubr.bf16.gmra.mrb[0].mxu0 %v7665
      %v7766 = vpop.f32.mrb[0].mxu0
      %v7767 = vadd.f32 0.0, %v7766
      %v7768 = vpop.f32.mrb[0].mxu0
      %v7769 = vpop.f32.mrb[0].mxu0
      %v7770 = vadd.f32 0.0, %v7769
      %v7771 = vpop.f32.mrb[0].mxu0
      %7772 = vmatprep.mubr.bf16.mxu0 0
      %7773 = vmatmul.mubr.bf16.gmra.mrb[0].mxu0 %v7668
      %v7774 = vpop.f32.mrb[0].mxu0
      %v7775 = vadd.f32 0.0, %v7774
      %v7776 = vpop.f32.mrb[0].mxu0
      %v7777 = vpop.f32.mrb[0].mxu0
      %v7778 = vadd.f32 0.0, %v7777
      %v7779 = vpop.f32.mrb[0].mxu0
      %7780 = vmatprep.mubr.bf16.mxu0 0
      %7781 = vmatmul.mubr.bf16.gmra.mrb[0].mxu0 %v7671
      %v7782 = vpop.f32.mrb[0].mxu0
      %v7783 = vadd.f32 0.0, %v7782
      %v7784 = vpop.f32.mrb[0].mxu0
      %v7785 = vpop.f32.mrb[0].mxu0
      %v7786 = vadd.f32 0.0, %v7785
      %v7787 = vpop.f32.mrb[0].mxu0
      %7788 = vmatprep.mubr.bf16.mxu0 0
      %7789 = vmatmul.mubr.bf16.gmra.mrb[0].mxu0 %v7674
      %v7790 = vpop.f32.mrb[0].mxu0
      %v7791 = vadd.f32 0.0, %v7790
      %v7792 = vpop.f32.mrb[0].mxu0
      %v7793 = vpop.f32.mrb[0].mxu0
      %v7794 = vadd.f32 0.0, %v7793
      %v7795 = vpop.f32.mrb[0].mxu0
      %7796 = vdwg.mxu0
      %v7798 = vsel %vm7651, %v3240, 0
      %v7801 = vsel %vm7651, %v3252, 0
      %v7804 = vsel %vm7651, %v3264, 0
      %v7807 = vsel %vm7651, %v3276, 0
      %v7810 = vsel %vm7651, %v3288, 0
      %v7813 = vsel %vm7651, %v3300, 0
      %v7816 = vsel %vm7651, %v3312, 0
      %v7819 = vsel %vm7651, %v3324, 0
      %v7822 = vsel %vm7651, %v5384, 0
      %v7825 = vsel %vm7651, %v5396, 0
      %v7828 = vsel %vm7651, %v5408, 0
      %v7831 = vsel %vm7651, %v5420, 0
      %v7834 = vsel %vm7651, %v5432, 0
      %v7837 = vsel %vm7651, %v5444, 0
      %v7840 = vsel %vm7651, %v5456, 0
      %v7843 = vsel %vm7651, %v5468, 0
      %7845 = vmatprep.subr.bf16.mxu0 0
      %7846 = vmatpush1.bf16.xpose.msra.mxu0 %v7822
      %7847 = vmatprep.subr.bf16.mxu0 0
      %7848 = vmatpush1.bf16.xpose.msra.mxu0 %v7825
      %7849 = vmatprep.subr.bf16.mxu0 0
      %7850 = vmatpush1.bf16.xpose.msra.mxu0 %v7828
      %7851 = vmatprep.subr.bf16.mxu0 0
      %7852 = vmatpush1.bf16.xpose.msra.mxu0 %v7831
      %7853 = vmatprep.subr.bf16.mxu0 0
      %7854 = vmatpush1.bf16.xpose.msra.mxu0 %v7834
      %7855 = vmatprep.subr.bf16.mxu0 0
      %7856 = vmatpush1.bf16.xpose.msra.mxu0 %v7837
      %7857 = vmatprep.subr.bf16.mxu0 0
      %7858 = vmatpush1.bf16.xpose.msra.mxu0 %v7840
      %7859 = vmatprep.subr.bf16.mxu0 0
      %7860 = vmatpush1.bf16.xpose.msra.mxu0 %v7843
      %7861 = vmatprep.subr.bf16.mxu0 0
      %7862 = vmatpush1.bf16.xpose.msra.mxu0 0
      %7863 = vmatprep.subr.bf16.mxu0 0
      %7864 = vmatpush1.bf16.xpose.msra.mxu0 0
      %7865 = vmatprep.subr.bf16.mxu0 0
      %7866 = vmatpush1.bf16.xpose.msra.mxu0 0
      %7867 = vmatprep.subr.bf16.mxu0 0
      %7868 = vmatpush1.bf16.xpose.msra.mxu0 0
      %7869 = vmatprep.subr.bf16.mxu0 0
      %7870 = vmatpush1.bf16.xpose.msra.mxu0 0
      %7871 = vmatprep.subr.bf16.mxu0 0
      %7872 = vmatpush1.bf16.xpose.msra.mxu0 0
      %7873 = vmatprep.subr.bf16.mxu0 0
      %7874 = vmatpush1.bf16.xpose.msra.mxu0 0
      %7875 = vmatprep.subr.bf16.mxu0 0
      %7876 = vmatpush1.bf16.xpose.msra.mxu0 0
      %7877 = vmatprep.mubr.bf16.mxu0 0
      %7878 = vmatmul.mubr.bf16.gmra.mrb[0].mxu0 %v7798
      %v7879 = vpop.f32.mrb[0].mxu0
      %v7880 = vadd.f32 0.0, %v7879
      %v7881 = vpop.f32.mrb[0].mxu0
      %v7882 = vpop.f32.mrb[0].mxu0
      %v7883 = vadd.f32 0.0, %v7882
      %v7884 = vpop.f32.mrb[0].mxu0
      %7885 = vmatprep.mubr.bf16.mxu0 0
      %7886 = vmatmul.mubr.bf16.gmra.mrb[0].mxu0 %v7801
      %v7887 = vpop.f32.mrb[0].mxu0
      %v7888 = vadd.f32 0.0, %v7887
      %v7889 = vpop.f32.mrb[0].mxu0
      %v7890 = vpop.f32.mrb[0].mxu0
      %v7891 = vadd.f32 0.0, %v7890
      %v7892 = vpop.f32.mrb[0].mxu0
      %7893 = vmatprep.mubr.bf16.mxu0 0
      %7894 = vmatmul.mubr.bf16.gmra.mrb[0].mxu0 %v7804
      %v7895 = vpop.f32.mrb[0].mxu0
      %v7896 = vadd.f32 0.0, %v7895
      %v7897 = vpop.f32.mrb[0].mxu0
      %v7898 = vpop.f32.mrb[0].mxu0
      %v7899 = vadd.f32 0.0, %v7898
      %v7900 = vpop.f32.mrb[0].mxu0
      %7901 = vmatprep.mubr.bf16.mxu0 0
      %7902 = vmatmul.mubr.bf16.gmra.mrb[0].mxu0 %v7807
      %v7903 = vpop.f32.mrb[0].mxu0
      %v7904 = vadd.f32 0.0, %v7903
      %v7905 = vpop.f32.mrb[0].mxu0
      %v7906 = vpop.f32.mrb[0].mxu0
      %v7907 = vadd.f32 0.0, %v7906
      %v7908 = vpop.f32.mrb[0].mxu0
      %7909 = vmatprep.mubr.bf16.mxu0 0
      %7910 = vmatmul.mubr.bf16.gmra.mrb[0].mxu0 %v7810
      %v7911 = vpop.f32.mrb[0].mxu0
      %v7912 = vadd.f32 0.0, %v7911
      %v7913 = vpop.f32.mrb[0].mxu0
      %v7914 = vpop.f32.mrb[0].mxu0
      %v7915 = vadd.f32 0.0, %v7914
      %v7916 = vpop.f32.mrb[0].mxu0
      %7917 = vmatprep.mubr.bf16.mxu0 0
      %7918 = vmatmul.mubr.bf16.gmra.mrb[0].mxu0 %v7813
      %v7919 = vpop.f32.mrb[0].mxu0
      %v7920 = vadd.f32 0.0, %v7919
      %v7921 = vpop.f32.mrb[0].mxu0
      %v7922 = vpop.f32.mrb[0].mxu0
      %v7923 = vadd.f32 0.0, %v7922
      %v7924 = vpop.f32.mrb[0].mxu0
      %7925 = vmatprep.mubr.bf16.mxu0 0
      %7926 = vmatmul.mubr.bf16.gmra.mrb[0].mxu0 %v7816
      %v7927 = vpop.f32.mrb[0].mxu0
      %v7928 = vadd.f32 0.0, %v7927
      %v7929 = vpop.f32.mrb[0].mxu0
      %v7930 = vpop.f32.mrb[0].mxu0
      %v7931 = vadd.f32 0.0, %v7930
      %v7932 = vpop.f32.mrb[0].mxu0
      %7933 = vmatprep.mubr.bf16.mxu0 0
      %7934 = vmatmul.mubr.bf16.gmra.mrb[0].mxu0 %v7819
      %v7935 = vpop.f32.mrb[0].mxu0
      %v7936 = vadd.f32 0.0, %v7935
      %v7937 = vpop.f32.mrb[0].mxu0
      %v7938 = vpop.f32.mrb[0].mxu0
      %v7939 = vadd.f32 0.0, %v7938
      %v7940 = vpop.f32.mrb[0].mxu0
      %7941 = vdwg.mxu0
      %v7943 = vsel %vm7651, %v3243, 0
      %v7946 = vsel %vm7651, %v3255, 0
      %v7949 = vsel %vm7651, %v3267, 0
      %v7952 = vsel %vm7651, %v3279, 0
      %v7955 = vsel %vm7651, %v3291, 0
      %v7958 = vsel %vm7651, %v3303, 0
      %v7961 = vsel %vm7651, %v3315, 0
      %v7964 = vsel %vm7651, %v3327, 0
      %v7967 = vsel %vm7651, %v5387, 0
      %v7970 = vsel %vm7651, %v5399, 0
      %v7973 = vsel %vm7651, %v5411, 0
      %v7976 = vsel %vm7651, %v5423, 0
      %v7979 = vsel %vm7651, %v5435, 0
      %v7982 = vsel %vm7651, %v5447, 0
      %v7985 = vsel %vm7651, %v5459, 0
      %v7988 = vsel %vm7651, %v5471, 0
      %7990 = vmatprep.subr.bf16.mxu0 0
      %7991 = vmatpush1.bf16.xpose.msra.mxu0 %v7967
      %7992 = vmatprep.subr.bf16.mxu0 0
      %7993 = vmatpush1.bf16.xpose.msra.mxu0 %v7970
      %7994 = vmatprep.subr.bf16.mxu0 0
      %7995 = vmatpush1.bf16.xpose.msra.mxu0 %v7973
      %7996 = vmatprep.subr.bf16.mxu0 0
      %7997 = vmatpush1.bf16.xpose.msra.mxu0 %v7976
      %7998 = vmatprep.subr.bf16.mxu0 0
      %7999 = vmatpush1.bf16.xpose.msra.mxu0 %v7979
      %8000 = vmatprep.subr.bf16.mxu0 0
      %8001 = vmatpush1.bf16.xpose.msra.mxu0 %v7982
      %8002 = vmatprep.subr.bf16.mxu0 0
      %8003 = vmatpush1.bf16.xpose.msra.mxu0 %v7985
      %8004 = vmatprep.subr.bf16.mxu0 0
      %8005 = vmatpush1.bf16.xpose.msra.mxu0 %v7988
      %8006 = vmatprep.subr.bf16.mxu0 0
      %8007 = vmatpush1.bf16.xpose.msra.mxu0 0
      %8008 = vmatprep.subr.bf16.mxu0 0
      %8009 = vmatpush1.bf16.xpose.msra.mxu0 0
      %8010 = vmatprep.subr.bf16.mxu0 0
      %8011 = vmatpush1.bf16.xpose.msra.mxu0 0
      %8012 = vmatprep.subr.bf16.mxu0 0
      %8013 = vmatpush1.bf16.xpose.msra.mxu0 0
      %8014 = vmatprep.subr.bf16.mxu0 0
      %8015 = vmatpush1.bf16.xpose.msra.mxu0 0
      %8016 = vmatprep.subr.bf16.mxu0 0
      %8017 = vmatpush1.bf16.xpose.msra.mxu0 0
      %8018 = vmatprep.subr.bf16.mxu0 0
      %8019 = vmatpush1.bf16.xpose.msra.mxu0 0
      %8020 = vmatprep.subr.bf16.mxu0 0
      %8021 = vmatpush1.bf16.xpose.msra.mxu0 0
      %8022 = vmatprep.mubr.bf16.mxu0 0
      %8023 = vmatmul.mubr.bf16.gmra.mrb[0].mxu0 %v7943
      %v8024 = vpop.f32.mrb[0].mxu0
      %v8025 = vadd.f32 0.0, %v8024
      %v8026 = vpop.f32.mrb[0].mxu0
      %v8027 = vpop.f32.mrb[0].mxu0
      %v8028 = vadd.f32 0.0, %v8027
      %v8029 = vpop.f32.mrb[0].mxu0
      %8030 = vmatprep.mubr.bf16.mxu0 0
      %8031 = vmatmul.mubr.bf16.gmra.mrb[0].mxu0 %v7946
      %v8032 = vpop.f32.mrb[0].mxu0
      %v8033 = vadd.f32 0.0, %v8032
      %v8034 = vpop.f32.mrb[0].mxu0
      %v8035 = vpop.f32.mrb[0].mxu0
      %v8036 = vadd.f32 0.0, %v8035
      %v8037 = vpop.f32.mrb[0].mxu0
      %8038 = vmatprep.mubr.bf16.mxu0 0
      %8039 = vmatmul.mubr.bf16.gmra.mrb[0].mxu0 %v7949
      %v8040 = vpop.f32.mrb[0].mxu0
      %v8041 = vadd.f32 0.0, %v8040
      %v8042 = vpop.f32.mrb[0].mxu0
      %v8043 = vpop.f32.mrb[0].mxu0
      %v8044 = vadd.f32 0.0, %v8043
      %v8045 = vpop.f32.mrb[0].mxu0
      %8046 = vmatprep.mubr.bf16.mxu0 0
      %8047 = vmatmul.mubr.bf16.gmra.mrb[0].mxu0 %v7952
      %v8048 = vpop.f32.mrb[0].mxu0
      %v8049 = vadd.f32 0.0, %v8048
      %v8050 = vpop.f32.mrb[0].mxu0
      %v8051 = vpop.f32.mrb[0].mxu0
      %v8052 = vadd.f32 0.0, %v8051
      %v8053 = vpop.f32.mrb[0].mxu0
      %8054 = vmatprep.mubr.bf16.mxu0 0
      %8055 = vmatmul.mubr.bf16.gmra.mrb[0].mxu0 %v7955
      %v8056 = vpop.f32.mrb[0].mxu0
      %v8057 = vadd.f32 0.0, %v8056
      %v8058 = vpop.f32.mrb[0].mxu0
      %v8059 = vpop.f32.mrb[0].mxu0
      %v8060 = vadd.f32 0.0, %v8059
      %v8061 = vpop.f32.mrb[0].mxu0
      %8062 = vmatprep.mubr.bf16.mxu0 0
      %8063 = vmatmul.mubr.bf16.gmra.mrb[0].mxu0 %v7958
      %v8064 = vpop.f32.mrb[0].mxu0
      %v8065 = vadd.f32 0.0, %v8064
      %v8066 = vpop.f32.mrb[0].mxu0
      %v8067 = vpop.f32.mrb[0].mxu0
      %v8068 = vadd.f32 0.0, %v8067
      %v8069 = vpop.f32.mrb[0].mxu0
      %8070 = vmatprep.mubr.bf16.mxu0 0
      %8071 = vmatmul.mubr.bf16.gmra.mrb[0].mxu0 %v7961
      %v8072 = vpop.f32.mrb[0].mxu0
      %v8073 = vadd.f32 0.0, %v8072
      %v8074 = vpop.f32.mrb[0].mxu0
      %v8075 = vpop.f32.mrb[0].mxu0
      %v8076 = vadd.f32 0.0, %v8075
      %v8077 = vpop.f32.mrb[0].mxu0
      %8078 = vmatprep.mubr.bf16.mxu0 0
      %8079 = vmatmul.mubr.bf16.gmra.mrb[0].mxu0 %v7964
      %v8080 = vpop.f32.mrb[0].mxu0
      %v8081 = vadd.f32 0.0, %v8080
      %v8082 = vpop.f32.mrb[0].mxu0
      %v8083 = vpop.f32.mrb[0].mxu0
      %v8084 = vadd.f32 0.0, %v8083
      %v8085 = vpop.f32.mrb[0].mxu0
      %8086 = vdwg.mxu0
      %v8088 = vsel %vm7651, %v3246, 0
      %v8091 = vsel %vm7651, %v3258, 0
      %v8094 = vsel %vm7651, %v3270, 0
      %v8097 = vsel %vm7651, %v3282, 0
      %v8100 = vsel %vm7651, %v3294, 0
      %v8103 = vsel %vm7651, %v3306, 0
      %v8106 = vsel %vm7651, %v3318, 0
      %v8109 = vsel %vm7651, %v3330, 0
      %v8112 = vsel %vm7651, %v5390, 0
      %v8115 = vsel %vm7651, %v5402, 0
      %v8118 = vsel %vm7651, %v5414, 0
      %v8121 = vsel %vm7651, %v5426, 0
      %v8124 = vsel %vm7651, %v5438, 0
      %v8127 = vsel %vm7651, %v5450, 0
      %v8130 = vsel %vm7651, %v5462, 0
      %v8133 = vsel %vm7651, %v5474, 0
      %8135 = vmatprep.subr.bf16.mxu0 0
      %8136 = vmatpush1.bf16.xpose.msra.mxu0 %v8112
      %8137 = vmatprep.subr.bf16.mxu0 0
      %8138 = vmatpush1.bf16.xpose.msra.mxu0 %v8115
      %8139 = vmatprep.subr.bf16.mxu0 0
      %8140 = vmatpush1.bf16.xpose.msra.mxu0 %v8118
      %8141 = vmatprep.subr.bf16.mxu0 0
      %8142 = vmatpush1.bf16.xpose.msra.mxu0 %v8121
      %8143 = vmatprep.subr.bf16.mxu0 0
      %8144 = vmatpush1.bf16.xpose.msra.mxu0 %v8124
      %8145 = vmatprep.subr.bf16.mxu0 0
      %8146 = vmatpush1.bf16.xpose.msra.mxu0 %v8127
      %8147 = vmatprep.subr.bf16.mxu0 0
      %8148 = vmatpush1.bf16.xpose.msra.mxu0 %v8130
      %8149 = vmatprep.subr.bf16.mxu0 0
      %8150 = vmatpush1.bf16.xpose.msra.mxu0 %v8133
      %8151 = vmatprep.subr.bf16.mxu0 0
      %8152 = vmatpush1.bf16.xpose.msra.mxu0 0
      %8153 = vmatprep.subr.bf16.mxu0 0
      %8154 = vmatpush1.bf16.xpose.msra.mxu0 0
      %8155 = vmatprep.subr.bf16.mxu0 0
      %8156 = vmatpush1.bf16.xpose.msra.mxu0 0
      %8157 = vmatprep.subr.bf16.mxu0 0
      %8158 = vmatpush1.bf16.xpose.msra.mxu0 0
      %8159 = vmatprep.subr.bf16.mxu0 0
      %8160 = vmatpush1.bf16.xpose.msra.mxu0 0
      %8161 = vmatprep.subr.bf16.mxu0 0
      %8162 = vmatpush1.bf16.xpose.msra.mxu0 0
      %8163 = vmatprep.subr.bf16.mxu0 0
      %8164 = vmatpush1.bf16.xpose.msra.mxu0 0
      %8165 = vmatprep.subr.bf16.mxu0 0
      %8166 = vmatpush1.bf16.xpose.msra.mxu0 0
      %8167 = vmatprep.mubr.bf16.mxu0 0
      %8168 = vmatmul.mubr.bf16.gmra.mrb[0].mxu0 %v8088
      %v8169 = vpop.f32.mrb[0].mxu0
      %v8170 = vadd.f32 0.0, %v8169
      %v8171 = vpop.f32.mrb[0].mxu0
      %v8172 = vpop.f32.mrb[0].mxu0
      %v8173 = vadd.f32 0.0, %v8172
      %v8174 = vpop.f32.mrb[0].mxu0
      %8175 = vmatprep.mubr.bf16.mxu0 0
      %8176 = vmatmul.mubr.bf16.gmra.mrb[0].mxu0 %v8091
      %v8177 = vpop.f32.mrb[0].mxu0
      %v8178 = vadd.f32 0.0, %v8177
      %v8179 = vpop.f32.mrb[0].mxu0
      %v8180 = vpop.f32.mrb[0].mxu0
      %v8181 = vadd.f32 0.0, %v8180
      %v8182 = vpop.f32.mrb[0].mxu0
      %8183 = vmatprep.mubr.bf16.mxu0 0
      %8184 = vmatmul.mubr.bf16.gmra.mrb[0].mxu0 %v8094
      %v8185 = vpop.f32.mrb[0].mxu0
      %v8186 = vadd.f32 0.0, %v8185
      %v8187 = vpop.f32.mrb[0].mxu0
      %v8188 = vpop.f32.mrb[0].mxu0
      %v8189 = vadd.f32 0.0, %v8188
      %v8190 = vpop.f32.mrb[0].mxu0
      %8191 = vmatprep.mubr.bf16.mxu0 0
      %8192 = vmatmul.mubr.bf16.gmra.mrb[0].mxu0 %v8097
      %v8193 = vpop.f32.mrb[0].mxu0
      %v8194 = vadd.f32 0.0, %v8193
      %v8195 = vpop.f32.mrb[0].mxu0
      %v8196 = vpop.f32.mrb[0].mxu0
      %v8197 = vadd.f32 0.0, %v8196
      %v8198 = vpop.f32.mrb[0].mxu0
      %8199 = vmatprep.mubr.bf16.mxu0 0
      %8200 = vmatmul.mubr.bf16.gmra.mrb[0].mxu0 %v8100
      %v8201 = vpop.f32.mrb[0].mxu0
      %v8202 = vadd.f32 0.0, %v8201
      %v8203 = vpop.f32.mrb[0].mxu0
      %v8204 = vpop.f32.mrb[0].mxu0
      %v8205 = vadd.f32 0.0, %v8204
      %v8206 = vpop.f32.mrb[0].mxu0
      %8207 = vmatprep.mubr.bf16.mxu0 0
      %8208 = vmatmul.mubr.bf16.gmra.mrb[0].mxu0 %v8103
      %v8209 = vpop.f32.mrb[0].mxu0
      %v8210 = vadd.f32 0.0, %v8209
      %v8211 = vpop.f32.mrb[0].mxu0
      %v8212 = vpop.f32.mrb[0].mxu0
      %v8213 = vadd.f32 0.0, %v8212
      %v8214 = vpop.f32.mrb[0].mxu0
      %8215 = vmatprep.mubr.bf16.mxu0 0
      %8216 = vmatmul.mubr.bf16.gmra.mrb[0].mxu0 %v8106
      %v8217 = vpop.f32.mrb[0].mxu0
      %v8218 = vadd.f32 0.0, %v8217
      %v8219 = vpop.f32.mrb[0].mxu0
      %v8220 = vpop.f32.mrb[0].mxu0
      %v8221 = vadd.f32 0.0, %v8220
      %v8222 = vpop.f32.mrb[0].mxu0
      %8223 = vmatprep.mubr.bf16.mxu0 0
      %8224 = vmatmul.mubr.bf16.gmra.mrb[0].mxu0 %v8109
      %v8225 = vpop.f32.mrb[0].mxu0
      %v8226 = vadd.f32 0.0, %v8225
      %v8227 = vpop.f32.mrb[0].mxu0
      %v8228 = vpop.f32.mrb[0].mxu0
      %v8229 = vadd.f32 0.0, %v8228
      %v8230 = vpop.f32.mrb[0].mxu0
      %8231 = vdwg.mxu0
      %v8232 = vlaneseq
      %v8233 = vshrl.u32 %v8232, 7
      %v8234 = vadd.s32 %v8233, 8
      %v8235 = vadd.s32 %v8233, 16
      %v8236 = vadd.s32 %v8233, 24
      %v8237 = vadd.s32 %v8233, 32
      %v8238 = vadd.s32 %v8233, 40
      %v8239 = vadd.s32 %v8233, 48
      %v8240 = vadd.s32 %v8233, 56
      %v8241 = vadd.s32 %v8233, 64
      %v8242 = vadd.s32 %v8233, 72
      %v8243 = vadd.s32 %v8233, 80
      %v8244 = vadd.s32 %v8233, 88
      %v8245 = vadd.s32 %v8233, 96
      %v8246 = vadd.s32 %v8233, 104
      %v8247 = vadd.s32 %v8233, 112
      %v8248 = vadd.s32 %v8233, 120
      %v8249 = vlaneseq
      %v8250 = vand.u32 %v8249, 127
      %vm8251 = vcmp.ge.s32.totalorder %v8233, %v8250
      %vm8252 = vcmp.ge.s32.totalorder %v8234, %v8250
      %vm8253 = vcmp.ge.s32.totalorder %v8235, %v8250
      %vm8254 = vcmp.ge.s32.totalorder %v8236, %v8250
      %vm8255 = vcmp.ge.s32.totalorder %v8237, %v8250
      %vm8256 = vcmp.ge.s32.totalorder %v8238, %v8250
      %vm8257 = vcmp.ge.s32.totalorder %v8239, %v8250
      %vm8258 = vcmp.ge.s32.totalorder %v8240, %v8250
      %vm8259 = vcmp.ge.s32.totalorder %v8241, %v8250
      %vm8260 = vcmp.ge.s32.totalorder %v8242, %v8250
      %vm8261 = vcmp.ge.s32.totalorder %v8243, %v8250
      %vm8262 = vcmp.ge.s32.totalorder %v8244, %v8250
      %vm8263 = vcmp.ge.s32.totalorder %v8245, %v8250
      %vm8264 = vcmp.ge.s32.totalorder %v8246, %v8250
      %vm8265 = vcmp.ge.s32.totalorder %v8247, %v8250
      %vm8266 = vcmp.ge.s32.totalorder %v8248, %v8250
      %v8267 = vsel %vm8251, 1, 0
      %v8268 = vsel %vm8252, 1, 0
      %v8269 = vsel %vm8253, 1, 0
      %v8270 = vsel %vm8254, 1, 0
      %v8271 = vsel %vm8255, 1, 0
      %v8272 = vsel %vm8256, 1, 0
      %v8273 = vsel %vm8257, 1, 0
      %v8274 = vsel %vm8258, 1, 0
      %v8275 = vsel %vm8259, 1, 0
      %v8276 = vsel %vm8260, 1, 0
      %v8277 = vsel %vm8261, 1, 0
      %v8278 = vsel %vm8262, 1, 0
      %v8279 = vsel %vm8263, 1, 0
      %v8280 = vsel %vm8264, 1, 0
      %v8281 = vsel %vm8265, 1, 0
      %v8282 = vsel %vm8266, 1, 0
      %vm8283 = vcmp.eq.s32.totalorder %v8267, 1
      %vm8284 = vcmp.eq.s32.totalorder %v8268, 1
      %vm8285 = vcmp.eq.s32.totalorder %v8269, 1
      %vm8286 = vcmp.eq.s32.totalorder %v8270, 1
      %vm8287 = vcmp.eq.s32.totalorder %v8271, 1
      %vm8288 = vcmp.eq.s32.totalorder %v8272, 1
      %vm8289 = vcmp.eq.s32.totalorder %v8273, 1
      %vm8290 = vcmp.eq.s32.totalorder %v8274, 1
      %vm8291 = vcmp.eq.s32.totalorder %v8275, 1
      %vm8292 = vcmp.eq.s32.totalorder %v8276, 1
      %vm8293 = vcmp.eq.s32.totalorder %v8277, 1
      %vm8294 = vcmp.eq.s32.totalorder %v8278, 1
      %vm8295 = vcmp.eq.s32.totalorder %v8279, 1
      %vm8296 = vcmp.eq.s32.totalorder %v8280, 1
      %vm8297 = vcmp.eq.s32.totalorder %v8281, 1
      %vm8298 = vcmp.eq.s32.totalorder %v8282, 1
      %v8299 = vsel %vm8283, %v7735, -1e+09
      %v8300 = vsel %vm8284, %v7738, -1e+09
      %v8301 = vsel %vm8285, %v7743, -1e+09
      %v8302 = vsel %vm8286, %v7746, -1e+09
      %v8303 = vsel %vm8287, %v7751, -1e+09
      %v8304 = vsel %vm8288, %v7754, -1e+09
      %v8305 = vsel %vm8289, %v7759, -1e+09
      %v8306 = vsel %vm8290, %v7762, -1e+09
      %v8307 = vsel %vm8291, %v7767, -1e+09
      %v8308 = vsel %vm8292, %v7770, -1e+09
      %v8309 = vsel %vm8293, %v7775, -1e+09
      %v8310 = vsel %vm8294, %v7778, -1e+09
      %v8311 = vsel %vm8295, %v7783, -1e+09
      %v8312 = vsel %vm8296, %v7786, -1e+09
      %v8313 = vsel %vm8297, %v7791, -1e+09
      %v8314 = vsel %vm8298, %v7794, -1e+09
      %v8315 = vsel %vm8283, %v7880, -1e+09
      %v8316 = vsel %vm8284, %v7883, -1e+09
      %v8317 = vsel %vm8285, %v7888, -1e+09
      %v8318 = vsel %vm8286, %v7891, -1e+09
      %v8319 = vsel %vm8287, %v7896, -1e+09
      %v8320 = vsel %vm8288, %v7899, -1e+09
      %v8321 = vsel %vm8289, %v7904, -1e+09
      %v8322 = vsel %vm8290, %v7907, -1e+09
      %v8323 = vsel %vm8291, %v7912, -1e+09
      %v8324 = vsel %vm8292, %v7915, -1e+09
      %v8325 = vsel %vm8293, %v7920, -1e+09
      %v8326 = vsel %vm8294, %v7923, -1e+09
      %v8327 = vsel %vm8295, %v7928, -1e+09
      %v8328 = vsel %vm8296, %v7931, -1e+09
      %v8329 = vsel %vm8297, %v7936, -1e+09
      %v8330 = vsel %vm8298, %v7939, -1e+09
      %v8331 = vsel %vm8283, %v8025, -1e+09
      %v8332 = vsel %vm8284, %v8028, -1e+09
      %v8333 = vsel %vm8285, %v8033, -1e+09
      %v8334 = vsel %vm8286, %v8036, -1e+09
      %v8335 = vsel %vm8287, %v8041, -1e+09
      %v8336 = vsel %vm8288, %v8044, -1e+09
      %v8337 = vsel %vm8289, %v8049, -1e+09
      %v8338 = vsel %vm8290, %v8052, -1e+09
      %v8339 = vsel %vm8291, %v8057, -1e+09
      %v8340 = vsel %vm8292, %v8060, -1e+09
      %v8341 = vsel %vm8293, %v8065, -1e+09
      %v8342 = vsel %vm8294, %v8068, -1e+09
      %v8343 = vsel %vm8295, %v8073, -1e+09
      %v8344 = vsel %vm8296, %v8076, -1e+09
      %v8345 = vsel %vm8297, %v8081, -1e+09
      %v8346 = vsel %vm8298, %v8084, -1e+09
      %v8347 = vsel %vm8283, %v8170, -1e+09
      %v8348 = vsel %vm8284, %v8173, -1e+09
      %v8349 = vsel %vm8285, %v8178, -1e+09
      %v8350 = vsel %vm8286, %v8181, -1e+09
      %v8351 = vsel %vm8287, %v8186, -1e+09
      %v8352 = vsel %vm8288, %v8189, -1e+09
      %v8353 = vsel %vm8289, %v8194, -1e+09
      %v8354 = vsel %vm8290, %v8197, -1e+09
      %v8355 = vsel %vm8291, %v8202, -1e+09
      %v8356 = vsel %vm8292, %v8205, -1e+09
      %v8357 = vsel %vm8293, %v8210, -1e+09
      %v8358 = vsel %vm8294, %v8213, -1e+09
      %v8359 = vsel %vm8295, %v8218, -1e+09
      %v8360 = vsel %vm8296, %v8221, -1e+09
      %v8361 = vsel %vm8297, %v8226, -1e+09
      %v8362 = vsel %vm8298, %v8229, -1e+09
      %8363 = vmax.xlane.f32.xlu0 %v8299
      %v8364 = vpop.xlane.xlu0 %8363
      %8365 = vmax.xlane.f32.xlu0 %v8300
      %v8366 = vpop.xlane.xlu0 %8365
      %8367 = vmax.xlane.f32.xlu0 %v8301
      %v8368 = vpop.xlane.xlu0 %8367
      %8369 = vmax.xlane.f32.xlu0 %v8302
      %v8370 = vpop.xlane.xlu0 %8369
      %8371 = vmax.xlane.f32.xlu0 %v8303
      %v8372 = vpop.xlane.xlu0 %8371
      %8373 = vmax.xlane.f32.xlu0 %v8304
      %v8374 = vpop.xlane.xlu0 %8373
      %8375 = vmax.xlane.f32.xlu0 %v8305
      %v8376 = vpop.xlane.xlu0 %8375
      %8377 = vmax.xlane.f32.xlu0 %v8306
      %v8378 = vpop.xlane.xlu0 %8377
      %8379 = vmax.xlane.f32.xlu0 %v8307
      %v8380 = vpop.xlane.xlu0 %8379
      %8381 = vmax.xlane.f32.xlu0 %v8308
      %v8382 = vpop.xlane.xlu0 %8381
      %8383 = vmax.xlane.f32.xlu0 %v8309
      %v8384 = vpop.xlane.xlu0 %8383
      %8385 = vmax.xlane.f32.xlu0 %v8310
      %v8386 = vpop.xlane.xlu0 %8385
      %8387 = vmax.xlane.f32.xlu0 %v8311
      %v8388 = vpop.xlane.xlu0 %8387
      %8389 = vmax.xlane.f32.xlu0 %v8312
      %v8390 = vpop.xlane.xlu0 %8389
      %8391 = vmax.xlane.f32.xlu0 %v8313
      %v8392 = vpop.xlane.xlu0 %8391
      %8393 = vmax.xlane.f32.xlu0 %v8314
      %v8394 = vpop.xlane.xlu0 %8393
      %8395 = vmax.xlane.f32.xlu0 %v8315
      %v8396 = vpop.xlane.xlu0 %8395
      %8397 = vmax.xlane.f32.xlu0 %v8316
      %v8398 = vpop.xlane.xlu0 %8397
      %8399 = vmax.xlane.f32.xlu0 %v8317
      %v8400 = vpop.xlane.xlu0 %8399
      %8401 = vmax.xlane.f32.xlu0 %v8318
      %v8402 = vpop.xlane.xlu0 %8401
      %8403 = vmax.xlane.f32.xlu0 %v8319
      %v8404 = vpop.xlane.xlu0 %8403
      %8405 = vmax.xlane.f32.xlu0 %v8320
      %v8406 = vpop.xlane.xlu0 %8405
      %8407 = vmax.xlane.f32.xlu0 %v8321
      %v8408 = vpop.xlane.xlu0 %8407
      %8409 = vmax.xlane.f32.xlu0 %v8322
      %v8410 = vpop.xlane.xlu0 %8409
      %8411 = vmax.xlane.f32.xlu0 %v8323
      %v8412 = vpop.xlane.xlu0 %8411
      %8413 = vmax.xlane.f32.xlu0 %v8324
      %v8414 = vpop.xlane.xlu0 %8413
      %8415 = vmax.xlane.f32.xlu0 %v8325
      %v8416 = vpop.xlane.xlu0 %8415
      %8417 = vmax.xlane.f32.xlu0 %v8326
      %v8418 = vpop.xlane.xlu0 %8417
      %8419 = vmax.xlane.f32.xlu0 %v8327
      %v8420 = vpop.xlane.xlu0 %8419
      %8421 = vmax.xlane.f32.xlu0 %v8328
      %v8422 = vpop.xlane.xlu0 %8421
      %8423 = vmax.xlane.f32.xlu0 %v8329
      %v8424 = vpop.xlane.xlu0 %8423
      %8425 = vmax.xlane.f32.xlu0 %v8330
      %v8426 = vpop.xlane.xlu0 %8425
      %8427 = vmax.xlane.f32.xlu0 %v8331
      %v8428 = vpop.xlane.xlu0 %8427
      %8429 = vmax.xlane.f32.xlu0 %v8332
      %v8430 = vpop.xlane.xlu0 %8429
      %8431 = vmax.xlane.f32.xlu0 %v8333
      %v8432 = vpop.xlane.xlu0 %8431
      %8433 = vmax.xlane.f32.xlu0 %v8334
      %v8434 = vpop.xlane.xlu0 %8433
      %8435 = vmax.xlane.f32.xlu0 %v8335
      %v8436 = vpop.xlane.xlu0 %8435
      %8437 = vmax.xlane.f32.xlu0 %v8336
      %v8438 = vpop.xlane.xlu0 %8437
      %8439 = vmax.xlane.f32.xlu0 %v8337
      %v8440 = vpop.xlane.xlu0 %8439
      %8441 = vmax.xlane.f32.xlu0 %v8338
      %v8442 = vpop.xlane.xlu0 %8441
      %8443 = vmax.xlane.f32.xlu0 %v8339
      %v8444 = vpop.xlane.xlu0 %8443
      %8445 = vmax.xlane.f32.xlu0 %v8340
      %v8446 = vpop.xlane.xlu0 %8445
      %8447 = vmax.xlane.f32.xlu0 %v8341
      %v8448 = vpop.xlane.xlu0 %8447
      %8449 = vmax.xlane.f32.xlu0 %v8342
      %v8450 = vpop.xlane.xlu0 %8449
      %8451 = vmax.xlane.f32.xlu0 %v8343
      %v8452 = vpop.xlane.xlu0 %8451
      %8453 = vmax.xlane.f32.xlu0 %v8344
      %v8454 = vpop.xlane.xlu0 %8453
      %8455 = vmax.xlane.f32.xlu0 %v8345
      %v8456 = vpop.xlane.xlu0 %8455
      %8457 = vmax.xlane.f32.xlu0 %v8346
      %v8458 = vpop.xlane.xlu0 %8457
      %8459 = vmax.xlane.f32.xlu0 %v8347
      %v8460 = vpop.xlane.xlu0 %8459
      %8461 = vmax.xlane.f32.xlu0 %v8348
      %v8462 = vpop.xlane.xlu0 %8461
      %8463 = vmax.xlane.f32.xlu0 %v8349
      %v8464 = vpop.xlane.xlu0 %8463
      %8465 = vmax.xlane.f32.xlu0 %v8350
      %v8466 = vpop.xlane.xlu0 %8465
      %8467 = vmax.xlane.f32.xlu0 %v8351
      %v8468 = vpop.xlane.xlu0 %8467
      %8469 = vmax.xlane.f32.xlu0 %v8352
      %v8470 = vpop.xlane.xlu0 %8469
      %8471 = vmax.xlane.f32.xlu0 %v8353
      %v8472 = vpop.xlane.xlu0 %8471
      %8473 = vmax.xlane.f32.xlu0 %v8354
      %v8474 = vpop.xlane.xlu0 %8473
      %8475 = vmax.xlane.f32.xlu0 %v8355
      %v8476 = vpop.xlane.xlu0 %8475
      %8477 = vmax.xlane.f32.xlu0 %v8356
      %v8478 = vpop.xlane.xlu0 %8477
      %8479 = vmax.xlane.f32.xlu0 %v8357
      %v8480 = vpop.xlane.xlu0 %8479
      %8481 = vmax.xlane.f32.xlu0 %v8358
      %v8482 = vpop.xlane.xlu0 %8481
      %8483 = vmax.xlane.f32.xlu0 %v8359
      %v8484 = vpop.xlane.xlu0 %8483
      %8485 = vmax.xlane.f32.xlu0 %v8360
      %v8486 = vpop.xlane.xlu0 %8485
      %8487 = vmax.xlane.f32.xlu0 %v8361
      %v8488 = vpop.xlane.xlu0 %8487
      %8489 = vmax.xlane.f32.xlu0 %v8362
      %v8490 = vpop.xlane.xlu0 %8489
      %v8491 = vsub.f32 %v8299, %v8364
      %v8492 = vsub.f32 %v8300, %v8366
      %v8493 = vsub.f32 %v8301, %v8368
      %v8494 = vsub.f32 %v8302, %v8370
      %v8495 = vsub.f32 %v8303, %v8372
      %v8496 = vsub.f32 %v8304, %v8374
      %v8497 = vsub.f32 %v8305, %v8376
      %v8498 = vsub.f32 %v8306, %v8378
      %v8499 = vsub.f32 %v8307, %v8380
      %v8500 = vsub.f32 %v8308, %v8382
      %v8501 = vsub.f32 %v8309, %v8384
      %v8502 = vsub.f32 %v8310, %v8386
      %v8503 = vsub.f32 %v8311, %v8388
      %v8504 = vsub.f32 %v8312, %v8390
      %v8505 = vsub.f32 %v8313, %v8392
      %v8506 = vsub.f32 %v8314, %v8394
      %v8507 = vsub.f32 %v8315, %v8396
      %v8508 = vsub.f32 %v8316, %v8398
      %v8509 = vsub.f32 %v8317, %v8400
      %v8510 = vsub.f32 %v8318, %v8402
      %v8511 = vsub.f32 %v8319, %v8404
      %v8512 = vsub.f32 %v8320, %v8406
      %v8513 = vsub.f32 %v8321, %v8408
      %v8514 = vsub.f32 %v8322, %v8410
      %v8515 = vsub.f32 %v8323, %v8412
      %v8516 = vsub.f32 %v8324, %v8414
      %v8517 = vsub.f32 %v8325, %v8416
      %v8518 = vsub.f32 %v8326, %v8418
      %v8519 = vsub.f32 %v8327, %v8420
      %v8520 = vsub.f32 %v8328, %v8422
      %v8521 = vsub.f32 %v8329, %v8424
      %v8522 = vsub.f32 %v8330, %v8426
      %v8523 = vsub.f32 %v8331, %v8428
      %v8524 = vsub.f32 %v8332, %v8430
      %v8525 = vsub.f32 %v8333, %v8432
      %v8526 = vsub.f32 %v8334, %v8434
      %v8527 = vsub.f32 %v8335, %v8436
      %v8528 = vsub.f32 %v8336, %v8438
      %v8529 = vsub.f32 %v8337, %v8440
      %v8530 = vsub.f32 %v8338, %v8442
      %v8531 = vsub.f32 %v8339, %v8444
      %v8532 = vsub.f32 %v8340, %v8446
      %v8533 = vsub.f32 %v8341, %v8448
      %v8534 = vsub.f32 %v8342, %v8450
      %v8535 = vsub.f32 %v8343, %v8452
      %v8536 = vsub.f32 %v8344, %v8454
      %v8537 = vsub.f32 %v8345, %v8456
      %v8538 = vsub.f32 %v8346, %v8458
      %v8539 = vsub.f32 %v8347, %v8460
      %v8540 = vsub.f32 %v8348, %v8462
      %v8541 = vsub.f32 %v8349, %v8464
      %v8542 = vsub.f32 %v8350, %v8466
      %v8543 = vsub.f32 %v8351, %v8468
      %v8544 = vsub.f32 %v8352, %v8470
      %v8545 = vsub.f32 %v8353, %v8472
      %v8546 = vsub.f32 %v8354, %v8474
      %v8547 = vsub.f32 %v8355, %v8476
      %v8548 = vsub.f32 %v8356, %v8478
      %v8549 = vsub.f32 %v8357, %v8480
      %v8550 = vsub.f32 %v8358, %v8482
      %v8551 = vsub.f32 %v8359, %v8484
      %v8552 = vsub.f32 %v8360, %v8486
      %v8553 = vsub.f32 %v8361, %v8488
      %v8554 = vsub.f32 %v8362, %v8490
      %v8555 = vmul.f32 %v8491, 1.442695
      %v8556 = vpow.pop %v8555
      %v8557 = vmul.f32 %v8492, 1.442695
      %v8558 = vpow.pop %v8557
      %v8559 = vmul.f32 %v8493, 1.442695
      %v8560 = vpow.pop %v8559
      %v8561 = vmul.f32 %v8494, 1.442695
      %v8562 = vpow.pop %v8561
      %v8563 = vmul.f32 %v8495, 1.442695
      %v8564 = vpow.pop %v8563
      %v8565 = vmul.f32 %v8496, 1.442695
      %v8566 = vpow.pop %v8565
      %v8567 = vmul.f32 %v8497, 1.442695
      %v8568 = vpow.pop %v8567
      %v8569 = vmul.f32 %v8498, 1.442695
      %v8570 = vpow.pop %v8569
      %v8571 = vmul.f32 %v8499, 1.442695
      %v8572 = vpow.pop %v8571
      %v8573 = vmul.f32 %v8500, 1.442695
      %v8574 = vpow.pop %v8573
      %v8575 = vmul.f32 %v8501, 1.442695
      %v8576 = vpow.pop %v8575
      %v8577 = vmul.f32 %v8502, 1.442695
      %v8578 = vpow.pop %v8577
      %v8579 = vmul.f32 %v8503, 1.442695
      %v8580 = vpow.pop %v8579
      %v8581 = vmul.f32 %v8504, 1.442695
      %v8582 = vpow.pop %v8581
      %v8583 = vmul.f32 %v8505, 1.442695
      %v8584 = vpow.pop %v8583
      %v8585 = vmul.f32 %v8506, 1.442695
      %v8586 = vpow.pop %v8585
      %v8587 = vmul.f32 %v8507, 1.442695
      %v8588 = vpow.pop %v8587
      %v8589 = vmul.f32 %v8508, 1.442695
      %v8590 = vpow.pop %v8589
      %v8591 = vmul.f32 %v8509, 1.442695
      %v8592 = vpow.pop %v8591
      %v8593 = vmul.f32 %v8510, 1.442695
      %v8594 = vpow.pop %v8593
      %v8595 = vmul.f32 %v8511, 1.442695
      %v8596 = vpow.pop %v8595
      %v8597 = vmul.f32 %v8512, 1.442695
      %v8598 = vpow.pop %v8597
      %v8599 = vmul.f32 %v8513, 1.442695
      %v8600 = vpow.pop %v8599
      %v8601 = vmul.f32 %v8514, 1.442695
      %v8602 = vpow.pop %v8601
      %v8603 = vmul.f32 %v8515, 1.442695
      %v8604 = vpow.pop %v8603
      %v8605 = vmul.f32 %v8516, 1.442695
      %v8606 = vpow.pop %v8605
      %v8607 = vmul.f32 %v8517, 1.442695
      %v8608 = vpow.pop %v8607
      %v8609 = vmul.f32 %v8518, 1.442695
      %v8610 = vpow.pop %v8609
      %v8611 = vmul.f32 %v8519, 1.442695
      %v8612 = vpow.pop %v8611
      %v8613 = vmul.f32 %v8520, 1.442695
      %v8614 = vpow.pop %v8613
      %v8615 = vmul.f32 %v8521, 1.442695
      %v8616 = vpow.pop %v8615
      %v8617 = vmul.f32 %v8522, 1.442695
      %v8618 = vpow.pop %v8617
      %v8619 = vmul.f32 %v8523, 1.442695
      %v8620 = vpow.pop %v8619
      %v8621 = vmul.f32 %v8524, 1.442695
      %v8622 = vpow.pop %v8621
      %v8623 = vmul.f32 %v8525, 1.442695
      %v8624 = vpow.pop %v8623
      %v8625 = vmul.f32 %v8526, 1.442695
      %v8626 = vpow.pop %v8625
      %v8627 = vmul.f32 %v8527, 1.442695
      %v8628 = vpow.pop %v8627
      %v8629 = vmul.f32 %v8528, 1.442695
      %v8630 = vpow.pop %v8629
      %v8631 = vmul.f32 %v8529, 1.442695
      %v8632 = vpow.pop %v8631
      %v8633 = vmul.f32 %v8530, 1.442695
      %v8634 = vpow.pop %v8633
      %v8635 = vmul.f32 %v8531, 1.442695
      %v8636 = vpow.pop %v8635
      %v8637 = vmul.f32 %v8532, 1.442695
      %v8638 = vpow.pop %v8637
      %v8639 = vmul.f32 %v8533, 1.442695
      %v8640 = vpow.pop %v8639
      %v8641 = vmul.f32 %v8534, 1.442695
      %v8642 = vpow.pop %v8641
      %v8643 = vmul.f32 %v8535, 1.442695
      %v8644 = vpow.pop %v8643
      %v8645 = vmul.f32 %v8536, 1.442695
      %v8646 = vpow.pop %v8645
      %v8647 = vmul.f32 %v8537, 1.442695
      %v8648 = vpow.pop %v8647
      %v8649 = vmul.f32 %v8538, 1.442695
      %v8650 = vpow.pop %v8649
      %v8651 = vmul.f32 %v8539, 1.442695
      %v8652 = vpow.pop %v8651
      %v8653 = vmul.f32 %v8540, 1.442695
      %v8654 = vpow.pop %v8653
      %v8655 = vmul.f32 %v8541, 1.442695
      %v8656 = vpow.pop %v8655
      %v8657 = vmul.f32 %v8542, 1.442695
      %v8658 = vpow.pop %v8657
      %v8659 = vmul.f32 %v8543, 1.442695
      %v8660 = vpow.pop %v8659
      %v8661 = vmul.f32 %v8544, 1.442695
      %v8662 = vpow.pop %v8661
      %v8663 = vmul.f32 %v8545, 1.442695
      %v8664 = vpow.pop %v8663
      %v8665 = vmul.f32 %v8546, 1.442695
      %v8666 = vpow.pop %v8665
      %v8667 = vmul.f32 %v8547, 1.442695
      %v8668 = vpow.pop %v8667
      %v8669 = vmul.f32 %v8548, 1.442695
      %v8670 = vpow.pop %v8669
      %v8671 = vmul.f32 %v8549, 1.442695
      %v8672 = vpow.pop %v8671
      %v8673 = vmul.f32 %v8550, 1.442695
      %v8674 = vpow.pop %v8673
      %v8675 = vmul.f32 %v8551, 1.442695
      %v8676 = vpow.pop %v8675
      %v8677 = vmul.f32 %v8552, 1.442695
      %v8678 = vpow.pop %v8677
      %v8679 = vmul.f32 %v8553, 1.442695
      %v8680 = vpow.pop %v8679
      %v8681 = vmul.f32 %v8554, 1.442695
      %v8682 = vpow.pop %v8681
      %8683 = vadd.xlane.f32.xlu0 %v8556
      %v8684 = vpop.xlane.xlu0 %8683
      %8685 = vadd.xlane.f32.xlu0 %v8558
      %v8686 = vpop.xlane.xlu0 %8685
      %8687 = vadd.xlane.f32.xlu0 %v8560
      %v8688 = vpop.xlane.xlu0 %8687
      %8689 = vadd.xlane.f32.xlu0 %v8562
      %v8690 = vpop.xlane.xlu0 %8689
      %8691 = vadd.xlane.f32.xlu0 %v8564
      %v8692 = vpop.xlane.xlu0 %8691
      %8693 = vadd.xlane.f32.xlu0 %v8566
      %v8694 = vpop.xlane.xlu0 %8693
      %8695 = vadd.xlane.f32.xlu0 %v8568
      %v8696 = vpop.xlane.xlu0 %8695
      %8697 = vadd.xlane.f32.xlu0 %v8570
      %v8698 = vpop.xlane.xlu0 %8697
      %8699 = vadd.xlane.f32.xlu0 %v8572
      %v8700 = vpop.xlane.xlu0 %8699
      %8701 = vadd.xlane.f32.xlu0 %v8574
      %v8702 = vpop.xlane.xlu0 %8701
      %8703 = vadd.xlane.f32.xlu0 %v8576
      %v8704 = vpop.xlane.xlu0 %8703
      %8705 = vadd.xlane.f32.xlu0 %v8578
      %v8706 = vpop.xlane.xlu0 %8705
      %8707 = vadd.xlane.f32.xlu0 %v8580
      %v8708 = vpop.xlane.xlu0 %8707
      %8709 = vadd.xlane.f32.xlu0 %v8582
      %v8710 = vpop.xlane.xlu0 %8709
      %8711 = vadd.xlane.f32.xlu0 %v8584
      %v8712 = vpop.xlane.xlu0 %8711
      %8713 = vadd.xlane.f32.xlu0 %v8586
      %v8714 = vpop.xlane.xlu0 %8713
      %8715 = vadd.xlane.f32.xlu0 %v8588
      %v8716 = vpop.xlane.xlu0 %8715
      %8717 = vadd.xlane.f32.xlu0 %v8590
      %v8718 = vpop.xlane.xlu0 %8717
      %8719 = vadd.xlane.f32.xlu0 %v8592
      %v8720 = vpop.xlane.xlu0 %8719
      %8721 = vadd.xlane.f32.xlu0 %v8594
      %v8722 = vpop.xlane.xlu0 %8721
      %8723 = vadd.xlane.f32.xlu0 %v8596
      %v8724 = vpop.xlane.xlu0 %8723
      %8725 = vadd.xlane.f32.xlu0 %v8598
      %v8726 = vpop.xlane.xlu0 %8725
      %8727 = vadd.xlane.f32.xlu0 %v8600
      %v8728 = vpop.xlane.xlu0 %8727
      %8729 = vadd.xlane.f32.xlu0 %v8602
      %v8730 = vpop.xlane.xlu0 %8729
      %8731 = vadd.xlane.f32.xlu0 %v8604
      %v8732 = vpop.xlane.xlu0 %8731
      %8733 = vadd.xlane.f32.xlu0 %v8606
      %v8734 = vpop.xlane.xlu0 %8733
      %8735 = vadd.xlane.f32.xlu0 %v8608
      %v8736 = vpop.xlane.xlu0 %8735
      %8737 = vadd.xlane.f32.xlu0 %v8610
      %v8738 = vpop.xlane.xlu0 %8737
      %8739 = vadd.xlane.f32.xlu0 %v8612
      %v8740 = vpop.xlane.xlu0 %8739
      %8741 = vadd.xlane.f32.xlu0 %v8614
      %v8742 = vpop.xlane.xlu0 %8741
      %8743 = vadd.xlane.f32.xlu0 %v8616
      %v8744 = vpop.xlane.xlu0 %8743
      %8745 = vadd.xlane.f32.xlu0 %v8618
      %v8746 = vpop.xlane.xlu0 %8745
      %8747 = vadd.xlane.f32.xlu0 %v8620
      %v8748 = vpop.xlane.xlu0 %8747
      %8749 = vadd.xlane.f32.xlu0 %v8622
      %v8750 = vpop.xlane.xlu0 %8749
      %8751 = vadd.xlane.f32.xlu0 %v8624
      %v8752 = vpop.xlane.xlu0 %8751
      %8753 = vadd.xlane.f32.xlu0 %v8626
      %v8754 = vpop.xlane.xlu0 %8753
      %8755 = vadd.xlane.f32.xlu0 %v8628
      %v8756 = vpop.xlane.xlu0 %8755
      %8757 = vadd.xlane.f32.xlu0 %v8630
      %v8758 = vpop.xlane.xlu0 %8757
      %8759 = vadd.xlane.f32.xlu0 %v8632
      %v8760 = vpop.xlane.xlu0 %8759
      %8761 = vadd.xlane.f32.xlu0 %v8634
      %v8762 = vpop.xlane.xlu0 %8761
      %8763 = vadd.xlane.f32.xlu0 %v8636
      %v8764 = vpop.xlane.xlu0 %8763
      %8765 = vadd.xlane.f32.xlu0 %v8638
      %v8766 = vpop.xlane.xlu0 %8765
      %8767 = vadd.xlane.f32.xlu0 %v8640
      %v8768 = vpop.xlane.xlu0 %8767
      %8769 = vadd.xlane.f32.xlu0 %v8642
      %v8770 = vpop.xlane.xlu0 %8769
      %8771 = vadd.xlane.f32.xlu0 %v8644
      %v8772 = vpop.xlane.xlu0 %8771
      %8773 = vadd.xlane.f32.xlu0 %v8646
      %v8774 = vpop.xlane.xlu0 %8773
      %8775 = vadd.xlane.f32.xlu0 %v8648
      %v8776 = vpop.xlane.xlu0 %8775
      %8777 = vadd.xlane.f32.xlu0 %v8650
      %v8778 = vpop.xlane.xlu0 %8777
      %8779 = vadd.xlane.f32.xlu0 %v8652
      %v8780 = vpop.xlane.xlu0 %8779
      %8781 = vadd.xlane.f32.xlu0 %v8654
      %v8782 = vpop.xlane.xlu0 %8781
      %8783 = vadd.xlane.f32.xlu0 %v8656
      %v8784 = vpop.xlane.xlu0 %8783
      %8785 = vadd.xlane.f32.xlu0 %v8658
      %v8786 = vpop.xlane.xlu0 %8785
      %8787 = vadd.xlane.f32.xlu0 %v8660
      %v8788 = vpop.xlane.xlu0 %8787
      %8789 = vadd.xlane.f32.xlu0 %v8662
      %v8790 = vpop.xlane.xlu0 %8789
      %8791 = vadd.xlane.f32.xlu0 %v8664
      %v8792 = vpop.xlane.xlu0 %8791
      %8793 = vadd.xlane.f32.xlu0 %v8666
      %v8794 = vpop.xlane.xlu0 %8793
      %8795 = vadd.xlane.f32.xlu0 %v8668
      %v8796 = vpop.xlane.xlu0 %8795
      %8797 = vadd.xlane.f32.xlu0 %v8670
      %v8798 = vpop.xlane.xlu0 %8797
      %8799 = vadd.xlane.f32.xlu0 %v8672
      %v8800 = vpop.xlane.xlu0 %8799
      %8801 = vadd.xlane.f32.xlu0 %v8674
      %v8802 = vpop.xlane.xlu0 %8801
      %8803 = vadd.xlane.f32.xlu0 %v8676
      %v8804 = vpop.xlane.xlu0 %8803
      %8805 = vadd.xlane.f32.xlu0 %v8678
      %v8806 = vpop.xlane.xlu0 %8805
      %8807 = vadd.xlane.f32.xlu0 %v8680
      %v8808 = vpop.xlane.xlu0 %8807
      %8809 = vadd.xlane.f32.xlu0 %v8682
      %v8810 = vpop.xlane.xlu0 %8809
      %v8811 = vrcp.pop %v8684
      %v8812 = vrcp.pop %v8686
      %v8813 = vrcp.pop %v8688
      %v8814 = vrcp.pop %v8690
      %v8815 = vrcp.pop %v8692
      %v8816 = vrcp.pop %v8694
      %v8817 = vrcp.pop %v8696
      %v8818 = vrcp.pop %v8698
      %v8819 = vrcp.pop %v8700
      %v8820 = vrcp.pop %v8702
      %v8821 = vrcp.pop %v8704
      %v8822 = vrcp.pop %v8706
      %v8823 = vrcp.pop %v8708
      %v8824 = vrcp.pop %v8710
      %v8825 = vrcp.pop %v8712
      %v8826 = vrcp.pop %v8714
      %v8827 = vrcp.pop %v8716
      %v8828 = vrcp.pop %v8718
      %v8829 = vrcp.pop %v8720
      %v8830 = vrcp.pop %v8722
      %v8831 = vrcp.pop %v8724
      %v8832 = vrcp.pop %v8726
      %v8833 = vrcp.pop %v8728
      %v8834 = vrcp.pop %v8730
      %v8835 = vrcp.pop %v8732
      %v8836 = vrcp.pop %v8734
      %v8837 = vrcp.pop %v8736
      %v8838 = vrcp.pop %v8738
      %v8839 = vrcp.pop %v8740
      %v8840 = vrcp.pop %v8742
      %v8841 = vrcp.pop %v8744
      %v8842 = vrcp.pop %v8746
      %v8843 = vrcp.pop %v8748
      %v8844 = vrcp.pop %v8750
      %v8845 = vrcp.pop %v8752
      %v8846 = vrcp.pop %v8754
      %v8847 = vrcp.pop %v8756
      %v8848 = vrcp.pop %v8758
      %v8849 = vrcp.pop %v8760
      %v8850 = vrcp.pop %v8762
      %v8851 = vrcp.pop %v8764
      %v8852 = vrcp.pop %v8766
      %v8853 = vrcp.pop %v8768
      %v8854 = vrcp.pop %v8770
      %v8855 = vrcp.pop %v8772
      %v8856 = vrcp.pop %v8774
      %v8857 = vrcp.pop %v8776
      %v8858 = vrcp.pop %v8778
      %v8859 = vrcp.pop %v8780
      %v8860 = vrcp.pop %v8782
      %v8861 = vrcp.pop %v8784
      %v8862 = vrcp.pop %v8786
      %v8863 = vrcp.pop %v8788
      %v8864 = vrcp.pop %v8790
      %v8865 = vrcp.pop %v8792
      %v8866 = vrcp.pop %v8794
      %v8867 = vrcp.pop %v8796
      %v8868 = vrcp.pop %v8798
      %v8869 = vrcp.pop %v8800
      %v8870 = vrcp.pop %v8802
      %v8871 = vrcp.pop %v8804
      %v8872 = vrcp.pop %v8806
      %v8873 = vrcp.pop %v8808
      %v8874 = vrcp.pop %v8810
      %v8875 = vmul.f32 %v8556, %v8811
      %v8876 = vmul.f32 %v8558, %v8812
      %v8877 = vmul.f32 %v8560, %v8813
      %v8878 = vmul.f32 %v8562, %v8814
      %v8879 = vmul.f32 %v8564, %v8815
      %v8880 = vmul.f32 %v8566, %v8816
      %v8881 = vmul.f32 %v8568, %v8817
      %v8882 = vmul.f32 %v8570, %v8818
      %v8883 = vmul.f32 %v8572, %v8819
      %v8884 = vmul.f32 %v8574, %v8820
      %v8885 = vmul.f32 %v8576, %v8821
      %v8886 = vmul.f32 %v8578, %v8822
      %v8887 = vmul.f32 %v8580, %v8823
      %v8888 = vmul.f32 %v8582, %v8824
      %v8889 = vmul.f32 %v8584, %v8825
      %v8890 = vmul.f32 %v8586, %v8826
      %v8891 = vmul.f32 %v8588, %v8827
      %v8892 = vmul.f32 %v8590, %v8828
      %v8893 = vmul.f32 %v8592, %v8829
      %v8894 = vmul.f32 %v8594, %v8830
      %v8895 = vmul.f32 %v8596, %v8831
      %v8896 = vmul.f32 %v8598, %v8832
      %v8897 = vmul.f32 %v8600, %v8833
      %v8898 = vmul.f32 %v8602, %v8834
      %v8899 = vmul.f32 %v8604, %v8835
      %v8900 = vmul.f32 %v8606, %v8836
      %v8901 = vmul.f32 %v8608, %v8837
      %v8902 = vmul.f32 %v8610, %v8838
      %v8903 = vmul.f32 %v8612, %v8839
      %v8904 = vmul.f32 %v8614, %v8840
      %v8905 = vmul.f32 %v8616, %v8841
      %v8906 = vmul.f32 %v8618, %v8842
      %v8907 = vmul.f32 %v8620, %v8843
      %v8908 = vmul.f32 %v8622, %v8844
      %v8909 = vmul.f32 %v8624, %v8845
      %v8910 = vmul.f32 %v8626, %v8846
      %v8911 = vmul.f32 %v8628, %v8847
      %v8912 = vmul.f32 %v8630, %v8848
      %v8913 = vmul.f32 %v8632, %v8849
      %v8914 = vmul.f32 %v8634, %v8850
      %v8915 = vmul.f32 %v8636, %v8851
      %v8916 = vmul.f32 %v8638, %v8852
      %v8917 = vmul.f32 %v8640, %v8853
      %v8918 = vmul.f32 %v8642, %v8854
      %v8919 = vmul.f32 %v8644, %v8855
      %v8920 = vmul.f32 %v8646, %v8856
      %v8921 = vmul.f32 %v8648, %v8857
      %v8922 = vmul.f32 %v8650, %v8858
      %v8923 = vmul.f32 %v8652, %v8859
      %v8924 = vmul.f32 %v8654, %v8860
      %v8925 = vmul.f32 %v8656, %v8861
      %v8926 = vmul.f32 %v8658, %v8862
      %v8927 = vmul.f32 %v8660, %v8863
      %v8928 = vmul.f32 %v8662, %v8864
      %v8929 = vmul.f32 %v8664, %v8865
      %v8930 = vmul.f32 %v8666, %v8866
      %v8931 = vmul.f32 %v8668, %v8867
      %v8932 = vmul.f32 %v8670, %v8868
      %v8933 = vmul.f32 %v8672, %v8869
      %v8934 = vmul.f32 %v8674, %v8870
      %v8935 = vmul.f32 %v8676, %v8871
      %v8936 = vmul.f32 %v8678, %v8872
      %v8937 = vmul.f32 %v8680, %v8873
      %v8938 = vmul.f32 %v8682, %v8874
      %v8939 = vpack.c.bf16 %v8876, %v8875
      %v8940 = vpack.c.bf16 %v8878, %v8877
      %v8941 = vpack.c.bf16 %v8880, %v8879
      %v8942 = vpack.c.bf16 %v8882, %v8881
      %v8943 = vpack.c.bf16 %v8884, %v8883
      %v8944 = vpack.c.bf16 %v8886, %v8885
      %v8945 = vpack.c.bf16 %v8888, %v8887
      %v8946 = vpack.c.bf16 %v8890, %v8889
      %v8947 = vpack.c.bf16 %v8892, %v8891
      %v8948 = vpack.c.bf16 %v8894, %v8893
      %v8949 = vpack.c.bf16 %v8896, %v8895
      %v8950 = vpack.c.bf16 %v8898, %v8897
      %v8951 = vpack.c.bf16 %v8900, %v8899
      %v8952 = vpack.c.bf16 %v8902, %v8901
      %v8953 = vpack.c.bf16 %v8904, %v8903
      %v8954 = vpack.c.bf16 %v8906, %v8905
      %v8955 = vpack.c.bf16 %v8908, %v8907
      %v8956 = vpack.c.bf16 %v8910, %v8909
      %v8957 = vpack.c.bf16 %v8912, %v8911
      %v8958 = vpack.c.bf16 %v8914, %v8913
      %v8959 = vpack.c.bf16 %v8916, %v8915
      %v8960 = vpack.c.bf16 %v8918, %v8917
      %v8961 = vpack.c.bf16 %v8920, %v8919
      %v8962 = vpack.c.bf16 %v8922, %v8921
      %v8963 = vpack.c.bf16 %v8924, %v8923
      %v8964 = vpack.c.bf16 %v8926, %v8925
      %v8965 = vpack.c.bf16 %v8928, %v8927
      %v8966 = vpack.c.bf16 %v8930, %v8929
      %v8967 = vpack.c.bf16 %v8932, %v8931
      %v8968 = vpack.c.bf16 %v8934, %v8933
      %v8969 = vpack.c.bf16 %v8936, %v8935
      %v8970 = vpack.c.bf16 %v8938, %v8937
      %8971 = vmatprep.subr.bf16.mxu0 0
      %8972 = vmatpush1.bf16.msra.mxu0 %v7525
      %8973 = vmatprep.subr.bf16.mxu0 0
      %8974 = vmatpush1.bf16.msra.mxu0 %v7541
      %8975 = vmatprep.subr.bf16.mxu0 0
      %8976 = vmatpush1.bf16.msra.mxu0 %v7557
      %8977 = vmatprep.subr.bf16.mxu0 0
      %8978 = vmatpush1.bf16.msra.mxu0 %v7573
      %8979 = vmatprep.subr.bf16.mxu0 0
      %8980 = vmatpush1.bf16.msra.mxu0 %v7589
      %8981 = vmatprep.subr.bf16.mxu0 0
      %8982 = vmatpush1.bf16.msra.mxu0 %v7605
      %8983 = vmatprep.subr.bf16.mxu0 0
      %8984 = vmatpush1.bf16.msra.mxu0 %v7621
      %8985 = vmatprep.subr.bf16.mxu0 0
      %8986 = vmatpush1.bf16.msra.mxu0 %v7637
      %8987 = vmatprep.subr.bf16.mxu0 0
      %8988 = vmatpush1.bf16.msra.mxu0 0
      %8989 = vmatprep.subr.bf16.mxu0 0
      %8990 = vmatpush1.bf16.msra.mxu0 0
      %8991 = vmatprep.subr.bf16.mxu0 0
      %8992 = vmatpush1.bf16.msra.mxu0 0
      %8993 = vmatprep.subr.bf16.mxu0 0
      %8994 = vmatpush1.bf16.msra.mxu0 0
      %8995 = vmatprep.subr.bf16.mxu0 0
      %8996 = vmatpush1.bf16.msra.mxu0 0
      %8997 = vmatprep.subr.bf16.mxu0 0
      %8998 = vmatpush1.bf16.msra.mxu0 0
      %8999 = vmatprep.subr.bf16.mxu0 0
      %9000 = vmatpush1.bf16.msra.mxu0 0
      %9001 = vmatprep.subr.bf16.mxu0 0
      %9002 = vmatpush1.bf16.msra.mxu0 0
      %9003 = vmatprep.mubr.bf16.mxu0 0
      %9004 = vmatmul.mubr.bf16.gmra.mrb[0].mxu0 %v8939
      %v9005 = vpop.f32.mrb[0].mxu0
      %v9006 = vadd.f32 0.0, %v9005
      %v9007 = vpop.f32.mrb[0].mxu0
      %v9008 = vpop.f32.mrb[0].mxu0
      %v9009 = vadd.f32 0.0, %v9008
      %v9010 = vpop.f32.mrb[0].mxu0
      %9011 = vmatprep.mubr.bf16.mxu0 0
      %9012 = vmatmul.mubr.bf16.gmra.mrb[0].mxu0 %v8940
      %v9013 = vpop.f32.mrb[0].mxu0
      %v9014 = vadd.f32 0.0, %v9013
      %v9015 = vpop.f32.mrb[0].mxu0
      %v9016 = vpop.f32.mrb[0].mxu0
      %v9017 = vadd.f32 0.0, %v9016
      %v9018 = vpop.f32.mrb[0].mxu0
      %9019 = vmatprep.mubr.bf16.mxu0 0
      %9020 = vmatmul.mubr.bf16.gmra.mrb[0].mxu0 %v8941
      %v9021 = vpop.f32.mrb[0].mxu0
      %v9022 = vadd.f32 0.0, %v9021
      %v9023 = vpop.f32.mrb[0].mxu0
      %v9024 = vpop.f32.mrb[0].mxu0
      %v9025 = vadd.f32 0.0, %v9024
      %v9026 = vpop.f32.mrb[0].mxu0
      %9027 = vmatprep.mubr.bf16.mxu0 0
      %9028 = vmatmul.mubr.bf16.gmra.mrb[0].mxu0 %v8942
      %v9029 = vpop.f32.mrb[0].mxu0
      %v9030 = vadd.f32 0.0, %v9029
      %v9031 = vpop.f32.mrb[0].mxu0
      %v9032 = vpop.f32.mrb[0].mxu0
      %v9033 = vadd.f32 0.0, %v9032
      %v9034 = vpop.f32.mrb[0].mxu0
      %9035 = vmatprep.mubr.bf16.mxu0 0
      %9036 = vmatmul.mubr.bf16.gmra.mrb[0].mxu0 %v8943
      %v9037 = vpop.f32.mrb[0].mxu0
      %v9038 = vadd.f32 0.0, %v9037
      %v9039 = vpop.f32.mrb[0].mxu0
      %v9040 = vpop.f32.mrb[0].mxu0
      %v9041 = vadd.f32 0.0, %v9040
      %v9042 = vpop.f32.mrb[0].mxu0
      %9043 = vmatprep.mubr.bf16.mxu0 0
      %9044 = vmatmul.mubr.bf16.gmra.mrb[0].mxu0 %v8944
      %v9045 = vpop.f32.mrb[0].mxu0
      %v9046 = vadd.f32 0.0, %v9045
      %v9047 = vpop.f32.mrb[0].mxu0
      %v9048 = vpop.f32.mrb[0].mxu0
      %v9049 = vadd.f32 0.0, %v9048
      %v9050 = vpop.f32.mrb[0].mxu0
      %9051 = vmatprep.mubr.bf16.mxu0 0
      %9052 = vmatmul.mubr.bf16.gmra.mrb[0].mxu0 %v8945
      %v9053 = vpop.f32.mrb[0].mxu0
      %v9054 = vadd.f32 0.0, %v9053
      %v9055 = vpop.f32.mrb[0].mxu0
      %v9056 = vpop.f32.mrb[0].mxu0
      %v9057 = vadd.f32 0.0, %v9056
      %v9058 = vpop.f32.mrb[0].mxu0
      %9059 = vmatprep.mubr.bf16.mxu0 0
      %9060 = vmatmul.mubr.bf16.gmra.mrb[0].mxu0 %v8946
      %v9061 = vpop.f32.mrb[0].mxu0
      %v9062 = vadd.f32 0.0, %v9061
      %v9063 = vpop.f32.mrb[0].mxu0
      %v9064 = vpop.f32.mrb[0].mxu0
      %v9065 = vadd.f32 0.0, %v9064
      %v9066 = vpop.f32.mrb[0].mxu0
      %9067 = vdwg.mxu0
      %9068 = vmatprep.subr.bf16.mxu0 0
      %9069 = vmatpush1.bf16.msra.mxu0 %v7529
      %9070 = vmatprep.subr.bf16.mxu0 0
      %9071 = vmatpush1.bf16.msra.mxu0 %v7545
      %9072 = vmatprep.subr.bf16.mxu0 0
      %9073 = vmatpush1.bf16.msra.mxu0 %v7561
      %9074 = vmatprep.subr.bf16.mxu0 0
      %9075 = vmatpush1.bf16.msra.mxu0 %v7577
      %9076 = vmatprep.subr.bf16.mxu0 0
      %9077 = vmatpush1.bf16.msra.mxu0 %v7593
      %9078 = vmatprep.subr.bf16.mxu0 0
      %9079 = vmatpush1.bf16.msra.mxu0 %v7609
      %9080 = vmatprep.subr.bf16.mxu0 0
      %9081 = vmatpush1.bf16.msra.mxu0 %v7625
      %9082 = vmatprep.subr.bf16.mxu0 0
      %9083 = vmatpush1.bf16.msra.mxu0 %v7641
      %9084 = vmatprep.subr.bf16.mxu0 0
      %9085 = vmatpush1.bf16.msra.mxu0 0
      %9086 = vmatprep.subr.bf16.mxu0 0
      %9087 = vmatpush1.bf16.msra.mxu0 0
      %9088 = vmatprep.subr.bf16.mxu0 0
      %9089 = vmatpush1.bf16.msra.mxu0 0
      %9090 = vmatprep.subr.bf16.mxu0 0
      %9091 = vmatpush1.bf16.msra.mxu0 0
      %9092 = vmatprep.subr.bf16.mxu0 0
      %9093 = vmatpush1.bf16.msra.mxu0 0
      %9094 = vmatprep.subr.bf16.mxu0 0
      %9095 = vmatpush1.bf16.msra.mxu0 0
      %9096 = vmatprep.subr.bf16.mxu0 0
      %9097 = vmatpush1.bf16.msra.mxu0 0
      %9098 = vmatprep.subr.bf16.mxu0 0
      %9099 = vmatpush1.bf16.msra.mxu0 0
      %9100 = vmatprep.mubr.bf16.mxu0 0
      %9101 = vmatmul.mubr.bf16.gmra.mrb[0].mxu0 %v8947
      %v9102 = vpop.f32.mrb[0].mxu0
      %v9103 = vadd.f32 0.0, %v9102
      %v9104 = vpop.f32.mrb[0].mxu0
      %v9105 = vpop.f32.mrb[0].mxu0
      %v9106 = vadd.f32 0.0, %v9105
      %v9107 = vpop.f32.mrb[0].mxu0
      %9108 = vmatprep.mubr.bf16.mxu0 0
      %9109 = vmatmul.mubr.bf16.gmra.mrb[0].mxu0 %v8948
      %v9110 = vpop.f32.mrb[0].mxu0
      %v9111 = vadd.f32 0.0, %v9110
      %v9112 = vpop.f32.mrb[0].mxu0
      %v9113 = vpop.f32.mrb[0].mxu0
      %v9114 = vadd.f32 0.0, %v9113
      %v9115 = vpop.f32.mrb[0].mxu0
      %9116 = vmatprep.mubr.bf16.mxu0 0
      %9117 = vmatmul.mubr.bf16.gmra.mrb[0].mxu0 %v8949
      %v9118 = vpop.f32.mrb[0].mxu0
      %v9119 = vadd.f32 0.0, %v9118
      %v9120 = vpop.f32.mrb[0].mxu0
      %v9121 = vpop.f32.mrb[0].mxu0
      %v9122 = vadd.f32 0.0, %v9121
      %v9123 = vpop.f32.mrb[0].mxu0
      %9124 = vmatprep.mubr.bf16.mxu0 0
      %9125 = vmatmul.mubr.bf16.gmra.mrb[0].mxu0 %v8950
      %v9126 = vpop.f32.mrb[0].mxu0
      %v9127 = vadd.f32 0.0, %v9126
      %v9128 = vpop.f32.mrb[0].mxu0
      %v9129 = vpop.f32.mrb[0].mxu0
      %v9130 = vadd.f32 0.0, %v9129
      %v9131 = vpop.f32.mrb[0].mxu0
      %9132 = vmatprep.mubr.bf16.mxu0 0
      %9133 = vmatmul.mubr.bf16.gmra.mrb[0].mxu0 %v8951
      %v9134 = vpop.f32.mrb[0].mxu0
      %v9135 = vadd.f32 0.0, %v9134
      %v9136 = vpop.f32.mrb[0].mxu0
      %v9137 = vpop.f32.mrb[0].mxu0
      %v9138 = vadd.f32 0.0, %v9137
      %v9139 = vpop.f32.mrb[0].mxu0
      %9140 = vmatprep.mubr.bf16.mxu0 0
      %9141 = vmatmul.mubr.bf16.gmra.mrb[0].mxu0 %v8952
      %v9142 = vpop.f32.mrb[0].mxu0
      %v9143 = vadd.f32 0.0, %v9142
      %v9144 = vpop.f32.mrb[0].mxu0
      %v9145 = vpop.f32.mrb[0].mxu0
      %v9146 = vadd.f32 0.0, %v9145
      %v9147 = vpop.f32.mrb[0].mxu0
      %9148 = vmatprep.mubr.bf16.mxu0 0
      %9149 = vmatmul.mubr.bf16.gmra.mrb[0].mxu0 %v8953
      %v9150 = vpop.f32.mrb[0].mxu0
      %v9151 = vadd.f32 0.0, %v9150
      %v9152 = vpop.f32.mrb[0].mxu0
      %v9153 = vpop.f32.mrb[0].mxu0
      %v9154 = vadd.f32 0.0, %v9153
      %v9155 = vpop.f32.mrb[0].mxu0
      %9156 = vmatprep.mubr.bf16.mxu0 0
      %9157 = vmatmul.mubr.bf16.gmra.mrb[0].mxu0 %v8954
      %v9158 = vpop.f32.mrb[0].mxu0
      %v9159 = vadd.f32 0.0, %v9158
      %v9160 = vpop.f32.mrb[0].mxu0
      %v9161 = vpop.f32.mrb[0].mxu0
      %v9162 = vadd.f32 0.0, %v9161
      %v9163 = vpop.f32.mrb[0].mxu0
      %9164 = vdwg.mxu0
      %9165 = vmatprep.subr.bf16.mxu0 0
      %9166 = vmatpush1.bf16.msra.mxu0 %v7533
      %9167 = vmatprep.subr.bf16.mxu0 0
      %9168 = vmatpush1.bf16.msra.mxu0 %v7549
      %9169 = vmatprep.subr.bf16.mxu0 0
      %9170 = vmatpush1.bf16.msra.mxu0 %v7565
      %9171 = vmatprep.subr.bf16.mxu0 0
      %9172 = vmatpush1.bf16.msra.mxu0 %v7581
      %9173 = vmatprep.subr.bf16.mxu0 0
      %9174 = vmatpush1.bf16.msra.mxu0 %v7597
      %9175 = vmatprep.subr.bf16.mxu0 0
      %9176 = vmatpush1.bf16.msra.mxu0 %v7613
      %9177 = vmatprep.subr.bf16.mxu0 0
      %9178 = vmatpush1.bf16.msra.mxu0 %v7629
      %9179 = vmatprep.subr.bf16.mxu0 0
      %9180 = vmatpush1.bf16.msra.mxu0 %v7645
      %9181 = vmatprep.subr.bf16.mxu0 0
      %9182 = vmatpush1.bf16.msra.mxu0 0
      %9183 = vmatprep.subr.bf16.mxu0 0
      %9184 = vmatpush1.bf16.msra.mxu0 0
      %9185 = vmatprep.subr.bf16.mxu0 0
      %9186 = vmatpush1.bf16.msra.mxu0 0
      %9187 = vmatprep.subr.bf16.mxu0 0
      %9188 = vmatpush1.bf16.msra.mxu0 0
      %9189 = vmatprep.subr.bf16.mxu0 0
      %9190 = vmatpush1.bf16.msra.mxu0 0
      %9191 = vmatprep.subr.bf16.mxu0 0
      %9192 = vmatpush1.bf16.msra.mxu0 0
      %9193 = vmatprep.subr.bf16.mxu0 0
      %9194 = vmatpush1.bf16.msra.mxu0 0
      %9195 = vmatprep.subr.bf16.mxu0 0
      %9196 = vmatpush1.bf16.msra.mxu0 0
      %9197 = vmatprep.mubr.bf16.mxu0 0
      %9198 = vmatmul.mubr.bf16.gmra.mrb[0].mxu0 %v8955
      %v9199 = vpop.f32.mrb[0].mxu0
      %v9200 = vadd.f32 0.0, %v9199
      %v9201 = vpop.f32.mrb[0].mxu0
      %v9202 = vpop.f32.mrb[0].mxu0
      %v9203 = vadd.f32 0.0, %v9202
      %v9204 = vpop.f32.mrb[0].mxu0
      %9205 = vmatprep.mubr.bf16.mxu0 0
      %9206 = vmatmul.mubr.bf16.gmra.mrb[0].mxu0 %v8956
      %v9207 = vpop.f32.mrb[0].mxu0
      %v9208 = vadd.f32 0.0, %v9207
      %v9209 = vpop.f32.mrb[0].mxu0
      %v9210 = vpop.f32.mrb[0].mxu0
      %v9211 = vadd.f32 0.0, %v9210
      %v9212 = vpop.f32.mrb[0].mxu0
      %9213 = vmatprep.mubr.bf16.mxu0 0
      %9214 = vmatmul.mubr.bf16.gmra.mrb[0].mxu0 %v8957
      %v9215 = vpop.f32.mrb[0].mxu0
      %v9216 = vadd.f32 0.0, %v9215
      %v9217 = vpop.f32.mrb[0].mxu0
      %v9218 = vpop.f32.mrb[0].mxu0
      %v9219 = vadd.f32 0.0, %v9218
      %v9220 = vpop.f32.mrb[0].mxu0
      %9221 = vmatprep.mubr.bf16.mxu0 0
      %9222 = vmatmul.mubr.bf16.gmra.mrb[0].mxu0 %v8958
      %v9223 = vpop.f32.mrb[0].mxu0
      %v9224 = vadd.f32 0.0, %v9223
      %v9225 = vpop.f32.mrb[0].mxu0
      %v9226 = vpop.f32.mrb[0].mxu0
      %v9227 = vadd.f32 0.0, %v9226
      %v9228 = vpop.f32.mrb[0].mxu0
      %9229 = vmatprep.mubr.bf16.mxu0 0
      %9230 = vmatmul.mubr.bf16.gmra.mrb[0].mxu0 %v8959
      %v9231 = vpop.f32.mrb[0].mxu0
      %v9232 = vadd.f32 0.0, %v9231
      %v9233 = vpop.f32.mrb[0].mxu0
      %v9234 = vpop.f32.mrb[0].mxu0
      %v9235 = vadd.f32 0.0, %v9234
      %v9236 = vpop.f32.mrb[0].mxu0
      %9237 = vmatprep.mubr.bf16.mxu0 0
      %9238 = vmatmul.mubr.bf16.gmra.mrb[0].mxu0 %v8960
      %v9239 = vpop.f32.mrb[0].mxu0
      %v9240 = vadd.f32 0.0, %v9239
      %v9241 = vpop.f32.mrb[0].mxu0
      %v9242 = vpop.f32.mrb[0].mxu0
      %v9243 = vadd.f32 0.0, %v9242
      %v9244 = vpop.f32.mrb[0].mxu0
      %9245 = vmatprep.mubr.bf16.mxu0 0
      %9246 = vmatmul.mubr.bf16.gmra.mrb[0].mxu0 %v8961
      %v9247 = vpop.f32.mrb[0].mxu0
      %v9248 = vadd.f32 0.0, %v9247
      %v9249 = vpop.f32.mrb[0].mxu0
      %v9250 = vpop.f32.mrb[0].mxu0
      %v9251 = vadd.f32 0.0, %v9250
      %v9252 = vpop.f32.mrb[0].mxu0
      %9253 = vmatprep.mubr.bf16.mxu0 0
      %9254 = vmatmul.mubr.bf16.gmra.mrb[0].mxu0 %v8962
      %v9255 = vpop.f32.mrb[0].mxu0
      %v9256 = vadd.f32 0.0, %v9255
      %v9257 = vpop.f32.mrb[0].mxu0
      %v9258 = vpop.f32.mrb[0].mxu0
      %v9259 = vadd.f32 0.0, %v9258
      %v9260 = vpop.f32.mrb[0].mxu0
      %9261 = vdwg.mxu0
      %9262 = vmatprep.subr.bf16.mxu0 0
      %9263 = vmatpush1.bf16.msra.mxu0 %v7537
      %9264 = vmatprep.subr.bf16.mxu0 0
      %9265 = vmatpush1.bf16.msra.mxu0 %v7553
      %9266 = vmatprep.subr.bf16.mxu0 0
      %9267 = vmatpush1.bf16.msra.mxu0 %v7569
      %9268 = vmatprep.subr.bf16.mxu0 0
      %9269 = vmatpush1.bf16.msra.mxu0 %v7585
      %9270 = vmatprep.subr.bf16.mxu0 0
      %9271 = vmatpush1.bf16.msra.mxu0 %v7601
      %9272 = vmatprep.subr.bf16.mxu0 0
      %9273 = vmatpush1.bf16.msra.mxu0 %v7617
      %9274 = vmatprep.subr.bf16.mxu0 0
      %9275 = vmatpush1.bf16.msra.mxu0 %v7633
      %9276 = vmatprep.subr.bf16.mxu0 0
      %9277 = vmatpush1.bf16.msra.mxu0 %v7649
      %9278 = vmatprep.subr.bf16.mxu0 0
      %9279 = vmatpush1.bf16.msra.mxu0 0
      %9280 = vmatprep.subr.bf16.mxu0 0
      %9281 = vmatpush1.bf16.msra.mxu0 0
      %9282 = vmatprep.subr.bf16.mxu0 0
      %9283 = vmatpush1.bf16.msra.mxu0 0
      %9284 = vmatprep.subr.bf16.mxu0 0
      %9285 = vmatpush1.bf16.msra.mxu0 0
      %9286 = vmatprep.subr.bf16.mxu0 0
      %9287 = vmatpush1.bf16.msra.mxu0 0
      %9288 = vmatprep.subr.bf16.mxu0 0
      %9289 = vmatpush1.bf16.msra.mxu0 0
      %9290 = vmatprep.subr.bf16.mxu0 0
      %9291 = vmatpush1.bf16.msra.mxu0 0
      %9292 = vmatprep.subr.bf16.mxu0 0
      %9293 = vmatpush1.bf16.msra.mxu0 0
      %9294 = vmatprep.mubr.bf16.mxu0 0
      %9295 = vmatmul.mubr.bf16.gmra.mrb[0].mxu0 %v8963
      %v9296 = vpop.f32.mrb[0].mxu0
      %v9297 = vadd.f32 0.0, %v9296
      %v9298 = vpop.f32.mrb[0].mxu0
      %v9299 = vpop.f32.mrb[0].mxu0
      %v9300 = vadd.f32 0.0, %v9299
      %v9301 = vpop.f32.mrb[0].mxu0
      %9302 = vmatprep.mubr.bf16.mxu0 0
      %9303 = vmatmul.mubr.bf16.gmra.mrb[0].mxu0 %v8964
      %v9304 = vpop.f32.mrb[0].mxu0
      %v9305 = vadd.f32 0.0, %v9304
      %v9306 = vpop.f32.mrb[0].mxu0
      %v9307 = vpop.f32.mrb[0].mxu0
      %v9308 = vadd.f32 0.0, %v9307
      %v9309 = vpop.f32.mrb[0].mxu0
      %9310 = vmatprep.mubr.bf16.mxu0 0
      %9311 = vmatmul.mubr.bf16.gmra.mrb[0].mxu0 %v8965
      %v9312 = vpop.f32.mrb[0].mxu0
      %v9313 = vadd.f32 0.0, %v9312
      %v9314 = vpop.f32.mrb[0].mxu0
      %v9315 = vpop.f32.mrb[0].mxu0
      %v9316 = vadd.f32 0.0, %v9315
      %v9317 = vpop.f32.mrb[0].mxu0
      %9318 = vmatprep.mubr.bf16.mxu0 0
      %9319 = vmatmul.mubr.bf16.gmra.mrb[0].mxu0 %v8966
      %v9320 = vpop.f32.mrb[0].mxu0
      %v9321 = vadd.f32 0.0, %v9320
      %v9322 = vpop.f32.mrb[0].mxu0
      %v9323 = vpop.f32.mrb[0].mxu0
      %v9324 = vadd.f32 0.0, %v9323
      %v9325 = vpop.f32.mrb[0].mxu0
      %9326 = vmatprep.mubr.bf16.mxu0 0
      %9327 = vmatmul.mubr.bf16.gmra.mrb[0].mxu0 %v8967
      %v9328 = vpop.f32.mrb[0].mxu0
      %v9329 = vadd.f32 0.0, %v9328
      %v9330 = vpop.f32.mrb[0].mxu0
      %v9331 = vpop.f32.mrb[0].mxu0
      %v9332 = vadd.f32 0.0, %v9331
      %v9333 = vpop.f32.mrb[0].mxu0
      %9334 = vmatprep.mubr.bf16.mxu0 0
      %9335 = vmatmul.mubr.bf16.gmra.mrb[0].mxu0 %v8968
      %v9336 = vpop.f32.mrb[0].mxu0
      %v9337 = vadd.f32 0.0, %v9336
      %v9338 = vpop.f32.mrb[0].mxu0
      %v9339 = vpop.f32.mrb[0].mxu0
      %v9340 = vadd.f32 0.0, %v9339
      %v9341 = vpop.f32.mrb[0].mxu0
      %9342 = vmatprep.mubr.bf16.mxu0 0
      %9343 = vmatmul.mubr.bf16.gmra.mrb[0].mxu0 %v8969
      %v9344 = vpop.f32.mrb[0].mxu0
      %v9345 = vadd.f32 0.0, %v9344
      %v9346 = vpop.f32.mrb[0].mxu0
      %v9347 = vpop.f32.mrb[0].mxu0
      %v9348 = vadd.f32 0.0, %v9347
      %v9349 = vpop.f32.mrb[0].mxu0
      %9350 = vmatprep.mubr.bf16.mxu0 0
      %9351 = vmatmul.mubr.bf16.gmra.mrb[0].mxu0 %v8970
      %v9352 = vpop.f32.mrb[0].mxu0
      %v9353 = vadd.f32 0.0, %v9352
      %v9354 = vpop.f32.mrb[0].mxu0
      %v9355 = vpop.f32.mrb[0].mxu0
      %v9356 = vadd.f32 0.0, %v9355
      %v9357 = vpop.f32.mrb[0].mxu0
      %9358 = vdwg.mxu0
      %v9359 = vpack.c.bf16 %v9009, %v9006
      %v9360 = vpack.c.bf16 %v9017, %v9014
      %v9361 = vpack.c.bf16 %v9025, %v9022
      %v9362 = vpack.c.bf16 %v9033, %v9030
      %v9363 = vpack.c.bf16 %v9041, %v9038
      %v9364 = vpack.c.bf16 %v9049, %v9046
      %v9365 = vpack.c.bf16 %v9057, %v9054
      %v9366 = vpack.c.bf16 %v9065, %v9062
      %v9367 = vpack.c.bf16 %v9106, %v9103
      %v9368 = vpack.c.bf16 %v9114, %v9111
      %v9369 = vpack.c.bf16 %v9122, %v9119
      %v9370 = vpack.c.bf16 %v9130, %v9127
      %v9371 = vpack.c.bf16 %v9138, %v9135
      %v9372 = vpack.c.bf16 %v9146, %v9143
      %v9373 = vpack.c.bf16 %v9154, %v9151
      %v9374 = vpack.c.bf16 %v9162, %v9159
      %v9375 = vpack.c.bf16 %v9203, %v9200
      %v9376 = vpack.c.bf16 %v9211, %v9208
      %v9377 = vpack.c.bf16 %v9219, %v9216
      %v9378 = vpack.c.bf16 %v9227, %v9224
      %v9379 = vpack.c.bf16 %v9235, %v9232
      %v9380 = vpack.c.bf16 %v9243, %v9240
      %v9381 = vpack.c.bf16 %v9251, %v9248
      %v9382 = vpack.c.bf16 %v9259, %v9256
      %v9383 = vpack.c.bf16 %v9300, %v9297
      %v9384 = vpack.c.bf16 %v9308, %v9305
      %v9385 = vpack.c.bf16 %v9316, %v9313
      %v9386 = vpack.c.bf16 %v9324, %v9321
      %v9387 = vpack.c.bf16 %v9332, %v9329
      %v9388 = vpack.c.bf16 %v9340, %v9337
      %v9389 = vpack.c.bf16 %v9348, %v9345
      %v9390 = vpack.c.bf16 %v9356, %v9353
      %v9393 = vpack.i.b16 %v9367, %v9359
      %v9395 = vshrl.u32 %v9359, 16
      %v9396 = vshrl.u32 %v9367, 16
      %v9397 = vpack.i.b16 %v9396, %v9395
      %v9401 = vpack.i.b16 %v9383, %v9375
      %v9403 = vshrl.u32 %v9375, 16
      %v9404 = vshrl.u32 %v9383, 16
      %v9405 = vpack.i.b16 %v9404, %v9403
      %v9409 = vpack.i.b16 %v9368, %v9360
      %v9411 = vshrl.u32 %v9360, 16
      %v9412 = vshrl.u32 %v9368, 16
      %v9413 = vpack.i.b16 %v9412, %v9411
      %v9417 = vpack.i.b16 %v9384, %v9376
      %v9419 = vshrl.u32 %v9376, 16
      %v9420 = vshrl.u32 %v9384, 16
      %v9421 = vpack.i.b16 %v9420, %v9419
      %v9425 = vpack.i.b16 %v9369, %v9361
      %v9427 = vshrl.u32 %v9361, 16
      %v9428 = vshrl.u32 %v9369, 16
      %v9429 = vpack.i.b16 %v9428, %v9427
      %v9433 = vpack.i.b16 %v9385, %v9377
      %v9435 = vshrl.u32 %v9377, 16
      %v9436 = vshrl.u32 %v9385, 16
      %v9437 = vpack.i.b16 %v9436, %v9435
      %v9441 = vpack.i.b16 %v9370, %v9362
      %v9443 = vshrl.u32 %v9362, 16
      %v9444 = vshrl.u32 %v9370, 16
      %v9445 = vpack.i.b16 %v9444, %v9443
      %v9449 = vpack.i.b16 %v9386, %v9378
      %v9451 = vshrl.u32 %v9378, 16
      %v9452 = vshrl.u32 %v9386, 16
      %v9453 = vpack.i.b16 %v9452, %v9451
      %v9457 = vpack.i.b16 %v9371, %v9363
      %v9459 = vshrl.u32 %v9363, 16
      %v9460 = vshrl.u32 %v9371, 16
      %v9461 = vpack.i.b16 %v9460, %v9459
      %v9465 = vpack.i.b16 %v9387, %v9379
      %v9467 = vshrl.u32 %v9379, 16
      %v9468 = vshrl.u32 %v9387, 16
      %v9469 = vpack.i.b16 %v9468, %v9467
      %v9473 = vpack.i.b16 %v9372, %v9364
      %v9475 = vshrl.u32 %v9364, 16
      %v9476 = vshrl.u32 %v9372, 16
      %v9477 = vpack.i.b16 %v9476, %v9475
      %v9481 = vpack.i.b16 %v9388, %v9380
      %v9483 = vshrl.u32 %v9380, 16
      %v9484 = vshrl.u32 %v9388, 16
      %v9485 = vpack.i.b16 %v9484, %v9483
      %v9489 = vpack.i.b16 %v9373, %v9365
      %v9491 = vshrl.u32 %v9365, 16
      %v9492 = vshrl.u32 %v9373, 16
      %v9493 = vpack.i.b16 %v9492, %v9491
      %v9497 = vpack.i.b16 %v9389, %v9381
      %v9499 = vshrl.u32 %v9381, 16
      %v9500 = vshrl.u32 %v9389, 16
      %v9501 = vpack.i.b16 %v9500, %v9499
      %v9505 = vpack.i.b16 %v9374, %v9366
      %v9507 = vshrl.u32 %v9366, 16
      %v9508 = vshrl.u32 %v9374, 16
      %v9509 = vpack.i.b16 %v9508, %v9507
      %v9513 = vpack.i.b16 %v9390, %v9382
      %v9515 = vshrl.u32 %v9382, 16
      %v9516 = vshrl.u32 %v9390, 16
      %v9517 = vpack.i.b16 %v9516, %v9515
      %v9519 = vcombine.high %v9393, %v1262
      %v9521 = vunpack.c.l.s4 1983009808
      %v9522 = vunpack.c.0.s8 %v9521
      %v9523 = vlaneseq
      %v9524 = vshrl.u32 %v9523, 7
      %v9525 = vsub.s32 %v9522, %v9524
      %v9526 = vrot.slane %v9393, %v9525
      %v9528 = vunpack.c.l.s4 1983009808
      %v9529 = vunpack.c.0.s8 %v9528
      %v9530 = vlaneseq
      %v9531 = vshrl.u32 %v9530, 7
      %v9532 = vsub.s32 %v9529, %v9531
      %v9533 = vrot.slane %v9519, %v9532
      %v9534 = vcombine.high %v9401, %v1262
      %v9536 = vunpack.c.l.s4 1983009808
      %v9537 = vunpack.c.0.s8 %v9536
      %v9538 = vlaneseq
      %v9539 = vshrl.u32 %v9538, 7
      %v9540 = vsub.s32 %v9537, %v9539
      %v9541 = vrot.slane %v9401, %v9540
      %v9543 = vunpack.c.l.s4 1983009808
      %v9544 = vunpack.c.0.s8 %v9543
      %v9545 = vlaneseq
      %v9546 = vshrl.u32 %v9545, 7
      %v9547 = vsub.s32 %v9544, %v9546
      %v9548 = vrot.slane %v9534, %v9547
      %v9549 = vcombine.low %v9526, %v9541
      %v9550 = vcombine.high %v9526, %v9541
      %v9552 = vunpack.c.l.s4 1934713408
      %v9553 = vunpack.c.0.s8 %v9552
      %v9554 = vlaneseq
      %v9555 = vshrl.u32 %v9554, 7
      %v9556 = vsub.s32 %v9553, %v9555
      %v9557 = vrot.slane %v9549, %v9556
      %v9559 = vunpack.c.l.s4 1934713408
      %v9560 = vunpack.c.0.s8 %v9559
      %v9561 = vlaneseq
      %v9562 = vshrl.u32 %v9561, 7
      %v9563 = vsub.s32 %v9560, %v9562
      %v9564 = vrot.slane %v9550, %v9563
      %v9565 = vcombine.low %v9533, %v9548
      %v9566 = vcombine.high %v9533, %v9548
      %v9568 = vunpack.c.l.s4 1934713408
      %v9569 = vunpack.c.0.s8 %v9568
      %v9570 = vlaneseq
      %v9571 = vshrl.u32 %v9570, 7
      %v9572 = vsub.s32 %v9569, %v9571
      %v9573 = vrot.slane %v9565, %v9572
      %v9575 = vunpack.c.l.s4 1934713408
      %v9576 = vunpack.c.0.s8 %v9575
      %v9577 = vlaneseq
      %v9578 = vshrl.u32 %v9577, 7
      %v9579 = vsub.s32 %v9576, %v9578
      %v9580 = vrot.slane %v9566, %v9579
      %v9581 = vcombine.high %v9557, 0
      %v9582 = vcombine.high %v9564, 0
      %v9583 = vcombine.high %v9573, 0
      %v9584 = vcombine.high %v9580, 0
      %v9585 = vcombine.high %v9397, %v1265
      %v9587 = vunpack.c.l.s4 1983009808
      %v9588 = vunpack.c.0.s8 %v9587
      %v9589 = vlaneseq
      %v9590 = vshrl.u32 %v9589, 7
      %v9591 = vsub.s32 %v9588, %v9590
      %v9592 = vrot.slane %v9397, %v9591
      %v9594 = vunpack.c.l.s4 1983009808
      %v9595 = vunpack.c.0.s8 %v9594
      %v9596 = vlaneseq
      %v9597 = vshrl.u32 %v9596, 7
      %v9598 = vsub.s32 %v9595, %v9597
      %v9599 = vrot.slane %v9585, %v9598
      %v9600 = vcombine.high %v9405, %v1265
      %v9602 = vunpack.c.l.s4 1983009808
      %v9603 = vunpack.c.0.s8 %v9602
      %v9604 = vlaneseq
      %v9605 = vshrl.u32 %v9604, 7
      %v9606 = vsub.s32 %v9603, %v9605
      %v9607 = vrot.slane %v9405, %v9606
      %v9609 = vunpack.c.l.s4 1983009808
      %v9610 = vunpack.c.0.s8 %v9609
      %v9611 = vlaneseq
      %v9612 = vshrl.u32 %v9611, 7
      %v9613 = vsub.s32 %v9610, %v9612
      %v9614 = vrot.slane %v9600, %v9613
      %v9615 = vcombine.low %v9592, %v9607
      %v9616 = vcombine.high %v9592, %v9607
      %v9618 = vunpack.c.l.s4 1934713408
      %v9619 = vunpack.c.0.s8 %v9618
      %v9620 = vlaneseq
      %v9621 = vshrl.u32 %v9620, 7
      %v9622 = vsub.s32 %v9619, %v9621
      %v9623 = vrot.slane %v9615, %v9622
      %v9625 = vunpack.c.l.s4 1934713408
      %v9626 = vunpack.c.0.s8 %v9625
      %v9627 = vlaneseq
      %v9628 = vshrl.u32 %v9627, 7
      %v9629 = vsub.s32 %v9626, %v9628
      %v9630 = vrot.slane %v9616, %v9629
      %v9631 = vcombine.low %v9599, %v9614
      %v9632 = vcombine.high %v9599, %v9614
      %v9634 = vunpack.c.l.s4 1934713408
      %v9635 = vunpack.c.0.s8 %v9634
      %v9636 = vlaneseq
      %v9637 = vshrl.u32 %v9636, 7
      %v9638 = vsub.s32 %v9635, %v9637
      %v9639 = vrot.slane %v9631, %v9638
      %v9641 = vunpack.c.l.s4 1934713408
      %v9642 = vunpack.c.0.s8 %v9641
      %v9643 = vlaneseq
      %v9644 = vshrl.u32 %v9643, 7
      %v9645 = vsub.s32 %v9642, %v9644
      %v9646 = vrot.slane %v9632, %v9645
      %v9647 = vcombine.high %v9623, 0
      %v9648 = vcombine.high %v9630, 0
      %v9649 = vcombine.high %v9639, 0
      %v9650 = vcombine.high %v9646, 0
      %v9651 = vcombine.high %v9409, %v1262
      %v9653 = vunpack.c.l.s4 1983009808
      %v9654 = vunpack.c.0.s8 %v9653
      %v9655 = vlaneseq
      %v9656 = vshrl.u32 %v9655, 7
      %v9657 = vsub.s32 %v9654, %v9656
      %v9658 = vrot.slane %v9409, %v9657
      %v9660 = vunpack.c.l.s4 1983009808
      %v9661 = vunpack.c.0.s8 %v9660
      %v9662 = vlaneseq
      %v9663 = vshrl.u32 %v9662, 7
      %v9664 = vsub.s32 %v9661, %v9663
      %v9665 = vrot.slane %v9651, %v9664
      %v9666 = vcombine.high %v9417, %v1262
      %v9668 = vunpack.c.l.s4 1983009808
      %v9669 = vunpack.c.0.s8 %v9668
      %v9670 = vlaneseq
      %v9671 = vshrl.u32 %v9670, 7
      %v9672 = vsub.s32 %v9669, %v9671
      %v9673 = vrot.slane %v9417, %v9672
      %v9675 = vunpack.c.l.s4 1983009808
      %v9676 = vunpack.c.0.s8 %v9675
      %v9677 = vlaneseq
      %v9678 = vshrl.u32 %v9677, 7
      %v9679 = vsub.s32 %v9676, %v9678
      %v9680 = vrot.slane %v9666, %v9679
      %v9681 = vcombine.low %v9658, %v9673
      %v9682 = vcombine.high %v9658, %v9673
      %v9684 = vunpack.c.l.s4 1934713408
      %v9685 = vunpack.c.0.s8 %v9684
      %v9686 = vlaneseq
      %v9687 = vshrl.u32 %v9686, 7
      %v9688 = vsub.s32 %v9685, %v9687
      %v9689 = vrot.slane %v9681, %v9688
      %v9691 = vunpack.c.l.s4 1934713408
      %v9692 = vunpack.c.0.s8 %v9691
      %v9693 = vlaneseq
      %v9694 = vshrl.u32 %v9693, 7
      %v9695 = vsub.s32 %v9692, %v9694
      %v9696 = vrot.slane %v9682, %v9695
      %v9697 = vcombine.low %v9665, %v9680
      %v9698 = vcombine.high %v9665, %v9680
      %v9700 = vunpack.c.l.s4 1934713408
      %v9701 = vunpack.c.0.s8 %v9700
      %v9702 = vlaneseq
      %v9703 = vshrl.u32 %v9702, 7
      %v9704 = vsub.s32 %v9701, %v9703
      %v9705 = vrot.slane %v9697, %v9704
      %v9707 = vunpack.c.l.s4 1934713408
      %v9708 = vunpack.c.0.s8 %v9707
      %v9709 = vlaneseq
      %v9710 = vshrl.u32 %v9709, 7
      %v9711 = vsub.s32 %v9708, %v9710
      %v9712 = vrot.slane %v9698, %v9711
      %v9713 = vcombine.high %v9689, 0
      %v9714 = vcombine.high %v9696, 0
      %v9715 = vcombine.high %v9705, 0
      %v9716 = vcombine.high %v9712, 0
      %v9717 = vcombine.high %v9413, %v1265
      %v9719 = vunpack.c.l.s4 1983009808
      %v9720 = vunpack.c.0.s8 %v9719
      %v9721 = vlaneseq
      %v9722 = vshrl.u32 %v9721, 7
      %v9723 = vsub.s32 %v9720, %v9722
      %v9724 = vrot.slane %v9413, %v9723
      %v9726 = vunpack.c.l.s4 1983009808
      %v9727 = vunpack.c.0.s8 %v9726
      %v9728 = vlaneseq
      %v9729 = vshrl.u32 %v9728, 7
      %v9730 = vsub.s32 %v9727, %v9729
      %v9731 = vrot.slane %v9717, %v9730
      %v9732 = vcombine.high %v9421, %v1265
      %v9734 = vunpack.c.l.s4 1983009808
      %v9735 = vunpack.c.0.s8 %v9734
      %v9736 = vlaneseq
      %v9737 = vshrl.u32 %v9736, 7
      %v9738 = vsub.s32 %v9735, %v9737
      %v9739 = vrot.slane %v9421, %v9738
      %v9741 = vunpack.c.l.s4 1983009808
      %v9742 = vunpack.c.0.s8 %v9741
      %v9743 = vlaneseq
      %v9744 = vshrl.u32 %v9743, 7
      %v9745 = vsub.s32 %v9742, %v9744
      %v9746 = vrot.slane %v9732, %v9745
      %v9747 = vcombine.low %v9724, %v9739
      %v9748 = vcombine.high %v9724, %v9739
      %v9750 = vunpack.c.l.s4 1934713408
      %v9751 = vunpack.c.0.s8 %v9750
      %v9752 = vlaneseq
      %v9753 = vshrl.u32 %v9752, 7
      %v9754 = vsub.s32 %v9751, %v9753
      %v9755 = vrot.slane %v9747, %v9754
      %v9757 = vunpack.c.l.s4 1934713408
      %v9758 = vunpack.c.0.s8 %v9757
      %v9759 = vlaneseq
      %v9760 = vshrl.u32 %v9759, 7
      %v9761 = vsub.s32 %v9758, %v9760
      %v9762 = vrot.slane %v9748, %v9761
      %v9763 = vcombine.low %v9731, %v9746
      %v9764 = vcombine.high %v9731, %v9746
      %v9766 = vunpack.c.l.s4 1934713408
      %v9767 = vunpack.c.0.s8 %v9766
      %v9768 = vlaneseq
      %v9769 = vshrl.u32 %v9768, 7
      %v9770 = vsub.s32 %v9767, %v9769
      %v9771 = vrot.slane %v9763, %v9770
      %v9773 = vunpack.c.l.s4 1934713408
      %v9774 = vunpack.c.0.s8 %v9773
      %v9775 = vlaneseq
      %v9776 = vshrl.u32 %v9775, 7
      %v9777 = vsub.s32 %v9774, %v9776
      %v9778 = vrot.slane %v9764, %v9777
      %v9779 = vcombine.high %v9755, 0
      %v9780 = vcombine.high %v9762, 0
      %v9781 = vcombine.high %v9771, 0
      %v9782 = vcombine.high %v9778, 0
      %v9783 = vcombine.high %v9425, %v1262
      %v9785 = vunpack.c.l.s4 1983009808
      %v9786 = vunpack.c.0.s8 %v9785
      %v9787 = vlaneseq
      %v9788 = vshrl.u32 %v9787, 7
      %v9789 = vsub.s32 %v9786, %v9788
      %v9790 = vrot.slane %v9425, %v9789
      %v9792 = vunpack.c.l.s4 1983009808
      %v9793 = vunpack.c.0.s8 %v9792
      %v9794 = vlaneseq
      %v9795 = vshrl.u32 %v9794, 7
      %v9796 = vsub.s32 %v9793, %v9795
      %v9797 = vrot.slane %v9783, %v9796
      %v9798 = vcombine.high %v9433, %v1262
      %v9800 = vunpack.c.l.s4 1983009808
      %v9801 = vunpack.c.0.s8 %v9800
      %v9802 = vlaneseq
      %v9803 = vshrl.u32 %v9802, 7
      %v9804 = vsub.s32 %v9801, %v9803
      %v9805 = vrot.slane %v9433, %v9804
      %v9807 = vunpack.c.l.s4 1983009808
      %v9808 = vunpack.c.0.s8 %v9807
      %v9809 = vlaneseq
      %v9810 = vshrl.u32 %v9809, 7
      %v9811 = vsub.s32 %v9808, %v9810
      %v9812 = vrot.slane %v9798, %v9811
      %v9813 = vcombine.low %v9790, %v9805
      %v9814 = vcombine.high %v9790, %v9805
      %v9816 = vunpack.c.l.s4 1934713408
      %v9817 = vunpack.c.0.s8 %v9816
      %v9818 = vlaneseq
      %v9819 = vshrl.u32 %v9818, 7
      %v9820 = vsub.s32 %v9817, %v9819
      %v9821 = vrot.slane %v9813, %v9820
      %v9823 = vunpack.c.l.s4 1934713408
      %v9824 = vunpack.c.0.s8 %v9823
      %v9825 = vlaneseq
      %v9826 = vshrl.u32 %v9825, 7
      %v9827 = vsub.s32 %v9824, %v9826
      %v9828 = vrot.slane %v9814, %v9827
      %v9829 = vcombine.low %v9797, %v9812
      %v9830 = vcombine.high %v9797, %v9812
      %v9832 = vunpack.c.l.s4 1934713408
      %v9833 = vunpack.c.0.s8 %v9832
      %v9834 = vlaneseq
      %v9835 = vshrl.u32 %v9834, 7
      %v9836 = vsub.s32 %v9833, %v9835
      %v9837 = vrot.slane %v9829, %v9836
      %v9839 = vunpack.c.l.s4 1934713408
      %v9840 = vunpack.c.0.s8 %v9839
      %v9841 = vlaneseq
      %v9842 = vshrl.u32 %v9841, 7
      %v9843 = vsub.s32 %v9840, %v9842
      %v9844 = vrot.slane %v9830, %v9843
      %v9845 = vcombine.high %v9821, 0
      %v9846 = vcombine.high %v9828, 0
      %v9847 = vcombine.high %v9837, 0
      %v9848 = vcombine.high %v9844, 0
      %v9849 = vcombine.high %v9429, %v1265
      %v9851 = vunpack.c.l.s4 1983009808
      %v9852 = vunpack.c.0.s8 %v9851
      %v9853 = vlaneseq
      %v9854 = vshrl.u32 %v9853, 7
      %v9855 = vsub.s32 %v9852, %v9854
      %v9856 = vrot.slane %v9429, %v9855
      %v9858 = vunpack.c.l.s4 1983009808
      %v9859 = vunpack.c.0.s8 %v9858
      %v9860 = vlaneseq
      %v9861 = vshrl.u32 %v9860, 7
      %v9862 = vsub.s32 %v9859, %v9861
      %v9863 = vrot.slane %v9849, %v9862
      %v9864 = vcombine.high %v9437, %v1265
      %v9866 = vunpack.c.l.s4 1983009808
      %v9867 = vunpack.c.0.s8 %v9866
      %v9868 = vlaneseq
      %v9869 = vshrl.u32 %v9868, 7
      %v9870 = vsub.s32 %v9867, %v9869
      %v9871 = vrot.slane %v9437, %v9870
      %v9873 = vunpack.c.l.s4 1983009808
      %v9874 = vunpack.c.0.s8 %v9873
      %v9875 = vlaneseq
      %v9876 = vshrl.u32 %v9875, 7
      %v9877 = vsub.s32 %v9874, %v9876
      %v9878 = vrot.slane %v9864, %v9877
      %v9879 = vcombine.low %v9856, %v9871
      %v9880 = vcombine.high %v9856, %v9871
      %v9882 = vunpack.c.l.s4 1934713408
      %v9883 = vunpack.c.0.s8 %v9882
      %v9884 = vlaneseq
      %v9885 = vshrl.u32 %v9884, 7
      %v9886 = vsub.s32 %v9883, %v9885
      %v9887 = vrot.slane %v9879, %v9886
      %v9889 = vunpack.c.l.s4 1934713408
      %v9890 = vunpack.c.0.s8 %v9889
      %v9891 = vlaneseq
      %v9892 = vshrl.u32 %v9891, 7
      %v9893 = vsub.s32 %v9890, %v9892
      %v9894 = vrot.slane %v9880, %v9893
      %v9895 = vcombine.low %v9863, %v9878
      %v9896 = vcombine.high %v9863, %v9878
      %v9898 = vunpack.c.l.s4 1934713408
      %v9899 = vunpack.c.0.s8 %v9898
      %v9900 = vlaneseq
      %v9901 = vshrl.u32 %v9900, 7
      %v9902 = vsub.s32 %v9899, %v9901
      %v9903 = vrot.slane %v9895, %v9902
      %v9905 = vunpack.c.l.s4 1934713408
      %v9906 = vunpack.c.0.s8 %v9905
      %v9907 = vlaneseq
      %v9908 = vshrl.u32 %v9907, 7
      %v9909 = vsub.s32 %v9906, %v9908
      %v9910 = vrot.slane %v9896, %v9909
      %v9911 = vcombine.high %v9887, 0
      %v9912 = vcombine.high %v9894, 0
      %v9913 = vcombine.high %v9903, 0
      %v9914 = vcombine.high %v9910, 0
      %v9915 = vcombine.high %v9441, %v1262
      %v9917 = vunpack.c.l.s4 1983009808
      %v9918 = vunpack.c.0.s8 %v9917
      %v9919 = vlaneseq
      %v9920 = vshrl.u32 %v9919, 7
      %v9921 = vsub.s32 %v9918, %v9920
      %v9922 = vrot.slane %v9441, %v9921
      %v9924 = vunpack.c.l.s4 1983009808
      %v9925 = vunpack.c.0.s8 %v9924
      %v9926 = vlaneseq
      %v9927 = vshrl.u32 %v9926, 7
      %v9928 = vsub.s32 %v9925, %v9927
      %v9929 = vrot.slane %v9915, %v9928
      %v9930 = vcombine.high %v9449, %v1262
      %v9932 = vunpack.c.l.s4 1983009808
      %v9933 = vunpack.c.0.s8 %v9932
      %v9934 = vlaneseq
      %v9935 = vshrl.u32 %v9934, 7
      %v9936 = vsub.s32 %v9933, %v9935
      %v9937 = vrot.slane %v9449, %v9936
      %v9939 = vunpack.c.l.s4 1983009808
      %v9940 = vunpack.c.0.s8 %v9939
      %v9941 = vlaneseq
      %v9942 = vshrl.u32 %v9941, 7
      %v9943 = vsub.s32 %v9940, %v9942
      %v9944 = vrot.slane %v9930, %v9943
      %v9945 = vcombine.low %v9922, %v9937
      %v9946 = vcombine.high %v9922, %v9937
      %v9948 = vunpack.c.l.s4 1934713408
      %v9949 = vunpack.c.0.s8 %v9948
      %v9950 = vlaneseq
      %v9951 = vshrl.u32 %v9950, 7
      %v9952 = vsub.s32 %v9949, %v9951
      %v9953 = vrot.slane %v9945, %v9952
      %v9955 = vunpack.c.l.s4 1934713408
      %v9956 = vunpack.c.0.s8 %v9955
      %v9957 = vlaneseq
      %v9958 = vshrl.u32 %v9957, 7
      %v9959 = vsub.s32 %v9956, %v9958
      %v9960 = vrot.slane %v9946, %v9959
      %v9961 = vcombine.low %v9929, %v9944
      %v9962 = vcombine.high %v9929, %v9944
      %v9964 = vunpack.c.l.s4 1934713408
      %v9965 = vunpack.c.0.s8 %v9964
      %v9966 = vlaneseq
      %v9967 = vshrl.u32 %v9966, 7
      %v9968 = vsub.s32 %v9965, %v9967
      %v9969 = vrot.slane %v9961, %v9968
      %v9971 = vunpack.c.l.s4 1934713408
      %v9972 = vunpack.c.0.s8 %v9971
      %v9973 = vlaneseq
      %v9974 = vshrl.u32 %v9973, 7
      %v9975 = vsub.s32 %v9972, %v9974
      %v9976 = vrot.slane %v9962, %v9975
      %v9977 = vcombine.high %v9953, 0
      %v9978 = vcombine.high %v9960, 0
      %v9979 = vcombine.high %v9969, 0
      %v9980 = vcombine.high %v9976, 0
      %v9981 = vcombine.high %v9445, %v1265
      %v9983 = vunpack.c.l.s4 1983009808
      %v9984 = vunpack.c.0.s8 %v9983
      %v9985 = vlaneseq
      %v9986 = vshrl.u32 %v9985, 7
      %v9987 = vsub.s32 %v9984, %v9986
      %v9988 = vrot.slane %v9445, %v9987
      %v9990 = vunpack.c.l.s4 1983009808
      %v9991 = vunpack.c.0.s8 %v9990
      %v9992 = vlaneseq
      %v9993 = vshrl.u32 %v9992, 7
      %v9994 = vsub.s32 %v9991, %v9993
      %v9995 = vrot.slane %v9981, %v9994
      %v9996 = vcombine.high %v9453, %v1265
      %v9998 = vunpack.c.l.s4 1983009808
      %v9999 = vunpack.c.0.s8 %v9998
      %v10000 = vlaneseq
      %v10001 = vshrl.u32 %v10000, 7
      %v10002 = vsub.s32 %v9999, %v10001
      %v10003 = vrot.slane %v9453, %v10002
      %v10005 = vunpack.c.l.s4 1983009808
      %v10006 = vunpack.c.0.s8 %v10005
      %v10007 = vlaneseq
      %v10008 = vshrl.u32 %v10007, 7
      %v10009 = vsub.s32 %v10006, %v10008
      %v10010 = vrot.slane %v9996, %v10009
      %v10011 = vcombine.low %v9988, %v10003
      %v10012 = vcombine.high %v9988, %v10003
      %v10014 = vunpack.c.l.s4 1934713408
      %v10015 = vunpack.c.0.s8 %v10014
      %v10016 = vlaneseq
      %v10017 = vshrl.u32 %v10016, 7
      %v10018 = vsub.s32 %v10015, %v10017
      %v10019 = vrot.slane %v10011, %v10018
      %v10021 = vunpack.c.l.s4 1934713408
      %v10022 = vunpack.c.0.s8 %v10021
      %v10023 = vlaneseq
      %v10024 = vshrl.u32 %v10023, 7
      %v10025 = vsub.s32 %v10022, %v10024
      %v10026 = vrot.slane %v10012, %v10025
      %v10027 = vcombine.low %v9995, %v10010
      %v10028 = vcombine.high %v9995, %v10010
      %v10030 = vunpack.c.l.s4 1934713408
      %v10031 = vunpack.c.0.s8 %v10030
      %v10032 = vlaneseq
      %v10033 = vshrl.u32 %v10032, 7
      %v10034 = vsub.s32 %v10031, %v10033
      %v10035 = vrot.slane %v10027, %v10034
      %v10037 = vunpack.c.l.s4 1934713408
      %v10038 = vunpack.c.0.s8 %v10037
      %v10039 = vlaneseq
      %v10040 = vshrl.u32 %v10039, 7
      %v10041 = vsub.s32 %v10038, %v10040
      %v10042 = vrot.slane %v10028, %v10041
      %v10043 = vcombine.high %v10019, 0
      %v10044 = vcombine.high %v10026, 0
      %v10045 = vcombine.high %v10035, 0
      %v10046 = vcombine.high %v10042, 0
      %v10047 = vcombine.high %v9457, %v1262
      %v10049 = vunpack.c.l.s4 1983009808
      %v10050 = vunpack.c.0.s8 %v10049
      %v10051 = vlaneseq
      %v10052 = vshrl.u32 %v10051, 7
      %v10053 = vsub.s32 %v10050, %v10052
      %v10054 = vrot.slane %v9457, %v10053
      %v10056 = vunpack.c.l.s4 1983009808
      %v10057 = vunpack.c.0.s8 %v10056
      %v10058 = vlaneseq
      %v10059 = vshrl.u32 %v10058, 7
      %v10060 = vsub.s32 %v10057, %v10059
      %v10061 = vrot.slane %v10047, %v10060
      %v10062 = vcombine.high %v9465, %v1262
      %v10064 = vunpack.c.l.s4 1983009808
      %v10065 = vunpack.c.0.s8 %v10064
      %v10066 = vlaneseq
      %v10067 = vshrl.u32 %v10066, 7
      %v10068 = vsub.s32 %v10065, %v10067
      %v10069 = vrot.slane %v9465, %v10068
      %v10071 = vunpack.c.l.s4 1983009808
      %v10072 = vunpack.c.0.s8 %v10071
      %v10073 = vlaneseq
      %v10074 = vshrl.u32 %v10073, 7
      %v10075 = vsub.s32 %v10072, %v10074
      %v10076 = vrot.slane %v10062, %v10075
      %v10077 = vcombine.low %v10054, %v10069
      %v10078 = vcombine.high %v10054, %v10069
      %v10080 = vunpack.c.l.s4 1934713408
      %v10081 = vunpack.c.0.s8 %v10080
      %v10082 = vlaneseq
      %v10083 = vshrl.u32 %v10082, 7
      %v10084 = vsub.s32 %v10081, %v10083
      %v10085 = vrot.slane %v10077, %v10084
      %v10087 = vunpack.c.l.s4 1934713408
      %v10088 = vunpack.c.0.s8 %v10087
      %v10089 = vlaneseq
      %v10090 = vshrl.u32 %v10089, 7
      %v10091 = vsub.s32 %v10088, %v10090
      %v10092 = vrot.slane %v10078, %v10091
      %v10093 = vcombine.low %v10061, %v10076
      %v10094 = vcombine.high %v10061, %v10076
      %v10096 = vunpack.c.l.s4 1934713408
      %v10097 = vunpack.c.0.s8 %v10096
      %v10098 = vlaneseq
      %v10099 = vshrl.u32 %v10098, 7
      %v10100 = vsub.s32 %v10097, %v10099
      %v10101 = vrot.slane %v10093, %v10100
      %v10103 = vunpack.c.l.s4 1934713408
      %v10104 = vunpack.c.0.s8 %v10103
      %v10105 = vlaneseq
      %v10106 = vshrl.u32 %v10105, 7
      %v10107 = vsub.s32 %v10104, %v10106
      %v10108 = vrot.slane %v10094, %v10107
      %v10109 = vcombine.high %v10085, 0
      %v10110 = vcombine.high %v10092, 0
      %v10111 = vcombine.high %v10101, 0
      %v10112 = vcombine.high %v10108, 0
      %v10113 = vcombine.high %v9461, %v1265
      %v10115 = vunpack.c.l.s4 1983009808
      %v10116 = vunpack.c.0.s8 %v10115
      %v10117 = vlaneseq
      %v10118 = vshrl.u32 %v10117, 7
      %v10119 = vsub.s32 %v10116, %v10118
      %v10120 = vrot.slane %v9461, %v10119
      %v10122 = vunpack.c.l.s4 1983009808
      %v10123 = vunpack.c.0.s8 %v10122
      %v10124 = vlaneseq
      %v10125 = vshrl.u32 %v10124, 7
      %v10126 = vsub.s32 %v10123, %v10125
      %v10127 = vrot.slane %v10113, %v10126
      %v10128 = vcombine.high %v9469, %v1265
      %v10130 = vunpack.c.l.s4 1983009808
      %v10131 = vunpack.c.0.s8 %v10130
      %v10132 = vlaneseq
      %v10133 = vshrl.u32 %v10132, 7
      %v10134 = vsub.s32 %v10131, %v10133
      %v10135 = vrot.slane %v9469, %v10134
      %v10137 = vunpack.c.l.s4 1983009808
      %v10138 = vunpack.c.0.s8 %v10137
      %v10139 = vlaneseq
      %v10140 = vshrl.u32 %v10139, 7
      %v10141 = vsub.s32 %v10138, %v10140
      %v10142 = vrot.slane %v10128, %v10141
      %v10143 = vcombine.low %v10120, %v10135
      %v10144 = vcombine.high %v10120, %v10135
      %v10146 = vunpack.c.l.s4 1934713408
      %v10147 = vunpack.c.0.s8 %v10146
      %v10148 = vlaneseq
      %v10149 = vshrl.u32 %v10148, 7
      %v10150 = vsub.s32 %v10147, %v10149
      %v10151 = vrot.slane %v10143, %v10150
      %v10153 = vunpack.c.l.s4 1934713408
      %v10154 = vunpack.c.0.s8 %v10153
      %v10155 = vlaneseq
      %v10156 = vshrl.u32 %v10155, 7
      %v10157 = vsub.s32 %v10154, %v10156
      %v10158 = vrot.slane %v10144, %v10157
      %v10159 = vcombine.low %v10127, %v10142
      %v10160 = vcombine.high %v10127, %v10142
      %v10162 = vunpack.c.l.s4 1934713408
      %v10163 = vunpack.c.0.s8 %v10162
      %v10164 = vlaneseq
      %v10165 = vshrl.u32 %v10164, 7
      %v10166 = vsub.s32 %v10163, %v10165
      %v10167 = vrot.slane %v10159, %v10166
      %v10169 = vunpack.c.l.s4 1934713408
      %v10170 = vunpack.c.0.s8 %v10169
      %v10171 = vlaneseq
      %v10172 = vshrl.u32 %v10171, 7
      %v10173 = vsub.s32 %v10170, %v10172
      %v10174 = vrot.slane %v10160, %v10173
      %v10175 = vcombine.high %v10151, 0
      %v10176 = vcombine.high %v10158, 0
      %v10177 = vcombine.high %v10167, 0
      %v10178 = vcombine.high %v10174, 0
      %v10179 = vcombine.high %v9473, %v1262
      %v10181 = vunpack.c.l.s4 1983009808
      %v10182 = vunpack.c.0.s8 %v10181
      %v10183 = vlaneseq
      %v10184 = vshrl.u32 %v10183, 7
      %v10185 = vsub.s32 %v10182, %v10184
      %v10186 = vrot.slane %v9473, %v10185
      %v10188 = vunpack.c.l.s4 1983009808
      %v10189 = vunpack.c.0.s8 %v10188
      %v10190 = vlaneseq
      %v10191 = vshrl.u32 %v10190, 7
      %v10192 = vsub.s32 %v10189, %v10191
      %v10193 = vrot.slane %v10179, %v10192
      %v10194 = vcombine.high %v9481, %v1262
      %v10196 = vunpack.c.l.s4 1983009808
      %v10197 = vunpack.c.0.s8 %v10196
      %v10198 = vlaneseq
      %v10199 = vshrl.u32 %v10198, 7
      %v10200 = vsub.s32 %v10197, %v10199
      %v10201 = vrot.slane %v9481, %v10200
      %v10203 = vunpack.c.l.s4 1983009808
      %v10204 = vunpack.c.0.s8 %v10203
      %v10205 = vlaneseq
      %v10206 = vshrl.u32 %v10205, 7
      %v10207 = vsub.s32 %v10204, %v10206
      %v10208 = vrot.slane %v10194, %v10207
      %v10209 = vcombine.low %v10186, %v10201
      %v10210 = vcombine.high %v10186, %v10201
      %v10212 = vunpack.c.l.s4 1934713408
      %v10213 = vunpack.c.0.s8 %v10212
      %v10214 = vlaneseq
      %v10215 = vshrl.u32 %v10214, 7
      %v10216 = vsub.s32 %v10213, %v10215
      %v10217 = vrot.slane %v10209, %v10216
      %v10219 = vunpack.c.l.s4 1934713408
      %v10220 = vunpack.c.0.s8 %v10219
      %v10221 = vlaneseq
      %v10222 = vshrl.u32 %v10221, 7
      %v10223 = vsub.s32 %v10220, %v10222
      %v10224 = vrot.slane %v10210, %v10223
      %v10225 = vcombine.low %v10193, %v10208
      %v10226 = vcombine.high %v10193, %v10208
      %v10228 = vunpack.c.l.s4 1934713408
      %v10229 = vunpack.c.0.s8 %v10228
      %v10230 = vlaneseq
      %v10231 = vshrl.u32 %v10230, 7
      %v10232 = vsub.s32 %v10229, %v10231
      %v10233 = vrot.slane %v10225, %v10232
      %v10235 = vunpack.c.l.s4 1934713408
      %v10236 = vunpack.c.0.s8 %v10235
      %v10237 = vlaneseq
      %v10238 = vshrl.u32 %v10237, 7
      %v10239 = vsub.s32 %v10236, %v10238
      %v10240 = vrot.slane %v10226, %v10239
      %v10241 = vcombine.high %v10217, 0
      %v10242 = vcombine.high %v10224, 0
      %v10243 = vcombine.high %v10233, 0
      %v10244 = vcombine.high %v10240, 0
      %v10245 = vcombine.high %v9477, %v1265
      %v10247 = vunpack.c.l.s4 1983009808
      %v10248 = vunpack.c.0.s8 %v10247
      %v10249 = vlaneseq
      %v10250 = vshrl.u32 %v10249, 7
      %v10251 = vsub.s32 %v10248, %v10250
      %v10252 = vrot.slane %v9477, %v10251
      %v10254 = vunpack.c.l.s4 1983009808
      %v10255 = vunpack.c.0.s8 %v10254
      %v10256 = vlaneseq
      %v10257 = vshrl.u32 %v10256, 7
      %v10258 = vsub.s32 %v10255, %v10257
      %v10259 = vrot.slane %v10245, %v10258
      %v10260 = vcombine.high %v9485, %v1265
      %v10262 = vunpack.c.l.s4 1983009808
      %v10263 = vunpack.c.0.s8 %v10262
      %v10264 = vlaneseq
      %v10265 = vshrl.u32 %v10264, 7
      %v10266 = vsub.s32 %v10263, %v10265
      %v10267 = vrot.slane %v9485, %v10266
      %v10269 = vunpack.c.l.s4 1983009808
      %v10270 = vunpack.c.0.s8 %v10269
      %v10271 = vlaneseq
      %v10272 = vshrl.u32 %v10271, 7
      %v10273 = vsub.s32 %v10270, %v10272
      %v10274 = vrot.slane %v10260, %v10273
      %v10275 = vcombine.low %v10252, %v10267
      %v10276 = vcombine.high %v10252, %v10267
      %v10278 = vunpack.c.l.s4 1934713408
      %v10279 = vunpack.c.0.s8 %v10278
      %v10280 = vlaneseq
      %v10281 = vshrl.u32 %v10280, 7
      %v10282 = vsub.s32 %v10279, %v10281
      %v10283 = vrot.slane %v10275, %v10282
      %v10285 = vunpack.c.l.s4 1934713408
      %v10286 = vunpack.c.0.s8 %v10285
      %v10287 = vlaneseq
      %v10288 = vshrl.u32 %v10287, 7
      %v10289 = vsub.s32 %v10286, %v10288
      %v10290 = vrot.slane %v10276, %v10289
      %v10291 = vcombine.low %v10259, %v10274
      %v10292 = vcombine.high %v10259, %v10274
      %v10294 = vunpack.c.l.s4 1934713408
      %v10295 = vunpack.c.0.s8 %v10294
      %v10296 = vlaneseq
      %v10297 = vshrl.u32 %v10296, 7
      %v10298 = vsub.s32 %v10295, %v10297
      %v10299 = vrot.slane %v10291, %v10298
      %v10301 = vunpack.c.l.s4 1934713408
      %v10302 = vunpack.c.0.s8 %v10301
      %v10303 = vlaneseq
      %v10304 = vshrl.u32 %v10303, 7
      %v10305 = vsub.s32 %v10302, %v10304
      %v10306 = vrot.slane %v10292, %v10305
      %v10307 = vcombine.high %v10283, 0
      %v10308 = vcombine.high %v10290, 0
      %v10309 = vcombine.high %v10299, 0
      %v10310 = vcombine.high %v10306, 0
      %v10311 = vcombine.high %v9489, %v1262
      %v10313 = vunpack.c.l.s4 1983009808
      %v10314 = vunpack.c.0.s8 %v10313
      %v10315 = vlaneseq
      %v10316 = vshrl.u32 %v10315, 7
      %v10317 = vsub.s32 %v10314, %v10316
      %v10318 = vrot.slane %v9489, %v10317
      %v10320 = vunpack.c.l.s4 1983009808
      %v10321 = vunpack.c.0.s8 %v10320
      %v10322 = vlaneseq
      %v10323 = vshrl.u32 %v10322, 7
      %v10324 = vsub.s32 %v10321, %v10323
      %v10325 = vrot.slane %v10311, %v10324
      %v10326 = vcombine.high %v9497, %v1262
      %v10328 = vunpack.c.l.s4 1983009808
      %v10329 = vunpack.c.0.s8 %v10328
      %v10330 = vlaneseq
      %v10331 = vshrl.u32 %v10330, 7
      %v10332 = vsub.s32 %v10329, %v10331
      %v10333 = vrot.slane %v9497, %v10332
      %v10335 = vunpack.c.l.s4 1983009808
      %v10336 = vunpack.c.0.s8 %v10335
      %v10337 = vlaneseq
      %v10338 = vshrl.u32 %v10337, 7
      %v10339 = vsub.s32 %v10336, %v10338
      %v10340 = vrot.slane %v10326, %v10339
      %v10341 = vcombine.low %v10318, %v10333
      %v10342 = vcombine.high %v10318, %v10333
      %v10344 = vunpack.c.l.s4 1934713408
      %v10345 = vunpack.c.0.s8 %v10344
      %v10346 = vlaneseq
      %v10347 = vshrl.u32 %v10346, 7
      %v10348 = vsub.s32 %v10345, %v10347
      %v10349 = vrot.slane %v10341, %v10348
      %v10351 = vunpack.c.l.s4 1934713408
      %v10352 = vunpack.c.0.s8 %v10351
      %v10353 = vlaneseq
      %v10354 = vshrl.u32 %v10353, 7
      %v10355 = vsub.s32 %v10352, %v10354
      %v10356 = vrot.slane %v10342, %v10355
      %v10357 = vcombine.low %v10325, %v10340
      %v10358 = vcombine.high %v10325, %v10340
      %v10360 = vunpack.c.l.s4 1934713408
      %v10361 = vunpack.c.0.s8 %v10360
      %v10362 = vlaneseq
      %v10363 = vshrl.u32 %v10362, 7
      %v10364 = vsub.s32 %v10361, %v10363
      %v10365 = vrot.slane %v10357, %v10364
      %v10367 = vunpack.c.l.s4 1934713408
      %v10368 = vunpack.c.0.s8 %v10367
      %v10369 = vlaneseq
      %v10370 = vshrl.u32 %v10369, 7
      %v10371 = vsub.s32 %v10368, %v10370
      %v10372 = vrot.slane %v10358, %v10371
      %v10373 = vcombine.high %v10349, 0
      %v10374 = vcombine.high %v10356, 0
      %v10375 = vcombine.high %v10365, 0
      %v10376 = vcombine.high %v10372, 0
      %v10377 = vcombine.high %v9493, %v1265
      %v10379 = vunpack.c.l.s4 1983009808
      %v10380 = vunpack.c.0.s8 %v10379
      %v10381 = vlaneseq
      %v10382 = vshrl.u32 %v10381, 7
      %v10383 = vsub.s32 %v10380, %v10382
      %v10384 = vrot.slane %v9493, %v10383
      %v10386 = vunpack.c.l.s4 1983009808
      %v10387 = vunpack.c.0.s8 %v10386
      %v10388 = vlaneseq
      %v10389 = vshrl.u32 %v10388, 7
      %v10390 = vsub.s32 %v10387, %v10389
      %v10391 = vrot.slane %v10377, %v10390
      %v10392 = vcombine.high %v9501, %v1265
      %v10394 = vunpack.c.l.s4 1983009808
      %v10395 = vunpack.c.0.s8 %v10394
      %v10396 = vlaneseq
      %v10397 = vshrl.u32 %v10396, 7
      %v10398 = vsub.s32 %v10395, %v10397
      %v10399 = vrot.slane %v9501, %v10398
      %v10401 = vunpack.c.l.s4 1983009808
      %v10402 = vunpack.c.0.s8 %v10401
      %v10403 = vlaneseq
      %v10404 = vshrl.u32 %v10403, 7
      %v10405 = vsub.s32 %v10402, %v10404
      %v10406 = vrot.slane %v10392, %v10405
      %v10407 = vcombine.low %v10384, %v10399
      %v10408 = vcombine.high %v10384, %v10399
      %v10410 = vunpack.c.l.s4 1934713408
      %v10411 = vunpack.c.0.s8 %v10410
      %v10412 = vlaneseq
      %v10413 = vshrl.u32 %v10412, 7
      %v10414 = vsub.s32 %v10411, %v10413
      %v10415 = vrot.slane %v10407, %v10414
      %v10417 = vunpack.c.l.s4 1934713408
      %v10418 = vunpack.c.0.s8 %v10417
      %v10419 = vlaneseq
      %v10420 = vshrl.u32 %v10419, 7
      %v10421 = vsub.s32 %v10418, %v10420
      %v10422 = vrot.slane %v10408, %v10421
      %v10423 = vcombine.low %v10391, %v10406
      %v10424 = vcombine.high %v10391, %v10406
      %v10426 = vunpack.c.l.s4 1934713408
      %v10427 = vunpack.c.0.s8 %v10426
      %v10428 = vlaneseq
      %v10429 = vshrl.u32 %v10428, 7
      %v10430 = vsub.s32 %v10427, %v10429
      %v10431 = vrot.slane %v10423, %v10430
      %v10433 = vunpack.c.l.s4 1934713408
      %v10434 = vunpack.c.0.s8 %v10433
      %v10435 = vlaneseq
      %v10436 = vshrl.u32 %v10435, 7
      %v10437 = vsub.s32 %v10434, %v10436
      %v10438 = vrot.slane %v10424, %v10437
      %v10439 = vcombine.high %v10415, 0
      %v10440 = vcombine.high %v10422, 0
      %v10441 = vcombine.high %v10431, 0
      %v10442 = vcombine.high %v10438, 0
      %v10443 = vcombine.high %v9505, %v1262
      %v10445 = vunpack.c.l.s4 1983009808
      %v10446 = vunpack.c.0.s8 %v10445
      %v10447 = vlaneseq
      %v10448 = vshrl.u32 %v10447, 7
      %v10449 = vsub.s32 %v10446, %v10448
      %v10450 = vrot.slane %v9505, %v10449
      %v10452 = vunpack.c.l.s4 1983009808
      %v10453 = vunpack.c.0.s8 %v10452
      %v10454 = vlaneseq
      %v10455 = vshrl.u32 %v10454, 7
      %v10456 = vsub.s32 %v10453, %v10455
      %v10457 = vrot.slane %v10443, %v10456
      %v10458 = vcombine.high %v9513, %v1262
      %v10460 = vunpack.c.l.s4 1983009808
      %v10461 = vunpack.c.0.s8 %v10460
      %v10462 = vlaneseq
      %v10463 = vshrl.u32 %v10462, 7
      %v10464 = vsub.s32 %v10461, %v10463
      %v10465 = vrot.slane %v9513, %v10464
      %v10467 = vunpack.c.l.s4 1983009808
      %v10468 = vunpack.c.0.s8 %v10467
      %v10469 = vlaneseq
      %v10470 = vshrl.u32 %v10469, 7
      %v10471 = vsub.s32 %v10468, %v10470
      %v10472 = vrot.slane %v10458, %v10471
      %v10473 = vcombine.low %v10450, %v10465
      %v10474 = vcombine.high %v10450, %v10465
      %v10476 = vunpack.c.l.s4 1934713408
      %v10477 = vunpack.c.0.s8 %v10476
      %v10478 = vlaneseq
      %v10479 = vshrl.u32 %v10478, 7
      %v10480 = vsub.s32 %v10477, %v10479
      %v10481 = vrot.slane %v10473, %v10480
      %v10483 = vunpack.c.l.s4 1934713408
      %v10484 = vunpack.c.0.s8 %v10483
      %v10485 = vlaneseq
      %v10486 = vshrl.u32 %v10485, 7
      %v10487 = vsub.s32 %v10484, %v10486
      %v10488 = vrot.slane %v10474, %v10487
      %v10489 = vcombine.low %v10457, %v10472
      %v10490 = vcombine.high %v10457, %v10472
      %v10492 = vunpack.c.l.s4 1934713408
      %v10493 = vunpack.c.0.s8 %v10492
      %v10494 = vlaneseq
      %v10495 = vshrl.u32 %v10494, 7
      %v10496 = vsub.s32 %v10493, %v10495
      %v10497 = vrot.slane %v10489, %v10496
      %v10499 = vunpack.c.l.s4 1934713408
      %v10500 = vunpack.c.0.s8 %v10499
      %v10501 = vlaneseq
      %v10502 = vshrl.u32 %v10501, 7
      %v10503 = vsub.s32 %v10500, %v10502
      %v10504 = vrot.slane %v10490, %v10503
      %v10505 = vcombine.high %v10481, 0
      %v10506 = vcombine.high %v10488, 0
      %v10507 = vcombine.high %v10497, 0
      %v10508 = vcombine.high %v10504, 0
      %v10509 = vcombine.high %v9509, %v1265
      %v10511 = vunpack.c.l.s4 1983009808
      %v10512 = vunpack.c.0.s8 %v10511
      %v10513 = vlaneseq
      %v10514 = vshrl.u32 %v10513, 7
      %v10515 = vsub.s32 %v10512, %v10514
      %v10516 = vrot.slane %v9509, %v10515
      %v10518 = vunpack.c.l.s4 1983009808
      %v10519 = vunpack.c.0.s8 %v10518
      %v10520 = vlaneseq
      %v10521 = vshrl.u32 %v10520, 7
      %v10522 = vsub.s32 %v10519, %v10521
      %v10523 = vrot.slane %v10509, %v10522
      %v10524 = vcombine.high %v9517, %v1265
      %v10526 = vunpack.c.l.s4 1983009808
      %v10527 = vunpack.c.0.s8 %v10526
      %v10528 = vlaneseq
      %v10529 = vshrl.u32 %v10528, 7
      %v10530 = vsub.s32 %v10527, %v10529
      %v10531 = vrot.slane %v9517, %v10530
      %v10533 = vunpack.c.l.s4 1983009808
      %v10534 = vunpack.c.0.s8 %v10533
      %v10535 = vlaneseq
      %v10536 = vshrl.u32 %v10535, 7
      %v10537 = vsub.s32 %v10534, %v10536
      %v10538 = vrot.slane %v10524, %v10537
      %v10539 = vcombine.low %v10516, %v10531
      %v10540 = vcombine.high %v10516, %v10531
      %v10542 = vunpack.c.l.s4 1934713408
      %v10543 = vunpack.c.0.s8 %v10542
      %v10544 = vlaneseq
      %v10545 = vshrl.u32 %v10544, 7
      %v10546 = vsub.s32 %v10543, %v10545
      %v10547 = vrot.slane %v10539, %v10546
      %v10549 = vunpack.c.l.s4 1934713408
      %v10550 = vunpack.c.0.s8 %v10549
      %v10551 = vlaneseq
      %v10552 = vshrl.u32 %v10551, 7
      %v10553 = vsub.s32 %v10550, %v10552
      %v10554 = vrot.slane %v10540, %v10553
      %v10555 = vcombine.low %v10523, %v10538
      %v10556 = vcombine.high %v10523, %v10538
      %v10558 = vunpack.c.l.s4 1934713408
      %v10559 = vunpack.c.0.s8 %v10558
      %v10560 = vlaneseq
      %v10561 = vshrl.u32 %v10560, 7
      %v10562 = vsub.s32 %v10559, %v10561
      %v10563 = vrot.slane %v10555, %v10562
      %v10565 = vunpack.c.l.s4 1934713408
      %v10566 = vunpack.c.0.s8 %v10565
      %v10567 = vlaneseq
      %v10568 = vshrl.u32 %v10567, 7
      %v10569 = vsub.s32 %v10566, %v10568
      %v10570 = vrot.slane %v10556, %v10569
      %v10571 = vcombine.high %v10547, 0
      %v10572 = vcombine.high %v10554, 0
      %v10573 = vcombine.high %v10563, 0
      %v10574 = vcombine.high %v10570, 0
      %v10575 = vcombine.low %v9557, %v9564
      %v10577 = vunpack.c.l.s4 1983009808
      %v10578 = vunpack.c.0.s8 %v10577
      %v10579 = vlaneseq
      %v10580 = vshrl.u32 %v10579, 7
      %v10581 = vsub.s32 %v10578, %v10580
      %v10582 = vrot.slane %v10575, %v10581
      %v10583 = vcombine.low %v9581, %v9582
      %v10585 = vunpack.c.l.s4 1983009808
      %v10586 = vunpack.c.0.s8 %v10585
      %v10587 = vlaneseq
      %v10588 = vshrl.u32 %v10587, 7
      %v10589 = vsub.s32 %v10586, %v10588
      %v10590 = vrot.slane %v10583, %v10589
      %v10591 = vcombine.low %v9573, %v9580
      %v10593 = vunpack.c.l.s4 1983009808
      %v10594 = vunpack.c.0.s8 %v10593
      %v10595 = vlaneseq
      %v10596 = vshrl.u32 %v10595, 7
      %v10597 = vsub.s32 %v10594, %v10596
      %v10598 = vrot.slane %v10591, %v10597
      %v10599 = vcombine.low %v9583, %v9584
      %v10601 = vunpack.c.l.s4 1983009808
      %v10602 = vunpack.c.0.s8 %v10601
      %v10603 = vlaneseq
      %v10604 = vshrl.u32 %v10603, 7
      %v10605 = vsub.s32 %v10602, %v10604
      %v10606 = vrot.slane %v10599, %v10605
      %v10607 = vcombine.low %v10582, %v10590
      %v10609 = vunpack.c.l.s4 1934713408
      %v10610 = vunpack.c.0.s8 %v10609
      %v10611 = vlaneseq
      %v10612 = vshrl.u32 %v10611, 7
      %v10613 = vsub.s32 %v10610, %v10612
      %v10614 = vrot.slane %v10607, %v10613
      %v10615 = vcombine.low %v10598, %v10606
      %v10617 = vunpack.c.l.s4 1934713408
      %v10618 = vunpack.c.0.s8 %v10617
      %v10619 = vlaneseq
      %v10620 = vshrl.u32 %v10619, 7
      %v10621 = vsub.s32 %v10618, %v10620
      %v10622 = vrot.slane %v10615, %v10621
      %v10623 = vcombine.low %v10614, %v10622
      %v10624 = vcombine.high %v10614, %v10622
      %v10625 = vcombine.low %v9623, %v9630
      %v10627 = vunpack.c.l.s4 1983009808
      %v10628 = vunpack.c.0.s8 %v10627
      %v10629 = vlaneseq
      %v10630 = vshrl.u32 %v10629, 7
      %v10631 = vsub.s32 %v10628, %v10630
      %v10632 = vrot.slane %v10625, %v10631
      %v10633 = vcombine.low %v9647, %v9648
      %v10635 = vunpack.c.l.s4 1983009808
      %v10636 = vunpack.c.0.s8 %v10635
      %v10637 = vlaneseq
      %v10638 = vshrl.u32 %v10637, 7
      %v10639 = vsub.s32 %v10636, %v10638
      %v10640 = vrot.slane %v10633, %v10639
      %v10641 = vcombine.low %v9639, %v9646
      %v10643 = vunpack.c.l.s4 1983009808
      %v10644 = vunpack.c.0.s8 %v10643
      %v10645 = vlaneseq
      %v10646 = vshrl.u32 %v10645, 7
      %v10647 = vsub.s32 %v10644, %v10646
      %v10648 = vrot.slane %v10641, %v10647
      %v10649 = vcombine.low %v9649, %v9650
      %v10651 = vunpack.c.l.s4 1983009808
      %v10652 = vunpack.c.0.s8 %v10651
      %v10653 = vlaneseq
      %v10654 = vshrl.u32 %v10653, 7
      %v10655 = vsub.s32 %v10652, %v10654
      %v10656 = vrot.slane %v10649, %v10655
      %v10657 = vcombine.low %v10632, %v10640
      %v10659 = vunpack.c.l.s4 1934713408
      %v10660 = vunpack.c.0.s8 %v10659
      %v10661 = vlaneseq
      %v10662 = vshrl.u32 %v10661, 7
      %v10663 = vsub.s32 %v10660, %v10662
      %v10664 = vrot.slane %v10657, %v10663
      %v10665 = vcombine.low %v10648, %v10656
      %v10667 = vunpack.c.l.s4 1934713408
      %v10668 = vunpack.c.0.s8 %v10667
      %v10669 = vlaneseq
      %v10670 = vshrl.u32 %v10669, 7
      %v10671 = vsub.s32 %v10668, %v10670
      %v10672 = vrot.slane %v10665, %v10671
      %v10673 = vcombine.low %v10664, %v10672
      %v10674 = vcombine.high %v10664, %v10672
      %v10675 = vcombine.low %v9689, %v9696
      %v10677 = vunpack.c.l.s4 1983009808
      %v10678 = vunpack.c.0.s8 %v10677
      %v10679 = vlaneseq
      %v10680 = vshrl.u32 %v10679, 7
      %v10681 = vsub.s32 %v10678, %v10680
      %v10682 = vrot.slane %v10675, %v10681
      %v10683 = vcombine.low %v9713, %v9714
      %v10685 = vunpack.c.l.s4 1983009808
      %v10686 = vunpack.c.0.s8 %v10685
      %v10687 = vlaneseq
      %v10688 = vshrl.u32 %v10687, 7
      %v10689 = vsub.s32 %v10686, %v10688
      %v10690 = vrot.slane %v10683, %v10689
      %v10691 = vcombine.low %v9705, %v9712
      %v10693 = vunpack.c.l.s4 1983009808
      %v10694 = vunpack.c.0.s8 %v10693
      %v10695 = vlaneseq
      %v10696 = vshrl.u32 %v10695, 7
      %v10697 = vsub.s32 %v10694, %v10696
      %v10698 = vrot.slane %v10691, %v10697
      %v10699 = vcombine.low %v9715, %v9716
      %v10701 = vunpack.c.l.s4 1983009808
      %v10702 = vunpack.c.0.s8 %v10701
      %v10703 = vlaneseq
      %v10704 = vshrl.u32 %v10703, 7
      %v10705 = vsub.s32 %v10702, %v10704
      %v10706 = vrot.slane %v10699, %v10705
      %v10707 = vcombine.low %v10682, %v10690
      %v10709 = vunpack.c.l.s4 1934713408
      %v10710 = vunpack.c.0.s8 %v10709
      %v10711 = vlaneseq
      %v10712 = vshrl.u32 %v10711, 7
      %v10713 = vsub.s32 %v10710, %v10712
      %v10714 = vrot.slane %v10707, %v10713
      %v10715 = vcombine.low %v10698, %v10706
      %v10717 = vunpack.c.l.s4 1934713408
      %v10718 = vunpack.c.0.s8 %v10717
      %v10719 = vlaneseq
      %v10720 = vshrl.u32 %v10719, 7
      %v10721 = vsub.s32 %v10718, %v10720
      %v10722 = vrot.slane %v10715, %v10721
      %v10723 = vcombine.low %v10714, %v10722
      %v10724 = vcombine.high %v10714, %v10722
      %v10725 = vcombine.low %v9755, %v9762
      %v10727 = vunpack.c.l.s4 1983009808
      %v10728 = vunpack.c.0.s8 %v10727
      %v10729 = vlaneseq
      %v10730 = vshrl.u32 %v10729, 7
      %v10731 = vsub.s32 %v10728, %v10730
      %v10732 = vrot.slane %v10725, %v10731
      %v10733 = vcombine.low %v9779, %v9780
      %v10735 = vunpack.c.l.s4 1983009808
      %v10736 = vunpack.c.0.s8 %v10735
      %v10737 = vlaneseq
      %v10738 = vshrl.u32 %v10737, 7
      %v10739 = vsub.s32 %v10736, %v10738
      %v10740 = vrot.slane %v10733, %v10739
      %v10741 = vcombine.low %v9771, %v9778
      %v10743 = vunpack.c.l.s4 1983009808
      %v10744 = vunpack.c.0.s8 %v10743
      %v10745 = vlaneseq
      %v10746 = vshrl.u32 %v10745, 7
      %v10747 = vsub.s32 %v10744, %v10746
      %v10748 = vrot.slane %v10741, %v10747
      %v10749 = vcombine.low %v9781, %v9782
      %v10751 = vunpack.c.l.s4 1983009808
      %v10752 = vunpack.c.0.s8 %v10751
      %v10753 = vlaneseq
      %v10754 = vshrl.u32 %v10753, 7
      %v10755 = vsub.s32 %v10752, %v10754
      %v10756 = vrot.slane %v10749, %v10755
      %v10757 = vcombine.low %v10732, %v10740
      %v10759 = vunpack.c.l.s4 1934713408
      %v10760 = vunpack.c.0.s8 %v10759
      %v10761 = vlaneseq
      %v10762 = vshrl.u32 %v10761, 7
      %v10763 = vsub.s32 %v10760, %v10762
      %v10764 = vrot.slane %v10757, %v10763
      %v10765 = vcombine.low %v10748, %v10756
      %v10767 = vunpack.c.l.s4 1934713408
      %v10768 = vunpack.c.0.s8 %v10767
      %v10769 = vlaneseq
      %v10770 = vshrl.u32 %v10769, 7
      %v10771 = vsub.s32 %v10768, %v10770
      %v10772 = vrot.slane %v10765, %v10771
      %v10773 = vcombine.low %v10764, %v10772
      %v10774 = vcombine.high %v10764, %v10772
      %v10775 = vcombine.low %v9821, %v9828
      %v10777 = vunpack.c.l.s4 1983009808
      %v10778 = vunpack.c.0.s8 %v10777
      %v10779 = vlaneseq
      %v10780 = vshrl.u32 %v10779, 7
      %v10781 = vsub.s32 %v10778, %v10780
      %v10782 = vrot.slane %v10775, %v10781
      %v10783 = vcombine.low %v9845, %v9846
      %v10785 = vunpack.c.l.s4 1983009808
      %v10786 = vunpack.c.0.s8 %v10785
      %v10787 = vlaneseq
      %v10788 = vshrl.u32 %v10787, 7
      %v10789 = vsub.s32 %v10786, %v10788
      %v10790 = vrot.slane %v10783, %v10789
      %v10791 = vcombine.low %v9837, %v9844
      %v10793 = vunpack.c.l.s4 1983009808
      %v10794 = vunpack.c.0.s8 %v10793
      %v10795 = vlaneseq
      %v10796 = vshrl.u32 %v10795, 7
      %v10797 = vsub.s32 %v10794, %v10796
      %v10798 = vrot.slane %v10791, %v10797
      %v10799 = vcombine.low %v9847, %v9848
      %v10801 = vunpack.c.l.s4 1983009808
      %v10802 = vunpack.c.0.s8 %v10801
      %v10803 = vlaneseq
      %v10804 = vshrl.u32 %v10803, 7
      %v10805 = vsub.s32 %v10802, %v10804
      %v10806 = vrot.slane %v10799, %v10805
      %v10807 = vcombine.low %v10782, %v10790
      %v10809 = vunpack.c.l.s4 1934713408
      %v10810 = vunpack.c.0.s8 %v10809
      %v10811 = vlaneseq
      %v10812 = vshrl.u32 %v10811, 7
      %v10813 = vsub.s32 %v10810, %v10812
      %v10814 = vrot.slane %v10807, %v10813
      %v10815 = vcombine.low %v10798, %v10806
      %v10817 = vunpack.c.l.s4 1934713408
      %v10818 = vunpack.c.0.s8 %v10817
      %v10819 = vlaneseq
      %v10820 = vshrl.u32 %v10819, 7
      %v10821 = vsub.s32 %v10818, %v10820
      %v10822 = vrot.slane %v10815, %v10821
      %v10823 = vcombine.low %v10814, %v10822
      %v10824 = vcombine.high %v10814, %v10822
      %v10825 = vcombine.low %v9887, %v9894
      %v10827 = vunpack.c.l.s4 1983009808
      %v10828 = vunpack.c.0.s8 %v10827
      %v10829 = vlaneseq
      %v10830 = vshrl.u32 %v10829, 7
      %v10831 = vsub.s32 %v10828, %v10830
      %v10832 = vrot.slane %v10825, %v10831
      %v10833 = vcombine.low %v9911, %v9912
      %v10835 = vunpack.c.l.s4 1983009808
      %v10836 = vunpack.c.0.s8 %v10835
      %v10837 = vlaneseq
      %v10838 = vshrl.u32 %v10837, 7
      %v10839 = vsub.s32 %v10836, %v10838
      %v10840 = vrot.slane %v10833, %v10839
      %v10841 = vcombine.low %v9903, %v9910
      %v10843 = vunpack.c.l.s4 1983009808
      %v10844 = vunpack.c.0.s8 %v10843
      %v10845 = vlaneseq
      %v10846 = vshrl.u32 %v10845, 7
      %v10847 = vsub.s32 %v10844, %v10846
      %v10848 = vrot.slane %v10841, %v10847
      %v10849 = vcombine.low %v9913, %v9914
      %v10851 = vunpack.c.l.s4 1983009808
      %v10852 = vunpack.c.0.s8 %v10851
      %v10853 = vlaneseq
      %v10854 = vshrl.u32 %v10853, 7
      %v10855 = vsub.s32 %v10852, %v10854
      %v10856 = vrot.slane %v10849, %v10855
      %v10857 = vcombine.low %v10832, %v10840
      %v10859 = vunpack.c.l.s4 1934713408
      %v10860 = vunpack.c.0.s8 %v10859
      %v10861 = vlaneseq
      %v10862 = vshrl.u32 %v10861, 7
      %v10863 = vsub.s32 %v10860, %v10862
      %v10864 = vrot.slane %v10857, %v10863
      %v10865 = vcombine.low %v10848, %v10856
      %v10867 = vunpack.c.l.s4 1934713408
      %v10868 = vunpack.c.0.s8 %v10867
      %v10869 = vlaneseq
      %v10870 = vshrl.u32 %v10869, 7
      %v10871 = vsub.s32 %v10868, %v10870
      %v10872 = vrot.slane %v10865, %v10871
      %v10873 = vcombine.low %v10864, %v10872
      %v10874 = vcombine.high %v10864, %v10872
      %v10875 = vcombine.low %v9953, %v9960
      %v10877 = vunpack.c.l.s4 1983009808
      %v10878 = vunpack.c.0.s8 %v10877
      %v10879 = vlaneseq
      %v10880 = vshrl.u32 %v10879, 7
      %v10881 = vsub.s32 %v10878, %v10880
      %v10882 = vrot.slane %v10875, %v10881
      %v10883 = vcombine.low %v9977, %v9978
      %v10885 = vunpack.c.l.s4 1983009808
      %v10886 = vunpack.c.0.s8 %v10885
      %v10887 = vlaneseq
      %v10888 = vshrl.u32 %v10887, 7
      %v10889 = vsub.s32 %v10886, %v10888
      %v10890 = vrot.slane %v10883, %v10889
      %v10891 = vcombine.low %v9969, %v9976
      %v10893 = vunpack.c.l.s4 1983009808
      %v10894 = vunpack.c.0.s8 %v10893
      %v10895 = vlaneseq
      %v10896 = vshrl.u32 %v10895, 7
      %v10897 = vsub.s32 %v10894, %v10896
      %v10898 = vrot.slane %v10891, %v10897
      %v10899 = vcombine.low %v9979, %v9980
      %v10901 = vunpack.c.l.s4 1983009808
      %v10902 = vunpack.c.0.s8 %v10901
      %v10903 = vlaneseq
      %v10904 = vshrl.u32 %v10903, 7
      %v10905 = vsub.s32 %v10902, %v10904
      %v10906 = vrot.slane %v10899, %v10905
      %v10907 = vcombine.low %v10882, %v10890
      %v10909 = vunpack.c.l.s4 1934713408
      %v10910 = vunpack.c.0.s8 %v10909
      %v10911 = vlaneseq
      %v10912 = vshrl.u32 %v10911, 7
      %v10913 = vsub.s32 %v10910, %v10912
      %v10914 = vrot.slane %v10907, %v10913
      %v10915 = vcombine.low %v10898, %v10906
      %v10917 = vunpack.c.l.s4 1934713408
      %v10918 = vunpack.c.0.s8 %v10917
      %v10919 = vlaneseq
      %v10920 = vshrl.u32 %v10919, 7
      %v10921 = vsub.s32 %v10918, %v10920
      %v10922 = vrot.slane %v10915, %v10921
      %v10923 = vcombine.low %v10914, %v10922
      %v10924 = vcombine.high %v10914, %v10922
      %v10925 = vcombine.low %v10019, %v10026
      %v10927 = vunpack.c.l.s4 1983009808
      %v10928 = vunpack.c.0.s8 %v10927
      %v10929 = vlaneseq
      %v10930 = vshrl.u32 %v10929, 7
      %v10931 = vsub.s32 %v10928, %v10930
      %v10932 = vrot.slane %v10925, %v10931
      %v10933 = vcombine.low %v10043, %v10044
      %v10935 = vunpack.c.l.s4 1983009808
      %v10936 = vunpack.c.0.s8 %v10935
      %v10937 = vlaneseq
      %v10938 = vshrl.u32 %v10937, 7
      %v10939 = vsub.s32 %v10936, %v10938
      %v10940 = vrot.slane %v10933, %v10939
      %v10941 = vcombine.low %v10035, %v10042
      %v10943 = vunpack.c.l.s4 1983009808
      %v10944 = vunpack.c.0.s8 %v10943
      %v10945 = vlaneseq
      %v10946 = vshrl.u32 %v10945, 7
      %v10947 = vsub.s32 %v10944, %v10946
      %v10948 = vrot.slane %v10941, %v10947
      %v10949 = vcombine.low %v10045, %v10046
      %v10951 = vunpack.c.l.s4 1983009808
      %v10952 = vunpack.c.0.s8 %v10951
      %v10953 = vlaneseq
      %v10954 = vshrl.u32 %v10953, 7
      %v10955 = vsub.s32 %v10952, %v10954
      %v10956 = vrot.slane %v10949, %v10955
      %v10957 = vcombine.low %v10932, %v10940
      %v10959 = vunpack.c.l.s4 1934713408
      %v10960 = vunpack.c.0.s8 %v10959
      %v10961 = vlaneseq
      %v10962 = vshrl.u32 %v10961, 7
      %v10963 = vsub.s32 %v10960, %v10962
      %v10964 = vrot.slane %v10957, %v10963
      %v10965 = vcombine.low %v10948, %v10956
      %v10967 = vunpack.c.l.s4 1934713408
      %v10968 = vunpack.c.0.s8 %v10967
      %v10969 = vlaneseq
      %v10970 = vshrl.u32 %v10969, 7
      %v10971 = vsub.s32 %v10968, %v10970
      %v10972 = vrot.slane %v10965, %v10971
      %v10973 = vcombine.low %v10964, %v10972
      %v10974 = vcombine.high %v10964, %v10972
      %v10975 = vcombine.low %v10085, %v10092
      %v10977 = vunpack.c.l.s4 1983009808
      %v10978 = vunpack.c.0.s8 %v10977
      %v10979 = vlaneseq
      %v10980 = vshrl.u32 %v10979, 7
      %v10981 = vsub.s32 %v10978, %v10980
      %v10982 = vrot.slane %v10975, %v10981
      %v10983 = vcombine.low %v10109, %v10110
      %v10985 = vunpack.c.l.s4 1983009808
      %v10986 = vunpack.c.0.s8 %v10985
      %v10987 = vlaneseq
      %v10988 = vshrl.u32 %v10987, 7
      %v10989 = vsub.s32 %v10986, %v10988
      %v10990 = vrot.slane %v10983, %v10989
      %v10991 = vcombine.low %v10101, %v10108
      %v10993 = vunpack.c.l.s4 1983009808
      %v10994 = vunpack.c.0.s8 %v10993
      %v10995 = vlaneseq
      %v10996 = vshrl.u32 %v10995, 7
      %v10997 = vsub.s32 %v10994, %v10996
      %v10998 = vrot.slane %v10991, %v10997
      %v10999 = vcombine.low %v10111, %v10112
      %v11001 = vunpack.c.l.s4 1983009808
      %v11002 = vunpack.c.0.s8 %v11001
      %v11003 = vlaneseq
      %v11004 = vshrl.u32 %v11003, 7
      %v11005 = vsub.s32 %v11002, %v11004
      %v11006 = vrot.slane %v10999, %v11005
      %v11007 = vcombine.low %v10982, %v10990
      %v11009 = vunpack.c.l.s4 1934713408
      %v11010 = vunpack.c.0.s8 %v11009
      %v11011 = vlaneseq
      %v11012 = vshrl.u32 %v11011, 7
      %v11013 = vsub.s32 %v11010, %v11012
      %v11014 = vrot.slane %v11007, %v11013
      %v11015 = vcombine.low %v10998, %v11006
      %v11017 = vunpack.c.l.s4 1934713408
      %v11018 = vunpack.c.0.s8 %v11017
      %v11019 = vlaneseq
      %v11020 = vshrl.u32 %v11019, 7
      %v11021 = vsub.s32 %v11018, %v11020
      %v11022 = vrot.slane %v11015, %v11021
      %v11023 = vcombine.low %v11014, %v11022
      %v11024 = vcombine.high %v11014, %v11022
      %v11025 = vcombine.low %v10151, %v10158
      %v11027 = vunpack.c.l.s4 1983009808
      %v11028 = vunpack.c.0.s8 %v11027
      %v11029 = vlaneseq
      %v11030 = vshrl.u32 %v11029, 7
      %v11031 = vsub.s32 %v11028, %v11030
      %v11032 = vrot.slane %v11025, %v11031
      %v11033 = vcombine.low %v10175, %v10176
      %v11035 = vunpack.c.l.s4 1983009808
      %v11036 = vunpack.c.0.s8 %v11035
      %v11037 = vlaneseq
      %v11038 = vshrl.u32 %v11037, 7
      %v11039 = vsub.s32 %v11036, %v11038
      %v11040 = vrot.slane %v11033, %v11039
      %v11041 = vcombine.low %v10167, %v10174
      %v11043 = vunpack.c.l.s4 1983009808
      %v11044 = vunpack.c.0.s8 %v11043
      %v11045 = vlaneseq
      %v11046 = vshrl.u32 %v11045, 7
      %v11047 = vsub.s32 %v11044, %v11046
      %v11048 = vrot.slane %v11041, %v11047
      %v11049 = vcombine.low %v10177, %v10178
      %v11051 = vunpack.c.l.s4 1983009808
      %v11052 = vunpack.c.0.s8 %v11051
      %v11053 = vlaneseq
      %v11054 = vshrl.u32 %v11053, 7
      %v11055 = vsub.s32 %v11052, %v11054
      %v11056 = vrot.slane %v11049, %v11055
      %v11057 = vcombine.low %v11032, %v11040
      %v11059 = vunpack.c.l.s4 1934713408
      %v11060 = vunpack.c.0.s8 %v11059
      %v11061 = vlaneseq
      %v11062 = vshrl.u32 %v11061, 7
      %v11063 = vsub.s32 %v11060, %v11062
      %v11064 = vrot.slane %v11057, %v11063
      %v11065 = vcombine.low %v11048, %v11056
      %v11067 = vunpack.c.l.s4 1934713408
      %v11068 = vunpack.c.0.s8 %v11067
      %v11069 = vlaneseq
      %v11070 = vshrl.u32 %v11069, 7
      %v11071 = vsub.s32 %v11068, %v11070
      %v11072 = vrot.slane %v11065, %v11071
      %v11073 = vcombine.low %v11064, %v11072
      %v11074 = vcombine.high %v11064, %v11072
      %v11075 = vcombine.low %v10217, %v10224
      %v11077 = vunpack.c.l.s4 1983009808
      %v11078 = vunpack.c.0.s8 %v11077
      %v11079 = vlaneseq
      %v11080 = vshrl.u32 %v11079, 7
      %v11081 = vsub.s32 %v11078, %v11080
      %v11082 = vrot.slane %v11075, %v11081
      %v11083 = vcombine.low %v10241, %v10242
      %v11085 = vunpack.c.l.s4 1983009808
      %v11086 = vunpack.c.0.s8 %v11085
      %v11087 = vlaneseq
      %v11088 = vshrl.u32 %v11087, 7
      %v11089 = vsub.s32 %v11086, %v11088
      %v11090 = vrot.slane %v11083, %v11089
      %v11091 = vcombine.low %v10233, %v10240
      %v11093 = vunpack.c.l.s4 1983009808
      %v11094 = vunpack.c.0.s8 %v11093
      %v11095 = vlaneseq
      %v11096 = vshrl.u32 %v11095, 7
      %v11097 = vsub.s32 %v11094, %v11096
      %v11098 = vrot.slane %v11091, %v11097
      %v11099 = vcombine.low %v10243, %v10244
      %v11101 = vunpack.c.l.s4 1983009808
      %v11102 = vunpack.c.0.s8 %v11101
      %v11103 = vlaneseq
      %v11104 = vshrl.u32 %v11103, 7
      %v11105 = vsub.s32 %v11102, %v11104
      %v11106 = vrot.slane %v11099, %v11105
      %v11107 = vcombine.low %v11082, %v11090
      %v11109 = vunpack.c.l.s4 1934713408
      %v11110 = vunpack.c.0.s8 %v11109
      %v11111 = vlaneseq
      %v11112 = vshrl.u32 %v11111, 7
      %v11113 = vsub.s32 %v11110, %v11112
      %v11114 = vrot.slane %v11107, %v11113
      %v11115 = vcombine.low %v11098, %v11106
      %v11117 = vunpack.c.l.s4 1934713408
      %v11118 = vunpack.c.0.s8 %v11117
      %v11119 = vlaneseq
      %v11120 = vshrl.u32 %v11119, 7
      %v11121 = vsub.s32 %v11118, %v11120
      %v11122 = vrot.slane %v11115, %v11121
      %v11123 = vcombine.low %v11114, %v11122
      %v11124 = vcombine.high %v11114, %v11122
      %v11125 = vcombine.low %v10283, %v10290
      %v11127 = vunpack.c.l.s4 1983009808
      %v11128 = vunpack.c.0.s8 %v11127
      %v11129 = vlaneseq
      %v11130 = vshrl.u32 %v11129, 7
      %v11131 = vsub.s32 %v11128, %v11130
      %v11132 = vrot.slane %v11125, %v11131
      %v11133 = vcombine.low %v10307, %v10308
      %v11135 = vunpack.c.l.s4 1983009808
      %v11136 = vunpack.c.0.s8 %v11135
      %v11137 = vlaneseq
      %v11138 = vshrl.u32 %v11137, 7
      %v11139 = vsub.s32 %v11136, %v11138
      %v11140 = vrot.slane %v11133, %v11139
      %v11141 = vcombine.low %v10299, %v10306
      %v11143 = vunpack.c.l.s4 1983009808
      %v11144 = vunpack.c.0.s8 %v11143
      %v11145 = vlaneseq
      %v11146 = vshrl.u32 %v11145, 7
      %v11147 = vsub.s32 %v11144, %v11146
      %v11148 = vrot.slane %v11141, %v11147
      %v11149 = vcombine.low %v10309, %v10310
      %v11151 = vunpack.c.l.s4 1983009808
      %v11152 = vunpack.c.0.s8 %v11151
      %v11153 = vlaneseq
      %v11154 = vshrl.u32 %v11153, 7
      %v11155 = vsub.s32 %v11152, %v11154
      %v11156 = vrot.slane %v11149, %v11155
      %v11157 = vcombine.low %v11132, %v11140
      %v11159 = vunpack.c.l.s4 1934713408
      %v11160 = vunpack.c.0.s8 %v11159
      %v11161 = vlaneseq
      %v11162 = vshrl.u32 %v11161, 7
      %v11163 = vsub.s32 %v11160, %v11162
      %v11164 = vrot.slane %v11157, %v11163
      %v11165 = vcombine.low %v11148, %v11156
      %v11167 = vunpack.c.l.s4 1934713408
      %v11168 = vunpack.c.0.s8 %v11167
      %v11169 = vlaneseq
      %v11170 = vshrl.u32 %v11169, 7
      %v11171 = vsub.s32 %v11168, %v11170
      %v11172 = vrot.slane %v11165, %v11171
      %v11173 = vcombine.low %v11164, %v11172
      %v11174 = vcombine.high %v11164, %v11172
      %v11175 = vcombine.low %v10349, %v10356
      %v11177 = vunpack.c.l.s4 1983009808
      %v11178 = vunpack.c.0.s8 %v11177
      %v11179 = vlaneseq
      %v11180 = vshrl.u32 %v11179, 7
      %v11181 = vsub.s32 %v11178, %v11180
      %v11182 = vrot.slane %v11175, %v11181
      %v11183 = vcombine.low %v10373, %v10374
      %v11185 = vunpack.c.l.s4 1983009808
      %v11186 = vunpack.c.0.s8 %v11185
      %v11187 = vlaneseq
      %v11188 = vshrl.u32 %v11187, 7
      %v11189 = vsub.s32 %v11186, %v11188
      %v11190 = vrot.slane %v11183, %v11189
      %v11191 = vcombine.low %v10365, %v10372
      %v11193 = vunpack.c.l.s4 1983009808
      %v11194 = vunpack.c.0.s8 %v11193
      %v11195 = vlaneseq
      %v11196 = vshrl.u32 %v11195, 7
      %v11197 = vsub.s32 %v11194, %v11196
      %v11198 = vrot.slane %v11191, %v11197
      %v11199 = vcombine.low %v10375, %v10376
      %v11201 = vunpack.c.l.s4 1983009808
      %v11202 = vunpack.c.0.s8 %v11201
      %v11203 = vlaneseq
      %v11204 = vshrl.u32 %v11203, 7
      %v11205 = vsub.s32 %v11202, %v11204
      %v11206 = vrot.slane %v11199, %v11205
      %v11207 = vcombine.low %v11182, %v11190
      %v11209 = vunpack.c.l.s4 1934713408
      %v11210 = vunpack.c.0.s8 %v11209
      %v11211 = vlaneseq
      %v11212 = vshrl.u32 %v11211, 7
      %v11213 = vsub.s32 %v11210, %v11212
      %v11214 = vrot.slane %v11207, %v11213
      %v11215 = vcombine.low %v11198, %v11206
      %v11217 = vunpack.c.l.s4 1934713408
      %v11218 = vunpack.c.0.s8 %v11217
      %v11219 = vlaneseq
      %v11220 = vshrl.u32 %v11219, 7
      %v11221 = vsub.s32 %v11218, %v11220
      %v11222 = vrot.slane %v11215, %v11221
      %v11223 = vcombine.low %v11214, %v11222
      %v11224 = vcombine.high %v11214, %v11222
      %v11225 = vcombine.low %v10415, %v10422
      %v11227 = vunpack.c.l.s4 1983009808
      %v11228 = vunpack.c.0.s8 %v11227
      %v11229 = vlaneseq
      %v11230 = vshrl.u32 %v11229, 7
      %v11231 = vsub.s32 %v11228, %v11230
      %v11232 = vrot.slane %v11225, %v11231
      %v11233 = vcombine.low %v10439, %v10440
      %v11235 = vunpack.c.l.s4 1983009808
      %v11236 = vunpack.c.0.s8 %v11235
      %v11237 = vlaneseq
      %v11238 = vshrl.u32 %v11237, 7
      %v11239 = vsub.s32 %v11236, %v11238
      %v11240 = vrot.slane %v11233, %v11239
      %v11241 = vcombine.low %v10431, %v10438
      %v11243 = vunpack.c.l.s4 1983009808
      %v11244 = vunpack.c.0.s8 %v11243
      %v11245 = vlaneseq
      %v11246 = vshrl.u32 %v11245, 7
      %v11247 = vsub.s32 %v11244, %v11246
      %v11248 = vrot.slane %v11241, %v11247
      %v11249 = vcombine.low %v10441, %v10442
      %v11251 = vunpack.c.l.s4 1983009808
      %v11252 = vunpack.c.0.s8 %v11251
      %v11253 = vlaneseq
      %v11254 = vshrl.u32 %v11253, 7
      %v11255 = vsub.s32 %v11252, %v11254
      %v11256 = vrot.slane %v11249, %v11255
      %v11257 = vcombine.low %v11232, %v11240
      %v11259 = vunpack.c.l.s4 1934713408
      %v11260 = vunpack.c.0.s8 %v11259
      %v11261 = vlaneseq
      %v11262 = vshrl.u32 %v11261, 7
      %v11263 = vsub.s32 %v11260, %v11262
      %v11264 = vrot.slane %v11257, %v11263
      %v11265 = vcombine.low %v11248, %v11256
      %v11267 = vunpack.c.l.s4 1934713408
      %v11268 = vunpack.c.0.s8 %v11267
      %v11269 = vlaneseq
      %v11270 = vshrl.u32 %v11269, 7
      %v11271 = vsub.s32 %v11268, %v11270
      %v11272 = vrot.slane %v11265, %v11271
      %v11273 = vcombine.low %v11264, %v11272
      %v11274 = vcombine.high %v11264, %v11272
      %v11275 = vcombine.low %v10481, %v10488
      %v11277 = vunpack.c.l.s4 1983009808
      %v11278 = vunpack.c.0.s8 %v11277
      %v11279 = vlaneseq
      %v11280 = vshrl.u32 %v11279, 7
      %v11281 = vsub.s32 %v11278, %v11280
      %v11282 = vrot.slane %v11275, %v11281
      %v11283 = vcombine.low %v10505, %v10506
      %v11285 = vunpack.c.l.s4 1983009808
      %v11286 = vunpack.c.0.s8 %v11285
      %v11287 = vlaneseq
      %v11288 = vshrl.u32 %v11287, 7
      %v11289 = vsub.s32 %v11286, %v11288
      %v11290 = vrot.slane %v11283, %v11289
      %v11291 = vcombine.low %v10497, %v10504
      %v11293 = vunpack.c.l.s4 1983009808
      %v11294 = vunpack.c.0.s8 %v11293
      %v11295 = vlaneseq
      %v11296 = vshrl.u32 %v11295, 7
      %v11297 = vsub.s32 %v11294, %v11296
      %v11298 = vrot.slane %v11291, %v11297
      %v11299 = vcombine.low %v10507, %v10508
      %v11301 = vunpack.c.l.s4 1983009808
      %v11302 = vunpack.c.0.s8 %v11301
      %v11303 = vlaneseq
      %v11304 = vshrl.u32 %v11303, 7
      %v11305 = vsub.s32 %v11302, %v11304
      %v11306 = vrot.slane %v11299, %v11305
      %v11307 = vcombine.low %v11282, %v11290
      %v11309 = vunpack.c.l.s4 1934713408
      %v11310 = vunpack.c.0.s8 %v11309
      %v11311 = vlaneseq
      %v11312 = vshrl.u32 %v11311, 7
      %v11313 = vsub.s32 %v11310, %v11312
      %v11314 = vrot.slane %v11307, %v11313
      %v11315 = vcombine.low %v11298, %v11306
      %v11317 = vunpack.c.l.s4 1934713408
      %v11318 = vunpack.c.0.s8 %v11317
      %v11319 = vlaneseq
      %v11320 = vshrl.u32 %v11319, 7
      %v11321 = vsub.s32 %v11318, %v11320
      %v11322 = vrot.slane %v11315, %v11321
      %v11323 = vcombine.low %v11314, %v11322
      %v11324 = vcombine.high %v11314, %v11322
      %v11325 = vcombine.low %v10547, %v10554
      %v11327 = vunpack.c.l.s4 1983009808
      %v11328 = vunpack.c.0.s8 %v11327
      %v11329 = vlaneseq
      %v11330 = vshrl.u32 %v11329, 7
      %v11331 = vsub.s32 %v11328, %v11330
      %v11332 = vrot.slane %v11325, %v11331
      %v11333 = vcombine.low %v10571, %v10572
      %v11335 = vunpack.c.l.s4 1983009808
      %v11336 = vunpack.c.0.s8 %v11335
      %v11337 = vlaneseq
      %v11338 = vshrl.u32 %v11337, 7
      %v11339 = vsub.s32 %v11336, %v11338
      %v11340 = vrot.slane %v11333, %v11339
      %v11341 = vcombine.low %v10563, %v10570
      %v11343 = vunpack.c.l.s4 1983009808
      %v11344 = vunpack.c.0.s8 %v11343
      %v11345 = vlaneseq
      %v11346 = vshrl.u32 %v11345, 7
      %v11347 = vsub.s32 %v11344, %v11346
      %v11348 = vrot.slane %v11341, %v11347
      %v11349 = vcombine.low %v10573, %v10574
      %v11351 = vunpack.c.l.s4 1983009808
      %v11352 = vunpack.c.0.s8 %v11351
      %v11353 = vlaneseq
      %v11354 = vshrl.u32 %v11353, 7
      %v11355 = vsub.s32 %v11352, %v11354
      %v11356 = vrot.slane %v11349, %v11355
      %v11357 = vcombine.low %v11332, %v11340
      %v11359 = vunpack.c.l.s4 1934713408
      %v11360 = vunpack.c.0.s8 %v11359
      %v11361 = vlaneseq
      %v11362 = vshrl.u32 %v11361, 7
      %v11363 = vsub.s32 %v11360, %v11362
      %v11364 = vrot.slane %v11357, %v11363
      %v11365 = vcombine.low %v11348, %v11356
      %v11367 = vunpack.c.l.s4 1934713408
      %v11368 = vunpack.c.0.s8 %v11367
      %v11369 = vlaneseq
      %v11370 = vshrl.u32 %v11369, 7
      %v11371 = vsub.s32 %v11368, %v11370
      %v11372 = vrot.slane %v11365, %v11371
      %v11373 = vcombine.low %v11364, %v11372
      %v11374 = vcombine.high %v11364, %v11372
      %v11377 = vpack.i.b16 %v10673, %v10623
      %v11378 = vshrl.u32 %v10623, 16
      %v11379 = vshrl.u32 %v10673, 16
      %v11380 = vpack.i.b16 %v11379, %v11378
      %v11383 = vpack.i.b16 %v10674, %v10624
      %v11384 = vshrl.u32 %v10624, 16
      %v11385 = vshrl.u32 %v10674, 16
      %v11386 = vpack.i.b16 %v11385, %v11384
      %v11389 = vpack.i.b16 %v10773, %v10723
      %v11390 = vshrl.u32 %v10723, 16
      %v11391 = vshrl.u32 %v10773, 16
      %v11392 = vpack.i.b16 %v11391, %v11390
      %v11395 = vpack.i.b16 %v10774, %v10724
      %v11396 = vshrl.u32 %v10724, 16
      %v11397 = vshrl.u32 %v10774, 16
      %v11398 = vpack.i.b16 %v11397, %v11396
      %v11401 = vpack.i.b16 %v10873, %v10823
      %v11402 = vshrl.u32 %v10823, 16
      %v11403 = vshrl.u32 %v10873, 16
      %v11404 = vpack.i.b16 %v11403, %v11402
      %v11407 = vpack.i.b16 %v10874, %v10824
      %v11408 = vshrl.u32 %v10824, 16
      %v11409 = vshrl.u32 %v10874, 16
      %v11410 = vpack.i.b16 %v11409, %v11408
      %v11413 = vpack.i.b16 %v10973, %v10923
      %v11414 = vshrl.u32 %v10923, 16
      %v11415 = vshrl.u32 %v10973, 16
      %v11416 = vpack.i.b16 %v11415, %v11414
      %v11419 = vpack.i.b16 %v10974, %v10924
      %v11420 = vshrl.u32 %v10924, 16
      %v11421 = vshrl.u32 %v10974, 16
      %v11422 = vpack.i.b16 %v11421, %v11420
      %v11425 = vpack.i.b16 %v11073, %v11023
      %v11426 = vshrl.u32 %v11023, 16
      %v11427 = vshrl.u32 %v11073, 16
      %v11428 = vpack.i.b16 %v11427, %v11426
      %v11431 = vpack.i.b16 %v11074, %v11024
      %v11432 = vshrl.u32 %v11024, 16
      %v11433 = vshrl.u32 %v11074, 16
      %v11434 = vpack.i.b16 %v11433, %v11432
      %v11437 = vpack.i.b16 %v11173, %v11123
      %v11438 = vshrl.u32 %v11123, 16
      %v11439 = vshrl.u32 %v11173, 16
      %v11440 = vpack.i.b16 %v11439, %v11438
      %v11443 = vpack.i.b16 %v11174, %v11124
      %v11444 = vshrl.u32 %v11124, 16
      %v11445 = vshrl.u32 %v11174, 16
      %v11446 = vpack.i.b16 %v11445, %v11444
      %v11449 = vpack.i.b16 %v11273, %v11223
      %v11450 = vshrl.u32 %v11223, 16
      %v11451 = vshrl.u32 %v11273, 16
      %v11452 = vpack.i.b16 %v11451, %v11450
      %v11455 = vpack.i.b16 %v11274, %v11224
      %v11456 = vshrl.u32 %v11224, 16
      %v11457 = vshrl.u32 %v11274, 16
      %v11458 = vpack.i.b16 %v11457, %v11456
      %v11461 = vpack.i.b16 %v11373, %v11323
      %v11462 = vshrl.u32 %v11323, 16
      %v11463 = vshrl.u32 %v11373, 16
      %v11464 = vpack.i.b16 %v11463, %v11462
      %v11467 = vpack.i.b16 %v11374, %v11324
      %v11468 = vshrl.u32 %v11324, 16
      %v11469 = vshrl.u32 %v11374, 16
      %v11470 = vpack.i.b16 %v11469, %v11468
      %11471 = vrot.lane.b32.xlu0 %v11380, 8
      %v11472 = vpop.permute.xlu0 %11471
      %11473 = vrot.lane.b32.xlu0 %v11392, 8
      %v11474 = vpop.permute.xlu0 %11473
      %11475 = vrot.lane.b32.xlu0 %v11404, 8
      %v11476 = vpop.permute.xlu0 %11475
      %11477 = vrot.lane.b32.xlu0 %v11416, 8
      %v11478 = vpop.permute.xlu0 %11477
      %11479 = vrot.lane.b32.xlu0 %v11428, 8
      %v11480 = vpop.permute.xlu0 %11479
      %11481 = vrot.lane.b32.xlu0 %v11440, 8
      %v11482 = vpop.permute.xlu0 %11481
      %11483 = vrot.lane.b32.xlu0 %v11452, 8
      %v11484 = vpop.permute.xlu0 %11483
      %11485 = vrot.lane.b32.xlu0 %v11464, 8
      %v11486 = vpop.permute.xlu0 %11485
      %11487 = vrot.lane.b32.xlu0 %v11383, 16
      %v11488 = vpop.permute.xlu0 %11487
      %11489 = vrot.lane.b32.xlu0 %v11395, 16
      %v11490 = vpop.permute.xlu0 %11489
      %11491 = vrot.lane.b32.xlu0 %v11407, 16
      %v11492 = vpop.permute.xlu0 %11491
      %11493 = vrot.lane.b32.xlu0 %v11419, 16
      %v11494 = vpop.permute.xlu0 %11493
      %11495 = vrot.lane.b32.xlu0 %v11431, 16
      %v11496 = vpop.permute.xlu0 %11495
      %11497 = vrot.lane.b32.xlu0 %v11443, 16
      %v11498 = vpop.permute.xlu0 %11497
      %11499 = vrot.lane.b32.xlu0 %v11455, 16
      %v11500 = vpop.permute.xlu0 %11499
      %11501 = vrot.lane.b32.xlu0 %v11467, 16
      %v11502 = vpop.permute.xlu0 %11501
      %11503 = vrot.lane.b32.xlu0 %v11386, 24
      %v11504 = vpop.permute.xlu0 %11503
      %11505 = vrot.lane.b32.xlu0 %v11398, 24
      %v11506 = vpop.permute.xlu0 %11505
      %11507 = vrot.lane.b32.xlu0 %v11410, 24
      %v11508 = vpop.permute.xlu0 %11507
      %11509 = vrot.lane.b32.xlu0 %v11422, 24
      %v11510 = vpop.permute.xlu0 %11509
      %11511 = vrot.lane.b32.xlu0 %v11434, 24
      %v11512 = vpop.permute.xlu0 %11511
      %11513 = vrot.lane.b32.xlu0 %v11446, 24
      %v11514 = vpop.permute.xlu0 %11513
      %11515 = vrot.lane.b32.xlu0 %v11458, 24
      %v11516 = vpop.permute.xlu0 %11515
      %11517 = vrot.lane.b32.xlu0 %v11470, 24
      %v11518 = vpop.permute.xlu0 %11517
      %v11521 = vsel %vm7651, %v11377, %v11472
      %v11524 = vsel %vm7651, %v11389, %v11474
      %v11527 = vsel %vm7651, %v11401, %v11476
      %v11530 = vsel %vm7651, %v11413, %v11478
      %v11533 = vsel %vm7651, %v11425, %v11480
      %v11536 = vsel %vm7651, %v11437, %v11482
      %v11539 = vsel %vm7651, %v11449, %v11484
      %v11542 = vsel %vm7651, %v11461, %v11486
      %vm11543 = vcmask 130048
      %v11545 = vsel %vm11543, %v11521, %v11488
      %v11547 = vsel %vm11543, %v11524, %v11490
      %v11549 = vsel %vm11543, %v11527, %v11492
      %v11551 = vsel %vm11543, %v11530, %v11494
      %v11553 = vsel %vm11543, %v11533, %v11496
      %v11555 = vsel %vm11543, %v11536, %v11498
      %v11557 = vsel %vm11543, %v11539, %v11500
      %v11559 = vsel %vm11543, %v11542, %v11502
      %vm11560 = vcmask 195584
      %v11562 = vsel %vm11560, %v11545, %v11504
      %v11564 = vsel %vm11560, %v11547, %v11506
      %v11566 = vsel %vm11560, %v11549, %v11508
      %v11568 = vsel %vm11560, %v11551, %v11510
      %v11570 = vsel %vm11560, %v11553, %v11512
      %v11572 = vsel %vm11560, %v11555, %v11514
      %v11574 = vsel %vm11560, %v11557, %v11516
      %v11576 = vsel %vm11560, %v11559, %v11518
      %v11577 = vld [vmem:[%s668] sm:$0xf]
      %v11578 = vld [vmem:[%s668 + $0x4] sm:$0xf]
      %v11579 = vld [vmem:[%s668 + $0x8] sm:$0xf]
      %v11580 = vld [vmem:[%s668 + $0xc] sm:$0xf]
      %v11581 = vld [vmem:[%s671] sm:$0x1]
      %v11583 = vlaneseq
      %v11584 = vshrl.u32 %v11583, 7
      %v11585 = vsub.s32 0, %v11584
      %v11586 = vrot.slane %v11581, %v11585
      %v11592 = vunpack.c.l.b16 %v11577
      %v11593 = vunpack.c.l.b16 %v11578
      %v11594 = vunpack.c.l.b16 %v11579
      %v11595 = vunpack.c.l.b16 %v11580
      %v11596 = vpack.c.b16 %v11593, %v11592
      %v11597 = vpack.c.b16 %v11595, %v11594
      %v11600 = vsel %vm775, %v11562, 0
      %v11602 = vsel %vm775, %v11564, 0
      %v11604 = vsel %vm775, %v11566, 0
      %v11606 = vsel %vm775, %v11568, 0
      %v11608 = vsel %vm775, %v11570, 0
      %v11610 = vsel %vm775, %v11572, 0
      %v11612 = vsel %vm775, %v11574, 0
      %v11614 = vsel %vm775, %v11576, 0
      %11616 = vmatprep.subr.bf16.mxu0 0
      %11617 = vmatpush1.bf16.msra.mxu0 %v11596
      %11618 = vmatprep.subr.bf16.mxu0 0
      %11619 = vmatpush1.bf16.msra.mxu0 %v11597
      %11620 = vmatprep.subr.bf16.mxu0 0
      %11621 = vmatpush1.bf16.msra.mxu0 0
      %11622 = vmatprep.subr.bf16.mxu0 0
      %11623 = vmatpush1.bf16.msra.mxu0 0
      %11624 = vmatprep.subr.bf16.mxu0 0
      %11625 = vmatpush1.bf16.msra.mxu0 0
      %11626 = vmatprep.subr.bf16.mxu0 0
      %11627 = vmatpush1.bf16.msra.mxu0 0
      %11628 = vmatprep.subr.bf16.mxu0 0
      %11629 = vmatpush1.bf16.msra.mxu0 0
      %11630 = vmatprep.subr.bf16.mxu0 0
      %11631 = vmatpush1.bf16.msra.mxu0 0
      %11632 = vmatprep.subr.bf16.mxu0 0
      %11633 = vmatpush1.bf16.msra.mxu0 0
      %11634 = vmatprep.subr.bf16.mxu0 0
      %11635 = vmatpush1.bf16.msra.mxu0 0
      %11636 = vmatprep.subr.bf16.mxu0 0
      %11637 = vmatpush1.bf16.msra.mxu0 0
      %11638 = vmatprep.subr.bf16.mxu0 0
      %11639 = vmatpush1.bf16.msra.mxu0 0
      %11640 = vmatprep.subr.bf16.mxu0 0
      %11641 = vmatpush1.bf16.msra.mxu0 0
      %11642 = vmatprep.subr.bf16.mxu0 0
      %11643 = vmatpush1.bf16.msra.mxu0 0
      %11644 = vmatprep.subr.bf16.mxu0 0
      %11645 = vmatpush1.bf16.msra.mxu0 0
      %11646 = vmatprep.subr.bf16.mxu0 0
      %11647 = vmatpush1.bf16.msra.mxu0 0
      %11648 = vmatprep.mubr.bf16.mxu0 0
      %11649 = vmatmul.mubr.bf16.gmra.mrb[0].mxu0 %v11600
      %v11650 = vpop.f32.mrb[0].mxu0
      %v11651 = vadd.f32 %v11586, %v11650
      %v11652 = vpop.f32.mrb[0].mxu0
      %v11653 = vpop.f32.mrb[0].mxu0
      %v11654 = vadd.f32 %v11586, %v11653
      %v11655 = vpop.f32.mrb[0].mxu0
      %11656 = vmatprep.mubr.bf16.mxu0 0
      %11657 = vmatmul.mubr.bf16.gmra.mrb[0].mxu0 %v11602
      %v11658 = vpop.f32.mrb[0].mxu0
      %v11659 = vadd.f32 %v11586, %v11658
      %v11660 = vpop.f32.mrb[0].mxu0
      %v11661 = vpop.f32.mrb[0].mxu0
      %v11662 = vadd.f32 %v11586, %v11661
      %v11663 = vpop.f32.mrb[0].mxu0
      %11664 = vmatprep.mubr.bf16.mxu0 0
      %11665 = vmatmul.mubr.bf16.gmra.mrb[0].mxu0 %v11604
      %v11666 = vpop.f32.mrb[0].mxu0
      %v11667 = vadd.f32 %v11586, %v11666
      %v11668 = vpop.f32.mrb[0].mxu0
      %v11669 = vpop.f32.mrb[0].mxu0
      %v11670 = vadd.f32 %v11586, %v11669
      %v11671 = vpop.f32.mrb[0].mxu0
      %11672 = vmatprep.mubr.bf16.mxu0 0
      %11673 = vmatmul.mubr.bf16.gmra.mrb[0].mxu0 %v11606
      %v11674 = vpop.f32.mrb[0].mxu0
      %v11675 = vadd.f32 %v11586, %v11674
      %v11676 = vpop.f32.mrb[0].mxu0
      %v11677 = vpop.f32.mrb[0].mxu0
      %v11678 = vadd.f32 %v11586, %v11677
      %v11679 = vpop.f32.mrb[0].mxu0
      %11680 = vmatprep.mubr.bf16.mxu0 0
      %11681 = vmatmul.mubr.bf16.gmra.mrb[0].mxu0 %v11608
      %v11682 = vpop.f32.mrb[0].mxu0
      %v11683 = vadd.f32 %v11586, %v11682
      %v11684 = vpop.f32.mrb[0].mxu0
      %v11685 = vpop.f32.mrb[0].mxu0
      %v11686 = vadd.f32 %v11586, %v11685
      %v11687 = vpop.f32.mrb[0].mxu0
      %11688 = vmatprep.mubr.bf16.mxu0 0
      %11689 = vmatmul.mubr.bf16.gmra.mrb[0].mxu0 %v11610
      %v11690 = vpop.f32.mrb[0].mxu0
      %v11691 = vadd.f32 %v11586, %v11690
      %v11692 = vpop.f32.mrb[0].mxu0
      %v11693 = vpop.f32.mrb[0].mxu0
      %v11694 = vadd.f32 %v11586, %v11693
      %v11695 = vpop.f32.mrb[0].mxu0
      %11696 = vmatprep.mubr.bf16.mxu0 0
      %11697 = vmatmul.mubr.bf16.gmra.mrb[0].mxu0 %v11612
      %v11698 = vpop.f32.mrb[0].mxu0
      %v11699 = vadd.f32 %v11586, %v11698
      %v11700 = vpop.f32.mrb[0].mxu0
      %v11701 = vpop.f32.mrb[0].mxu0
      %v11702 = vadd.f32 %v11586, %v11701
      %v11703 = vpop.f32.mrb[0].mxu0
      %11704 = vmatprep.mubr.bf16.mxu0 0
      %11705 = vmatmul.mubr.bf16.gmra.mrb[0].mxu0 %v11614
      %v11706 = vpop.f32.mrb[0].mxu0
      %v11707 = vadd.f32 %v11586, %v11706
      %v11708 = vpop.f32.mrb[0].mxu0
      %v11709 = vpop.f32.mrb[0].mxu0
      %v11710 = vadd.f32 %v11586, %v11709
      %v11711 = vpop.f32.mrb[0].mxu0
      %11712 = vdwg.mxu0
      %v11713 = vadd.f32 %v757, %v11651
      %v11714 = vadd.f32 %v758, %v11654
      %v11715 = vadd.f32 %v759, %v11659
      %v11716 = vadd.f32 %v760, %v11662
      %v11717 = vadd.f32 %v761, %v11667
      %v11718 = vadd.f32 %v762, %v11670
      %v11719 = vadd.f32 %v763, %v11675
      %v11720 = vadd.f32 %v764, %v11678
      %v11721 = vadd.f32 %v765, %v11683
      %v11722 = vadd.f32 %v766, %v11686
      %v11723 = vadd.f32 %v767, %v11691
      %v11724 = vadd.f32 %v768, %v11694
      %v11725 = vadd.f32 %v769, %v11699
      %v11726 = vadd.f32 %v770, %v11702
      %v11727 = vadd.f32 %v771, %v11707
      %v11728 = vadd.f32 %v772, %v11710
      %v11729 = vld [vmem:[%s674] sm:$0x1]
      %v11730 = vld [vmem:[%s677] sm:$0x1]
      %v11731 = vsel %vm775, %v11713, 0.0
      %11732 = vadd.xlane.f32.xlu0 %v11731
      %v11733 = vpop.xlane.xlu0 %11732
      %v11734 = vsel %vm775, %v11714, 0.0
      %11735 = vadd.xlane.f32.xlu0 %v11734
      %v11736 = vpop.xlane.xlu0 %11735
      %v11737 = vsel %vm775, %v11715, 0.0
      %11738 = vadd.xlane.f32.xlu0 %v11737
      %v11739 = vpop.xlane.xlu0 %11738
      %v11740 = vsel %vm775, %v11716, 0.0
      %11741 = vadd.xlane.f32.xlu0 %v11740
      %v11742 = vpop.xlane.xlu0 %11741
      %v11743 = vsel %vm775, %v11717, 0.0
      %11744 = vadd.xlane.f32.xlu0 %v11743
      %v11745 = vpop.xlane.xlu0 %11744
      %v11746 = vsel %vm775, %v11718, 0.0
      %11747 = vadd.xlane.f32.xlu0 %v11746
      %v11748 = vpop.xlane.xlu0 %11747
      %v11749 = vsel %vm775, %v11719, 0.0
      %11750 = vadd.xlane.f32.xlu0 %v11749
      %v11751 = vpop.xlane.xlu0 %11750
      %v11752 = vsel %vm775, %v11720, 0.0
      %11753 = vadd.xlane.f32.xlu0 %v11752
      %v11754 = vpop.xlane.xlu0 %11753
      %v11755 = vsel %vm775, %v11721, 0.0
      %11756 = vadd.xlane.f32.xlu0 %v11755
      %v11757 = vpop.xlane.xlu0 %11756
      %v11758 = vsel %vm775, %v11722, 0.0
      %11759 = vadd.xlane.f32.xlu0 %v11758
      %v11760 = vpop.xlane.xlu0 %11759
      %v11761 = vsel %vm775, %v11723, 0.0
      %11762 = vadd.xlane.f32.xlu0 %v11761
      %v11763 = vpop.xlane.xlu0 %11762
      %v11764 = vsel %vm775, %v11724, 0.0
      %11765 = vadd.xlane.f32.xlu0 %v11764
      %v11766 = vpop.xlane.xlu0 %11765
      %v11767 = vsel %vm775, %v11725, 0.0
      %11768 = vadd.xlane.f32.xlu0 %v11767
      %v11769 = vpop.xlane.xlu0 %11768
      %v11770 = vsel %vm775, %v11726, 0.0
      %11771 = vadd.xlane.f32.xlu0 %v11770
      %v11772 = vpop.xlane.xlu0 %11771
      %v11773 = vsel %vm775, %v11727, 0.0
      %11774 = vadd.xlane.f32.xlu0 %v11773
      %v11775 = vpop.xlane.xlu0 %11774
      %v11776 = vsel %vm775, %v11728, 0.0
      %11777 = vadd.xlane.f32.xlu0 %v11776
      %v11778 = vpop.xlane.xlu0 %11777
      %v11779 = vmul.f32 %v11733, %v824
      %v11780 = vmul.f32 %v11736, %v824
      %v11781 = vmul.f32 %v11739, %v824
      %v11782 = vmul.f32 %v11742, %v824
      %v11783 = vmul.f32 %v11745, %v824
      %v11784 = vmul.f32 %v11748, %v824
      %v11785 = vmul.f32 %v11751, %v824
      %v11786 = vmul.f32 %v11754, %v824
      %v11787 = vmul.f32 %v11757, %v824
      %v11788 = vmul.f32 %v11760, %v824
      %v11789 = vmul.f32 %v11763, %v824
      %v11790 = vmul.f32 %v11766, %v824
      %v11791 = vmul.f32 %v11769, %v824
      %v11792 = vmul.f32 %v11772, %v824
      %v11793 = vmul.f32 %v11775, %v824
      %v11794 = vmul.f32 %v11778, %v824
      %v11795 = vsub.f32 %v11713, %v11779
      %v11796 = vsub.f32 %v11714, %v11780
      %v11797 = vsub.f32 %v11715, %v11781
      %v11798 = vsub.f32 %v11716, %v11782
      %v11799 = vsub.f32 %v11717, %v11783
      %v11800 = vsub.f32 %v11718, %v11784
      %v11801 = vsub.f32 %v11719, %v11785
      %v11802 = vsub.f32 %v11720, %v11786
      %v11803 = vsub.f32 %v11721, %v11787
      %v11804 = vsub.f32 %v11722, %v11788
      %v11805 = vsub.f32 %v11723, %v11789
      %v11806 = vsub.f32 %v11724, %v11790
      %v11807 = vsub.f32 %v11725, %v11791
      %v11808 = vsub.f32 %v11726, %v11792
      %v11809 = vsub.f32 %v11727, %v11793
      %v11810 = vsub.f32 %v11728, %v11794
      %v11811 = vmul.f32 %v11795, %v11795
      %v11812 = vmul.f32 %v11796, %v11796
      %v11813 = vmul.f32 %v11797, %v11797
      %v11814 = vmul.f32 %v11798, %v11798
      %v11815 = vmul.f32 %v11799, %v11799
      %v11816 = vmul.f32 %v11800, %v11800
      %v11817 = vmul.f32 %v11801, %v11801
      %v11818 = vmul.f32 %v11802, %v11802
      %v11819 = vmul.f32 %v11803, %v11803
      %v11820 = vmul.f32 %v11804, %v11804
      %v11821 = vmul.f32 %v11805, %v11805
      %v11822 = vmul.f32 %v11806, %v11806
      %v11823 = vmul.f32 %v11807, %v11807
      %v11824 = vmul.f32 %v11808, %v11808
      %v11825 = vmul.f32 %v11809, %v11809
      %v11826 = vmul.f32 %v11810, %v11810
      %v11827 = vsel %vm775, %v11811, 0.0
      %11828 = vadd.xlane.f32.xlu0 %v11827
      %v11829 = vpop.xlane.xlu0 %11828
      %v11830 = vsel %vm775, %v11812, 0.0
      %11831 = vadd.xlane.f32.xlu0 %v11830
      %v11832 = vpop.xlane.xlu0 %11831
      %v11833 = vsel %vm775, %v11813, 0.0
      %11834 = vadd.xlane.f32.xlu0 %v11833
      %v11835 = vpop.xlane.xlu0 %11834
      %v11836 = vsel %vm775, %v11814, 0.0
      %11837 = vadd.xlane.f32.xlu0 %v11836
      %v11838 = vpop.xlane.xlu0 %11837
      %v11839 = vsel %vm775, %v11815, 0.0
      %11840 = vadd.xlane.f32.xlu0 %v11839
      %v11841 = vpop.xlane.xlu0 %11840
      %v11842 = vsel %vm775, %v11816, 0.0
      %11843 = vadd.xlane.f32.xlu0 %v11842
      %v11844 = vpop.xlane.xlu0 %11843
      %v11845 = vsel %vm775, %v11817, 0.0
      %11846 = vadd.xlane.f32.xlu0 %v11845
      %v11847 = vpop.xlane.xlu0 %11846
      %v11848 = vsel %vm775, %v11818, 0.0
      %11849 = vadd.xlane.f32.xlu0 %v11848
      %v11850 = vpop.xlane.xlu0 %11849
      %v11851 = vsel %vm775, %v11819, 0.0
      %11852 = vadd.xlane.f32.xlu0 %v11851
      %v11853 = vpop.xlane.xlu0 %11852
      %v11854 = vsel %vm775, %v11820, 0.0
      %11855 = vadd.xlane.f32.xlu0 %v11854
      %v11856 = vpop.xlane.xlu0 %11855
      %v11857 = vsel %vm775, %v11821, 0.0
      %11858 = vadd.xlane.f32.xlu0 %v11857
      %v11859 = vpop.xlane.xlu0 %11858
      %v11860 = vsel %vm775, %v11822, 0.0
      %11861 = vadd.xlane.f32.xlu0 %v11860
      %v11862 = vpop.xlane.xlu0 %11861
      %v11863 = vsel %vm775, %v11823, 0.0
      %11864 = vadd.xlane.f32.xlu0 %v11863
      %v11865 = vpop.xlane.xlu0 %11864
      %v11866 = vsel %vm775, %v11824, 0.0
      %11867 = vadd.xlane.f32.xlu0 %v11866
      %v11868 = vpop.xlane.xlu0 %11867
      %v11869 = vsel %vm775, %v11825, 0.0
      %11870 = vadd.xlane.f32.xlu0 %v11869
      %v11871 = vpop.xlane.xlu0 %11870
      %v11872 = vsel %vm775, %v11826, 0.0
      %11873 = vadd.xlane.f32.xlu0 %v11872
      %v11874 = vpop.xlane.xlu0 %11873
      %v11875 = vmul.f32 %v11829, %v824
      %v11876 = vmul.f32 %v11832, %v824
      %v11877 = vmul.f32 %v11835, %v824
      %v11878 = vmul.f32 %v11838, %v824
      %v11879 = vmul.f32 %v11841, %v824
      %v11880 = vmul.f32 %v11844, %v824
      %v11881 = vmul.f32 %v11847, %v824
      %v11882 = vmul.f32 %v11850, %v824
      %v11883 = vmul.f32 %v11853, %v824
      %v11884 = vmul.f32 %v11856, %v824
      %v11885 = vmul.f32 %v11859, %v824
      %v11886 = vmul.f32 %v11862, %v824
      %v11887 = vmul.f32 %v11865, %v824
      %v11888 = vmul.f32 %v11868, %v824
      %v11889 = vmul.f32 %v11871, %v824
      %v11890 = vmul.f32 %v11874, %v824
      %v11891 = vadd.f32 %v11875, 1e-05
      %v11892 = vadd.f32 %v11876, 1e-05
      %v11893 = vadd.f32 %v11877, 1e-05
      %v11894 = vadd.f32 %v11878, 1e-05
      %v11895 = vadd.f32 %v11879, 1e-05
      %v11896 = vadd.f32 %v11880, 1e-05
      %v11897 = vadd.f32 %v11881, 1e-05
      %v11898 = vadd.f32 %v11882, 1e-05
      %v11899 = vadd.f32 %v11883, 1e-05
      %v11900 = vadd.f32 %v11884, 1e-05
      %v11901 = vadd.f32 %v11885, 1e-05
      %v11902 = vadd.f32 %v11886, 1e-05
      %v11903 = vadd.f32 %v11887, 1e-05
      %v11904 = vadd.f32 %v11888, 1e-05
      %v11905 = vadd.f32 %v11889, 1e-05
      %v11906 = vadd.f32 %v11890, 1e-05
      %v11907 = vrsqrt.pop %v11891
      %v11908 = vrsqrt.pop %v11892
      %v11909 = vrsqrt.pop %v11893
      %v11910 = vrsqrt.pop %v11894
      %v11911 = vrsqrt.pop %v11895
      %v11912 = vrsqrt.pop %v11896
      %v11913 = vrsqrt.pop %v11897
      %v11914 = vrsqrt.pop %v11898
      %v11915 = vrsqrt.pop %v11899
      %v11916 = vrsqrt.pop %v11900
      %v11917 = vrsqrt.pop %v11901
      %v11918 = vrsqrt.pop %v11902
      %v11919 = vrsqrt.pop %v11903
      %v11920 = vrsqrt.pop %v11904
      %v11921 = vrsqrt.pop %v11905
      %v11922 = vrsqrt.pop %v11906
      %v11923 = vmul.f32 %v11795, %v11907
      %v11924 = vmul.f32 %v11796, %v11908
      %v11925 = vmul.f32 %v11797, %v11909
      %v11926 = vmul.f32 %v11798, %v11910
      %v11927 = vmul.f32 %v11799, %v11911
      %v11928 = vmul.f32 %v11800, %v11912
      %v11929 = vmul.f32 %v11801, %v11913
      %v11930 = vmul.f32 %v11802, %v11914
      %v11931 = vmul.f32 %v11803, %v11915
      %v11932 = vmul.f32 %v11804, %v11916
      %v11933 = vmul.f32 %v11805, %v11917
      %v11934 = vmul.f32 %v11806, %v11918
      %v11935 = vmul.f32 %v11807, %v11919
      %v11936 = vmul.f32 %v11808, %v11920
      %v11937 = vmul.f32 %v11809, %v11921
      %v11938 = vmul.f32 %v11810, %v11922
      %v11940 = vlaneseq
      %v11941 = vshrl.u32 %v11940, 7
      %v11942 = vsub.s32 0, %v11941
      %v11943 = vrot.slane %v11729, %v11942
      %v11945 = vmul.f32 %v11923, %v11943
      %v11946 = vmul.f32 %v11924, %v11943
      %v11947 = vmul.f32 %v11925, %v11943
      %v11948 = vmul.f32 %v11926, %v11943
      %v11949 = vmul.f32 %v11927, %v11943
      %v11950 = vmul.f32 %v11928, %v11943
      %v11951 = vmul.f32 %v11929, %v11943
      %v11952 = vmul.f32 %v11930, %v11943
      %v11953 = vmul.f32 %v11931, %v11943
      %v11954 = vmul.f32 %v11932, %v11943
      %v11955 = vmul.f32 %v11933, %v11943
      %v11956 = vmul.f32 %v11934, %v11943
      %v11957 = vmul.f32 %v11935, %v11943
      %v11958 = vmul.f32 %v11936, %v11943
      %v11959 = vmul.f32 %v11937, %v11943
      %v11960 = vmul.f32 %v11938, %v11943
      %v11962 = vlaneseq
      %v11963 = vshrl.u32 %v11962, 7
      %v11964 = vsub.s32 0, %v11963
      %v11965 = vrot.slane %v11730, %v11964
      %v11967 = vadd.f32 %v11945, %v11965
      %v11968 = vadd.f32 %v11946, %v11965
      %v11969 = vadd.f32 %v11947, %v11965
      %v11970 = vadd.f32 %v11948, %v11965
      %v11971 = vadd.f32 %v11949, %v11965
      %v11972 = vadd.f32 %v11950, %v11965
      %v11973 = vadd.f32 %v11951, %v11965
      %v11974 = vadd.f32 %v11952, %v11965
      %v11975 = vadd.f32 %v11953, %v11965
      %v11976 = vadd.f32 %v11954, %v11965
      %v11977 = vadd.f32 %v11955, %v11965
      %v11978 = vadd.f32 %v11956, %v11965
      %v11979 = vadd.f32 %v11957, %v11965
      %v11980 = vadd.f32 %v11958, %v11965
      %v11981 = vadd.f32 %v11959, %v11965
      %v11982 = vadd.f32 %v11960, %v11965
      %v11983 = vpack.c.bf16 %v11968, %v11967
      %v11984 = vpack.c.bf16 %v11970, %v11969
      %v11985 = vpack.c.bf16 %v11972, %v11971
      %v11986 = vpack.c.bf16 %v11974, %v11973
      %v11987 = vpack.c.bf16 %v11976, %v11975
      %v11988 = vpack.c.bf16 %v11978, %v11977
      %v11989 = vpack.c.bf16 %v11980, %v11979
      %v11990 = vpack.c.bf16 %v11982, %v11981
      %v11991 = vld [vmem:[%s682] sm:$0xf]
      %v11992 = vld [vmem:[%s682 + $0x4] sm:$0xf]
      %v11993 = vld [vmem:[%s682 + $0x8] sm:$0xf]
      %v11994 = vld [vmem:[%s682 + $0xc] sm:$0xf]
      %v11995 = vld [vmem:[%s685] sm:$0x1]
      %v11997 = vlaneseq
      %v11998 = vshrl.u32 %v11997, 7
      %v11999 = vsub.s32 0, %v11998
      %v12000 = vrot.slane %v11995, %v11999
      %v12006 = vunpack.c.l.b16 %v11991
      %v12007 = vunpack.c.l.b16 %v11992
      %v12008 = vunpack.c.l.b16 %v11993
      %v12009 = vunpack.c.l.b16 %v11994
      %v12010 = vpack.c.b16 %v12007, %v12006
      %v12011 = vpack.c.b16 %v12009, %v12008
      %v12015 = vsel %vm775, %v11983, 0
      %v12018 = vsel %vm775, %v11984, 0
      %v12021 = vsel %vm775, %v11985, 0
      %v12024 = vsel %vm775, %v11986, 0
      %v12027 = vsel %vm775, %v11987, 0
      %v12030 = vsel %vm775, %v11988, 0
      %v12033 = vsel %vm775, %v11989, 0
      %v12036 = vsel %vm775, %v11990, 0
      %12038 = vmatprep.subr.bf16.mxu0 0
      %12039 = vmatpush1.bf16.msra.mxu0 %v12010
      %12040 = vmatprep.subr.bf16.mxu0 0
      %12041 = vmatpush1.bf16.msra.mxu0 %v12011
      %12042 = vmatprep.subr.bf16.mxu0 0
      %12043 = vmatpush1.bf16.msra.mxu0 0
      %12044 = vmatprep.subr.bf16.mxu0 0
      %12045 = vmatpush1.bf16.msra.mxu0 0
      %12046 = vmatprep.subr.bf16.mxu0 0
      %12047 = vmatpush1.bf16.msra.mxu0 0
      %12048 = vmatprep.subr.bf16.mxu0 0
      %12049 = vmatpush1.bf16.msra.mxu0 0
      %12050 = vmatprep.subr.bf16.mxu0 0
      %12051 = vmatpush1.bf16.msra.mxu0 0
      %12052 = vmatprep.subr.bf16.mxu0 0
      %12053 = vmatpush1.bf16.msra.mxu0 0
      %12054 = vmatprep.subr.bf16.mxu0 0
      %12055 = vmatpush1.bf16.msra.mxu0 0
      %12056 = vmatprep.subr.bf16.mxu0 0
      %12057 = vmatpush1.bf16.msra.mxu0 0
      %12058 = vmatprep.subr.bf16.mxu0 0
      %12059 = vmatpush1.bf16.msra.mxu0 0
      %12060 = vmatprep.subr.bf16.mxu0 0
      %12061 = vmatpush1.bf16.msra.mxu0 0
      %12062 = vmatprep.subr.bf16.mxu0 0
      %12063 = vmatpush1.bf16.msra.mxu0 0
      %12064 = vmatprep.subr.bf16.mxu0 0
      %12065 = vmatpush1.bf16.msra.mxu0 0
      %12066 = vmatprep.subr.bf16.mxu0 0
      %12067 = vmatpush1.bf16.msra.mxu0 0
      %12068 = vmatprep.subr.bf16.mxu0 0
      %12069 = vmatpush1.bf16.msra.mxu0 0
      %12070 = vmatprep.mubr.bf16.mxu0 0
      %12071 = vmatmul.mubr.bf16.gmra.mrb[0].mxu0 %v12015
      %v12072 = vpop.f32.mrb[0].mxu0
      %v12073 = vadd.f32 %v12000, %v12072
      %v12074 = vpop.f32.mrb[0].mxu0
      %v12075 = vpop.f32.mrb[0].mxu0
      %v12076 = vadd.f32 %v12000, %v12075
      %v12077 = vpop.f32.mrb[0].mxu0
      %12078 = vmatprep.mubr.bf16.mxu0 0
      %12079 = vmatmul.mubr.bf16.gmra.mrb[0].mxu0 %v12018
      %v12080 = vpop.f32.mrb[0].mxu0
      %v12081 = vadd.f32 %v12000, %v12080
      %v12082 = vpop.f32.mrb[0].mxu0
      %v12083 = vpop.f32.mrb[0].mxu0
      %v12084 = vadd.f32 %v12000, %v12083
      %v12085 = vpop.f32.mrb[0].mxu0
      %12086 = vmatprep.mubr.bf16.mxu0 0
      %12087 = vmatmul.mubr.bf16.gmra.mrb[0].mxu0 %v12021
      %v12088 = vpop.f32.mrb[0].mxu0
      %v12089 = vadd.f32 %v12000, %v12088
      %v12090 = vpop.f32.mrb[0].mxu0
      %v12091 = vpop.f32.mrb[0].mxu0
      %v12092 = vadd.f32 %v12000, %v12091
      %v12093 = vpop.f32.mrb[0].mxu0
      %12094 = vmatprep.mubr.bf16.mxu0 0
      %12095 = vmatmul.mubr.bf16.gmra.mrb[0].mxu0 %v12024
      %v12096 = vpop.f32.mrb[0].mxu0
      %v12097 = vadd.f32 %v12000, %v12096
      %v12098 = vpop.f32.mrb[0].mxu0
      %v12099 = vpop.f32.mrb[0].mxu0
      %v12100 = vadd.f32 %v12000, %v12099
      %v12101 = vpop.f32.mrb[0].mxu0
      %12102 = vmatprep.mubr.bf16.mxu0 0
      %12103 = vmatmul.mubr.bf16.gmra.mrb[0].mxu0 %v12027
      %v12104 = vpop.f32.mrb[0].mxu0
      %v12105 = vadd.f32 %v12000, %v12104
      %v12106 = vpop.f32.mrb[0].mxu0
      %v12107 = vpop.f32.mrb[0].mxu0
      %v12108 = vadd.f32 %v12000, %v12107
      %v12109 = vpop.f32.mrb[0].mxu0
      %12110 = vmatprep.mubr.bf16.mxu0 0
      %12111 = vmatmul.mubr.bf16.gmra.mrb[0].mxu0 %v12030
      %v12112 = vpop.f32.mrb[0].mxu0
      %v12113 = vadd.f32 %v12000, %v12112
      %v12114 = vpop.f32.mrb[0].mxu0
      %v12115 = vpop.f32.mrb[0].mxu0
      %v12116 = vadd.f32 %v12000, %v12115
      %v12117 = vpop.f32.mrb[0].mxu0
      %12118 = vmatprep.mubr.bf16.mxu0 0
      %12119 = vmatmul.mubr.bf16.gmra.mrb[0].mxu0 %v12033
      %v12120 = vpop.f32.mrb[0].mxu0
      %v12121 = vadd.f32 %v12000, %v12120
      %v12122 = vpop.f32.mrb[0].mxu0
      %v12123 = vpop.f32.mrb[0].mxu0
      %v12124 = vadd.f32 %v12000, %v12123
      %v12125 = vpop.f32.mrb[0].mxu0
      %12126 = vmatprep.mubr.bf16.mxu0 0
      %12127 = vmatmul.mubr.bf16.gmra.mrb[0].mxu0 %v12036
      %v12128 = vpop.f32.mrb[0].mxu0
      %v12129 = vadd.f32 %v12000, %v12128
      %v12130 = vpop.f32.mrb[0].mxu0
      %v12131 = vpop.f32.mrb[0].mxu0
      %v12132 = vadd.f32 %v12000, %v12131
      %v12133 = vpop.f32.mrb[0].mxu0
      %12134 = vdwg.mxu0
      %v12135 = vmul.f32 %v12073, 1.702
      %v12136 = vmul.f32 %v12076, 1.702
      %v12137 = vmul.f32 %v12081, 1.702
      %v12138 = vmul.f32 %v12084, 1.702
      %v12139 = vmul.f32 %v12089, 1.702
      %v12140 = vmul.f32 %v12092, 1.702
      %v12141 = vmul.f32 %v12097, 1.702
      %v12142 = vmul.f32 %v12100, 1.702
      %v12143 = vmul.f32 %v12105, 1.702
      %v12144 = vmul.f32 %v12108, 1.702
      %v12145 = vmul.f32 %v12113, 1.702
      %v12146 = vmul.f32 %v12116, 1.702
      %v12147 = vmul.f32 %v12121, 1.702
      %v12148 = vmul.f32 %v12124, 1.702
      %v12149 = vmul.f32 %v12129, 1.702
      %v12150 = vmul.f32 %v12132, 1.702
      %v12151 = vxor.u32 %v12135, 2147483648
      %v12152 = vxor.u32 %v12136, 2147483648
      %v12153 = vxor.u32 %v12137, 2147483648
      %v12154 = vxor.u32 %v12138, 2147483648
      %v12155 = vxor.u32 %v12139, 2147483648
      %v12156 = vxor.u32 %v12140, 2147483648
      %v12157 = vxor.u32 %v12141, 2147483648
      %v12158 = vxor.u32 %v12142, 2147483648
      %v12159 = vxor.u32 %v12143, 2147483648
      %v12160 = vxor.u32 %v12144, 2147483648
      %v12161 = vxor.u32 %v12145, 2147483648
      %v12162 = vxor.u32 %v12146, 2147483648
      %v12163 = vxor.u32 %v12147, 2147483648
      %v12164 = vxor.u32 %v12148, 2147483648
      %v12165 = vxor.u32 %v12149, 2147483648
      %v12166 = vxor.u32 %v12150, 2147483648
      %v12167 = vmul.f32 %v12151, 1.442695
      %v12168 = vpow.pop %v12167
      %v12169 = vmul.f32 %v12152, 1.442695
      %v12170 = vpow.pop %v12169
      %v12171 = vmul.f32 %v12153, 1.442695
      %v12172 = vpow.pop %v12171
      %v12173 = vmul.f32 %v12154, 1.442695
      %v12174 = vpow.pop %v12173
      %v12175 = vmul.f32 %v12155, 1.442695
      %v12176 = vpow.pop %v12175
      %v12177 = vmul.f32 %v12156, 1.442695
      %v12178 = vpow.pop %v12177
      %v12179 = vmul.f32 %v12157, 1.442695
      %v12180 = vpow.pop %v12179
      %v12181 = vmul.f32 %v12158, 1.442695
      %v12182 = vpow.pop %v12181
      %v12183 = vmul.f32 %v12159, 1.442695
      %v12184 = vpow.pop %v12183
      %v12185 = vmul.f32 %v12160, 1.442695
      %v12186 = vpow.pop %v12185
      %v12187 = vmul.f32 %v12161, 1.442695
      %v12188 = vpow.pop %v12187
      %v12189 = vmul.f32 %v12162, 1.442695
      %v12190 = vpow.pop %v12189
      %v12191 = vmul.f32 %v12163, 1.442695
      %v12192 = vpow.pop %v12191
      %v12193 = vmul.f32 %v12164, 1.442695
      %v12194 = vpow.pop %v12193
      %v12195 = vmul.f32 %v12165, 1.442695
      %v12196 = vpow.pop %v12195
      %v12197 = vmul.f32 %v12166, 1.442695
      %v12198 = vpow.pop %v12197
      %v12199 = vadd.f32 %v12168, 1.0
      %v12200 = vadd.f32 %v12170, 1.0
      %v12201 = vadd.f32 %v12172, 1.0
      %v12202 = vadd.f32 %v12174, 1.0
      %v12203 = vadd.f32 %v12176, 1.0
      %v12204 = vadd.f32 %v12178, 1.0
      %v12205 = vadd.f32 %v12180, 1.0
      %v12206 = vadd.f32 %v12182, 1.0
      %v12207 = vadd.f32 %v12184, 1.0
      %v12208 = vadd.f32 %v12186, 1.0
      %v12209 = vadd.f32 %v12188, 1.0
      %v12210 = vadd.f32 %v12190, 1.0
      %v12211 = vadd.f32 %v12192, 1.0
      %v12212 = vadd.f32 %v12194, 1.0
      %v12213 = vadd.f32 %v12196, 1.0
      %v12214 = vadd.f32 %v12198, 1.0
      %v12215 = vrcp.pop %v12199
      %v12216 = vmul.f32 1.0, %v12215
      %v12217 = vrcp.pop %v12200
      %v12218 = vmul.f32 1.0, %v12217
      %v12219 = vrcp.pop %v12201
      %v12220 = vmul.f32 1.0, %v12219
      %v12221 = vrcp.pop %v12202
      %v12222 = vmul.f32 1.0, %v12221
      %v12223 = vrcp.pop %v12203
      %v12224 = vmul.f32 1.0, %v12223
      %v12225 = vrcp.pop %v12204
      %v12226 = vmul.f32 1.0, %v12225
      %v12227 = vrcp.pop %v12205
      %v12228 = vmul.f32 1.0, %v12227
      %v12229 = vrcp.pop %v12206
      %v12230 = vmul.f32 1.0, %v12229
      %v12231 = vrcp.pop %v12207
      %v12232 = vmul.f32 1.0, %v12231
      %v12233 = vrcp.pop %v12208
      %v12234 = vmul.f32 1.0, %v12233
      %v12235 = vrcp.pop %v12209
      %v12236 = vmul.f32 1.0, %v12235
      %v12237 = vrcp.pop %v12210
      %v12238 = vmul.f32 1.0, %v12237
      %v12239 = vrcp.pop %v12211
      %v12240 = vmul.f32 1.0, %v12239
      %v12241 = vrcp.pop %v12212
      %v12242 = vmul.f32 1.0, %v12241
      %v12243 = vrcp.pop %v12213
      %v12244 = vmul.f32 1.0, %v12243
      %v12245 = vrcp.pop %v12214
      %v12246 = vmul.f32 1.0, %v12245
      %v12247 = vmul.f32 %v12073, %v12216
      %v12248 = vmul.f32 %v12076, %v12218
      %v12249 = vmul.f32 %v12081, %v12220
      %v12250 = vmul.f32 %v12084, %v12222
      %v12251 = vmul.f32 %v12089, %v12224
      %v12252 = vmul.f32 %v12092, %v12226
      %v12253 = vmul.f32 %v12097, %v12228
      %v12254 = vmul.f32 %v12100, %v12230
      %v12255 = vmul.f32 %v12105, %v12232
      %v12256 = vmul.f32 %v12108, %v12234
      %v12257 = vmul.f32 %v12113, %v12236
      %v12258 = vmul.f32 %v12116, %v12238
      %v12259 = vmul.f32 %v12121, %v12240
      %v12260 = vmul.f32 %v12124, %v12242
      %v12261 = vmul.f32 %v12129, %v12244
      %v12262 = vmul.f32 %v12132, %v12246
      %v12263 = vpack.c.bf16 %v12248, %v12247
      %v12264 = vpack.c.bf16 %v12250, %v12249
      %v12265 = vpack.c.bf16 %v12252, %v12251
      %v12266 = vpack.c.bf16 %v12254, %v12253
      %v12267 = vpack.c.bf16 %v12256, %v12255
      %v12268 = vpack.c.bf16 %v12258, %v12257
      %v12269 = vpack.c.bf16 %v12260, %v12259
      %v12270 = vpack.c.bf16 %v12262, %v12261
      %v12271 = vld [vmem:[%s690] sm:$0xf]
      %v12272 = vld [vmem:[%s690 + $0x4] sm:$0xf]
      %v12273 = vld [vmem:[%s690 + $0x8] sm:$0xf]
      %v12274 = vld [vmem:[%s690 + $0xc] sm:$0xf]
      %v12275 = vld [vmem:[%s690 + $0x10] sm:$0xf]
      %v12276 = vld [vmem:[%s690 + $0x14] sm:$0xf]
      %v12277 = vld [vmem:[%s690 + $0x18] sm:$0xf]
      %v12278 = vld [vmem:[%s690 + $0x1c] sm:$0xf]
      %v12279 = vld [vmem:[%s690 + $0x20] sm:$0xf]
      %v12280 = vld [vmem:[%s690 + $0x24] sm:$0xf]
      %v12281 = vld [vmem:[%s690 + $0x28] sm:$0xf]
      %v12282 = vld [vmem:[%s690 + $0x2c] sm:$0xf]
      %v12283 = vld [vmem:[%s690 + $0x30] sm:$0xf]
      %v12284 = vld [vmem:[%s690 + $0x34] sm:$0xf]
      %v12285 = vld [vmem:[%s690 + $0x38] sm:$0xf]
      %v12286 = vld [vmem:[%s690 + $0x3c] sm:$0xf]
      %v12287 = vld [vmem:[%s693] sm:$0x1]
      %v12289 = vlaneseq
      %v12290 = vshrl.u32 %v12289, 7
      %v12291 = vsub.s32 0, %v12290
      %v12292 = vrot.slane %v12287, %v12291
      %v12310 = vunpack.c.l.b16 %v12271
      %v12311 = vunpack.c.l.b16 %v12272
      %v12312 = vunpack.c.l.b16 %v12273
      %v12313 = vunpack.c.l.b16 %v12274
      %v12314 = vunpack.c.l.b16 %v12275
      %v12315 = vunpack.c.l.b16 %v12276
      %v12316 = vunpack.c.l.b16 %v12277
      %v12317 = vunpack.c.l.b16 %v12278
      %v12318 = vunpack.c.l.b16 %v12279
      %v12319 = vunpack.c.l.b16 %v12280
      %v12320 = vunpack.c.l.b16 %v12281
      %v12321 = vunpack.c.l.b16 %v12282
      %v12322 = vunpack.c.l.b16 %v12283
      %v12323 = vunpack.c.l.b16 %v12284
      %v12324 = vunpack.c.l.b16 %v12285
      %v12325 = vunpack.c.l.b16 %v12286
      %v12326 = vpack.c.b16 %v12311, %v12310
      %v12327 = vpack.c.b16 %v12313, %v12312
      %v12328 = vpack.c.b16 %v12315, %v12314
      %v12329 = vpack.c.b16 %v12317, %v12316
      %v12330 = vpack.c.b16 %v12319, %v12318
      %v12331 = vpack.c.b16 %v12321, %v12320
      %v12332 = vpack.c.b16 %v12323, %v12322
      %v12333 = vpack.c.b16 %v12325, %v12324
      %12342 = vmatprep.subr.bf16.mxu0 0
      %12343 = vmatpush1.bf16.msra.mxu0 %v12326
      %12344 = vmatprep.subr.bf16.mxu0 0
      %12345 = vmatpush1.bf16.msra.mxu0 %v12327
      %12346 = vmatprep.subr.bf16.mxu0 0
      %12347 = vmatpush1.bf16.msra.mxu0 %v12328
      %12348 = vmatprep.subr.bf16.mxu0 0
      %12349 = vmatpush1.bf16.msra.mxu0 %v12329
      %12350 = vmatprep.subr.bf16.mxu0 0
      %12351 = vmatpush1.bf16.msra.mxu0 %v12330
      %12352 = vmatprep.subr.bf16.mxu0 0
      %12353 = vmatpush1.bf16.msra.mxu0 %v12331
      %12354 = vmatprep.subr.bf16.mxu0 0
      %12355 = vmatpush1.bf16.msra.mxu0 %v12332
      %12356 = vmatprep.subr.bf16.mxu0 0
      %12357 = vmatpush1.bf16.msra.mxu0 %v12333
      %12358 = vmatprep.subr.bf16.mxu0 0
      %12359 = vmatpush1.bf16.msra.mxu0 0
      %12360 = vmatprep.subr.bf16.mxu0 0
      %12361 = vmatpush1.bf16.msra.mxu0 0
      %12362 = vmatprep.subr.bf16.mxu0 0
      %12363 = vmatpush1.bf16.msra.mxu0 0
      %12364 = vmatprep.subr.bf16.mxu0 0
      %12365 = vmatpush1.bf16.msra.mxu0 0
      %12366 = vmatprep.subr.bf16.mxu0 0
      %12367 = vmatpush1.bf16.msra.mxu0 0
      %12368 = vmatprep.subr.bf16.mxu0 0
      %12369 = vmatpush1.bf16.msra.mxu0 0
      %12370 = vmatprep.subr.bf16.mxu0 0
      %12371 = vmatpush1.bf16.msra.mxu0 0
      %12372 = vmatprep.subr.bf16.mxu0 0
      %12373 = vmatpush1.bf16.msra.mxu0 0
      %12374 = vmatprep.mubr.bf16.mxu0 0
      %12375 = vmatmul.mubr.bf16.gmra.mrb[0].mxu0 %v12263
      %v12376 = vpop.f32.mrb[0].mxu0
      %v12377 = vadd.f32 %v12292, %v12376
      %v12378 = vpop.f32.mrb[0].mxu0
      %v12379 = vpop.f32.mrb[0].mxu0
      %v12380 = vadd.f32 %v12292, %v12379
      %v12381 = vpop.f32.mrb[0].mxu0
      %12382 = vmatprep.mubr.bf16.mxu0 0
      %12383 = vmatmul.mubr.bf16.gmra.mrb[0].mxu0 %v12264
      %v12384 = vpop.f32.mrb[0].mxu0
      %v12385 = vadd.f32 %v12292, %v12384
      %v12386 = vpop.f32.mrb[0].mxu0
      %v12387 = vpop.f32.mrb[0].mxu0
      %v12388 = vadd.f32 %v12292, %v12387
      %v12389 = vpop.f32.mrb[0].mxu0
      %12390 = vmatprep.mubr.bf16.mxu0 0
      %12391 = vmatmul.mubr.bf16.gmra.mrb[0].mxu0 %v12265
      %v12392 = vpop.f32.mrb[0].mxu0
      %v12393 = vadd.f32 %v12292, %v12392
      %v12394 = vpop.f32.mrb[0].mxu0
      %v12395 = vpop.f32.mrb[0].mxu0
      %v12396 = vadd.f32 %v12292, %v12395
      %v12397 = vpop.f32.mrb[0].mxu0
      %12398 = vmatprep.mubr.bf16.mxu0 0
      %12399 = vmatmul.mubr.bf16.gmra.mrb[0].mxu0 %v12266
      %v12400 = vpop.f32.mrb[0].mxu0
      %v12401 = vadd.f32 %v12292, %v12400
      %v12402 = vpop.f32.mrb[0].mxu0
      %v12403 = vpop.f32.mrb[0].mxu0
      %v12404 = vadd.f32 %v12292, %v12403
      %v12405 = vpop.f32.mrb[0].mxu0
      %12406 = vmatprep.mubr.bf16.mxu0 0
      %12407 = vmatmul.mubr.bf16.gmra.mrb[0].mxu0 %v12267
      %v12408 = vpop.f32.mrb[0].mxu0
      %v12409 = vadd.f32 %v12292, %v12408
      %v12410 = vpop.f32.mrb[0].mxu0
      %v12411 = vpop.f32.mrb[0].mxu0
      %v12412 = vadd.f32 %v12292, %v12411
      %v12413 = vpop.f32.mrb[0].mxu0
      %12414 = vmatprep.mubr.bf16.mxu0 0
      %12415 = vmatmul.mubr.bf16.gmra.mrb[0].mxu0 %v12268
      %v12416 = vpop.f32.mrb[0].mxu0
      %v12417 = vadd.f32 %v12292, %v12416
      %v12418 = vpop.f32.mrb[0].mxu0
      %v12419 = vpop.f32.mrb[0].mxu0
      %v12420 = vadd.f32 %v12292, %v12419
      %v12421 = vpop.f32.mrb[0].mxu0
      %12422 = vmatprep.mubr.bf16.mxu0 0
      %12423 = vmatmul.mubr.bf16.gmra.mrb[0].mxu0 %v12269
      %v12424 = vpop.f32.mrb[0].mxu0
      %v12425 = vadd.f32 %v12292, %v12424
      %v12426 = vpop.f32.mrb[0].mxu0
      %v12427 = vpop.f32.mrb[0].mxu0
      %v12428 = vadd.f32 %v12292, %v12427
      %v12429 = vpop.f32.mrb[0].mxu0
      %12430 = vmatprep.mubr.bf16.mxu0 0
      %12431 = vmatmul.mubr.bf16.gmra.mrb[0].mxu0 %v12270
      %v12432 = vpop.f32.mrb[0].mxu0
      %v12433 = vadd.f32 %v12292, %v12432
      %v12434 = vpop.f32.mrb[0].mxu0
      %v12435 = vpop.f32.mrb[0].mxu0
      %v12436 = vadd.f32 %v12292, %v12435
      %v12437 = vpop.f32.mrb[0].mxu0
      %12438 = vdwg.mxu0
      %v12439 = vadd.f32 %v11713, %v12377
      %v12440 = vadd.f32 %v11714, %v12380
      %v12441 = vadd.f32 %v11715, %v12385
      %v12442 = vadd.f32 %v11716, %v12388
      %v12443 = vadd.f32 %v11717, %v12393
      %v12444 = vadd.f32 %v11718, %v12396
      %v12445 = vadd.f32 %v11719, %v12401
      %v12446 = vadd.f32 %v11720, %v12404
      %v12447 = vadd.f32 %v11721, %v12409
      %v12448 = vadd.f32 %v11722, %v12412
      %v12449 = vadd.f32 %v11723, %v12417
      %v12450 = vadd.f32 %v11724, %v12420
      %v12451 = vadd.f32 %v11725, %v12425
      %v12452 = vadd.f32 %v11726, %v12428
      %v12453 = vadd.f32 %v11727, %v12433
      %v12454 = vadd.f32 %v11728, %v12436
      %12455 = vst.msk [vmem:[%s756] sm:$0xff] %vm775, %v12439
      %12456 = vst.msk [vmem:[%s756 + $0x8] sm:$0xff] %vm775, %v12440
      %12457 = vst.msk [vmem:[%s756 + $0x10] sm:$0xff] %vm775, %v12441
      %12458 = vst.msk [vmem:[%s756 + $0x18] sm:$0xff] %vm775, %v12442
      %12459 = vst.msk [vmem:[%s756 + $0x20] sm:$0xff] %vm775, %v12443
      %12460 = vst.msk [vmem:[%s756 + $0x28] sm:$0xff] %vm775, %v12444
      %12461 = vst.msk [vmem:[%s756 + $0x30] sm:$0xff] %vm775, %v12445
      %12462 = vst.msk [vmem:[%s756 + $0x38] sm:$0xff] %vm775, %v12446
      %12463 = vst.msk [vmem:[%s756 + $0x40] sm:$0xff] %vm775, %v12447
      %12464 = vst.msk [vmem:[%s756 + $0x48] sm:$0xff] %vm775, %v12448
      %12465 = vst.msk [vmem:[%s756 + $0x50] sm:$0xff] %vm775, %v12449
      %12466 = vst.msk [vmem:[%s756 + $0x58] sm:$0xff] %vm775, %v12450
      %12467 = vst.msk [vmem:[%s756 + $0x60] sm:$0xff] %vm775, %v12451
      %12468 = vst.msk [vmem:[%s756 + $0x68] sm:$0xff] %vm775, %v12452
      %12469 = vst.msk [vmem:[%s756 + $0x70] sm:$0xff] %vm775, %v12453
      %12470 = vst.msk [vmem:[%s756 + $0x78] sm:$0xff] %vm775, %v12454
      %p12471 = scmp.eq.s32.totalorder %s30, 1
      // Predicated region
      $region85: #{tpu_custom_call.1} parent=79 // pred_check
        %p12472 = pneg %p12471
      $region86: #{tpu_custom_call.1} parent=79 // pred_check_branch
        %12474 = sbr.rel (%p12472) target = $region88
      $region87: #{tpu_custom_call.1} parent=79 // pred_region
        %v12475 = vld [vmem:[%s13] sm:$0x1]
        %v12476 = vld [vmem:[%s14] sm:$0x1]
        %v12477 = vsel %vm775, %v12439, 0.0
        %12478 = vadd.xlane.f32.xlu0 %v12477
        %v12479 = vpop.xlane.xlu0 %12478
        %v12480 = vsel %vm775, %v12440, 0.0
        %12481 = vadd.xlane.f32.xlu0 %v12480
        %v12482 = vpop.xlane.xlu0 %12481
        %v12483 = vsel %vm775, %v12441, 0.0
        %12484 = vadd.xlane.f32.xlu0 %v12483
        %v12485 = vpop.xlane.xlu0 %12484
        %v12486 = vsel %vm775, %v12442, 0.0
        %12487 = vadd.xlane.f32.xlu0 %v12486
        %v12488 = vpop.xlane.xlu0 %12487
        %v12489 = vsel %vm775, %v12443, 0.0
        %12490 = vadd.xlane.f32.xlu0 %v12489
        %v12491 = vpop.xlane.xlu0 %12490
        %v12492 = vsel %vm775, %v12444, 0.0
        %12493 = vadd.xlane.f32.xlu0 %v12492
        %v12494 = vpop.xlane.xlu0 %12493
        %v12495 = vsel %vm775, %v12445, 0.0
        %12496 = vadd.xlane.f32.xlu0 %v12495
        %v12497 = vpop.xlane.xlu0 %12496
        %v12498 = vsel %vm775, %v12446, 0.0
        %12499 = vadd.xlane.f32.xlu0 %v12498
        %v12500 = vpop.xlane.xlu0 %12499
        %v12501 = vsel %vm775, %v12447, 0.0
        %12502 = vadd.xlane.f32.xlu0 %v12501
        %v12503 = vpop.xlane.xlu0 %12502
        %v12504 = vsel %vm775, %v12448, 0.0
        %12505 = vadd.xlane.f32.xlu0 %v12504
        %v12506 = vpop.xlane.xlu0 %12505
        %v12507 = vsel %vm775, %v12449, 0.0
        %12508 = vadd.xlane.f32.xlu0 %v12507
        %v12509 = vpop.xlane.xlu0 %12508
        %v12510 = vsel %vm775, %v12450, 0.0
        %12511 = vadd.xlane.f32.xlu0 %v12510
        %v12512 = vpop.xlane.xlu0 %12511
        %v12513 = vsel %vm775, %v12451, 0.0
        %12514 = vadd.xlane.f32.xlu0 %v12513
        %v12515 = vpop.xlane.xlu0 %12514
        %v12516 = vsel %vm775, %v12452, 0.0
        %12517 = vadd.xlane.f32.xlu0 %v12516
        %v12518 = vpop.xlane.xlu0 %12517
        %v12519 = vsel %vm775, %v12453, 0.0
        %12520 = vadd.xlane.f32.xlu0 %v12519
        %v12521 = vpop.xlane.xlu0 %12520
        %v12522 = vsel %vm775, %v12454, 0.0
        %12523 = vadd.xlane.f32.xlu0 %v12522
        %v12524 = vpop.xlane.xlu0 %12523
        %v12525 = vmul.f32 %v12479, %v824
        %v12526 = vmul.f32 %v12482, %v824
        %v12527 = vmul.f32 %v12485, %v824
        %v12528 = vmul.f32 %v12488, %v824
        %v12529 = vmul.f32 %v12491, %v824
        %v12530 = vmul.f32 %v12494, %v824
        %v12531 = vmul.f32 %v12497, %v824
        %v12532 = vmul.f32 %v12500, %v824
        %v12533 = vmul.f32 %v12503, %v824
        %v12534 = vmul.f32 %v12506, %v824
        %v12535 = vmul.f32 %v12509, %v824
        %v12536 = vmul.f32 %v12512, %v824
        %v12537 = vmul.f32 %v12515, %v824
        %v12538 = vmul.f32 %v12518, %v824
        %v12539 = vmul.f32 %v12521, %v824
        %v12540 = vmul.f32 %v12524, %v824
        %v12541 = vsub.f32 %v12439, %v12525
        %v12542 = vsub.f32 %v12440, %v12526
        %v12543 = vsub.f32 %v12441, %v12527
        %v12544 = vsub.f32 %v12442, %v12528
        %v12545 = vsub.f32 %v12443, %v12529
        %v12546 = vsub.f32 %v12444, %v12530
        %v12547 = vsub.f32 %v12445, %v12531
        %v12548 = vsub.f32 %v12446, %v12532
        %v12549 = vsub.f32 %v12447, %v12533
        %v12550 = vsub.f32 %v12448, %v12534
        %v12551 = vsub.f32 %v12449, %v12535
        %v12552 = vsub.f32 %v12450, %v12536
        %v12553 = vsub.f32 %v12451, %v12537
        %v12554 = vsub.f32 %v12452, %v12538
        %v12555 = vsub.f32 %v12453, %v12539
        %v12556 = vsub.f32 %v12454, %v12540
        %v12557 = vmul.f32 %v12541, %v12541
        %v12558 = vmul.f32 %v12542, %v12542
        %v12559 = vmul.f32 %v12543, %v12543
        %v12560 = vmul.f32 %v12544, %v12544
        %v12561 = vmul.f32 %v12545, %v12545
        %v12562 = vmul.f32 %v12546, %v12546
        %v12563 = vmul.f32 %v12547, %v12547
        %v12564 = vmul.f32 %v12548, %v12548
        %v12565 = vmul.f32 %v12549, %v12549
        %v12566 = vmul.f32 %v12550, %v12550
        %v12567 = vmul.f32 %v12551, %v12551
        %v12568 = vmul.f32 %v12552, %v12552
        %v12569 = vmul.f32 %v12553, %v12553
        %v12570 = vmul.f32 %v12554, %v12554
        %v12571 = vmul.f32 %v12555, %v12555
        %v12572 = vmul.f32 %v12556, %v12556
        %v12573 = vsel %vm775, %v12557, 0.0
        %12574 = vadd.xlane.f32.xlu0 %v12573
        %v12575 = vpop.xlane.xlu0 %12574
        %v12576 = vsel %vm775, %v12558, 0.0
        %12577 = vadd.xlane.f32.xlu0 %v12576
        %v12578 = vpop.xlane.xlu0 %12577
        %v12579 = vsel %vm775, %v12559, 0.0
        %12580 = vadd.xlane.f32.xlu0 %v12579
        %v12581 = vpop.xlane.xlu0 %12580
        %v12582 = vsel %vm775, %v12560, 0.0
        %12583 = vadd.xlane.f32.xlu0 %v12582
        %v12584 = vpop.xlane.xlu0 %12583
        %v12585 = vsel %vm775, %v12561, 0.0
        %12586 = vadd.xlane.f32.xlu0 %v12585
        %v12587 = vpop.xlane.xlu0 %12586
        %v12588 = vsel %vm775, %v12562, 0.0
        %12589 = vadd.xlane.f32.xlu0 %v12588
        %v12590 = vpop.xlane.xlu0 %12589
        %v12591 = vsel %vm775, %v12563, 0.0
        %12592 = vadd.xlane.f32.xlu0 %v12591
        %v12593 = vpop.xlane.xlu0 %12592
        %v12594 = vsel %vm775, %v12564, 0.0
        %12595 = vadd.xlane.f32.xlu0 %v12594
        %v12596 = vpop.xlane.xlu0 %12595
        %v12597 = vsel %vm775, %v12565, 0.0
        %12598 = vadd.xlane.f32.xlu0 %v12597
        %v12599 = vpop.xlane.xlu0 %12598
        %v12600 = vsel %vm775, %v12566, 0.0
        %12601 = vadd.xlane.f32.xlu0 %v12600
        %v12602 = vpop.xlane.xlu0 %12601
        %v12603 = vsel %vm775, %v12567, 0.0
        %12604 = vadd.xlane.f32.xlu0 %v12603
        %v12605 = vpop.xlane.xlu0 %12604
        %v12606 = vsel %vm775, %v12568, 0.0
        %12607 = vadd.xlane.f32.xlu0 %v12606
        %v12608 = vpop.xlane.xlu0 %12607
        %v12609 = vsel %vm775, %v12569, 0.0
        %12610 = vadd.xlane.f32.xlu0 %v12609
        %v12611 = vpop.xlane.xlu0 %12610
        %v12612 = vsel %vm775, %v12570, 0.0
        %12613 = vadd.xlane.f32.xlu0 %v12612
        %v12614 = vpop.xlane.xlu0 %12613
        %v12615 = vsel %vm775, %v12571, 0.0
        %12616 = vadd.xlane.f32.xlu0 %v12615
        %v12617 = vpop.xlane.xlu0 %12616
        %v12618 = vsel %vm775, %v12572, 0.0
        %12619 = vadd.xlane.f32.xlu0 %v12618
        %v12620 = vpop.xlane.xlu0 %12619
        %v12621 = vmul.f32 %v12575, %v824
        %v12622 = vmul.f32 %v12578, %v824
        %v12623 = vmul.f32 %v12581, %v824
        %v12624 = vmul.f32 %v12584, %v824
        %v12625 = vmul.f32 %v12587, %v824
        %v12626 = vmul.f32 %v12590, %v824
        %v12627 = vmul.f32 %v12593, %v824
        %v12628 = vmul.f32 %v12596, %v824
        %v12629 = vmul.f32 %v12599, %v824
        %v12630 = vmul.f32 %v12602, %v824
        %v12631 = vmul.f32 %v12605, %v824
        %v12632 = vmul.f32 %v12608, %v824
        %v12633 = vmul.f32 %v12611, %v824
        %v12634 = vmul.f32 %v12614, %v824
        %v12635 = vmul.f32 %v12617, %v824
        %v12636 = vmul.f32 %v12620, %v824
        %v12637 = vadd.f32 %v12621, 1e-05
        %v12638 = vadd.f32 %v12622, 1e-05
        %v12639 = vadd.f32 %v12623, 1e-05
        %v12640 = vadd.f32 %v12624, 1e-05
        %v12641 = vadd.f32 %v12625, 1e-05
        %v12642 = vadd.f32 %v12626, 1e-05
        %v12643 = vadd.f32 %v12627, 1e-05
        %v12644 = vadd.f32 %v12628, 1e-05
        %v12645 = vadd.f32 %v12629, 1e-05
        %v12646 = vadd.f32 %v12630, 1e-05
        %v12647 = vadd.f32 %v12631, 1e-05
        %v12648 = vadd.f32 %v12632, 1e-05
        %v12649 = vadd.f32 %v12633, 1e-05
        %v12650 = vadd.f32 %v12634, 1e-05
        %v12651 = vadd.f32 %v12635, 1e-05
        %v12652 = vadd.f32 %v12636, 1e-05
        %v12653 = vrsqrt.pop %v12637
        %v12654 = vrsqrt.pop %v12638
        %v12655 = vrsqrt.pop %v12639
        %v12656 = vrsqrt.pop %v12640
        %v12657 = vrsqrt.pop %v12641
        %v12658 = vrsqrt.pop %v12642
        %v12659 = vrsqrt.pop %v12643
        %v12660 = vrsqrt.pop %v12644
        %v12661 = vrsqrt.pop %v12645
        %v12662 = vrsqrt.pop %v12646
        %v12663 = vrsqrt.pop %v12647
        %v12664 = vrsqrt.pop %v12648
        %v12665 = vrsqrt.pop %v12649
        %v12666 = vrsqrt.pop %v12650
        %v12667 = vrsqrt.pop %v12651
        %v12668 = vrsqrt.pop %v12652
        %v12669 = vmul.f32 %v12541, %v12653
        %v12670 = vmul.f32 %v12542, %v12654
        %v12671 = vmul.f32 %v12543, %v12655
        %v12672 = vmul.f32 %v12544, %v12656
        %v12673 = vmul.f32 %v12545, %v12657
        %v12674 = vmul.f32 %v12546, %v12658
        %v12675 = vmul.f32 %v12547, %v12659
        %v12676 = vmul.f32 %v12548, %v12660
        %v12677 = vmul.f32 %v12549, %v12661
        %v12678 = vmul.f32 %v12550, %v12662
        %v12679 = vmul.f32 %v12551, %v12663
        %v12680 = vmul.f32 %v12552, %v12664
        %v12681 = vmul.f32 %v12553, %v12665
        %v12682 = vmul.f32 %v12554, %v12666
        %v12683 = vmul.f32 %v12555, %v12667
        %v12684 = vmul.f32 %v12556, %v12668
        %v12686 = vlaneseq
        %v12687 = vshrl.u32 %v12686, 7
        %v12688 = vsub.s32 0, %v12687
        %v12689 = vrot.slane %v12475, %v12688
        %v12691 = vmul.f32 %v12669, %v12689
        %v12692 = vmul.f32 %v12670, %v12689
        %v12693 = vmul.f32 %v12671, %v12689
        %v12694 = vmul.f32 %v12672, %v12689
        %v12695 = vmul.f32 %v12673, %v12689
        %v12696 = vmul.f32 %v12674, %v12689
        %v12697 = vmul.f32 %v12675, %v12689
        %v12698 = vmul.f32 %v12676, %v12689
        %v12699 = vmul.f32 %v12677, %v12689
        %v12700 = vmul.f32 %v12678, %v12689
        %v12701 = vmul.f32 %v12679, %v12689
        %v12702 = vmul.f32 %v12680, %v12689
        %v12703 = vmul.f32 %v12681, %v12689
        %v12704 = vmul.f32 %v12682, %v12689
        %v12705 = vmul.f32 %v12683, %v12689
        %v12706 = vmul.f32 %v12684, %v12689
        %v12708 = vlaneseq
        %v12709 = vshrl.u32 %v12708, 7
        %v12710 = vsub.s32 0, %v12709
        %v12711 = vrot.slane %v12476, %v12710
        %v12713 = vadd.f32 %v12691, %v12711
        %v12714 = vadd.f32 %v12692, %v12711
        %v12715 = vadd.f32 %v12693, %v12711
        %v12716 = vadd.f32 %v12694, %v12711
        %v12717 = vadd.f32 %v12695, %v12711
        %v12718 = vadd.f32 %v12696, %v12711
        %v12719 = vadd.f32 %v12697, %v12711
        %v12720 = vadd.f32 %v12698, %v12711
        %v12721 = vadd.f32 %v12699, %v12711
        %v12722 = vadd.f32 %v12700, %v12711
        %v12723 = vadd.f32 %v12701, %v12711
        %v12724 = vadd.f32 %v12702, %v12711
        %v12725 = vadd.f32 %v12703, %v12711
        %v12726 = vadd.f32 %v12704, %v12711
        %v12727 = vadd.f32 %v12705, %v12711
        %v12728 = vadd.f32 %v12706, %v12711
        %12729 = vst.msk [vmem:[%s698] sm:$0xff] %vm775, %v12713
        %12730 = vst.msk [vmem:[%s698 + $0x8] sm:$0xff] %vm775, %v12714
        %12731 = vst.msk [vmem:[%s698 + $0x10] sm:$0xff] %vm775, %v12715
        %12732 = vst.msk [vmem:[%s698 + $0x18] sm:$0xff] %vm775, %v12716
        %12733 = vst.msk [vmem:[%s698 + $0x20] sm:$0xff] %vm775, %v12717
        %12734 = vst.msk [vmem:[%s698 + $0x28] sm:$0xff] %vm775, %v12718
        %12735 = vst.msk [vmem:[%s698 + $0x30] sm:$0xff] %vm775, %v12719
        %12736 = vst.msk [vmem:[%s698 + $0x38] sm:$0xff] %vm775, %v12720
        %12737 = vst.msk [vmem:[%s698 + $0x40] sm:$0xff] %vm775, %v12721
        %12738 = vst.msk [vmem:[%s698 + $0x48] sm:$0xff] %vm775, %v12722
        %12739 = vst.msk [vmem:[%s698 + $0x50] sm:$0xff] %vm775, %v12723
        %12740 = vst.msk [vmem:[%s698 + $0x58] sm:$0xff] %vm775, %v12724
        %12741 = vst.msk [vmem:[%s698 + $0x60] sm:$0xff] %vm775, %v12725
        %12742 = vst.msk [vmem:[%s698 + $0x68] sm:$0xff] %vm775, %v12726
        %12743 = vst.msk [vmem:[%s698 + $0x70] sm:$0xff] %vm775, %v12727
        %12744 = vst.msk [vmem:[%s698 + $0x78] sm:$0xff] %vm775, %v12728
      $region88: #{tpu_custom_call.1} parent=79 // pred_fallthru
        _
      %p12745 = scmp.ne.s32.totalorder %s30, 1
      // Predicated region
      $region89: #{tpu_custom_call.1} parent=79 // pred_check
        %p12746 = pneg %p12745
      $region90: #{tpu_custom_call.1} parent=79 // pred_check_branch
        %12748 = sbr.rel (%p12746) target = $region92
      $region91: #{tpu_custom_call.1} parent=79 // pred_region
        %12749 = vst.msk [vmem:[%s698] sm:$0xff] %vm775, %v12439
        %12750 = vst.msk [vmem:[%s698 + $0x8] sm:$0xff] %vm775, %v12440
        %12751 = vst.msk [vmem:[%s698 + $0x10] sm:$0xff] %vm775, %v12441
        %12752 = vst.msk [vmem:[%s698 + $0x18] sm:$0xff] %vm775, %v12442
        %12753 = vst.msk [vmem:[%s698 + $0x20] sm:$0xff] %vm775, %v12443
        %12754 = vst.msk [vmem:[%s698 + $0x28] sm:$0xff] %vm775, %v12444
        %12755 = vst.msk [vmem:[%s698 + $0x30] sm:$0xff] %vm775, %v12445
        %12756 = vst.msk [vmem:[%s698 + $0x38] sm:$0xff] %vm775, %v12446
        %12757 = vst.msk [vmem:[%s698 + $0x40] sm:$0xff] %vm775, %v12447
        %12758 = vst.msk [vmem:[%s698 + $0x48] sm:$0xff] %vm775, %v12448
        %12759 = vst.msk [vmem:[%s698 + $0x50] sm:$0xff] %vm775, %v12449
        %12760 = vst.msk [vmem:[%s698 + $0x58] sm:$0xff] %vm775, %v12450
        %12761 = vst.msk [vmem:[%s698 + $0x60] sm:$0xff] %vm775, %v12451
        %12762 = vst.msk [vmem:[%s698 + $0x68] sm:$0xff] %vm775, %v12452
        %12763 = vst.msk [vmem:[%s698 + $0x70] sm:$0xff] %vm775, %v12453
        %12764 = vst.msk [vmem:[%s698 + $0x78] sm:$0xff] %vm775, %v12454
      $region92: #{tpu_custom_call.1} parent=79 // pred_fallthru
        _
      %p12765 = scmp.lt.s32.totalorder %s31, 1
      %s12766 = scalar_select %p12765, %s31, 1
      %s12767 = smul.addr %s12766, 16
      %s12768 = smul.addr %s12767, 8
      %s12769 = scalar_lea.vmem %s15, %s12768
      // Predicated region
      $region93: #{tpu_custom_call.1} parent=79 // pred_check
        %p12770 = pneg %p436
      $region94: #{tpu_custom_call.1} parent=79 // pred_check_branch
        %12772 = sbr.rel (%p12770) target = $region96
      $region95: #{tpu_custom_call.1} parent=79 // pred_region
        _
      $region96: #{tpu_custom_call.1} parent=79 // pred_fallthru
        _
    $region80: #{tpu_custom_call.1} parent=5 // pred_fallthru
      _
    %p12773 = scmp.le.s32.totalorder 2, %s21
    // Predicated region
    $region97: #{tpu_custom_call.1} parent=5 // pred_check
      %p12774 = pneg %p12773
    $region98: #{tpu_custom_call.1} parent=5 // pred_check_branch
      %12776 = sbr.rel (%p12774) target = $region100
    $region99: #{tpu_custom_call.1} parent=5 // pred_region
      %s12777 = ssub.s32 %s21, 2
      // Predicated region
      $region101: #{tpu_custom_call.1} parent=99 // pred_check
        %p12778 = pneg %p442
      $region102: #{tpu_custom_call.1} parent=99 // pred_check_branch
        %12780 = sbr.rel (%p12778) target = $region104
      $region103: #{tpu_custom_call.1} parent=99 // pred_region
        %p12781 = scmp.lt.s32.totalorder %s33, 1
        %s12782 = scalar_select %p12781, %s33, 1
        %s12783 = smul.addr %s12782, 16
        %s12784 = smul.addr %s12783, 8
        %s12785 = scalar_lea.vmem %s15, %s12784
      $region104: #{tpu_custom_call.1} parent=99 // pred_fallthru
        _
    $region100: #{tpu_custom_call.1} parent=5 // pred_fallthru
      _
  $region6: #{tpu_custom_call.1} parent=0 // loop_footer
    %s25 = sadd.s32 1, %s21
  $region7: #{tpu_custom_call.1} parent=0 // loop_footer_branch
    %20 = sbr.rel target = $region3
  $region8: #{tpu_custom_call.1} parent=0 // loop_exit
    _

</llo_original>
